<compile_context>
chip_gen: v7x
topology: tpu7x:2x2x1
jax: 0.10.0
libtpu: 0.0.40
codegen_flags: <defaults>
</compile_context>

<pallas_src>
import functools

import jax
import jax.numpy as jnp
import numpy as np
from jax import lax
from jax.experimental import pallas as pl
from jax.experimental.pallas import tpu as pltpu

_LANE_TILE = 256  # batch problems per grid step (2 x 128-lane tiles for ILP)


def _pdhg_lp_kernel(k_mnb_ref, k_nmb_ref, q_ref, c_ref, y_ref,
                    ks_mnb_scr, ks_nmb_scr, *, lb, ub, n_iters, unroll):
    # One grid step = Bt independent LP instances, batch on lanes.
    M, Bt = q_ref.shape
    N = c_ref.shape[0]

    # ---- one-time setup (outside the hot loop) ------------------------------
    # Per-problem PDHG step sizes: tau * sigma * ||K||_2^2 < 1, bounded via the
    # Frobenius norm.  K is streamed slice-by-slice to keep vreg pressure low.
    acc = jnp.zeros((M, Bt), jnp.float32)
    for n in range(N):
        kn = k_nmb_ref[n]                                     # (M, Bt)
        acc = acc + kn * kn
    fro = jnp.sqrt(jnp.sum(acc, axis=0, keepdims=True))       # (1, Bt)
    # Padded lanes have K == 0 -> fro == 0: give them a benign unit step
    # instead of ~1e8 so padded lanes stay inert under any future changes.
    step = jnp.where(fro > 1e-6, 0.9 / jnp.maximum(fro, 1e-6), 1.0)   # (1, Bt)

    # Fold sigma into K (dual orientation) and tau into K^T (primal
    # orientation), staged in VMEM scratch so the hot loop streams them through
    # the (slack) vld slots instead of holding 64+ vregs of K.  Also pre-scale
    # q and c.  Saves the per-iteration step-size multiplies on the VALU.
    for n in range(N):
        ks_nmb_scr[n] = k_nmb_ref[n] * step                   # sigma*K   (M, Bt)
    for m in range(M):
        ks_mnb_scr[m] = k_mnb_ref[m] * step                   # tau*K^T   (N, Bt)
    q_s = q_ref[...] * step                                   # sigma*q   (M, Bt)
    c_s = c_ref[...] * step                                   # tau*c     (N, Bt)

    y0 = jnp.full((N, Bt), 0.5 * (lb + ub), dtype=jnp.float32)
    lam0 = jnp.zeros((M, Bt), dtype=jnp.float32)

    def one_step(carry):
        y, y_bar, lam = carry
        # dual ascent:  lam <- max(0, lam + sigma*(K y_bar + q))
        #   Kyb[m,b] = sum_n K[m,n,b] * y_bar[n,b]   (VPU mul/add, K from VMEM)
        kyb = q_s
        for n in range(N):
            kyb = kyb + ks_nmb_scr[n] * y_bar[n:n + 1]        # (M,Bt)*(1,Bt)
        lam_new = jnp.maximum(lam + kyb, 0.0)
        # primal descent + box projection:
        #   y <- clip(y - tau*(c + K^T lam), lb, ub)
        ktl = c_s
        for m in range(M):
            ktl = ktl + ks_mnb_scr[m] * lam_new[m:m + 1]      # (N,Bt)*(1,Bt)
        y_new = jnp.clip(y - ktl, lb, ub)
        y_bar_new = 2.0 * y_new - y
        return y_new, y_bar_new, lam_new

    u = max(1, int(unroll))
    n_outer, n_rem = divmod(int(n_iters), u)

    def body(_, carry):
        for _i in range(u):          # manual unroll inside the fori_loop body
            carry = one_step(carry)
        return carry

    carry = (y0, y0, lam0)
    if n_outer:
        carry = lax.fori_loop(0, n_outer, body, carry)
    for _i in range(n_rem):          # static remainder (no second fori_loop)
        carry = one_step(carry)

    # Single lane-dense (N, Bt) store.
    y_ref[...] = carry[0].astype(y_ref.dtype)


def cvxpy_forward(a, b, c, h=None, *, lb=0.0, ub=1.0, use_entropy=False,
                  n_iters=1500, unroll=8, lane_tile=_LANE_TILE):
    """Mirrors Cvxpy.forward(a, b, c, h) -> (y, status)."""
    # TODO(synk): use_entropy=True adds an entropy barrier to the cvxpylayers
    # objective; only the plain LP relaxation (use_entropy=False) is done here.
    assert not use_entropy, "use_entropy=True not implemented"
    del h  # unused by the reference module as well

    B, M, N = a.shape
    a = a.astype(jnp.float32)
    b = b.astype(jnp.float32)
    c = c.astype(jnp.float32)

    # Batch-on-lanes layout; sign flip folded once here (K = -a, q = -b).
    # K is passed in both orientations so both mat-vecs stream contiguous
    # leading-axis slices.  VMEM note (v7x scaling): at large M/N/Bt this dual
    # orientation doubles per-block VMEM; drop one orientation or single-buffer
    # (pl.Buffered(1)) before growing shapes.  Irrelevant at M=8, N=16.
    k_mnb = jnp.transpose(-a, (1, 2, 0))          # (M, N, B)  tau-side  K^T
    k_nmb = jnp.transpose(-a, (2, 1, 0))          # (N, M, B)  sigma-side K
    q_mb = jnp.transpose(-b, (1, 0))              # (M, B)
    c_nb = jnp.transpose(c, (1, 0))               # (N, B)

    bt = int(lane_tile)
    assert bt % 128 == 0
    b_pad = ((B + bt - 1) // bt) * bt
    pad = b_pad - B
    if pad:
        k_mnb = jnp.pad(k_mnb, ((0, 0), (0, 0), (0, pad)))
        k_nmb = jnp.pad(k_nmb, ((0, 0), (0, 0), (0, pad)))
        q_mb = jnp.pad(q_mb, ((0, 0), (0, pad)))
        c_nb = jnp.pad(c_nb, ((0, 0), (0, pad)))

    # Each grid step solves `bt` problems; for B > bt the steps are independent
    # ("parallel") so v7x megacore can split them across its two TensorCores.
    grid = (b_pad // bt,)

    # Compute-heavy / HBM-light hint for XLA's scheduler.
    cost = pl.CostEstimate(
        flops=int(4 * M * N * b_pad) * int(n_iters),
        transcendentals=int(b_pad),
        bytes_accessed=int(4 * (2 * M * N * b_pad + M * b_pad + 2 * N * b_pad)))

    kernel = functools.partial(_pdhg_lp_kernel, lb=float(lb), ub=float(ub),
                               n_iters=int(n_iters), unroll=int(unroll))
    y_nb = pl.pallas_call(
        kernel,
        out_shape=jax.ShapeDtypeStruct((N, b_pad), jnp.float32),
        grid=grid,
        in_specs=[
            pl.BlockSpec((M, N, bt), lambda i: (0, 0, i)),
            pl.BlockSpec((N, M, bt), lambda i: (0, 0, i)),
            pl.BlockSpec((M, bt), lambda i: (0, i)),
            pl.BlockSpec((N, bt), lambda i: (0, i)),
        ],
        out_specs=pl.BlockSpec((N, bt), lambda i: (0, i)),
        scratch_shapes=[
            pltpu.VMEM((M, N, bt), jnp.float32),   # tau  * K^T (indexed by m)
            pltpu.VMEM((N, M, bt), jnp.float32),   # sigma* K   (indexed by n)
        ],
        cost_estimate=cost,
        compiler_params=pltpu.CompilerParams(
            dimension_semantics=("parallel",)),
    )(k_mnb, k_nmb, q_mb, c_nb)

    y = jnp.transpose(y_nb[:, :B], (1, 0))        # (B, N)
    # torch.long -> int32 (JAX default integer width without x64 enabled).
    status = jnp.zeros((B,), dtype=jnp.int32)
    return y, status


def _reference_pdhg(a, b, c, lb, ub, n_iters):
    """Pure-JAX reference of the same fixed-iteration PDHG (for validation)."""
    K = -a
    q = -b
    fro = jnp.sqrt(jnp.sum(K * K, axis=(1, 2)))               # (B,)
    tau = (0.9 / fro)[:, None]
    sigma = (0.9 / fro)[:, None]
    y = jnp.full_like(c, 0.5 * (lb + ub))
    y_bar = y
    lam = jnp.zeros_like(b)

    def body(_, carry):
        y, y_bar, lam = carry
        Kyb = jnp.einsum("bmn,bn->bm", K, y_bar)
        lam_new = jnp.maximum(lam + sigma * (Kyb + q), 0.0)
        KTl = jnp.einsum("bmn,bm->bn", K, lam_new)
        y_new = jnp.clip(y - tau * (c + KTl), lb, ub)
        return y_new, 2.0 * y_new - y, lam_new

    y, _, _ = lax.fori_loop(0, n_iters, body, (y, y_bar, lam))
    return y


if __name__ == "__main__":
    # Shapes implied by the forward: a (B, M, N), b (B, M), c (B, N).
    B, M, N = 2, 8, 16
    LB, UB = 0.0, 1.0
    N_ITERS = 1500

    key = jax.random.PRNGKey(0)
    ka, kb, kc = jax.random.split(key, 3)
    a = jax.random.normal(ka, (B, M, N), dtype=jnp.float32)
    c = jax.random.normal(kc, (B, N), dtype=jnp.float32)
    # Construct b so that y0 = 0.5 is strictly feasible:  a y0 + b >= margin > 0
    y_feas = jnp.full((B, N), 0.5, dtype=jnp.float32)
    margin = jnp.abs(jax.random.normal(kb, (B, M), dtype=jnp.float32)) + 0.1
    b = -jnp.einsum("bmn,bn->bm", a, y_feas) + margin

    y, status = cvxpy_forward(a, b, c, lb=LB, ub=UB, use_entropy=False,
                              n_iters=N_ITERS)
    y = jax.block_until_ready(y)
    status = jax.block_until_ready(status)

    # Validate against the pure-JAX reference of the identical iteration.
    # (Tolerance is loosened vs. bitwise: the kernel folds step sizes into K
    # and uses a streamed, batched reduction order inside the mat-vecs.)
    y_ref = jax.block_until_ready(_reference_pdhg(a, b, c, LB, UB, N_ITERS))
    np.testing.assert_allclose(np.asarray(y), np.asarray(y_ref),
                               rtol=2e-3, atol=2e-3)
    assert y.shape == (B, N) and y.dtype == jnp.float32
    assert status.shape == (B,) and int(jnp.sum(status)) == 0
    assert bool(jnp.all(jnp.isfinite(y)))
    assert bool(jnp.all((y >= LB - 1e-4) & (y <= UB + 1e-4)))

    print("KERNEL_OK")
</pallas_src>

<mosaic_0001>
module attributes {stable_mosaic.version = 11 : i64} {
  func.func @_pdhg_lp_kernel(%arg0: i32, %arg1: memref<8x16x256xf32, #tpu.memory_space<vmem>>, %arg2: memref<16x8x256xf32, #tpu.memory_space<vmem>>, %arg3: memref<8x256xf32, #tpu.memory_space<vmem>>, %arg4: memref<16x256xf32, #tpu.memory_space<vmem>>, %arg5: memref<16x256xf32, #tpu.memory_space<vmem>>, %arg6: memref<8x16x256xf32, #tpu.memory_space<vmem>>, %arg7: memref<16x8x256xf32, #tpu.memory_space<vmem>>) attributes {dimension_semantics = [#tpu.dimension_semantics<parallel>], iteration_bounds = array<i64: 1>, scalar_prefetch = 0 : i64, scratch_operands = 2 : i64, tpu.core_type = #tpu.core_type<tc>, window_params = [{transform_indices = @transform_0, window_bounds = array<i64: 8, 16, 256>}, {transform_indices = @transform_1, window_bounds = array<i64: 16, 8, 256>}, {transform_indices = @transform_2, window_bounds = array<i64: 8, 256>}, {transform_indices = @transform_3, window_bounds = array<i64: 16, 256>}, {transform_indices = @transform_4, window_bounds = array<i64: 16, 256>}]} {
    %cst = arith.constant 0.000000e+00 : f32
    %0 = vector.broadcast %cst : f32 to vector<8x256xf32>
    %c0 = arith.constant 0 : index
    %c0_0 = arith.constant 0 : index
    %c0_1 = arith.constant 0 : index
    %1 = vector.load %arg2[%c0, %c0_0, %c0_1] : memref<16x8x256xf32, #tpu.memory_space<vmem>>, vector<1x8x256xf32>
    %2 = vector.shape_cast %1 : vector<1x8x256xf32> to vector<8x256xf32>
    %3 = arith.mulf %2, %2 : vector<8x256xf32>
    %4 = arith.addf %0, %3 : vector<8x256xf32>
    %c1 = arith.constant 1 : index
    %c0_2 = arith.constant 0 : index
    %c0_3 = arith.constant 0 : index
    %5 = vector.load %arg2[%c1, %c0_2, %c0_3] : memref<16x8x256xf32, #tpu.memory_space<vmem>>, vector<1x8x256xf32>
    %6 = vector.shape_cast %5 : vector<1x8x256xf32> to vector<8x256xf32>
    %7 = arith.mulf %6, %6 : vector<8x256xf32>
    %8 = arith.addf %4, %7 : vector<8x256xf32>
    %c2 = arith.constant 2 : index
    %c0_4 = arith.constant 0 : index
    %c0_5 = arith.constant 0 : index
    %9 = vector.load %arg2[%c2, %c0_4, %c0_5] : memref<16x8x256xf32, #tpu.memory_space<vmem>>, vector<1x8x256xf32>
    %10 = vector.shape_cast %9 : vector<1x8x256xf32> to vector<8x256xf32>
    %11 = arith.mulf %10, %10 : vector<8x256xf32>
    %12 = arith.addf %8, %11 : vector<8x256xf32>
    %c3 = arith.constant 3 : index
    %c0_6 = arith.constant 0 : index
    %c0_7 = arith.constant 0 : index
    %13 = vector.load %arg2[%c3, %c0_6, %c0_7] : memref<16x8x256xf32, #tpu.memory_space<vmem>>, vector<1x8x256xf32>
    %14 = vector.shape_cast %13 : vector<1x8x256xf32> to vector<8x256xf32>
    %15 = arith.mulf %14, %14 : vector<8x256xf32>
    %16 = arith.addf %12, %15 : vector<8x256xf32>
    %c4 = arith.constant 4 : index
    %c0_8 = arith.constant 0 : index
    %c0_9 = arith.constant 0 : index
    %17 = vector.load %arg2[%c4, %c0_8, %c0_9] : memref<16x8x256xf32, #tpu.memory_space<vmem>>, vector<1x8x256xf32>
    %18 = vector.shape_cast %17 : vector<1x8x256xf32> to vector<8x256xf32>
    %19 = arith.mulf %18, %18 : vector<8x256xf32>
    %20 = arith.addf %16, %19 : vector<8x256xf32>
    %c5 = arith.constant 5 : index
    %c0_10 = arith.constant 0 : index
    %c0_11 = arith.constant 0 : index
    %21 = vector.load %arg2[%c5, %c0_10, %c0_11] : memref<16x8x256xf32, #tpu.memory_space<vmem>>, vector<1x8x256xf32>
    %22 = vector.shape_cast %21 : vector<1x8x256xf32> to vector<8x256xf32>
    %23 = arith.mulf %22, %22 : vector<8x256xf32>
    %24 = arith.addf %20, %23 : vector<8x256xf32>
    %c6 = arith.constant 6 : index
    %c0_12 = arith.constant 0 : index
    %c0_13 = arith.constant 0 : index
    %25 = vector.load %arg2[%c6, %c0_12, %c0_13] : memref<16x8x256xf32, #tpu.memory_space<vmem>>, vector<1x8x256xf32>
    %26 = vector.shape_cast %25 : vector<1x8x256xf32> to vector<8x256xf32>
    %27 = arith.mulf %26, %26 : vector<8x256xf32>
    %28 = arith.addf %24, %27 : vector<8x256xf32>
    %c7 = arith.constant 7 : index
    %c0_14 = arith.constant 0 : index
    %c0_15 = arith.constant 0 : index
    %29 = vector.load %arg2[%c7, %c0_14, %c0_15] : memref<16x8x256xf32, #tpu.memory_space<vmem>>, vector<1x8x256xf32>
    %30 = vector.shape_cast %29 : vector<1x8x256xf32> to vector<8x256xf32>
    %31 = arith.mulf %30, %30 : vector<8x256xf32>
    %32 = arith.addf %28, %31 : vector<8x256xf32>
    %c8 = arith.constant 8 : index
    %c0_16 = arith.constant 0 : index
    %c0_17 = arith.constant 0 : index
    %33 = vector.load %arg2[%c8, %c0_16, %c0_17] : memref<16x8x256xf32, #tpu.memory_space<vmem>>, vector<1x8x256xf32>
    %34 = vector.shape_cast %33 : vector<1x8x256xf32> to vector<8x256xf32>
    %35 = arith.mulf %34, %34 : vector<8x256xf32>
    %36 = arith.addf %32, %35 : vector<8x256xf32>
    %c9 = arith.constant 9 : index
    %c0_18 = arith.constant 0 : index
    %c0_19 = arith.constant 0 : index
    %37 = vector.load %arg2[%c9, %c0_18, %c0_19] : memref<16x8x256xf32, #tpu.memory_space<vmem>>, vector<1x8x256xf32>
    %38 = vector.shape_cast %37 : vector<1x8x256xf32> to vector<8x256xf32>
    %39 = arith.mulf %38, %38 : vector<8x256xf32>
    %40 = arith.addf %36, %39 : vector<8x256xf32>
    %c10 = arith.constant 10 : index
    %c0_20 = arith.constant 0 : index
    %c0_21 = arith.constant 0 : index
    %41 = vector.load %arg2[%c10, %c0_20, %c0_21] : memref<16x8x256xf32, #tpu.memory_space<vmem>>, vector<1x8x256xf32>
    %42 = vector.shape_cast %41 : vector<1x8x256xf32> to vector<8x256xf32>
    %43 = arith.mulf %42, %42 : vector<8x256xf32>
    %44 = arith.addf %40, %43 : vector<8x256xf32>
    %c11 = arith.constant 11 : index
    %c0_22 = arith.constant 0 : index
    %c0_23 = arith.constant 0 : index
    %45 = vector.load %arg2[%c11, %c0_22, %c0_23] : memref<16x8x256xf32, #tpu.memory_space<vmem>>, vector<1x8x256xf32>
    %46 = vector.shape_cast %45 : vector<1x8x256xf32> to vector<8x256xf32>
    %47 = arith.mulf %46, %46 : vector<8x256xf32>
    %48 = arith.addf %44, %47 : vector<8x256xf32>
    %c12 = arith.constant 12 : index
    %c0_24 = arith.constant 0 : index
    %c0_25 = arith.constant 0 : index
    %49 = vector.load %arg2[%c12, %c0_24, %c0_25] : memref<16x8x256xf32, #tpu.memory_space<vmem>>, vector<1x8x256xf32>
    %50 = vector.shape_cast %49 : vector<1x8x256xf32> to vector<8x256xf32>
    %51 = arith.mulf %50, %50 : vector<8x256xf32>
    %52 = arith.addf %48, %51 : vector<8x256xf32>
    %c13 = arith.constant 13 : index
    %c0_26 = arith.constant 0 : index
    %c0_27 = arith.constant 0 : index
    %53 = vector.load %arg2[%c13, %c0_26, %c0_27] : memref<16x8x256xf32, #tpu.memory_space<vmem>>, vector<1x8x256xf32>
    %54 = vector.shape_cast %53 : vector<1x8x256xf32> to vector<8x256xf32>
    %55 = arith.mulf %54, %54 : vector<8x256xf32>
    %56 = arith.addf %52, %55 : vector<8x256xf32>
    %c14 = arith.constant 14 : index
    %c0_28 = arith.constant 0 : index
    %c0_29 = arith.constant 0 : index
    %57 = vector.load %arg2[%c14, %c0_28, %c0_29] : memref<16x8x256xf32, #tpu.memory_space<vmem>>, vector<1x8x256xf32>
    %58 = vector.shape_cast %57 : vector<1x8x256xf32> to vector<8x256xf32>
    %59 = arith.mulf %58, %58 : vector<8x256xf32>
    %60 = arith.addf %56, %59 : vector<8x256xf32>
    %c15 = arith.constant 15 : index
    %c0_30 = arith.constant 0 : index
    %c0_31 = arith.constant 0 : index
    %61 = vector.load %arg2[%c15, %c0_30, %c0_31] : memref<16x8x256xf32, #tpu.memory_space<vmem>>, vector<1x8x256xf32>
    %62 = vector.shape_cast %61 : vector<1x8x256xf32> to vector<8x256xf32>
    %63 = arith.mulf %62, %62 : vector<8x256xf32>
    %64 = arith.addf %60, %63 : vector<8x256xf32>
    %cst_32 = arith.constant dense<0.000000e+00> : vector<256xf32>
    %65 = vector.multi_reduction <add>, %64, %cst_32 [0] : vector<8x256xf32> to vector<256xf32>
    %66 = vector.shape_cast %65 : vector<256xf32> to vector<1x256xf32>
    %67 = math.sqrt %66 : vector<1x256xf32>
    %cst_33 = arith.constant 9.99999997E-7 : f32
    %68 = vector.broadcast %cst_33 : f32 to vector<1x256xf32>
    %69 = arith.cmpf ogt, %67, %68 : vector<1x256xf32>
    %cst_34 = arith.constant 9.99999997E-7 : f32
    %70 = vector.broadcast %cst_34 : f32 to vector<1x256xf32>
    %71 = arith.maximumf %67, %70 : vector<1x256xf32>
    %cst_35 = arith.constant 0.899999976 : f32
    %72 = vector.broadcast %cst_35 : f32 to vector<1x256xf32>
    %73 = arith.divf %72, %71 : vector<1x256xf32>
    %cst_36 = arith.constant 1.000000e+00 : f32
    %74 = vector.broadcast %cst_36 : f32 to vector<1x256xf32>
    %75 = arith.select %69, %73, %74 : vector<1x256xi1>, vector<1x256xf32>
    %c0_37 = arith.constant 0 : index
    %c0_38 = arith.constant 0 : index
    %c0_39 = arith.constant 0 : index
    %76 = vector.load %arg2[%c0_37, %c0_38, %c0_39] : memref<16x8x256xf32, #tpu.memory_space<vmem>>, vector<1x8x256xf32>
    %77 = vector.shape_cast %76 : vector<1x8x256xf32> to vector<8x256xf32>
    %78 = vector.broadcast %75 : vector<1x256xf32> to vector<8x256xf32>
    %79 = arith.mulf %77, %78 : vector<8x256xf32>
    %c0_40 = arith.constant 0 : index
    %c0_41 = arith.constant 0 : index
    %c0_42 = arith.constant 0 : index
    %80 = vector.load %arg7[%c0_40, %c0_41, %c0_42] : memref<16x8x256xf32, #tpu.memory_space<vmem>>, vector<1x8x256xf32>
    %81 = vector.shape_cast %80 : vector<1x8x256xf32> to vector<8x256xf32>
    %82 = vector.shape_cast %79 : vector<8x256xf32> to vector<1x8x256xf32>
    tpu.vector_store %arg7[%c0_40, %c0_41, %c0_42], %82 {strides = array<i32>} : memref<16x8x256xf32, #tpu.memory_space<vmem>>, vector<1x8x256xf32>,
    %c1_43 = arith.constant 1 : index
    %c0_44 = arith.constant 0 : index
    %c0_45 = arith.constant 0 : index
    %83 = vector.load %arg2[%c1_43, %c0_44, %c0_45] : memref<16x8x256xf32, #tpu.memory_space<vmem>>, vector<1x8x256xf32>
    %84 = vector.shape_cast %83 : vector<1x8x256xf32> to vector<8x256xf32>
    %85 = vector.broadcast %75 : vector<1x256xf32> to vector<8x256xf32>
    %86 = arith.mulf %84, %85 : vector<8x256xf32>
    %c1_46 = arith.constant 1 : index
    %c0_47 = arith.constant 0 : index
    %c0_48 = arith.constant 0 : index
    %87 = vector.load %arg7[%c1_46, %c0_47, %c0_48] : memref<16x8x256xf32, #tpu.memory_space<vmem>>, vector<1x8x256xf32>
    %88 = vector.shape_cast %87 : vector<1x8x256xf32> to vector<8x256xf32>
    %89 = vector.shape_cast %86 : vector<8x256xf32> to vector<1x8x256xf32>
    tpu.vector_store %arg7[%c1_46, %c0_47, %c0_48], %89 {strides = array<i32>} : memref<16x8x256xf32, #tpu.memory_space<vmem>>, vector<1x8x256xf32>,
    %c2_49 = arith.constant 2 : index
    %c0_50 = arith.constant 0 : index
    %c0_51 = arith.constant 0 : index
    %90 = vector.load %arg2[%c2_49, %c0_50, %c0_51] : memref<16x8x256xf32, #tpu.memory_space<vmem>>, vector<1x8x256xf32>
    %91 = vector.shape_cast %90 : vector<1x8x256xf32> to vector<8x256xf32>
    %92 = vector.broadcast %75 : vector<1x256xf32> to vector<8x256xf32>
    %93 = arith.mulf %91, %92 : vector<8x256xf32>
    %c2_52 = arith.constant 2 : index
    %c0_53 = arith.constant 0 : index
    %c0_54 = arith.constant 0 : index
    %94 = vector.load %arg7[%c2_52, %c0_53, %c0_54] : memref<16x8x256xf32, #tpu.memory_space<vmem>>, vector<1x8x256xf32>
    %95 = vector.shape_cast %94 : vector<1x8x256xf32> to vector<8x256xf32>
    %96 = vector.shape_cast %93 : vector<8x256xf32> to vector<1x8x256xf32>
    tpu.vector_store %arg7[%c2_52, %c0_53, %c0_54], %96 {strides = array<i32>} : memref<16x8x256xf32, #tpu.memory_space<vmem>>, vector<1x8x256xf32>,
    %c3_55 = arith.constant 3 : index
    %c0_56 = arith.constant 0 : index
    %c0_57 = arith.constant 0 : index
    %97 = vector.load %arg2[%c3_55, %c0_56, %c0_57] : memref<16x8x256xf32, #tpu.memory_space<vmem>>, vector<1x8x256xf32>
    %98 = vector.shape_cast %97 : vector<1x8x256xf32> to vector<8x256xf32>
    %99 = vector.broadcast %75 : vector<1x256xf32> to vector<8x256xf32>
    %100 = arith.mulf %98, %99 : vector<8x256xf32>
    %c3_58 = arith.constant 3 : index
    %c0_59 = arith.constant 0 : index
    %c0_60 = arith.constant 0 : index
    %101 = vector.load %arg7[%c3_58, %c0_59, %c0_60] : memref<16x8x256xf32, #tpu.memory_space<vmem>>, vector<1x8x256xf32>
    %102 = vector.shape_cast %101 : vector<1x8x256xf32> to vector<8x256xf32>
    %103 = vector.shape_cast %100 : vector<8x256xf32> to vector<1x8x256xf32>
    tpu.vector_store %arg7[%c3_58, %c0_59, %c0_60], %103 {strides = array<i32>} : memref<16x8x256xf32, #tpu.memory_space<vmem>>, vector<1x8x256xf32>,
    %c4_61 = arith.constant 4 : index
    %c0_62 = arith.constant 0 : index
    %c0_63 = arith.constant 0 : index
    %104 = vector.load %arg2[%c4_61, %c0_62, %c0_63] : memref<16x8x256xf32, #tpu.memory_space<vmem>>, vector<1x8x256xf32>
    %105 = vector.shape_cast %104 : vector<1x8x256xf32> to vector<8x256xf32>
    %106 = vector.broadcast %75 : vector<1x256xf32> to vector<8x256xf32>
    %107 = arith.mulf %105, %106 : vector<8x256xf32>
    %c4_64 = arith.constant 4 : index
    %c0_65 = arith.constant 0 : index
    %c0_66 = arith.constant 0 : index
    %108 = vector.load %arg7[%c4_64, %c0_65, %c0_66] : memref<16x8x256xf32, #tpu.memory_space<vmem>>, vector<1x8x256xf32>
    %109 = vector.shape_cast %108 : vector<1x8x256xf32> to vector<8x256xf32>
    %110 = vector.shape_cast %107 : vector<8x256xf32> to vector<1x8x256xf32>
    tpu.vector_store %arg7[%c4_64, %c0_65, %c0_66], %110 {strides = array<i32>} : memref<16x8x256xf32, #tpu.memory_space<vmem>>, vector<1x8x256xf32>,
    %c5_67 = arith.constant 5 : index
    %c0_68 = arith.constant 0 : index
    %c0_69 = arith.constant 0 : index
    %111 = vector.load %arg2[%c5_67, %c0_68, %c0_69] : memref<16x8x256xf32, #tpu.memory_space<vmem>>, vector<1x8x256xf32>
    %112 = vector.shape_cast %111 : vector<1x8x256xf32> to vector<8x256xf32>
    %113 = vector.broadcast %75 : vector<1x256xf32> to vector<8x256xf32>
    %114 = arith.mulf %112, %113 : vector<8x256xf32>
    %c5_70 = arith.constant 5 : index
    %c0_71 = arith.constant 0 : index
    %c0_72 = arith.constant 0 : index
    %115 = vector.load %arg7[%c5_70, %c0_71, %c0_72] : memref<16x8x256xf32, #tpu.memory_space<vmem>>, vector<1x8x256xf32>
    %116 = vector.shape_cast %115 : vector<1x8x256xf32> to vector<8x256xf32>
    %117 = vector.shape_cast %114 : vector<8x256xf32> to vector<1x8x256xf32>
    tpu.vector_store %arg7[%c5_70, %c0_71, %c0_72], %117 {strides = array<i32>} : memref<16x8x256xf32, #tpu.memory_space<vmem>>, vector<1x8x256xf32>,
    %c6_73 = arith.constant 6 : index
    %c0_74 = arith.constant 0 : index
    %c0_75 = arith.constant 0 : index
    %118 = vector.load %arg2[%c6_73, %c0_74, %c0_75] : memref<16x8x256xf32, #tpu.memory_space<vmem>>, vector<1x8x256xf32>
    %119 = vector.shape_cast %118 : vector<1x8x256xf32> to vector<8x256xf32>
    %120 = vector.broadcast %75 : vector<1x256xf32> to vector<8x256xf32>
    %121 = arith.mulf %119, %120 : vector<8x256xf32>
    %c6_76 = arith.constant 6 : index
    %c0_77 = arith.constant 0 : index
    %c0_78 = arith.constant 0 : index
    %122 = vector.load %arg7[%c6_76, %c0_77, %c0_78] : memref<16x8x256xf32, #tpu.memory_space<vmem>>, vector<1x8x256xf32>
    %123 = vector.shape_cast %122 : vector<1x8x256xf32> to vector<8x256xf32>
    %124 = vector.shape_cast %121 : vector<8x256xf32> to vector<1x8x256xf32>
    tpu.vector_store %arg7[%c6_76, %c0_77, %c0_78], %124 {strides = array<i32>} : memref<16x8x256xf32, #tpu.memory_space<vmem>>, vector<1x8x256xf32>,
    %c7_79 = arith.constant 7 : index
    %c0_80 = arith.constant 0 : index
    %c0_81 = arith.constant 0 : index
    %125 = vector.load %arg2[%c7_79, %c0_80, %c0_81] : memref<16x8x256xf32, #tpu.memory_space<vmem>>, vector<1x8x256xf32>
    %126 = vector.shape_cast %125 : vector<1x8x256xf32> to vector<8x256xf32>
    %127 = vector.broadcast %75 : vector<1x256xf32> to vector<8x256xf32>
    %128 = arith.mulf %126, %127 : vector<8x256xf32>
    %c7_82 = arith.constant 7 : index
    %c0_83 = arith.constant 0 : index
    %c0_84 = arith.constant 0 : index
    %129 = vector.load %arg7[%c7_82, %c0_83, %c0_84] : memref<16x8x256xf32, #tpu.memory_space<vmem>>, vector<1x8x256xf32>
    %130 = vector.shape_cast %129 : vector<1x8x256xf32> to vector<8x256xf32>
    %131 = vector.shape_cast %128 : vector<8x256xf32> to vector<1x8x256xf32>
    tpu.vector_store %arg7[%c7_82, %c0_83, %c0_84], %131 {strides = array<i32>} : memref<16x8x256xf32, #tpu.memory_space<vmem>>, vector<1x8x256xf32>,
    %c8_85 = arith.constant 8 : index
    %c0_86 = arith.constant 0 : index
    %c0_87 = arith.constant 0 : index
    %132 = vector.load %arg2[%c8_85, %c0_86, %c0_87] : memref<16x8x256xf32, #tpu.memory_space<vmem>>, vector<1x8x256xf32>
    %133 = vector.shape_cast %132 : vector<1x8x256xf32> to vector<8x256xf32>
    %134 = vector.broadcast %75 : vector<1x256xf32> to vector<8x256xf32>
    %135 = arith.mulf %133, %134 : vector<8x256xf32>
    %c8_88 = arith.constant 8 : index
    %c0_89 = arith.constant 0 : index
    %c0_90 = arith.constant 0 : index
    %136 = vector.load %arg7[%c8_88, %c0_89, %c0_90] : memref<16x8x256xf32, #tpu.memory_space<vmem>>, vector<1x8x256xf32>
    %137 = vector.shape_cast %136 : vector<1x8x256xf32> to vector<8x256xf32>
    %138 = vector.shape_cast %135 : vector<8x256xf32> to vector<1x8x256xf32>
    tpu.vector_store %arg7[%c8_88, %c0_89, %c0_90], %138 {strides = array<i32>} : memref<16x8x256xf32, #tpu.memory_space<vmem>>, vector<1x8x256xf32>,
    %c9_91 = arith.constant 9 : index
    %c0_92 = arith.constant 0 : index
    %c0_93 = arith.constant 0 : index
    %139 = vector.load %arg2[%c9_91, %c0_92, %c0_93] : memref<16x8x256xf32, #tpu.memory_space<vmem>>, vector<1x8x256xf32>
    %140 = vector.shape_cast %139 : vector<1x8x256xf32> to vector<8x256xf32>
    %141 = vector.broadcast %75 : vector<1x256xf32> to vector<8x256xf32>
    %142 = arith.mulf %140, %141 : vector<8x256xf32>
    %c9_94 = arith.constant 9 : index
    %c0_95 = arith.constant 0 : index
    %c0_96 = arith.constant 0 : index
    %143 = vector.load %arg7[%c9_94, %c0_95, %c0_96] : memref<16x8x256xf32, #tpu.memory_space<vmem>>, vector<1x8x256xf32>
    %144 = vector.shape_cast %143 : vector<1x8x256xf32> to vector<8x256xf32>
    %145 = vector.shape_cast %142 : vector<8x256xf32> to vector<1x8x256xf32>
    tpu.vector_store %arg7[%c9_94, %c0_95, %c0_96], %145 {strides = array<i32>} : memref<16x8x256xf32, #tpu.memory_space<vmem>>, vector<1x8x256xf32>,
    %c10_97 = arith.constant 10 : index
    %c0_98 = arith.constant 0 : index
    %c0_99 = arith.constant 0 : index
    %146 = vector.load %arg2[%c10_97, %c0_98, %c0_99] : memref<16x8x256xf32, #tpu.memory_space<vmem>>, vector<1x8x256xf32>
    %147 = vector.shape_cast %146 : vector<1x8x256xf32> to vector<8x256xf32>
    %148 = vector.broadcast %75 : vector<1x256xf32> to vector<8x256xf32>
    %149 = arith.mulf %147, %148 : vector<8x256xf32>
    %c10_100 = arith.constant 10 : index
    %c0_101 = arith.constant 0 : index
    %c0_102 = arith.constant 0 : index
    %150 = vector.load %arg7[%c10_100, %c0_101, %c0_102] : memref<16x8x256xf32, #tpu.memory_space<vmem>>, vector<1x8x256xf32>
    %151 = vector.shape_cast %150 : vector<1x8x256xf32> to vector<8x256xf32>
    %152 = vector.shape_cast %149 : vector<8x256xf32> to vector<1x8x256xf32>
    tpu.vector_store %arg7[%c10_100, %c0_101, %c0_102], %152 {strides = array<i32>} : memref<16x8x256xf32, #tpu.memory_space<vmem>>, vector<1x8x256xf32>,
    %c11_103 = arith.constant 11 : index
    %c0_104 = arith.constant 0 : index
    %c0_105 = arith.constant 0 : index
    %153 = vector.load %arg2[%c11_103, %c0_104, %c0_105] : memref<16x8x256xf32, #tpu.memory_space<vmem>>, vector<1x8x256xf32>
    %154 = vector.shape_cast %153 : vector<1x8x256xf32> to vector<8x256xf32>
    %155 = vector.broadcast %75 : vector<1x256xf32> to vector<8x256xf32>
    %156 = arith.mulf %154, %155 : vector<8x256xf32>
    %c11_106 = arith.constant 11 : index
    %c0_107 = arith.constant 0 : index
    %c0_108 = arith.constant 0 : index
    %157 = vector.load %arg7[%c11_106, %c0_107, %c0_108] : memref<16x8x256xf32, #tpu.memory_space<vmem>>, vector<1x8x256xf32>
    %158 = vector.shape_cast %157 : vector<1x8x256xf32> to vector<8x256xf32>
    %159 = vector.shape_cast %156 : vector<8x256xf32> to vector<1x8x256xf32>
    tpu.vector_store %arg7[%c11_106, %c0_107, %c0_108], %159 {strides = array<i32>} : memref<16x8x256xf32, #tpu.memory_space<vmem>>, vector<1x8x256xf32>,
    %c12_109 = arith.constant 12 : index
    %c0_110 = arith.constant 0 : index
    %c0_111 = arith.constant 0 : index
    %160 = vector.load %arg2[%c12_109, %c0_110, %c0_111] : memref<16x8x256xf32, #tpu.memory_space<vmem>>, vector<1x8x256xf32>
    %161 = vector.shape_cast %160 : vector<1x8x256xf32> to vector<8x256xf32>
    %162 = vector.broadcast %75 : vector<1x256xf32> to vector<8x256xf32>
    %163 = arith.mulf %161, %162 : vector<8x256xf32>
    %c12_112 = arith.constant 12 : index
    %c0_113 = arith.constant 0 : index
    %c0_114 = arith.constant 0 : index
    %164 = vector.load %arg7[%c12_112, %c0_113, %c0_114] : memref<16x8x256xf32, #tpu.memory_space<vmem>>, vector<1x8x256xf32>
    %165 = vector.shape_cast %164 : vector<1x8x256xf32> to vector<8x256xf32>
    %166 = vector.shape_cast %163 : vector<8x256xf32> to vector<1x8x256xf32>
    tpu.vector_store %arg7[%c12_112, %c0_113, %c0_114], %166 {strides = array<i32>} : memref<16x8x256xf32, #tpu.memory_space<vmem>>, vector<1x8x256xf32>,
    %c13_115 = arith.constant 13 : index
    %c0_116 = arith.constant 0 : index
    %c0_117 = arith.constant 0 : index
    %167 = vector.load %arg2[%c13_115, %c0_116, %c0_117] : memref<16x8x256xf32, #tpu.memory_space<vmem>>, vector<1x8x256xf32>
    %168 = vector.shape_cast %167 : vector<1x8x256xf32> to vector<8x256xf32>
    %169 = vector.broadcast %75 : vector<1x256xf32> to vector<8x256xf32>
    %170 = arith.mulf %168, %169 : vector<8x256xf32>
    %c13_118 = arith.constant 13 : index
    %c0_119 = arith.constant 0 : index
    %c0_120 = arith.constant 0 : index
    %171 = vector.load %arg7[%c13_118, %c0_119, %c0_120] : memref<16x8x256xf32, #tpu.memory_space<vmem>>, vector<1x8x256xf32>
    %172 = vector.shape_cast %171 : vector<1x8x256xf32> to vector<8x256xf32>
    %173 = vector.shape_cast %170 : vector<8x256xf32> to vector<1x8x256xf32>
    tpu.vector_store %arg7[%c13_118, %c0_119, %c0_120], %173 {strides = array<i32>} : memref<16x8x256xf32, #tpu.memory_space<vmem>>, vector<1x8x256xf32>,
    %c14_121 = arith.constant 14 : index
    %c0_122 = arith.constant 0 : index
    %c0_123 = arith.constant 0 : index
    %174 = vector.load %arg2[%c14_121, %c0_122, %c0_123] : memref<16x8x256xf32, #tpu.memory_space<vmem>>, vector<1x8x256xf32>
    %175 = vector.shape_cast %174 : vector<1x8x256xf32> to vector<8x256xf32>
    %176 = vector.broadcast %75 : vector<1x256xf32> to vector<8x256xf32>
    %177 = arith.mulf %175, %176 : vector<8x256xf32>
    %c14_124 = arith.constant 14 : index
    %c0_125 = arith.constant 0 : index
    %c0_126 = arith.constant 0 : index
    %178 = vector.load %arg7[%c14_124, %c0_125, %c0_126] : memref<16x8x256xf32, #tpu.memory_space<vmem>>, vector<1x8x256xf32>
    %179 = vector.shape_cast %178 : vector<1x8x256xf32> to vector<8x256xf32>
    %180 = vector.shape_cast %177 : vector<8x256xf32> to vector<1x8x256xf32>
    tpu.vector_store %arg7[%c14_124, %c0_125, %c0_126], %180 {strides = array<i32>} : memref<16x8x256xf32, #tpu.memory_space<vmem>>, vector<1x8x256xf32>,
    %c15_127 = arith.constant 15 : index
    %c0_128 = arith.constant 0 : index
    %c0_129 = arith.constant 0 : index
    %181 = vector.load %arg2[%c15_127, %c0_128, %c0_129] : memref<16x8x256xf32, #tpu.memory_space<vmem>>, vector<1x8x256xf32>
    %182 = vector.shape_cast %181 : vector<1x8x256xf32> to vector<8x256xf32>
    %183 = vector.broadcast %75 : vector<1x256xf32> to vector<8x256xf32>
    %184 = arith.mulf %182, %183 : vector<8x256xf32>
    %c15_130 = arith.constant 15 : index
    %c0_131 = arith.constant 0 : index
    %c0_132 = arith.constant 0 : index
    %185 = vector.load %arg7[%c15_130, %c0_131, %c0_132] : memref<16x8x256xf32, #tpu.memory_space<vmem>>, vector<1x8x256xf32>
    %186 = vector.shape_cast %185 : vector<1x8x256xf32> to vector<8x256xf32>
    %187 = vector.shape_cast %184 : vector<8x256xf32> to vector<1x8x256xf32>
    tpu.vector_store %arg7[%c15_130, %c0_131, %c0_132], %187 {strides = array<i32>} : memref<16x8x256xf32, #tpu.memory_space<vmem>>, vector<1x8x256xf32>,
    %c0_133 = arith.constant 0 : index
    %c0_134 = arith.constant 0 : index
    %c0_135 = arith.constant 0 : index
    %188 = vector.load %arg1[%c0_133, %c0_134, %c0_135] : memref<8x16x256xf32, #tpu.memory_space<vmem>>, vector<1x16x256xf32>
    %189 = vector.shape_cast %188 : vector<1x16x256xf32> to vector<16x256xf32>
    %190 = vector.broadcast %75 : vector<1x256xf32> to vector<16x256xf32>
    %191 = arith.mulf %189, %190 : vector<16x256xf32>
    %c0_136 = arith.constant 0 : index
    %c0_137 = arith.constant 0 : index
    %c0_138 = arith.constant 0 : index
    %192 = vector.load %arg6[%c0_136, %c0_137, %c0_138] : memref<8x16x256xf32, #tpu.memory_space<vmem>>, vector<1x16x256xf32>
    %193 = vector.shape_cast %192 : vector<1x16x256xf32> to vector<16x256xf32>
    %194 = vector.shape_cast %191 : vector<16x256xf32> to vector<1x16x256xf32>
    tpu.vector_store %arg6[%c0_136, %c0_137, %c0_138], %194 {strides = array<i32>} : memref<8x16x256xf32, #tpu.memory_space<vmem>>, vector<1x16x256xf32>,
    %c1_139 = arith.constant 1 : index
    %c0_140 = arith.constant 0 : index
    %c0_141 = arith.constant 0 : index
    %195 = vector.load %arg1[%c1_139, %c0_140, %c0_141] : memref<8x16x256xf32, #tpu.memory_space<vmem>>, vector<1x16x256xf32>
    %196 = vector.shape_cast %195 : vector<1x16x256xf32> to vector<16x256xf32>
    %197 = vector.broadcast %75 : vector<1x256xf32> to vector<16x256xf32>
    %198 = arith.mulf %196, %197 : vector<16x256xf32>
    %c1_142 = arith.constant 1 : index
    %c0_143 = arith.constant 0 : index
    %c0_144 = arith.constant 0 : index
    %199 = vector.load %arg6[%c1_142, %c0_143, %c0_144] : memref<8x16x256xf32, #tpu.memory_space<vmem>>, vector<1x16x256xf32>
    %200 = vector.shape_cast %199 : vector<1x16x256xf32> to vector<16x256xf32>
    %201 = vector.shape_cast %198 : vector<16x256xf32> to vector<1x16x256xf32>
    tpu.vector_store %arg6[%c1_142, %c0_143, %c0_144], %201 {strides = array<i32>} : memref<8x16x256xf32, #tpu.memory_space<vmem>>, vector<1x16x256xf32>,
    %c2_145 = arith.constant 2 : index
    %c0_146 = arith.constant 0 : index
    %c0_147 = arith.constant 0 : index
    %202 = vector.load %arg1[%c2_145, %c0_146, %c0_147] : memref<8x16x256xf32, #tpu.memory_space<vmem>>, vector<1x16x256xf32>
    %203 = vector.shape_cast %202 : vector<1x16x256xf32> to vector<16x256xf32>
    %204 = vector.broadcast %75 : vector<1x256xf32> to vector<16x256xf32>
    %205 = arith.mulf %203, %204 : vector<16x256xf32>
    %c2_148 = arith.constant 2 : index
    %c0_149 = arith.constant 0 : index
    %c0_150 = arith.constant 0 : index
    %206 = vector.load %arg6[%c2_148, %c0_149, %c0_150] : memref<8x16x256xf32, #tpu.memory_space<vmem>>, vector<1x16x256xf32>
    %207 = vector.shape_cast %206 : vector<1x16x256xf32> to vector<16x256xf32>
    %208 = vector.shape_cast %205 : vector<16x256xf32> to vector<1x16x256xf32>
    tpu.vector_store %arg6[%c2_148, %c0_149, %c0_150], %208 {strides = array<i32>} : memref<8x16x256xf32, #tpu.memory_space<vmem>>, vector<1x16x256xf32>,
    %c3_151 = arith.constant 3 : index
    %c0_152 = arith.constant 0 : index
    %c0_153 = arith.constant 0 : index
    %209 = vector.load %arg1[%c3_151, %c0_152, %c0_153] : memref<8x16x256xf32, #tpu.memory_space<vmem>>, vector<1x16x256xf32>
    %210 = vector.shape_cast %209 : vector<1x16x256xf32> to vector<16x256xf32>
    %211 = vector.broadcast %75 : vector<1x256xf32> to vector<16x256xf32>
    %212 = arith.mulf %210, %211 : vector<16x256xf32>
    %c3_154 = arith.constant 3 : index
    %c0_155 = arith.constant 0 : index
    %c0_156 = arith.constant 0 : index
    %213 = vector.load %arg6[%c3_154, %c0_155, %c0_156] : memref<8x16x256xf32, #tpu.memory_space<vmem>>, vector<1x16x256xf32>
    %214 = vector.shape_cast %213 : vector<1x16x256xf32> to vector<16x256xf32>
    %215 = vector.shape_cast %212 : vector<16x256xf32> to vector<1x16x256xf32>
    tpu.vector_store %arg6[%c3_154, %c0_155, %c0_156], %215 {strides = array<i32>} : memref<8x16x256xf32, #tpu.memory_space<vmem>>, vector<1x16x256xf32>,
    %c4_157 = arith.constant 4 : index
    %c0_158 = arith.constant 0 : index
    %c0_159 = arith.constant 0 : index
    %216 = vector.load %arg1[%c4_157, %c0_158, %c0_159] : memref<8x16x256xf32, #tpu.memory_space<vmem>>, vector<1x16x256xf32>
    %217 = vector.shape_cast %216 : vector<1x16x256xf32> to vector<16x256xf32>
    %218 = vector.broadcast %75 : vector<1x256xf32> to vector<16x256xf32>
    %219 = arith.mulf %217, %218 : vector<16x256xf32>
    %c4_160 = arith.constant 4 : index
    %c0_161 = arith.constant 0 : index
    %c0_162 = arith.constant 0 : index
    %220 = vector.load %arg6[%c4_160, %c0_161, %c0_162] : memref<8x16x256xf32, #tpu.memory_space<vmem>>, vector<1x16x256xf32>
    %221 = vector.shape_cast %220 : vector<1x16x256xf32> to vector<16x256xf32>
    %222 = vector.shape_cast %219 : vector<16x256xf32> to vector<1x16x256xf32>
    tpu.vector_store %arg6[%c4_160, %c0_161, %c0_162], %222 {strides = array<i32>} : memref<8x16x256xf32, #tpu.memory_space<vmem>>, vector<1x16x256xf32>,
    %c5_163 = arith.constant 5 : index
    %c0_164 = arith.constant 0 : index
    %c0_165 = arith.constant 0 : index
    %223 = vector.load %arg1[%c5_163, %c0_164, %c0_165] : memref<8x16x256xf32, #tpu.memory_space<vmem>>, vector<1x16x256xf32>
    %224 = vector.shape_cast %223 : vector<1x16x256xf32> to vector<16x256xf32>
    %225 = vector.broadcast %75 : vector<1x256xf32> to vector<16x256xf32>
    %226 = arith.mulf %224, %225 : vector<16x256xf32>
    %c5_166 = arith.constant 5 : index
    %c0_167 = arith.constant 0 : index
    %c0_168 = arith.constant 0 : index
    %227 = vector.load %arg6[%c5_166, %c0_167, %c0_168] : memref<8x16x256xf32, #tpu.memory_space<vmem>>, vector<1x16x256xf32>
    %228 = vector.shape_cast %227 : vector<1x16x256xf32> to vector<16x256xf32>
    %229 = vector.shape_cast %226 : vector<16x256xf32> to vector<1x16x256xf32>
    tpu.vector_store %arg6[%c5_166, %c0_167, %c0_168], %229 {strides = array<i32>} : memref<8x16x256xf32, #tpu.memory_space<vmem>>, vector<1x16x256xf32>,
    %c6_169 = arith.constant 6 : index
    %c0_170 = arith.constant 0 : index
    %c0_171 = arith.constant 0 : index
    %230 = vector.load %arg1[%c6_169, %c0_170, %c0_171] : memref<8x16x256xf32, #tpu.memory_space<vmem>>, vector<1x16x256xf32>
    %231 = vector.shape_cast %230 : vector<1x16x256xf32> to vector<16x256xf32>
    %232 = vector.broadcast %75 : vector<1x256xf32> to vector<16x256xf32>
    %233 = arith.mulf %231, %232 : vector<16x256xf32>
    %c6_172 = arith.constant 6 : index
    %c0_173 = arith.constant 0 : index
    %c0_174 = arith.constant 0 : index
    %234 = vector.load %arg6[%c6_172, %c0_173, %c0_174] : memref<8x16x256xf32, #tpu.memory_space<vmem>>, vector<1x16x256xf32>
    %235 = vector.shape_cast %234 : vector<1x16x256xf32> to vector<16x256xf32>
    %236 = vector.shape_cast %233 : vector<16x256xf32> to vector<1x16x256xf32>
    tpu.vector_store %arg6[%c6_172, %c0_173, %c0_174], %236 {strides = array<i32>} : memref<8x16x256xf32, #tpu.memory_space<vmem>>, vector<1x16x256xf32>,
    %c7_175 = arith.constant 7 : index
    %c0_176 = arith.constant 0 : index
    %c0_177 = arith.constant 0 : index
    %237 = vector.load %arg1[%c7_175, %c0_176, %c0_177] : memref<8x16x256xf32, #tpu.memory_space<vmem>>, vector<1x16x256xf32>
    %238 = vector.shape_cast %237 : vector<1x16x256xf32> to vector<16x256xf32>
    %239 = vector.broadcast %75 : vector<1x256xf32> to vector<16x256xf32>
    %240 = arith.mulf %238, %239 : vector<16x256xf32>
    %c7_178 = arith.constant 7 : index
    %c0_179 = arith.constant 0 : index
    %c0_180 = arith.constant 0 : index
    %241 = vector.load %arg6[%c7_178, %c0_179, %c0_180] : memref<8x16x256xf32, #tpu.memory_space<vmem>>, vector<1x16x256xf32>
    %242 = vector.shape_cast %241 : vector<1x16x256xf32> to vector<16x256xf32>
    %243 = vector.shape_cast %240 : vector<16x256xf32> to vector<1x16x256xf32>
    tpu.vector_store %arg6[%c7_178, %c0_179, %c0_180], %243 {strides = array<i32>} : memref<8x16x256xf32, #tpu.memory_space<vmem>>, vector<1x16x256xf32>,
    %c0_181 = arith.constant 0 : index
    %c0_182 = arith.constant 0 : index
    %244 = vector.load %arg3[%c0_181, %c0_182] : memref<8x256xf32, #tpu.memory_space<vmem>>, vector<8x256xf32>
    %245 = vector.broadcast %75 : vector<1x256xf32> to vector<8x256xf32>
    %246 = arith.mulf %244, %245 : vector<8x256xf32>
    %c0_183 = arith.constant 0 : index
    %c0_184 = arith.constant 0 : index
    %247 = vector.load %arg4[%c0_183, %c0_184] : memref<16x256xf32, #tpu.memory_space<vmem>>, vector<16x256xf32>
    %248 = vector.broadcast %75 : vector<1x256xf32> to vector<16x256xf32>
    %249 = arith.mulf %247, %248 : vector<16x256xf32>
    %cst_185 = arith.constant 5.000000e-01 : f32
    %250 = vector.broadcast %cst_185 : f32 to vector<16x256xf32>
    %cst_186 = arith.constant 0.000000e+00 : f32
    %251 = vector.broadcast %cst_186 : f32 to vector<8x256xf32>
    %c0_i32 = arith.constant 0 : i32
    %c187_i32 = arith.constant 187 : i32
    %252 = arith.addi %c0_i32, %c187_i32 : i32
    %c1_i32 = arith.constant 1 : i32
    %253:3 = scf.for %arg8 = %c0_i32 to %252 step %c1_i32 iter_args(%arg9 = %250, %arg10 = %250, %arg11 = %251) -> (vector<16x256xf32>, vector<16x256xf32>, vector<8x256xf32>)  : i32 {
      %c0_492 = arith.constant 0 : index
      %c0_493 = arith.constant 0 : index
      %c0_494 = arith.constant 0 : index
      %872 = vector.load %arg7[%c0_492, %c0_493, %c0_494] : memref<16x8x256xf32, #tpu.memory_space<vmem>>, vector<1x8x256xf32>
      %873 = vector.shape_cast %872 : vector<1x8x256xf32> to vector<8x256xf32>
      %874 = vector.extract_strided_slice %arg10 {offsets = [0, 0], sizes = [1, 256], strides = [1, 1]} : vector<16x256xf32> to vector<1x256xf32>
      %875 = vector.broadcast %874 : vector<1x256xf32> to vector<8x256xf32>
      %876 = arith.mulf %873, %875 : vector<8x256xf32>
      %877 = arith.addf %246, %876 : vector<8x256xf32>
      %c1_495 = arith.constant 1 : index
      %c0_496 = arith.constant 0 : index
      %c0_497 = arith.constant 0 : index
      %878 = vector.load %arg7[%c1_495, %c0_496, %c0_497] : memref<16x8x256xf32, #tpu.memory_space<vmem>>, vector<1x8x256xf32>
      %879 = vector.shape_cast %878 : vector<1x8x256xf32> to vector<8x256xf32>
      %880 = vector.extract_strided_slice %arg10 {offsets = [1, 0], sizes = [1, 256], strides = [1, 1]} : vector<16x256xf32> to vector<1x256xf32>
      %881 = vector.broadcast %880 : vector<1x256xf32> to vector<8x256xf32>
      %882 = arith.mulf %879, %881 : vector<8x256xf32>
      %883 = arith.addf %877, %882 : vector<8x256xf32>
      %c2_498 = arith.constant 2 : index
      %c0_499 = arith.constant 0 : index
      %c0_500 = arith.constant 0 : index
      %884 = vector.load %arg7[%c2_498, %c0_499, %c0_500] : memref<16x8x256xf32, #tpu.memory_space<vmem>>, vector<1x8x256xf32>
      %885 = vector.shape_cast %884 : vector<1x8x256xf32> to vector<8x256xf32>
      %886 = vector.extract_strided_slice %arg10 {offsets = [2, 0], sizes = [1, 256], strides = [1, 1]} : vector<16x256xf32> to vector<1x256xf32>
      %887 = vector.broadcast %886 : vector<1x256xf32> to vector<8x256xf32>
      %888 = arith.mulf %885, %887 : vector<8x256xf32>
      %889 = arith.addf %883, %888 : vector<8x256xf32>
      %c3_501 = arith.constant 3 : index
      %c0_502 = arith.constant 0 : index
      %c0_503 = arith.constant 0 : index
      %890 = vector.load %arg7[%c3_501, %c0_502, %c0_503] : memref<16x8x256xf32, #tpu.memory_space<vmem>>, vector<1x8x256xf32>
      %891 = vector.shape_cast %890 : vector<1x8x256xf32> to vector<8x256xf32>
      %892 = vector.extract_strided_slice %arg10 {offsets = [3, 0], sizes = [1, 256], strides = [1, 1]} : vector<16x256xf32> to vector<1x256xf32>
      %893 = vector.broadcast %892 : vector<1x256xf32> to vector<8x256xf32>
      %894 = arith.mulf %891, %893 : vector<8x256xf32>
      %895 = arith.addf %889, %894 : vector<8x256xf32>
      %c4_504 = arith.constant 4 : index
      %c0_505 = arith.constant 0 : index
      %c0_506 = arith.constant 0 : index
      %896 = vector.load %arg7[%c4_504, %c0_505, %c0_506] : memref<16x8x256xf32, #tpu.memory_space<vmem>>, vector<1x8x256xf32>
      %897 = vector.shape_cast %896 : vector<1x8x256xf32> to vector<8x256xf32>
      %898 = vector.extract_strided_slice %arg10 {offsets = [4, 0], sizes = [1, 256], strides = [1, 1]} : vector<16x256xf32> to vector<1x256xf32>
      %899 = vector.broadcast %898 : vector<1x256xf32> to vector<8x256xf32>
      %900 = arith.mulf %897, %899 : vector<8x256xf32>
      %901 = arith.addf %895, %900 : vector<8x256xf32>
      %c5_507 = arith.constant 5 : index
      %c0_508 = arith.constant 0 : index
      %c0_509 = arith.constant 0 : index
      %902 = vector.load %arg7[%c5_507, %c0_508, %c0_509] : memref<16x8x256xf32, #tpu.memory_space<vmem>>, vector<1x8x256xf32>
      %903 = vector.shape_cast %902 : vector<1x8x256xf32> to vector<8x256xf32>
      %904 = vector.extract_strided_slice %arg10 {offsets = [5, 0], sizes = [1, 256], strides = [1, 1]} : vector<16x256xf32> to vector<1x256xf32>
      %905 = vector.broadcast %904 : vector<1x256xf32> to vector<8x256xf32>
      %906 = arith.mulf %903, %905 : vector<8x256xf32>
      %907 = arith.addf %901, %906 : vector<8x256xf32>
      %c6_510 = arith.constant 6 : index
      %c0_511 = arith.constant 0 : index
      %c0_512 = arith.constant 0 : index
      %908 = vector.load %arg7[%c6_510, %c0_511, %c0_512] : memref<16x8x256xf32, #tpu.memory_space<vmem>>, vector<1x8x256xf32>
      %909 = vector.shape_cast %908 : vector<1x8x256xf32> to vector<8x256xf32>
      %910 = vector.extract_strided_slice %arg10 {offsets = [6, 0], sizes = [1, 256], strides = [1, 1]} : vector<16x256xf32> to vector<1x256xf32>
      %911 = vector.broadcast %910 : vector<1x256xf32> to vector<8x256xf32>
      %912 = arith.mulf %909, %911 : vector<8x256xf32>
      %913 = arith.addf %907, %912 : vector<8x256xf32>
      %c7_513 = arith.constant 7 : index
      %c0_514 = arith.constant 0 : index
      %c0_515 = arith.constant 0 : index
      %914 = vector.load %arg7[%c7_513, %c0_514, %c0_515] : memref<16x8x256xf32, #tpu.memory_space<vmem>>, vector<1x8x256xf32>
      %915 = vector.shape_cast %914 : vector<1x8x256xf32> to vector<8x256xf32>
      %916 = vector.extract_strided_slice %arg10 {offsets = [7, 0], sizes = [1, 256], strides = [1, 1]} : vector<16x256xf32> to vector<1x256xf32>
      %917 = vector.broadcast %916 : vector<1x256xf32> to vector<8x256xf32>
      %918 = arith.mulf %915, %917 : vector<8x256xf32>
      %919 = arith.addf %913, %918 : vector<8x256xf32>
      %c8_516 = arith.constant 8 : index
      %c0_517 = arith.constant 0 : index
      %c0_518 = arith.constant 0 : index
      %920 = vector.load %arg7[%c8_516, %c0_517, %c0_518] : memref<16x8x256xf32, #tpu.memory_space<vmem>>, vector<1x8x256xf32>
      %921 = vector.shape_cast %920 : vector<1x8x256xf32> to vector<8x256xf32>
      %922 = vector.extract_strided_slice %arg10 {offsets = [8, 0], sizes = [1, 256], strides = [1, 1]} : vector<16x256xf32> to vector<1x256xf32>
      %923 = vector.broadcast %922 : vector<1x256xf32> to vector<8x256xf32>
      %924 = arith.mulf %921, %923 : vector<8x256xf32>
      %925 = arith.addf %919, %924 : vector<8x256xf32>
      %c9_519 = arith.constant 9 : index
      %c0_520 = arith.constant 0 : index
      %c0_521 = arith.constant 0 : index
      %926 = vector.load %arg7[%c9_519, %c0_520, %c0_521] : memref<16x8x256xf32, #tpu.memory_space<vmem>>, vector<1x8x256xf32>
      %927 = vector.shape_cast %926 : vector<1x8x256xf32> to vector<8x256xf32>
      %928 = vector.extract_strided_slice %arg10 {offsets = [9, 0], sizes = [1, 256], strides = [1, 1]} : vector<16x256xf32> to vector<1x256xf32>
      %929 = vector.broadcast %928 : vector<1x256xf32> to vector<8x256xf32>
      %930 = arith.mulf %927, %929 : vector<8x256xf32>
      %931 = arith.addf %925, %930 : vector<8x256xf32>
      %c10_522 = arith.constant 10 : index
      %c0_523 = arith.constant 0 : index
      %c0_524 = arith.constant 0 : index
      %932 = vector.load %arg7[%c10_522, %c0_523, %c0_524] : memref<16x8x256xf32, #tpu.memory_space<vmem>>, vector<1x8x256xf32>
      %933 = vector.shape_cast %932 : vector<1x8x256xf32> to vector<8x256xf32>
      %934 = vector.extract_strided_slice %arg10 {offsets = [10, 0], sizes = [1, 256], strides = [1, 1]} : vector<16x256xf32> to vector<1x256xf32>
      %935 = vector.broadcast %934 : vector<1x256xf32> to vector<8x256xf32>
      %936 = arith.mulf %933, %935 : vector<8x256xf32>
      %937 = arith.addf %931, %936 : vector<8x256xf32>
      %c11_525 = arith.constant 11 : index
      %c0_526 = arith.constant 0 : index
      %c0_527 = arith.constant 0 : index
      %938 = vector.load %arg7[%c11_525, %c0_526, %c0_527] : memref<16x8x256xf32, #tpu.memory_space<vmem>>, vector<1x8x256xf32>
      %939 = vector.shape_cast %938 : vector<1x8x256xf32> to vector<8x256xf32>
      %940 = vector.extract_strided_slice %arg10 {offsets = [11, 0], sizes = [1, 256], strides = [1, 1]} : vector<16x256xf32> to vector<1x256xf32>
      %941 = vector.broadcast %940 : vector<1x256xf32> to vector<8x256xf32>
      %942 = arith.mulf %939, %941 : vector<8x256xf32>
      %943 = arith.addf %937, %942 : vector<8x256xf32>
      %c12_528 = arith.constant 12 : index
      %c0_529 = arith.constant 0 : index
      %c0_530 = arith.constant 0 : index
      %944 = vector.load %arg7[%c12_528, %c0_529, %c0_530] : memref<16x8x256xf32, #tpu.memory_space<vmem>>, vector<1x8x256xf32>
      %945 = vector.shape_cast %944 : vector<1x8x256xf32> to vector<8x256xf32>
      %946 = vector.extract_strided_slice %arg10 {offsets = [12, 0], sizes = [1, 256], strides = [1, 1]} : vector<16x256xf32> to vector<1x256xf32>
      %947 = vector.broadcast %946 : vector<1x256xf32> to vector<8x256xf32>
      %948 = arith.mulf %945, %947 : vector<8x256xf32>
      %949 = arith.addf %943, %948 : vector<8x256xf32>
      %c13_531 = arith.constant 13 : index
      %c0_532 = arith.constant 0 : index
      %c0_533 = arith.constant 0 : index
      %950 = vector.load %arg7[%c13_531, %c0_532, %c0_533] : memref<16x8x256xf32, #tpu.memory_space<vmem>>, vector<1x8x256xf32>
      %951 = vector.shape_cast %950 : vector<1x8x256xf32> to vector<8x256xf32>
      %952 = vector.extract_strided_slice %arg10 {offsets = [13, 0], sizes = [1, 256], strides = [1, 1]} : vector<16x256xf32> to vector<1x256xf32>
      %953 = vector.broadcast %952 : vector<1x256xf32> to vector<8x256xf32>
      %954 = arith.mulf %951, %953 : vector<8x256xf32>
      %955 = arith.addf %949, %954 : vector<8x256xf32>
      %c14_534 = arith.constant 14 : index
      %c0_535 = arith.constant 0 : index
      %c0_536 = arith.constant 0 : index
      %956 = vector.load %arg7[%c14_534, %c0_535, %c0_536] : memref<16x8x256xf32, #tpu.memory_space<vmem>>, vector<1x8x256xf32>
      %957 = vector.shape_cast %956 : vector<1x8x256xf32> to vector<8x256xf32>
      %958 = vector.extract_strided_slice %arg10 {offsets = [14, 0], sizes = [1, 256], strides = [1, 1]} : vector<16x256xf32> to vector<1x256xf32>
      %959 = vector.broadcast %958 : vector<1x256xf32> to vector<8x256xf32>
      %960 = arith.mulf %957, %959 : vector<8x256xf32>
      %961 = arith.addf %955, %960 : vector<8x256xf32>
      %c15_537 = arith.constant 15 : index
      %c0_538 = arith.constant 0 : index
      %c0_539 = arith.constant 0 : index
      %962 = vector.load %arg7[%c15_537, %c0_538, %c0_539] : memref<16x8x256xf32, #tpu.memory_space<vmem>>, vector<1x8x256xf32>
      %963 = vector.shape_cast %962 : vector<1x8x256xf32> to vector<8x256xf32>
      %964 = vector.extract_strided_slice %arg10 {offsets = [15, 0], sizes = [1, 256], strides = [1, 1]} : vector<16x256xf32> to vector<1x256xf32>
      %965 = vector.broadcast %964 : vector<1x256xf32> to vector<8x256xf32>
      %966 = arith.mulf %963, %965 : vector<8x256xf32>
      %967 = arith.addf %961, %966 : vector<8x256xf32>
      %968 = arith.addf %arg11, %967 : vector<8x256xf32>
      %cst_540 = arith.constant 0.000000e+00 : f32
      %969 = vector.broadcast %cst_540 : f32 to vector<8x256xf32>
      %970 = arith.maximumf %968, %969 : vector<8x256xf32>
      %c0_541 = arith.constant 0 : index
      %c0_542 = arith.constant 0 : index
      %c0_543 = arith.constant 0 : index
      %971 = vector.load %arg6[%c0_541, %c0_542, %c0_543] : memref<8x16x256xf32, #tpu.memory_space<vmem>>, vector<1x16x256xf32>
      %972 = vector.shape_cast %971 : vector<1x16x256xf32> to vector<16x256xf32>
      %973 = vector.extract_strided_slice %970 {offsets = [0, 0], sizes = [1, 256], strides = [1, 1]} : vector<8x256xf32> to vector<1x256xf32>
      %974 = vector.broadcast %973 : vector<1x256xf32> to vector<16x256xf32>
      %975 = arith.mulf %972, %974 : vector<16x256xf32>
      %976 = arith.addf %249, %975 : vector<16x256xf32>
      %c1_544 = arith.constant 1 : index
      %c0_545 = arith.constant 0 : index
      %c0_546 = arith.constant 0 : index
      %977 = vector.load %arg6[%c1_544, %c0_545, %c0_546] : memref<8x16x256xf32, #tpu.memory_space<vmem>>, vector<1x16x256xf32>
      %978 = vector.shape_cast %977 : vector<1x16x256xf32> to vector<16x256xf32>
      %979 = vector.extract_strided_slice %970 {offsets = [1, 0], sizes = [1, 256], strides = [1, 1]} : vector<8x256xf32> to vector<1x256xf32>
      %980 = vector.broadcast %979 : vector<1x256xf32> to vector<16x256xf32>
      %981 = arith.mulf %978, %980 : vector<16x256xf32>
      %982 = arith.addf %976, %981 : vector<16x256xf32>
      %c2_547 = arith.constant 2 : index
      %c0_548 = arith.constant 0 : index
      %c0_549 = arith.constant 0 : index
      %983 = vector.load %arg6[%c2_547, %c0_548, %c0_549] : memref<8x16x256xf32, #tpu.memory_space<vmem>>, vector<1x16x256xf32>
      %984 = vector.shape_cast %983 : vector<1x16x256xf32> to vector<16x256xf32>
      %985 = vector.extract_strided_slice %970 {offsets = [2, 0], sizes = [1, 256], strides = [1, 1]} : vector<8x256xf32> to vector<1x256xf32>
      %986 = vector.broadcast %985 : vector<1x256xf32> to vector<16x256xf32>
      %987 = arith.mulf %984, %986 : vector<16x256xf32>
      %988 = arith.addf %982, %987 : vector<16x256xf32>
      %c3_550 = arith.constant 3 : index
      %c0_551 = arith.constant 0 : index
      %c0_552 = arith.constant 0 : index
      %989 = vector.load %arg6[%c3_550, %c0_551, %c0_552] : memref<8x16x256xf32, #tpu.memory_space<vmem>>, vector<1x16x256xf32>
      %990 = vector.shape_cast %989 : vector<1x16x256xf32> to vector<16x256xf32>
      %991 = vector.extract_strided_slice %970 {offsets = [3, 0], sizes = [1, 256], strides = [1, 1]} : vector<8x256xf32> to vector<1x256xf32>
      %992 = vector.broadcast %991 : vector<1x256xf32> to vector<16x256xf32>
      %993 = arith.mulf %990, %992 : vector<16x256xf32>
      %994 = arith.addf %988, %993 : vector<16x256xf32>
      %c4_553 = arith.constant 4 : index
      %c0_554 = arith.constant 0 : index
      %c0_555 = arith.constant 0 : index
      %995 = vector.load %arg6[%c4_553, %c0_554, %c0_555] : memref<8x16x256xf32, #tpu.memory_space<vmem>>, vector<1x16x256xf32>
      %996 = vector.shape_cast %995 : vector<1x16x256xf32> to vector<16x256xf32>
      %997 = vector.extract_strided_slice %970 {offsets = [4, 0], sizes = [1, 256], strides = [1, 1]} : vector<8x256xf32> to vector<1x256xf32>
      %998 = vector.broadcast %997 : vector<1x256xf32> to vector<16x256xf32>
      %999 = arith.mulf %996, %998 : vector<16x256xf32>
      %1000 = arith.addf %994, %999 : vector<16x256xf32>
      %c5_556 = arith.constant 5 : index
      %c0_557 = arith.constant 0 : index
      %c0_558 = arith.constant 0 : index
      %1001 = vector.load %arg6[%c5_556, %c0_557, %c0_558] : memref<8x16x256xf32, #tpu.memory_space<vmem>>, vector<1x16x256xf32>
      %1002 = vector.shape_cast %1001 : vector<1x16x256xf32> to vector<16x256xf32>
      %1003 = vector.extract_strided_slice %970 {offsets = [5, 0], sizes = [1, 256], strides = [1, 1]} : vector<8x256xf32> to vector<1x256xf32>
      %1004 = vector.broadcast %1003 : vector<1x256xf32> to vector<16x256xf32>
      %1005 = arith.mulf %1002, %1004 : vector<16x256xf32>
      %1006 = arith.addf %1000, %1005 : vector<16x256xf32>
      %c6_559 = arith.constant 6 : index
      %c0_560 = arith.constant 0 : index
      %c0_561 = arith.constant 0 : index
      %1007 = vector.load %arg6[%c6_559, %c0_560, %c0_561] : memref<8x16x256xf32, #tpu.memory_space<vmem>>, vector<1x16x256xf32>
      %1008 = vector.shape_cast %1007 : vector<1x16x256xf32> to vector<16x256xf32>
      %1009 = vector.extract_strided_slice %970 {offsets = [6, 0], sizes = [1, 256], strides = [1, 1]} : vector<8x256xf32> to vector<1x256xf32>
      %1010 = vector.broadcast %1009 : vector<1x256xf32> to vector<16x256xf32>
      %1011 = arith.mulf %1008, %1010 : vector<16x256xf32>
      %1012 = arith.addf %1006, %1011 : vector<16x256xf32>
      %c7_562 = arith.constant 7 : index
      %c0_563 = arith.constant 0 : index
      %c0_564 = arith.constant 0 : index
      %1013 = vector.load %arg6[%c7_562, %c0_563, %c0_564] : memref<8x16x256xf32, #tpu.memory_space<vmem>>, vector<1x16x256xf32>
      %1014 = vector.shape_cast %1013 : vector<1x16x256xf32> to vector<16x256xf32>
      %1015 = vector.extract_strided_slice %970 {offsets = [7, 0], sizes = [1, 256], strides = [1, 1]} : vector<8x256xf32> to vector<1x256xf32>
      %1016 = vector.broadcast %1015 : vector<1x256xf32> to vector<16x256xf32>
      %1017 = arith.mulf %1014, %1016 : vector<16x256xf32>
      %1018 = arith.addf %1012, %1017 : vector<16x256xf32>
      %1019 = arith.subf %arg9, %1018 : vector<16x256xf32>
      %cst_565 = arith.constant 0.000000e+00 : f32
      %cst_566 = arith.constant 1.000000e+00 : f32
      %1020 = vector.broadcast %cst_565 : f32 to vector<16x256xf32>
      %1021 = arith.maximumf %1020, %1019 : vector<16x256xf32>
      %1022 = vector.broadcast %cst_566 : f32 to vector<16x256xf32>
      %1023 = arith.minimumf %1022, %1021 : vector<16x256xf32>
      %cst_567 = arith.constant 2.000000e+00 : f32
      %1024 = vector.broadcast %cst_567 : f32 to vector<16x256xf32>
      %1025 = arith.mulf %1024, %1023 : vector<16x256xf32>
      %1026 = arith.subf %1025, %arg9 : vector<16x256xf32>
      %c0_568 = arith.constant 0 : index
      %c0_569 = arith.constant 0 : index
      %c0_570 = arith.constant 0 : index
      %1027 = vector.load %arg7[%c0_568, %c0_569, %c0_570] : memref<16x8x256xf32, #tpu.memory_space<vmem>>, vector<1x8x256xf32>
      %1028 = vector.shape_cast %1027 : vector<1x8x256xf32> to vector<8x256xf32>
      %1029 = vector.extract_strided_slice %1026 {offsets = [0, 0], sizes = [1, 256], strides = [1, 1]} : vector<16x256xf32> to vector<1x256xf32>
      %1030 = vector.broadcast %1029 : vector<1x256xf32> to vector<8x256xf32>
      %1031 = arith.mulf %1028, %1030 : vector<8x256xf32>
      %1032 = arith.addf %246, %1031 : vector<8x256xf32>
      %c1_571 = arith.constant 1 : index
      %c0_572 = arith.constant 0 : index
      %c0_573 = arith.constant 0 : index
      %1033 = vector.load %arg7[%c1_571, %c0_572, %c0_573] : memref<16x8x256xf32, #tpu.memory_space<vmem>>, vector<1x8x256xf32>
      %1034 = vector.shape_cast %1033 : vector<1x8x256xf32> to vector<8x256xf32>
      %1035 = vector.extract_strided_slice %1026 {offsets = [1, 0], sizes = [1, 256], strides = [1, 1]} : vector<16x256xf32> to vector<1x256xf32>
      %1036 = vector.broadcast %1035 : vector<1x256xf32> to vector<8x256xf32>
      %1037 = arith.mulf %1034, %1036 : vector<8x256xf32>
      %1038 = arith.addf %1032, %1037 : vector<8x256xf32>
      %c2_574 = arith.constant 2 : index
      %c0_575 = arith.constant 0 : index
      %c0_576 = arith.constant 0 : index
      %1039 = vector.load %arg7[%c2_574, %c0_575, %c0_576] : memref<16x8x256xf32, #tpu.memory_space<vmem>>, vector<1x8x256xf32>
      %1040 = vector.shape_cast %1039 : vector<1x8x256xf32> to vector<8x256xf32>
      %1041 = vector.extract_strided_slice %1026 {offsets = [2, 0], sizes = [1, 256], strides = [1, 1]} : vector<16x256xf32> to vector<1x256xf32>
      %1042 = vector.broadcast %1041 : vector<1x256xf32> to vector<8x256xf32>
      %1043 = arith.mulf %1040, %1042 : vector<8x256xf32>
      %1044 = arith.addf %1038, %1043 : vector<8x256xf32>
      %c3_577 = arith.constant 3 : index
      %c0_578 = arith.constant 0 : index
      %c0_579 = arith.constant 0 : index
      %1045 = vector.load %arg7[%c3_577, %c0_578, %c0_579] : memref<16x8x256xf32, #tpu.memory_space<vmem>>, vector<1x8x256xf32>
      %1046 = vector.shape_cast %1045 : vector<1x8x256xf32> to vector<8x256xf32>
      %1047 = vector.extract_strided_slice %1026 {offsets = [3, 0], sizes = [1, 256], strides = [1, 1]} : vector<16x256xf32> to vector<1x256xf32>
      %1048 = vector.broadcast %1047 : vector<1x256xf32> to vector<8x256xf32>
      %1049 = arith.mulf %1046, %1048 : vector<8x256xf32>
      %1050 = arith.addf %1044, %1049 : vector<8x256xf32>
      %c4_580 = arith.constant 4 : index
      %c0_581 = arith.constant 0 : index
      %c0_582 = arith.constant 0 : index
      %1051 = vector.load %arg7[%c4_580, %c0_581, %c0_582] : memref<16x8x256xf32, #tpu.memory_space<vmem>>, vector<1x8x256xf32>
      %1052 = vector.shape_cast %1051 : vector<1x8x256xf32> to vector<8x256xf32>
      %1053 = vector.extract_strided_slice %1026 {offsets = [4, 0], sizes = [1, 256], strides = [1, 1]} : vector<16x256xf32> to vector<1x256xf32>
      %1054 = vector.broadcast %1053 : vector<1x256xf32> to vector<8x256xf32>
      %1055 = arith.mulf %1052, %1054 : vector<8x256xf32>
      %1056 = arith.addf %1050, %1055 : vector<8x256xf32>
      %c5_583 = arith.constant 5 : index
      %c0_584 = arith.constant 0 : index
      %c0_585 = arith.constant 0 : index
      %1057 = vector.load %arg7[%c5_583, %c0_584, %c0_585] : memref<16x8x256xf32, #tpu.memory_space<vmem>>, vector<1x8x256xf32>
      %1058 = vector.shape_cast %1057 : vector<1x8x256xf32> to vector<8x256xf32>
      %1059 = vector.extract_strided_slice %1026 {offsets = [5, 0], sizes = [1, 256], strides = [1, 1]} : vector<16x256xf32> to vector<1x256xf32>
      %1060 = vector.broadcast %1059 : vector<1x256xf32> to vector<8x256xf32>
      %1061 = arith.mulf %1058, %1060 : vector<8x256xf32>
      %1062 = arith.addf %1056, %1061 : vector<8x256xf32>
      %c6_586 = arith.constant 6 : index
      %c0_587 = arith.constant 0 : index
      %c0_588 = arith.constant 0 : index
      %1063 = vector.load %arg7[%c6_586, %c0_587, %c0_588] : memref<16x8x256xf32, #tpu.memory_space<vmem>>, vector<1x8x256xf32>
      %1064 = vector.shape_cast %1063 : vector<1x8x256xf32> to vector<8x256xf32>
      %1065 = vector.extract_strided_slice %1026 {offsets = [6, 0], sizes = [1, 256], strides = [1, 1]} : vector<16x256xf32> to vector<1x256xf32>
      %1066 = vector.broadcast %1065 : vector<1x256xf32> to vector<8x256xf32>
      %1067 = arith.mulf %1064, %1066 : vector<8x256xf32>
      %1068 = arith.addf %1062, %1067 : vector<8x256xf32>
      %c7_589 = arith.constant 7 : index
      %c0_590 = arith.constant 0 : index
      %c0_591 = arith.constant 0 : index
      %1069 = vector.load %arg7[%c7_589, %c0_590, %c0_591] : memref<16x8x256xf32, #tpu.memory_space<vmem>>, vector<1x8x256xf32>
      %1070 = vector.shape_cast %1069 : vector<1x8x256xf32> to vector<8x256xf32>
      %1071 = vector.extract_strided_slice %1026 {offsets = [7, 0], sizes = [1, 256], strides = [1, 1]} : vector<16x256xf32> to vector<1x256xf32>
      %1072 = vector.broadcast %1071 : vector<1x256xf32> to vector<8x256xf32>
      %1073 = arith.mulf %1070, %1072 : vector<8x256xf32>
      %1074 = arith.addf %1068, %1073 : vector<8x256xf32>
      %c8_592 = arith.constant 8 : index
      %c0_593 = arith.constant 0 : index
      %c0_594 = arith.constant 0 : index
      %1075 = vector.load %arg7[%c8_592, %c0_593, %c0_594] : memref<16x8x256xf32, #tpu.memory_space<vmem>>, vector<1x8x256xf32>
      %1076 = vector.shape_cast %1075 : vector<1x8x256xf32> to vector<8x256xf32>
      %1077 = vector.extract_strided_slice %1026 {offsets = [8, 0], sizes = [1, 256], strides = [1, 1]} : vector<16x256xf32> to vector<1x256xf32>
      %1078 = vector.broadcast %1077 : vector<1x256xf32> to vector<8x256xf32>
      %1079 = arith.mulf %1076, %1078 : vector<8x256xf32>
      %1080 = arith.addf %1074, %1079 : vector<8x256xf32>
      %c9_595 = arith.constant 9 : index
      %c0_596 = arith.constant 0 : index
      %c0_597 = arith.constant 0 : index
      %1081 = vector.load %arg7[%c9_595, %c0_596, %c0_597] : memref<16x8x256xf32, #tpu.memory_space<vmem>>, vector<1x8x256xf32>
      %1082 = vector.shape_cast %1081 : vector<1x8x256xf32> to vector<8x256xf32>
      %1083 = vector.extract_strided_slice %1026 {offsets = [9, 0], sizes = [1, 256], strides = [1, 1]} : vector<16x256xf32> to vector<1x256xf32>
      %1084 = vector.broadcast %1083 : vector<1x256xf32> to vector<8x256xf32>
      %1085 = arith.mulf %1082, %1084 : vector<8x256xf32>
      %1086 = arith.addf %1080, %1085 : vector<8x256xf32>
      %c10_598 = arith.constant 10 : index
      %c0_599 = arith.constant 0 : index
      %c0_600 = arith.constant 0 : index
      %1087 = vector.load %arg7[%c10_598, %c0_599, %c0_600] : memref<16x8x256xf32, #tpu.memory_space<vmem>>, vector<1x8x256xf32>
      %1088 = vector.shape_cast %1087 : vector<1x8x256xf32> to vector<8x256xf32>
      %1089 = vector.extract_strided_slice %1026 {offsets = [10, 0], sizes = [1, 256], strides = [1, 1]} : vector<16x256xf32> to vector<1x256xf32>
      %1090 = vector.broadcast %1089 : vector<1x256xf32> to vector<8x256xf32>
      %1091 = arith.mulf %1088, %1090 : vector<8x256xf32>
      %1092 = arith.addf %1086, %1091 : vector<8x256xf32>
      %c11_601 = arith.constant 11 : index
      %c0_602 = arith.constant 0 : index
      %c0_603 = arith.constant 0 : index
      %1093 = vector.load %arg7[%c11_601, %c0_602, %c0_603] : memref<16x8x256xf32, #tpu.memory_space<vmem>>, vector<1x8x256xf32>
      %1094 = vector.shape_cast %1093 : vector<1x8x256xf32> to vector<8x256xf32>
      %1095 = vector.extract_strided_slice %1026 {offsets = [11, 0], sizes = [1, 256], strides = [1, 1]} : vector<16x256xf32> to vector<1x256xf32>
      %1096 = vector.broadcast %1095 : vector<1x256xf32> to vector<8x256xf32>
      %1097 = arith.mulf %1094, %1096 : vector<8x256xf32>
      %1098 = arith.addf %1092, %1097 : vector<8x256xf32>
      %c12_604 = arith.constant 12 : index
      %c0_605 = arith.constant 0 : index
      %c0_606 = arith.constant 0 : index
      %1099 = vector.load %arg7[%c12_604, %c0_605, %c0_606] : memref<16x8x256xf32, #tpu.memory_space<vmem>>, vector<1x8x256xf32>
      %1100 = vector.shape_cast %1099 : vector<1x8x256xf32> to vector<8x256xf32>
      %1101 = vector.extract_strided_slice %1026 {offsets = [12, 0], sizes = [1, 256], strides = [1, 1]} : vector<16x256xf32> to vector<1x256xf32>
      %1102 = vector.broadcast %1101 : vector<1x256xf32> to vector<8x256xf32>
      %1103 = arith.mulf %1100, %1102 : vector<8x256xf32>
      %1104 = arith.addf %1098, %1103 : vector<8x256xf32>
      %c13_607 = arith.constant 13 : index
      %c0_608 = arith.constant 0 : index
      %c0_609 = arith.constant 0 : index
      %1105 = vector.load %arg7[%c13_607, %c0_608, %c0_609] : memref<16x8x256xf32, #tpu.memory_space<vmem>>, vector<1x8x256xf32>
      %1106 = vector.shape_cast %1105 : vector<1x8x256xf32> to vector<8x256xf32>
      %1107 = vector.extract_strided_slice %1026 {offsets = [13, 0], sizes = [1, 256], strides = [1, 1]} : vector<16x256xf32> to vector<1x256xf32>
      %1108 = vector.broadcast %1107 : vector<1x256xf32> to vector<8x256xf32>
      %1109 = arith.mulf %1106, %1108 : vector<8x256xf32>
      %1110 = arith.addf %1104, %1109 : vector<8x256xf32>
      %c14_610 = arith.constant 14 : index
      %c0_611 = arith.constant 0 : index
      %c0_612 = arith.constant 0 : index
      %1111 = vector.load %arg7[%c14_610, %c0_611, %c0_612] : memref<16x8x256xf32, #tpu.memory_space<vmem>>, vector<1x8x256xf32>
      %1112 = vector.shape_cast %1111 : vector<1x8x256xf32> to vector<8x256xf32>
      %1113 = vector.extract_strided_slice %1026 {offsets = [14, 0], sizes = [1, 256], strides = [1, 1]} : vector<16x256xf32> to vector<1x256xf32>
      %1114 = vector.broadcast %1113 : vector<1x256xf32> to vector<8x256xf32>
      %1115 = arith.mulf %1112, %1114 : vector<8x256xf32>
      %1116 = arith.addf %1110, %1115 : vector<8x256xf32>
      %c15_613 = arith.constant 15 : index
      %c0_614 = arith.constant 0 : index
      %c0_615 = arith.constant 0 : index
      %1117 = vector.load %arg7[%c15_613, %c0_614, %c0_615] : memref<16x8x256xf32, #tpu.memory_space<vmem>>, vector<1x8x256xf32>
      %1118 = vector.shape_cast %1117 : vector<1x8x256xf32> to vector<8x256xf32>
      %1119 = vector.extract_strided_slice %1026 {offsets = [15, 0], sizes = [1, 256], strides = [1, 1]} : vector<16x256xf32> to vector<1x256xf32>
      %1120 = vector.broadcast %1119 : vector<1x256xf32> to vector<8x256xf32>
      %1121 = arith.mulf %1118, %1120 : vector<8x256xf32>
      %1122 = arith.addf %1116, %1121 : vector<8x256xf32>
      %1123 = arith.addf %970, %1122 : vector<8x256xf32>
      %cst_616 = arith.constant 0.000000e+00 : f32
      %1124 = vector.broadcast %cst_616 : f32 to vector<8x256xf32>
      %1125 = arith.maximumf %1123, %1124 : vector<8x256xf32>
      %c0_617 = arith.constant 0 : index
      %c0_618 = arith.constant 0 : index
      %c0_619 = arith.constant 0 : index
      %1126 = vector.load %arg6[%c0_617, %c0_618, %c0_619] : memref<8x16x256xf32, #tpu.memory_space<vmem>>, vector<1x16x256xf32>
      %1127 = vector.shape_cast %1126 : vector<1x16x256xf32> to vector<16x256xf32>
      %1128 = vector.extract_strided_slice %1125 {offsets = [0, 0], sizes = [1, 256], strides = [1, 1]} : vector<8x256xf32> to vector<1x256xf32>
      %1129 = vector.broadcast %1128 : vector<1x256xf32> to vector<16x256xf32>
      %1130 = arith.mulf %1127, %1129 : vector<16x256xf32>
      %1131 = arith.addf %249, %1130 : vector<16x256xf32>
      %c1_620 = arith.constant 1 : index
      %c0_621 = arith.constant 0 : index
      %c0_622 = arith.constant 0 : index
      %1132 = vector.load %arg6[%c1_620, %c0_621, %c0_622] : memref<8x16x256xf32, #tpu.memory_space<vmem>>, vector<1x16x256xf32>
      %1133 = vector.shape_cast %1132 : vector<1x16x256xf32> to vector<16x256xf32>
      %1134 = vector.extract_strided_slice %1125 {offsets = [1, 0], sizes = [1, 256], strides = [1, 1]} : vector<8x256xf32> to vector<1x256xf32>
      %1135 = vector.broadcast %1134 : vector<1x256xf32> to vector<16x256xf32>
      %1136 = arith.mulf %1133, %1135 : vector<16x256xf32>
      %1137 = arith.addf %1131, %1136 : vector<16x256xf32>
      %c2_623 = arith.constant 2 : index
      %c0_624 = arith.constant 0 : index
      %c0_625 = arith.constant 0 : index
      %1138 = vector.load %arg6[%c2_623, %c0_624, %c0_625] : memref<8x16x256xf32, #tpu.memory_space<vmem>>, vector<1x16x256xf32>
      %1139 = vector.shape_cast %1138 : vector<1x16x256xf32> to vector<16x256xf32>
      %1140 = vector.extract_strided_slice %1125 {offsets = [2, 0], sizes = [1, 256], strides = [1, 1]} : vector<8x256xf32> to vector<1x256xf32>
      %1141 = vector.broadcast %1140 : vector<1x256xf32> to vector<16x256xf32>
      %1142 = arith.mulf %1139, %1141 : vector<16x256xf32>
      %1143 = arith.addf %1137, %1142 : vector<16x256xf32>
      %c3_626 = arith.constant 3 : index
      %c0_627 = arith.constant 0 : index
      %c0_628 = arith.constant 0 : index
      %1144 = vector.load %arg6[%c3_626, %c0_627, %c0_628] : memref<8x16x256xf32, #tpu.memory_space<vmem>>, vector<1x16x256xf32>
      %1145 = vector.shape_cast %1144 : vector<1x16x256xf32> to vector<16x256xf32>
      %1146 = vector.extract_strided_slice %1125 {offsets = [3, 0], sizes = [1, 256], strides = [1, 1]} : vector<8x256xf32> to vector<1x256xf32>
      %1147 = vector.broadcast %1146 : vector<1x256xf32> to vector<16x256xf32>
      %1148 = arith.mulf %1145, %1147 : vector<16x256xf32>
      %1149 = arith.addf %1143, %1148 : vector<16x256xf32>
      %c4_629 = arith.constant 4 : index
      %c0_630 = arith.constant 0 : index
      %c0_631 = arith.constant 0 : index
      %1150 = vector.load %arg6[%c4_629, %c0_630, %c0_631] : memref<8x16x256xf32, #tpu.memory_space<vmem>>, vector<1x16x256xf32>
      %1151 = vector.shape_cast %1150 : vector<1x16x256xf32> to vector<16x256xf32>
      %1152 = vector.extract_strided_slice %1125 {offsets = [4, 0], sizes = [1, 256], strides = [1, 1]} : vector<8x256xf32> to vector<1x256xf32>
      %1153 = vector.broadcast %1152 : vector<1x256xf32> to vector<16x256xf32>
      %1154 = arith.mulf %1151, %1153 : vector<16x256xf32>
      %1155 = arith.addf %1149, %1154 : vector<16x256xf32>
      %c5_632 = arith.constant 5 : index
      %c0_633 = arith.constant 0 : index
      %c0_634 = arith.constant 0 : index
      %1156 = vector.load %arg6[%c5_632, %c0_633, %c0_634] : memref<8x16x256xf32, #tpu.memory_space<vmem>>, vector<1x16x256xf32>
      %1157 = vector.shape_cast %1156 : vector<1x16x256xf32> to vector<16x256xf32>
      %1158 = vector.extract_strided_slice %1125 {offsets = [5, 0], sizes = [1, 256], strides = [1, 1]} : vector<8x256xf32> to vector<1x256xf32>
      %1159 = vector.broadcast %1158 : vector<1x256xf32> to vector<16x256xf32>
      %1160 = arith.mulf %1157, %1159 : vector<16x256xf32>
      %1161 = arith.addf %1155, %1160 : vector<16x256xf32>
      %c6_635 = arith.constant 6 : index
      %c0_636 = arith.constant 0 : index
      %c0_637 = arith.constant 0 : index
      %1162 = vector.load %arg6[%c6_635, %c0_636, %c0_637] : memref<8x16x256xf32, #tpu.memory_space<vmem>>, vector<1x16x256xf32>
      %1163 = vector.shape_cast %1162 : vector<1x16x256xf32> to vector<16x256xf32>
      %1164 = vector.extract_strided_slice %1125 {offsets = [6, 0], sizes = [1, 256], strides = [1, 1]} : vector<8x256xf32> to vector<1x256xf32>
      %1165 = vector.broadcast %1164 : vector<1x256xf32> to vector<16x256xf32>
      %1166 = arith.mulf %1163, %1165 : vector<16x256xf32>
      %1167 = arith.addf %1161, %1166 : vector<16x256xf32>
      %c7_638 = arith.constant 7 : index
      %c0_639 = arith.constant 0 : index
      %c0_640 = arith.constant 0 : index
      %1168 = vector.load %arg6[%c7_638, %c0_639, %c0_640] : memref<8x16x256xf32, #tpu.memory_space<vmem>>, vector<1x16x256xf32>
      %1169 = vector.shape_cast %1168 : vector<1x16x256xf32> to vector<16x256xf32>
      %1170 = vector.extract_strided_slice %1125 {offsets = [7, 0], sizes = [1, 256], strides = [1, 1]} : vector<8x256xf32> to vector<1x256xf32>
      %1171 = vector.broadcast %1170 : vector<1x256xf32> to vector<16x256xf32>
      %1172 = arith.mulf %1169, %1171 : vector<16x256xf32>
      %1173 = arith.addf %1167, %1172 : vector<16x256xf32>
      %1174 = arith.subf %1023, %1173 : vector<16x256xf32>
      %cst_641 = arith.constant 0.000000e+00 : f32
      %cst_642 = arith.constant 1.000000e+00 : f32
      %1175 = vector.broadcast %cst_641 : f32 to vector<16x256xf32>
      %1176 = arith.maximumf %1175, %1174 : vector<16x256xf32>
      %1177 = vector.broadcast %cst_642 : f32 to vector<16x256xf32>
      %1178 = arith.minimumf %1177, %1176 : vector<16x256xf32>
      %cst_643 = arith.constant 2.000000e+00 : f32
      %1179 = vector.broadcast %cst_643 : f32 to vector<16x256xf32>
      %1180 = arith.mulf %1179, %1178 : vector<16x256xf32>
      %1181 = arith.subf %1180, %1023 : vector<16x256xf32>
      %c0_644 = arith.constant 0 : index
      %c0_645 = arith.constant 0 : index
      %c0_646 = arith.constant 0 : index
      %1182 = vector.load %arg7[%c0_644, %c0_645, %c0_646] : memref<16x8x256xf32, #tpu.memory_space<vmem>>, vector<1x8x256xf32>
      %1183 = vector.shape_cast %1182 : vector<1x8x256xf32> to vector<8x256xf32>
      %1184 = vector.extract_strided_slice %1181 {offsets = [0, 0], sizes = [1, 256], strides = [1, 1]} : vector<16x256xf32> to vector<1x256xf32>
      %1185 = vector.broadcast %1184 : vector<1x256xf32> to vector<8x256xf32>
      %1186 = arith.mulf %1183, %1185 : vector<8x256xf32>
      %1187 = arith.addf %246, %1186 : vector<8x256xf32>
      %c1_647 = arith.constant 1 : index
      %c0_648 = arith.constant 0 : index
      %c0_649 = arith.constant 0 : index
      %1188 = vector.load %arg7[%c1_647, %c0_648, %c0_649] : memref<16x8x256xf32, #tpu.memory_space<vmem>>, vector<1x8x256xf32>
      %1189 = vector.shape_cast %1188 : vector<1x8x256xf32> to vector<8x256xf32>
      %1190 = vector.extract_strided_slice %1181 {offsets = [1, 0], sizes = [1, 256], strides = [1, 1]} : vector<16x256xf32> to vector<1x256xf32>
      %1191 = vector.broadcast %1190 : vector<1x256xf32> to vector<8x256xf32>
      %1192 = arith.mulf %1189, %1191 : vector<8x256xf32>
      %1193 = arith.addf %1187, %1192 : vector<8x256xf32>
      %c2_650 = arith.constant 2 : index
      %c0_651 = arith.constant 0 : index
      %c0_652 = arith.constant 0 : index
      %1194 = vector.load %arg7[%c2_650, %c0_651, %c0_652] : memref<16x8x256xf32, #tpu.memory_space<vmem>>, vector<1x8x256xf32>
      %1195 = vector.shape_cast %1194 : vector<1x8x256xf32> to vector<8x256xf32>
      %1196 = vector.extract_strided_slice %1181 {offsets = [2, 0], sizes = [1, 256], strides = [1, 1]} : vector<16x256xf32> to vector<1x256xf32>
      %1197 = vector.broadcast %1196 : vector<1x256xf32> to vector<8x256xf32>
      %1198 = arith.mulf %1195, %1197 : vector<8x256xf32>
      %1199 = arith.addf %1193, %1198 : vector<8x256xf32>
      %c3_653 = arith.constant 3 : index
      %c0_654 = arith.constant 0 : index
      %c0_655 = arith.constant 0 : index
      %1200 = vector.load %arg7[%c3_653, %c0_654, %c0_655] : memref<16x8x256xf32, #tpu.memory_space<vmem>>, vector<1x8x256xf32>
      %1201 = vector.shape_cast %1200 : vector<1x8x256xf32> to vector<8x256xf32>
      %1202 = vector.extract_strided_slice %1181 {offsets = [3, 0], sizes = [1, 256], strides = [1, 1]} : vector<16x256xf32> to vector<1x256xf32>
      %1203 = vector.broadcast %1202 : vector<1x256xf32> to vector<8x256xf32>
      %1204 = arith.mulf %1201, %1203 : vector<8x256xf32>
      %1205 = arith.addf %1199, %1204 : vector<8x256xf32>
      %c4_656 = arith.constant 4 : index
      %c0_657 = arith.constant 0 : index
      %c0_658 = arith.constant 0 : index
      %1206 = vector.load %arg7[%c4_656, %c0_657, %c0_658] : memref<16x8x256xf32, #tpu.memory_space<vmem>>, vector<1x8x256xf32>
      %1207 = vector.shape_cast %1206 : vector<1x8x256xf32> to vector<8x256xf32>
      %1208 = vector.extract_strided_slice %1181 {offsets = [4, 0], sizes = [1, 256], strides = [1, 1]} : vector<16x256xf32> to vector<1x256xf32>
      %1209 = vector.broadcast %1208 : vector<1x256xf32> to vector<8x256xf32>
      %1210 = arith.mulf %1207, %1209 : vector<8x256xf32>
      %1211 = arith.addf %1205, %1210 : vector<8x256xf32>
      %c5_659 = arith.constant 5 : index
      %c0_660 = arith.constant 0 : index
      %c0_661 = arith.constant 0 : index
      %1212 = vector.load %arg7[%c5_659, %c0_660, %c0_661] : memref<16x8x256xf32, #tpu.memory_space<vmem>>, vector<1x8x256xf32>
      %1213 = vector.shape_cast %1212 : vector<1x8x256xf32> to vector<8x256xf32>
      %1214 = vector.extract_strided_slice %1181 {offsets = [5, 0], sizes = [1, 256], strides = [1, 1]} : vector<16x256xf32> to vector<1x256xf32>
      %1215 = vector.broadcast %1214 : vector<1x256xf32> to vector<8x256xf32>
      %1216 = arith.mulf %1213, %1215 : vector<8x256xf32>
      %1217 = arith.addf %1211, %1216 : vector<8x256xf32>
      %c6_662 = arith.constant 6 : index
      %c0_663 = arith.constant 0 : index
      %c0_664 = arith.constant 0 : index
      %1218 = vector.load %arg7[%c6_662, %c0_663, %c0_664] : memref<16x8x256xf32, #tpu.memory_space<vmem>>, vector<1x8x256xf32>
      %1219 = vector.shape_cast %1218 : vector<1x8x256xf32> to vector<8x256xf32>
      %1220 = vector.extract_strided_slice %1181 {offsets = [6, 0], sizes = [1, 256], strides = [1, 1]} : vector<16x256xf32> to vector<1x256xf32>
      %1221 = vector.broadcast %1220 : vector<1x256xf32> to vector<8x256xf32>
      %1222 = arith.mulf %1219, %1221 : vector<8x256xf32>
      %1223 = arith.addf %1217, %1222 : vector<8x256xf32>
      %c7_665 = arith.constant 7 : index
      %c0_666 = arith.constant 0 : index
      %c0_667 = arith.constant 0 : index
      %1224 = vector.load %arg7[%c7_665, %c0_666, %c0_667] : memref<16x8x256xf32, #tpu.memory_space<vmem>>, vector<1x8x256xf32>
      %1225 = vector.shape_cast %1224 : vector<1x8x256xf32> to vector<8x256xf32>
      %1226 = vector.extract_strided_slice %1181 {offsets = [7, 0], sizes = [1, 256], strides = [1, 1]} : vector<16x256xf32> to vector<1x256xf32>
      %1227 = vector.broadcast %1226 : vector<1x256xf32> to vector<8x256xf32>
      %1228 = arith.mulf %1225, %1227 : vector<8x256xf32>
      %1229 = arith.addf %1223, %1228 : vector<8x256xf32>
      %c8_668 = arith.constant 8 : index
      %c0_669 = arith.constant 0 : index
      %c0_670 = arith.constant 0 : index
      %1230 = vector.load %arg7[%c8_668, %c0_669, %c0_670] : memref<16x8x256xf32, #tpu.memory_space<vmem>>, vector<1x8x256xf32>
      %1231 = vector.shape_cast %1230 : vector<1x8x256xf32> to vector<8x256xf32>
      %1232 = vector.extract_strided_slice %1181 {offsets = [8, 0], sizes = [1, 256], strides = [1, 1]} : vector<16x256xf32> to vector<1x256xf32>
      %1233 = vector.broadcast %1232 : vector<1x256xf32> to vector<8x256xf32>
      %1234 = arith.mulf %1231, %1233 : vector<8x256xf32>
      %1235 = arith.addf %1229, %1234 : vector<8x256xf32>
      %c9_671 = arith.constant 9 : index
      %c0_672 = arith.constant 0 : index
      %c0_673 = arith.constant 0 : index
      %1236 = vector.load %arg7[%c9_671, %c0_672, %c0_673] : memref<16x8x256xf32, #tpu.memory_space<vmem>>, vector<1x8x256xf32>
      %1237 = vector.shape_cast %1236 : vector<1x8x256xf32> to vector<8x256xf32>
      %1238 = vector.extract_strided_slice %1181 {offsets = [9, 0], sizes = [1, 256], strides = [1, 1]} : vector<16x256xf32> to vector<1x256xf32>
      %1239 = vector.broadcast %1238 : vector<1x256xf32> to vector<8x256xf32>
      %1240 = arith.mulf %1237, %1239 : vector<8x256xf32>
      %1241 = arith.addf %1235, %1240 : vector<8x256xf32>
      %c10_674 = arith.constant 10 : index
      %c0_675 = arith.constant 0 : index
      %c0_676 = arith.constant 0 : index
      %1242 = vector.load %arg7[%c10_674, %c0_675, %c0_676] : memref<16x8x256xf32, #tpu.memory_space<vmem>>, vector<1x8x256xf32>
      %1243 = vector.shape_cast %1242 : vector<1x8x256xf32> to vector<8x256xf32>
      %1244 = vector.extract_strided_slice %1181 {offsets = [10, 0], sizes = [1, 256], strides = [1, 1]} : vector<16x256xf32> to vector<1x256xf32>
      %1245 = vector.broadcast %1244 : vector<1x256xf32> to vector<8x256xf32>
      %1246 = arith.mulf %1243, %1245 : vector<8x256xf32>
      %1247 = arith.addf %1241, %1246 : vector<8x256xf32>
      %c11_677 = arith.constant 11 : index
      %c0_678 = arith.constant 0 : index
      %c0_679 = arith.constant 0 : index
      %1248 = vector.load %arg7[%c11_677, %c0_678, %c0_679] : memref<16x8x256xf32, #tpu.memory_space<vmem>>, vector<1x8x256xf32>
      %1249 = vector.shape_cast %1248 : vector<1x8x256xf32> to vector<8x256xf32>
      %1250 = vector.extract_strided_slice %1181 {offsets = [11, 0], sizes = [1, 256], strides = [1, 1]} : vector<16x256xf32> to vector<1x256xf32>
      %1251 = vector.broadcast %1250 : vector<1x256xf32> to vector<8x256xf32>
      %1252 = arith.mulf %1249, %1251 : vector<8x256xf32>
      %1253 = arith.addf %1247, %1252 : vector<8x256xf32>
      %c12_680 = arith.constant 12 : index
      %c0_681 = arith.constant 0 : index
      %c0_682 = arith.constant 0 : index
      %1254 = vector.load %arg7[%c12_680, %c0_681, %c0_682] : memref<16x8x256xf32, #tpu.memory_space<vmem>>, vector<1x8x256xf32>
      %1255 = vector.shape_cast %1254 : vector<1x8x256xf32> to vector<8x256xf32>
      %1256 = vector.extract_strided_slice %1181 {offsets = [12, 0], sizes = [1, 256], strides = [1, 1]} : vector<16x256xf32> to vector<1x256xf32>
      %1257 = vector.broadcast %1256 : vector<1x256xf32> to vector<8x256xf32>
      %1258 = arith.mulf %1255, %1257 : vector<8x256xf32>
      %1259 = arith.addf %1253, %1258 : vector<8x256xf32>
      %c13_683 = arith.constant 13 : index
      %c0_684 = arith.constant 0 : index
      %c0_685 = arith.constant 0 : index
      %1260 = vector.load %arg7[%c13_683, %c0_684, %c0_685] : memref<16x8x256xf32, #tpu.memory_space<vmem>>, vector<1x8x256xf32>
      %1261 = vector.shape_cast %1260 : vector<1x8x256xf32> to vector<8x256xf32>
      %1262 = vector.extract_strided_slice %1181 {offsets = [13, 0], sizes = [1, 256], strides = [1, 1]} : vector<16x256xf32> to vector<1x256xf32>
      %1263 = vector.broadcast %1262 : vector<1x256xf32> to vector<8x256xf32>
      %1264 = arith.mulf %1261, %1263 : vector<8x256xf32>
      %1265 = arith.addf %1259, %1264 : vector<8x256xf32>
      %c14_686 = arith.constant 14 : index
      %c0_687 = arith.constant 0 : index
      %c0_688 = arith.constant 0 : index
      %1266 = vector.load %arg7[%c14_686, %c0_687, %c0_688] : memref<16x8x256xf32, #tpu.memory_space<vmem>>, vector<1x8x256xf32>
      %1267 = vector.shape_cast %1266 : vector<1x8x256xf32> to vector<8x256xf32>
      %1268 = vector.extract_strided_slice %1181 {offsets = [14, 0], sizes = [1, 256], strides = [1, 1]} : vector<16x256xf32> to vector<1x256xf32>
      %1269 = vector.broadcast %1268 : vector<1x256xf32> to vector<8x256xf32>
      %1270 = arith.mulf %1267, %1269 : vector<8x256xf32>
      %1271 = arith.addf %1265, %1270 : vector<8x256xf32>
      %c15_689 = arith.constant 15 : index
      %c0_690 = arith.constant 0 : index
      %c0_691 = arith.constant 0 : index
      %1272 = vector.load %arg7[%c15_689, %c0_690, %c0_691] : memref<16x8x256xf32, #tpu.memory_space<vmem>>, vector<1x8x256xf32>
      %1273 = vector.shape_cast %1272 : vector<1x8x256xf32> to vector<8x256xf32>
      %1274 = vector.extract_strided_slice %1181 {offsets = [15, 0], sizes = [1, 256], strides = [1, 1]} : vector<16x256xf32> to vector<1x256xf32>
      %1275 = vector.broadcast %1274 : vector<1x256xf32> to vector<8x256xf32>
      %1276 = arith.mulf %1273, %1275 : vector<8x256xf32>
      %1277 = arith.addf %1271, %1276 : vector<8x256xf32>
      %1278 = arith.addf %1125, %1277 : vector<8x256xf32>
      %cst_692 = arith.constant 0.000000e+00 : f32
      %1279 = vector.broadcast %cst_692 : f32 to vector<8x256xf32>
      %1280 = arith.maximumf %1278, %1279 : vector<8x256xf32>
      %c0_693 = arith.constant 0 : index
      %c0_694 = arith.constant 0 : index
      %c0_695 = arith.constant 0 : index
      %1281 = vector.load %arg6[%c0_693, %c0_694, %c0_695] : memref<8x16x256xf32, #tpu.memory_space<vmem>>, vector<1x16x256xf32>
      %1282 = vector.shape_cast %1281 : vector<1x16x256xf32> to vector<16x256xf32>
      %1283 = vector.extract_strided_slice %1280 {offsets = [0, 0], sizes = [1, 256], strides = [1, 1]} : vector<8x256xf32> to vector<1x256xf32>
      %1284 = vector.broadcast %1283 : vector<1x256xf32> to vector<16x256xf32>
      %1285 = arith.mulf %1282, %1284 : vector<16x256xf32>
      %1286 = arith.addf %249, %1285 : vector<16x256xf32>
      %c1_696 = arith.constant 1 : index
      %c0_697 = arith.constant 0 : index
      %c0_698 = arith.constant 0 : index
      %1287 = vector.load %arg6[%c1_696, %c0_697, %c0_698] : memref<8x16x256xf32, #tpu.memory_space<vmem>>, vector<1x16x256xf32>
      %1288 = vector.shape_cast %1287 : vector<1x16x256xf32> to vector<16x256xf32>
      %1289 = vector.extract_strided_slice %1280 {offsets = [1, 0], sizes = [1, 256], strides = [1, 1]} : vector<8x256xf32> to vector<1x256xf32>
      %1290 = vector.broadcast %1289 : vector<1x256xf32> to vector<16x256xf32>
      %1291 = arith.mulf %1288, %1290 : vector<16x256xf32>
      %1292 = arith.addf %1286, %1291 : vector<16x256xf32>
      %c2_699 = arith.constant 2 : index
      %c0_700 = arith.constant 0 : index
      %c0_701 = arith.constant 0 : index
      %1293 = vector.load %arg6[%c2_699, %c0_700, %c0_701] : memref<8x16x256xf32, #tpu.memory_space<vmem>>, vector<1x16x256xf32>
      %1294 = vector.shape_cast %1293 : vector<1x16x256xf32> to vector<16x256xf32>
      %1295 = vector.extract_strided_slice %1280 {offsets = [2, 0], sizes = [1, 256], strides = [1, 1]} : vector<8x256xf32> to vector<1x256xf32>
      %1296 = vector.broadcast %1295 : vector<1x256xf32> to vector<16x256xf32>
      %1297 = arith.mulf %1294, %1296 : vector<16x256xf32>
      %1298 = arith.addf %1292, %1297 : vector<16x256xf32>
      %c3_702 = arith.constant 3 : index
      %c0_703 = arith.constant 0 : index
      %c0_704 = arith.constant 0 : index
      %1299 = vector.load %arg6[%c3_702, %c0_703, %c0_704] : memref<8x16x256xf32, #tpu.memory_space<vmem>>, vector<1x16x256xf32>
      %1300 = vector.shape_cast %1299 : vector<1x16x256xf32> to vector<16x256xf32>
      %1301 = vector.extract_strided_slice %1280 {offsets = [3, 0], sizes = [1, 256], strides = [1, 1]} : vector<8x256xf32> to vector<1x256xf32>
      %1302 = vector.broadcast %1301 : vector<1x256xf32> to vector<16x256xf32>
      %1303 = arith.mulf %1300, %1302 : vector<16x256xf32>
      %1304 = arith.addf %1298, %1303 : vector<16x256xf32>
      %c4_705 = arith.constant 4 : index
      %c0_706 = arith.constant 0 : index
      %c0_707 = arith.constant 0 : index
      %1305 = vector.load %arg6[%c4_705, %c0_706, %c0_707] : memref<8x16x256xf32, #tpu.memory_space<vmem>>, vector<1x16x256xf32>
      %1306 = vector.shape_cast %1305 : vector<1x16x256xf32> to vector<16x256xf32>
      %1307 = vector.extract_strided_slice %1280 {offsets = [4, 0], sizes = [1, 256], strides = [1, 1]} : vector<8x256xf32> to vector<1x256xf32>
      %1308 = vector.broadcast %1307 : vector<1x256xf32> to vector<16x256xf32>
      %1309 = arith.mulf %1306, %1308 : vector<16x256xf32>
      %1310 = arith.addf %1304, %1309 : vector<16x256xf32>
      %c5_708 = arith.constant 5 : index
      %c0_709 = arith.constant 0 : index
      %c0_710 = arith.constant 0 : index
      %1311 = vector.load %arg6[%c5_708, %c0_709, %c0_710] : memref<8x16x256xf32, #tpu.memory_space<vmem>>, vector<1x16x256xf32>
      %1312 = vector.shape_cast %1311 : vector<1x16x256xf32> to vector<16x256xf32>
      %1313 = vector.extract_strided_slice %1280 {offsets = [5, 0], sizes = [1, 256], strides = [1, 1]} : vector<8x256xf32> to vector<1x256xf32>
      %1314 = vector.broadcast %1313 : vector<1x256xf32> to vector<16x256xf32>
      %1315 = arith.mulf %1312, %1314 : vector<16x256xf32>
      %1316 = arith.addf %1310, %1315 : vector<16x256xf32>
      %c6_711 = arith.constant 6 : index
      %c0_712 = arith.constant 0 : index
      %c0_713 = arith.constant 0 : index
      %1317 = vector.load %arg6[%c6_711, %c0_712, %c0_713] : memref<8x16x256xf32, #tpu.memory_space<vmem>>, vector<1x16x256xf32>
      %1318 = vector.shape_cast %1317 : vector<1x16x256xf32> to vector<16x256xf32>
      %1319 = vector.extract_strided_slice %1280 {offsets = [6, 0], sizes = [1, 256], strides = [1, 1]} : vector<8x256xf32> to vector<1x256xf32>
      %1320 = vector.broadcast %1319 : vector<1x256xf32> to vector<16x256xf32>
      %1321 = arith.mulf %1318, %1320 : vector<16x256xf32>
      %1322 = arith.addf %1316, %1321 : vector<16x256xf32>
      %c7_714 = arith.constant 7 : index
      %c0_715 = arith.constant 0 : index
      %c0_716 = arith.constant 0 : index
      %1323 = vector.load %arg6[%c7_714, %c0_715, %c0_716] : memref<8x16x256xf32, #tpu.memory_space<vmem>>, vector<1x16x256xf32>
      %1324 = vector.shape_cast %1323 : vector<1x16x256xf32> to vector<16x256xf32>
      %1325 = vector.extract_strided_slice %1280 {offsets = [7, 0], sizes = [1, 256], strides = [1, 1]} : vector<8x256xf32> to vector<1x256xf32>
      %1326 = vector.broadcast %1325 : vector<1x256xf32> to vector<16x256xf32>
      %1327 = arith.mulf %1324, %1326 : vector<16x256xf32>
      %1328 = arith.addf %1322, %1327 : vector<16x256xf32>
      %1329 = arith.subf %1178, %1328 : vector<16x256xf32>
      %cst_717 = arith.constant 0.000000e+00 : f32
      %cst_718 = arith.constant 1.000000e+00 : f32
      %1330 = vector.broadcast %cst_717 : f32 to vector<16x256xf32>
      %1331 = arith.maximumf %1330, %1329 : vector<16x256xf32>
      %1332 = vector.broadcast %cst_718 : f32 to vector<16x256xf32>
      %1333 = arith.minimumf %1332, %1331 : vector<16x256xf32>
      %cst_719 = arith.constant 2.000000e+00 : f32
      %1334 = vector.broadcast %cst_719 : f32 to vector<16x256xf32>
      %1335 = arith.mulf %1334, %1333 : vector<16x256xf32>
      %1336 = arith.subf %1335, %1178 : vector<16x256xf32>
      %c0_720 = arith.constant 0 : index
      %c0_721 = arith.constant 0 : index
      %c0_722 = arith.constant 0 : index
      %1337 = vector.load %arg7[%c0_720, %c0_721, %c0_722] : memref<16x8x256xf32, #tpu.memory_space<vmem>>, vector<1x8x256xf32>
      %1338 = vector.shape_cast %1337 : vector<1x8x256xf32> to vector<8x256xf32>
      %1339 = vector.extract_strided_slice %1336 {offsets = [0, 0], sizes = [1, 256], strides = [1, 1]} : vector<16x256xf32> to vector<1x256xf32>
      %1340 = vector.broadcast %1339 : vector<1x256xf32> to vector<8x256xf32>
      %1341 = arith.mulf %1338, %1340 : vector<8x256xf32>
      %1342 = arith.addf %246, %1341 : vector<8x256xf32>
      %c1_723 = arith.constant 1 : index
      %c0_724 = arith.constant 0 : index
      %c0_725 = arith.constant 0 : index
      %1343 = vector.load %arg7[%c1_723, %c0_724, %c0_725] : memref<16x8x256xf32, #tpu.memory_space<vmem>>, vector<1x8x256xf32>
      %1344 = vector.shape_cast %1343 : vector<1x8x256xf32> to vector<8x256xf32>
      %1345 = vector.extract_strided_slice %1336 {offsets = [1, 0], sizes = [1, 256], strides = [1, 1]} : vector<16x256xf32> to vector<1x256xf32>
      %1346 = vector.broadcast %1345 : vector<1x256xf32> to vector<8x256xf32>
      %1347 = arith.mulf %1344, %1346 : vector<8x256xf32>
      %1348 = arith.addf %1342, %1347 : vector<8x256xf32>
      %c2_726 = arith.constant 2 : index
      %c0_727 = arith.constant 0 : index
      %c0_728 = arith.constant 0 : index
      %1349 = vector.load %arg7[%c2_726, %c0_727, %c0_728] : memref<16x8x256xf32, #tpu.memory_space<vmem>>, vector<1x8x256xf32>
      %1350 = vector.shape_cast %1349 : vector<1x8x256xf32> to vector<8x256xf32>
      %1351 = vector.extract_strided_slice %1336 {offsets = [2, 0], sizes = [1, 256], strides = [1, 1]} : vector<16x256xf32> to vector<1x256xf32>
      %1352 = vector.broadcast %1351 : vector<1x256xf32> to vector<8x256xf32>
      %1353 = arith.mulf %1350, %1352 : vector<8x256xf32>
      %1354 = arith.addf %1348, %1353 : vector<8x256xf32>
      %c3_729 = arith.constant 3 : index
      %c0_730 = arith.constant 0 : index
      %c0_731 = arith.constant 0 : index
      %1355 = vector.load %arg7[%c3_729, %c0_730, %c0_731] : memref<16x8x256xf32, #tpu.memory_space<vmem>>, vector<1x8x256xf32>
      %1356 = vector.shape_cast %1355 : vector<1x8x256xf32> to vector<8x256xf32>
      %1357 = vector.extract_strided_slice %1336 {offsets = [3, 0], sizes = [1, 256], strides = [1, 1]} : vector<16x256xf32> to vector<1x256xf32>
      %1358 = vector.broadcast %1357 : vector<1x256xf32> to vector<8x256xf32>
      %1359 = arith.mulf %1356, %1358 : vector<8x256xf32>
      %1360 = arith.addf %1354, %1359 : vector<8x256xf32>
      %c4_732 = arith.constant 4 : index
      %c0_733 = arith.constant 0 : index
      %c0_734 = arith.constant 0 : index
      %1361 = vector.load %arg7[%c4_732, %c0_733, %c0_734] : memref<16x8x256xf32, #tpu.memory_space<vmem>>, vector<1x8x256xf32>
      %1362 = vector.shape_cast %1361 : vector<1x8x256xf32> to vector<8x256xf32>
      %1363 = vector.extract_strided_slice %1336 {offsets = [4, 0], sizes = [1, 256], strides = [1, 1]} : vector<16x256xf32> to vector<1x256xf32>
      %1364 = vector.broadcast %1363 : vector<1x256xf32> to vector<8x256xf32>
      %1365 = arith.mulf %1362, %1364 : vector<8x256xf32>
      %1366 = arith.addf %1360, %1365 : vector<8x256xf32>
      %c5_735 = arith.constant 5 : index
      %c0_736 = arith.constant 0 : index
      %c0_737 = arith.constant 0 : index
      %1367 = vector.load %arg7[%c5_735, %c0_736, %c0_737] : memref<16x8x256xf32, #tpu.memory_space<vmem>>, vector<1x8x256xf32>
      %1368 = vector.shape_cast %1367 : vector<1x8x256xf32> to vector<8x256xf32>
      %1369 = vector.extract_strided_slice %1336 {offsets = [5, 0], sizes = [1, 256], strides = [1, 1]} : vector<16x256xf32> to vector<1x256xf32>
      %1370 = vector.broadcast %1369 : vector<1x256xf32> to vector<8x256xf32>
      %1371 = arith.mulf %1368, %1370 : vector<8x256xf32>
      %1372 = arith.addf %1366, %1371 : vector<8x256xf32>
      %c6_738 = arith.constant 6 : index
      %c0_739 = arith.constant 0 : index
      %c0_740 = arith.constant 0 : index
      %1373 = vector.load %arg7[%c6_738, %c0_739, %c0_740] : memref<16x8x256xf32, #tpu.memory_space<vmem>>, vector<1x8x256xf32>
      %1374 = vector.shape_cast %1373 : vector<1x8x256xf32> to vector<8x256xf32>
      %1375 = vector.extract_strided_slice %1336 {offsets = [6, 0], sizes = [1, 256], strides = [1, 1]} : vector<16x256xf32> to vector<1x256xf32>
      %1376 = vector.broadcast %1375 : vector<1x256xf32> to vector<8x256xf32>
      %1377 = arith.mulf %1374, %1376 : vector<8x256xf32>
      %1378 = arith.addf %1372, %1377 : vector<8x256xf32>
      %c7_741 = arith.constant 7 : index
      %c0_742 = arith.constant 0 : index
      %c0_743 = arith.constant 0 : index
      %1379 = vector.load %arg7[%c7_741, %c0_742, %c0_743] : memref<16x8x256xf32, #tpu.memory_space<vmem>>, vector<1x8x256xf32>
      %1380 = vector.shape_cast %1379 : vector<1x8x256xf32> to vector<8x256xf32>
      %1381 = vector.extract_strided_slice %1336 {offsets = [7, 0], sizes = [1, 256], strides = [1, 1]} : vector<16x256xf32> to vector<1x256xf32>
      %1382 = vector.broadcast %1381 : vector<1x256xf32> to vector<8x256xf32>
      %1383 = arith.mulf %1380, %1382 : vector<8x256xf32>
      %1384 = arith.addf %1378, %1383 : vector<8x256xf32>
      %c8_744 = arith.constant 8 : index
      %c0_745 = arith.constant 0 : index
      %c0_746 = arith.constant 0 : index
      %1385 = vector.load %arg7[%c8_744, %c0_745, %c0_746] : memref<16x8x256xf32, #tpu.memory_space<vmem>>, vector<1x8x256xf32>
      %1386 = vector.shape_cast %1385 : vector<1x8x256xf32> to vector<8x256xf32>
      %1387 = vector.extract_strided_slice %1336 {offsets = [8, 0], sizes = [1, 256], strides = [1, 1]} : vector<16x256xf32> to vector<1x256xf32>
      %1388 = vector.broadcast %1387 : vector<1x256xf32> to vector<8x256xf32>
      %1389 = arith.mulf %1386, %1388 : vector<8x256xf32>
      %1390 = arith.addf %1384, %1389 : vector<8x256xf32>
      %c9_747 = arith.constant 9 : index
      %c0_748 = arith.constant 0 : index
      %c0_749 = arith.constant 0 : index
      %1391 = vector.load %arg7[%c9_747, %c0_748, %c0_749] : memref<16x8x256xf32, #tpu.memory_space<vmem>>, vector<1x8x256xf32>
      %1392 = vector.shape_cast %1391 : vector<1x8x256xf32> to vector<8x256xf32>
      %1393 = vector.extract_strided_slice %1336 {offsets = [9, 0], sizes = [1, 256], strides = [1, 1]} : vector<16x256xf32> to vector<1x256xf32>
      %1394 = vector.broadcast %1393 : vector<1x256xf32> to vector<8x256xf32>
      %1395 = arith.mulf %1392, %1394 : vector<8x256xf32>
      %1396 = arith.addf %1390, %1395 : vector<8x256xf32>
      %c10_750 = arith.constant 10 : index
      %c0_751 = arith.constant 0 : index
      %c0_752 = arith.constant 0 : index
      %1397 = vector.load %arg7[%c10_750, %c0_751, %c0_752] : memref<16x8x256xf32, #tpu.memory_space<vmem>>, vector<1x8x256xf32>
      %1398 = vector.shape_cast %1397 : vector<1x8x256xf32> to vector<8x256xf32>
      %1399 = vector.extract_strided_slice %1336 {offsets = [10, 0], sizes = [1, 256], strides = [1, 1]} : vector<16x256xf32> to vector<1x256xf32>
      %1400 = vector.broadcast %1399 : vector<1x256xf32> to vector<8x256xf32>
      %1401 = arith.mulf %1398, %1400 : vector<8x256xf32>
      %1402 = arith.addf %1396, %1401 : vector<8x256xf32>
      %c11_753 = arith.constant 11 : index
      %c0_754 = arith.constant 0 : index
      %c0_755 = arith.constant 0 : index
      %1403 = vector.load %arg7[%c11_753, %c0_754, %c0_755] : memref<16x8x256xf32, #tpu.memory_space<vmem>>, vector<1x8x256xf32>
      %1404 = vector.shape_cast %1403 : vector<1x8x256xf32> to vector<8x256xf32>
      %1405 = vector.extract_strided_slice %1336 {offsets = [11, 0], sizes = [1, 256], strides = [1, 1]} : vector<16x256xf32> to vector<1x256xf32>
      %1406 = vector.broadcast %1405 : vector<1x256xf32> to vector<8x256xf32>
      %1407 = arith.mulf %1404, %1406 : vector<8x256xf32>
      %1408 = arith.addf %1402, %1407 : vector<8x256xf32>
      %c12_756 = arith.constant 12 : index
      %c0_757 = arith.constant 0 : index
      %c0_758 = arith.constant 0 : index
      %1409 = vector.load %arg7[%c12_756, %c0_757, %c0_758] : memref<16x8x256xf32, #tpu.memory_space<vmem>>, vector<1x8x256xf32>
      %1410 = vector.shape_cast %1409 : vector<1x8x256xf32> to vector<8x256xf32>
      %1411 = vector.extract_strided_slice %1336 {offsets = [12, 0], sizes = [1, 256], strides = [1, 1]} : vector<16x256xf32> to vector<1x256xf32>
      %1412 = vector.broadcast %1411 : vector<1x256xf32> to vector<8x256xf32>
      %1413 = arith.mulf %1410, %1412 : vector<8x256xf32>
      %1414 = arith.addf %1408, %1413 : vector<8x256xf32>
      %c13_759 = arith.constant 13 : index
      %c0_760 = arith.constant 0 : index
      %c0_761 = arith.constant 0 : index
      %1415 = vector.load %arg7[%c13_759, %c0_760, %c0_761] : memref<16x8x256xf32, #tpu.memory_space<vmem>>, vector<1x8x256xf32>
      %1416 = vector.shape_cast %1415 : vector<1x8x256xf32> to vector<8x256xf32>
      %1417 = vector.extract_strided_slice %1336 {offsets = [13, 0], sizes = [1, 256], strides = [1, 1]} : vector<16x256xf32> to vector<1x256xf32>
      %1418 = vector.broadcast %1417 : vector<1x256xf32> to vector<8x256xf32>
      %1419 = arith.mulf %1416, %1418 : vector<8x256xf32>
      %1420 = arith.addf %1414, %1419 : vector<8x256xf32>
      %c14_762 = arith.constant 14 : index
      %c0_763 = arith.constant 0 : index
      %c0_764 = arith.constant 0 : index
      %1421 = vector.load %arg7[%c14_762, %c0_763, %c0_764] : memref<16x8x256xf32, #tpu.memory_space<vmem>>, vector<1x8x256xf32>
      %1422 = vector.shape_cast %1421 : vector<1x8x256xf32> to vector<8x256xf32>
      %1423 = vector.extract_strided_slice %1336 {offsets = [14, 0], sizes = [1, 256], strides = [1, 1]} : vector<16x256xf32> to vector<1x256xf32>
      %1424 = vector.broadcast %1423 : vector<1x256xf32> to vector<8x256xf32>
      %1425 = arith.mulf %1422, %1424 : vector<8x256xf32>
      %1426 = arith.addf %1420, %1425 : vector<8x256xf32>
      %c15_765 = arith.constant 15 : index
      %c0_766 = arith.constant 0 : index
      %c0_767 = arith.constant 0 : index
      %1427 = vector.load %arg7[%c15_765, %c0_766, %c0_767] : memref<16x8x256xf32, #tpu.memory_space<vmem>>, vector<1x8x256xf32>
      %1428 = vector.shape_cast %1427 : vector<1x8x256xf32> to vector<8x256xf32>
      %1429 = vector.extract_strided_slice %1336 {offsets = [15, 0], sizes = [1, 256], strides = [1, 1]} : vector<16x256xf32> to vector<1x256xf32>
      %1430 = vector.broadcast %1429 : vector<1x256xf32> to vector<8x256xf32>
      %1431 = arith.mulf %1428, %1430 : vector<8x256xf32>
      %1432 = arith.addf %1426, %1431 : vector<8x256xf32>
      %1433 = arith.addf %1280, %1432 : vector<8x256xf32>
      %cst_768 = arith.constant 0.000000e+00 : f32
      %1434 = vector.broadcast %cst_768 : f32 to vector<8x256xf32>
      %1435 = arith.maximumf %1433, %1434 : vector<8x256xf32>
      %c0_769 = arith.constant 0 : index
      %c0_770 = arith.constant 0 : index
      %c0_771 = arith.constant 0 : index
      %1436 = vector.load %arg6[%c0_769, %c0_770, %c0_771] : memref<8x16x256xf32, #tpu.memory_space<vmem>>, vector<1x16x256xf32>
      %1437 = vector.shape_cast %1436 : vector<1x16x256xf32> to vector<16x256xf32>
      %1438 = vector.extract_strided_slice %1435 {offsets = [0, 0], sizes = [1, 256], strides = [1, 1]} : vector<8x256xf32> to vector<1x256xf32>
      %1439 = vector.broadcast %1438 : vector<1x256xf32> to vector<16x256xf32>
      %1440 = arith.mulf %1437, %1439 : vector<16x256xf32>
      %1441 = arith.addf %249, %1440 : vector<16x256xf32>
      %c1_772 = arith.constant 1 : index
      %c0_773 = arith.constant 0 : index
      %c0_774 = arith.constant 0 : index
      %1442 = vector.load %arg6[%c1_772, %c0_773, %c0_774] : memref<8x16x256xf32, #tpu.memory_space<vmem>>, vector<1x16x256xf32>
      %1443 = vector.shape_cast %1442 : vector<1x16x256xf32> to vector<16x256xf32>
      %1444 = vector.extract_strided_slice %1435 {offsets = [1, 0], sizes = [1, 256], strides = [1, 1]} : vector<8x256xf32> to vector<1x256xf32>
      %1445 = vector.broadcast %1444 : vector<1x256xf32> to vector<16x256xf32>
      %1446 = arith.mulf %1443, %1445 : vector<16x256xf32>
      %1447 = arith.addf %1441, %1446 : vector<16x256xf32>
      %c2_775 = arith.constant 2 : index
      %c0_776 = arith.constant 0 : index
      %c0_777 = arith.constant 0 : index
      %1448 = vector.load %arg6[%c2_775, %c0_776, %c0_777] : memref<8x16x256xf32, #tpu.memory_space<vmem>>, vector<1x16x256xf32>
      %1449 = vector.shape_cast %1448 : vector<1x16x256xf32> to vector<16x256xf32>
      %1450 = vector.extract_strided_slice %1435 {offsets = [2, 0], sizes = [1, 256], strides = [1, 1]} : vector<8x256xf32> to vector<1x256xf32>
      %1451 = vector.broadcast %1450 : vector<1x256xf32> to vector<16x256xf32>
      %1452 = arith.mulf %1449, %1451 : vector<16x256xf32>
      %1453 = arith.addf %1447, %1452 : vector<16x256xf32>
      %c3_778 = arith.constant 3 : index
      %c0_779 = arith.constant 0 : index
      %c0_780 = arith.constant 0 : index
      %1454 = vector.load %arg6[%c3_778, %c0_779, %c0_780] : memref<8x16x256xf32, #tpu.memory_space<vmem>>, vector<1x16x256xf32>
      %1455 = vector.shape_cast %1454 : vector<1x16x256xf32> to vector<16x256xf32>
      %1456 = vector.extract_strided_slice %1435 {offsets = [3, 0], sizes = [1, 256], strides = [1, 1]} : vector<8x256xf32> to vector<1x256xf32>
      %1457 = vector.broadcast %1456 : vector<1x256xf32> to vector<16x256xf32>
      %1458 = arith.mulf %1455, %1457 : vector<16x256xf32>
      %1459 = arith.addf %1453, %1458 : vector<16x256xf32>
      %c4_781 = arith.constant 4 : index
      %c0_782 = arith.constant 0 : index
      %c0_783 = arith.constant 0 : index
      %1460 = vector.load %arg6[%c4_781, %c0_782, %c0_783] : memref<8x16x256xf32, #tpu.memory_space<vmem>>, vector<1x16x256xf32>
      %1461 = vector.shape_cast %1460 : vector<1x16x256xf32> to vector<16x256xf32>
      %1462 = vector.extract_strided_slice %1435 {offsets = [4, 0], sizes = [1, 256], strides = [1, 1]} : vector<8x256xf32> to vector<1x256xf32>
      %1463 = vector.broadcast %1462 : vector<1x256xf32> to vector<16x256xf32>
      %1464 = arith.mulf %1461, %1463 : vector<16x256xf32>
      %1465 = arith.addf %1459, %1464 : vector<16x256xf32>
      %c5_784 = arith.constant 5 : index
      %c0_785 = arith.constant 0 : index
      %c0_786 = arith.constant 0 : index
      %1466 = vector.load %arg6[%c5_784, %c0_785, %c0_786] : memref<8x16x256xf32, #tpu.memory_space<vmem>>, vector<1x16x256xf32>
      %1467 = vector.shape_cast %1466 : vector<1x16x256xf32> to vector<16x256xf32>
      %1468 = vector.extract_strided_slice %1435 {offsets = [5, 0], sizes = [1, 256], strides = [1, 1]} : vector<8x256xf32> to vector<1x256xf32>
      %1469 = vector.broadcast %1468 : vector<1x256xf32> to vector<16x256xf32>
      %1470 = arith.mulf %1467, %1469 : vector<16x256xf32>
      %1471 = arith.addf %1465, %1470 : vector<16x256xf32>
      %c6_787 = arith.constant 6 : index
      %c0_788 = arith.constant 0 : index
      %c0_789 = arith.constant 0 : index
      %1472 = vector.load %arg6[%c6_787, %c0_788, %c0_789] : memref<8x16x256xf32, #tpu.memory_space<vmem>>, vector<1x16x256xf32>
      %1473 = vector.shape_cast %1472 : vector<1x16x256xf32> to vector<16x256xf32>
      %1474 = vector.extract_strided_slice %1435 {offsets = [6, 0], sizes = [1, 256], strides = [1, 1]} : vector<8x256xf32> to vector<1x256xf32>
      %1475 = vector.broadcast %1474 : vector<1x256xf32> to vector<16x256xf32>
      %1476 = arith.mulf %1473, %1475 : vector<16x256xf32>
      %1477 = arith.addf %1471, %1476 : vector<16x256xf32>
      %c7_790 = arith.constant 7 : index
      %c0_791 = arith.constant 0 : index
      %c0_792 = arith.constant 0 : index
      %1478 = vector.load %arg6[%c7_790, %c0_791, %c0_792] : memref<8x16x256xf32, #tpu.memory_space<vmem>>, vector<1x16x256xf32>
      %1479 = vector.shape_cast %1478 : vector<1x16x256xf32> to vector<16x256xf32>
      %1480 = vector.extract_strided_slice %1435 {offsets = [7, 0], sizes = [1, 256], strides = [1, 1]} : vector<8x256xf32> to vector<1x256xf32>
      %1481 = vector.broadcast %1480 : vector<1x256xf32> to vector<16x256xf32>
      %1482 = arith.mulf %1479, %1481 : vector<16x256xf32>
      %1483 = arith.addf %1477, %1482 : vector<16x256xf32>
      %1484 = arith.subf %1333, %1483 : vector<16x256xf32>
      %cst_793 = arith.constant 0.000000e+00 : f32
      %cst_794 = arith.constant 1.000000e+00 : f32
      %1485 = vector.broadcast %cst_793 : f32 to vector<16x256xf32>
      %1486 = arith.maximumf %1485, %1484 : vector<16x256xf32>
      %1487 = vector.broadcast %cst_794 : f32 to vector<16x256xf32>
      %1488 = arith.minimumf %1487, %1486 : vector<16x256xf32>
      %cst_795 = arith.constant 2.000000e+00 : f32
      %1489 = vector.broadcast %cst_795 : f32 to vector<16x256xf32>
      %1490 = arith.mulf %1489, %1488 : vector<16x256xf32>
      %1491 = arith.subf %1490, %1333 : vector<16x256xf32>
      %c0_796 = arith.constant 0 : index
      %c0_797 = arith.constant 0 : index
      %c0_798 = arith.constant 0 : index
      %1492 = vector.load %arg7[%c0_796, %c0_797, %c0_798] : memref<16x8x256xf32, #tpu.memory_space<vmem>>, vector<1x8x256xf32>
      %1493 = vector.shape_cast %1492 : vector<1x8x256xf32> to vector<8x256xf32>
      %1494 = vector.extract_strided_slice %1491 {offsets = [0, 0], sizes = [1, 256], strides = [1, 1]} : vector<16x256xf32> to vector<1x256xf32>
      %1495 = vector.broadcast %1494 : vector<1x256xf32> to vector<8x256xf32>
      %1496 = arith.mulf %1493, %1495 : vector<8x256xf32>
      %1497 = arith.addf %246, %1496 : vector<8x256xf32>
      %c1_799 = arith.constant 1 : index
      %c0_800 = arith.constant 0 : index
      %c0_801 = arith.constant 0 : index
      %1498 = vector.load %arg7[%c1_799, %c0_800, %c0_801] : memref<16x8x256xf32, #tpu.memory_space<vmem>>, vector<1x8x256xf32>
      %1499 = vector.shape_cast %1498 : vector<1x8x256xf32> to vector<8x256xf32>
      %1500 = vector.extract_strided_slice %1491 {offsets = [1, 0], sizes = [1, 256], strides = [1, 1]} : vector<16x256xf32> to vector<1x256xf32>
      %1501 = vector.broadcast %1500 : vector<1x256xf32> to vector<8x256xf32>
      %1502 = arith.mulf %1499, %1501 : vector<8x256xf32>
      %1503 = arith.addf %1497, %1502 : vector<8x256xf32>
      %c2_802 = arith.constant 2 : index
      %c0_803 = arith.constant 0 : index
      %c0_804 = arith.constant 0 : index
      %1504 = vector.load %arg7[%c2_802, %c0_803, %c0_804] : memref<16x8x256xf32, #tpu.memory_space<vmem>>, vector<1x8x256xf32>
      %1505 = vector.shape_cast %1504 : vector<1x8x256xf32> to vector<8x256xf32>
      %1506 = vector.extract_strided_slice %1491 {offsets = [2, 0], sizes = [1, 256], strides = [1, 1]} : vector<16x256xf32> to vector<1x256xf32>
      %1507 = vector.broadcast %1506 : vector<1x256xf32> to vector<8x256xf32>
      %1508 = arith.mulf %1505, %1507 : vector<8x256xf32>
      %1509 = arith.addf %1503, %1508 : vector<8x256xf32>
      %c3_805 = arith.constant 3 : index
      %c0_806 = arith.constant 0 : index
      %c0_807 = arith.constant 0 : index
      %1510 = vector.load %arg7[%c3_805, %c0_806, %c0_807] : memref<16x8x256xf32, #tpu.memory_space<vmem>>, vector<1x8x256xf32>
      %1511 = vector.shape_cast %1510 : vector<1x8x256xf32> to vector<8x256xf32>
      %1512 = vector.extract_strided_slice %1491 {offsets = [3, 0], sizes = [1, 256], strides = [1, 1]} : vector<16x256xf32> to vector<1x256xf32>
      %1513 = vector.broadcast %1512 : vector<1x256xf32> to vector<8x256xf32>
      %1514 = arith.mulf %1511, %1513 : vector<8x256xf32>
      %1515 = arith.addf %1509, %1514 : vector<8x256xf32>
      %c4_808 = arith.constant 4 : index
      %c0_809 = arith.constant 0 : index
      %c0_810 = arith.constant 0 : index
      %1516 = vector.load %arg7[%c4_808, %c0_809, %c0_810] : memref<16x8x256xf32, #tpu.memory_space<vmem>>, vector<1x8x256xf32>
      %1517 = vector.shape_cast %1516 : vector<1x8x256xf32> to vector<8x256xf32>
      %1518 = vector.extract_strided_slice %1491 {offsets = [4, 0], sizes = [1, 256], strides = [1, 1]} : vector<16x256xf32> to vector<1x256xf32>
      %1519 = vector.broadcast %1518 : vector<1x256xf32> to vector<8x256xf32>
      %1520 = arith.mulf %1517, %1519 : vector<8x256xf32>
      %1521 = arith.addf %1515, %1520 : vector<8x256xf32>
      %c5_811 = arith.constant 5 : index
      %c0_812 = arith.constant 0 : index
      %c0_813 = arith.constant 0 : index
      %1522 = vector.load %arg7[%c5_811, %c0_812, %c0_813] : memref<16x8x256xf32, #tpu.memory_space<vmem>>, vector<1x8x256xf32>
      %1523 = vector.shape_cast %1522 : vector<1x8x256xf32> to vector<8x256xf32>
      %1524 = vector.extract_strided_slice %1491 {offsets = [5, 0], sizes = [1, 256], strides = [1, 1]} : vector<16x256xf32> to vector<1x256xf32>
      %1525 = vector.broadcast %1524 : vector<1x256xf32> to vector<8x256xf32>
      %1526 = arith.mulf %1523, %1525 : vector<8x256xf32>
      %1527 = arith.addf %1521, %1526 : vector<8x256xf32>
      %c6_814 = arith.constant 6 : index
      %c0_815 = arith.constant 0 : index
      %c0_816 = arith.constant 0 : index
      %1528 = vector.load %arg7[%c6_814, %c0_815, %c0_816] : memref<16x8x256xf32, #tpu.memory_space<vmem>>, vector<1x8x256xf32>
      %1529 = vector.shape_cast %1528 : vector<1x8x256xf32> to vector<8x256xf32>
      %1530 = vector.extract_strided_slice %1491 {offsets = [6, 0], sizes = [1, 256], strides = [1, 1]} : vector<16x256xf32> to vector<1x256xf32>
      %1531 = vector.broadcast %1530 : vector<1x256xf32> to vector<8x256xf32>
      %1532 = arith.mulf %1529, %1531 : vector<8x256xf32>
      %1533 = arith.addf %1527, %1532 : vector<8x256xf32>
      %c7_817 = arith.constant 7 : index
      %c0_818 = arith.constant 0 : index
      %c0_819 = arith.constant 0 : index
      %1534 = vector.load %arg7[%c7_817, %c0_818, %c0_819] : memref<16x8x256xf32, #tpu.memory_space<vmem>>, vector<1x8x256xf32>
      %1535 = vector.shape_cast %1534 : vector<1x8x256xf32> to vector<8x256xf32>
      %1536 = vector.extract_strided_slice %1491 {offsets = [7, 0], sizes = [1, 256], strides = [1, 1]} : vector<16x256xf32> to vector<1x256xf32>
      %1537 = vector.broadcast %1536 : vector<1x256xf32> to vector<8x256xf32>
      %1538 = arith.mulf %1535, %1537 : vector<8x256xf32>
      %1539 = arith.addf %1533, %1538 : vector<8x256xf32>
      %c8_820 = arith.constant 8 : index
      %c0_821 = arith.constant 0 : index
      %c0_822 = arith.constant 0 : index
      %1540 = vector.load %arg7[%c8_820, %c0_821, %c0_822] : memref<16x8x256xf32, #tpu.memory_space<vmem>>, vector<1x8x256xf32>
      %1541 = vector.shape_cast %1540 : vector<1x8x256xf32> to vector<8x256xf32>
      %1542 = vector.extract_strided_slice %1491 {offsets = [8, 0], sizes = [1, 256], strides = [1, 1]} : vector<16x256xf32> to vector<1x256xf32>
      %1543 = vector.broadcast %1542 : vector<1x256xf32> to vector<8x256xf32>
      %1544 = arith.mulf %1541, %1543 : vector<8x256xf32>
      %1545 = arith.addf %1539, %1544 : vector<8x256xf32>
      %c9_823 = arith.constant 9 : index
      %c0_824 = arith.constant 0 : index
      %c0_825 = arith.constant 0 : index
      %1546 = vector.load %arg7[%c9_823, %c0_824, %c0_825] : memref<16x8x256xf32, #tpu.memory_space<vmem>>, vector<1x8x256xf32>
      %1547 = vector.shape_cast %1546 : vector<1x8x256xf32> to vector<8x256xf32>
      %1548 = vector.extract_strided_slice %1491 {offsets = [9, 0], sizes = [1, 256], strides = [1, 1]} : vector<16x256xf32> to vector<1x256xf32>
      %1549 = vector.broadcast %1548 : vector<1x256xf32> to vector<8x256xf32>
      %1550 = arith.mulf %1547, %1549 : vector<8x256xf32>
      %1551 = arith.addf %1545, %1550 : vector<8x256xf32>
      %c10_826 = arith.constant 10 : index
      %c0_827 = arith.constant 0 : index
      %c0_828 = arith.constant 0 : index
      %1552 = vector.load %arg7[%c10_826, %c0_827, %c0_828] : memref<16x8x256xf32, #tpu.memory_space<vmem>>, vector<1x8x256xf32>
      %1553 = vector.shape_cast %1552 : vector<1x8x256xf32> to vector<8x256xf32>
      %1554 = vector.extract_strided_slice %1491 {offsets = [10, 0], sizes = [1, 256], strides = [1, 1]} : vector<16x256xf32> to vector<1x256xf32>
      %1555 = vector.broadcast %1554 : vector<1x256xf32> to vector<8x256xf32>
      %1556 = arith.mulf %1553, %1555 : vector<8x256xf32>
      %1557 = arith.addf %1551, %1556 : vector<8x256xf32>
      %c11_829 = arith.constant 11 : index
      %c0_830 = arith.constant 0 : index
      %c0_831 = arith.constant 0 : index
      %1558 = vector.load %arg7[%c11_829, %c0_830, %c0_831] : memref<16x8x256xf32, #tpu.memory_space<vmem>>, vector<1x8x256xf32>
      %1559 = vector.shape_cast %1558 : vector<1x8x256xf32> to vector<8x256xf32>
      %1560 = vector.extract_strided_slice %1491 {offsets = [11, 0], sizes = [1, 256], strides = [1, 1]} : vector<16x256xf32> to vector<1x256xf32>
      %1561 = vector.broadcast %1560 : vector<1x256xf32> to vector<8x256xf32>
      %1562 = arith.mulf %1559, %1561 : vector<8x256xf32>
      %1563 = arith.addf %1557, %1562 : vector<8x256xf32>
      %c12_832 = arith.constant 12 : index
      %c0_833 = arith.constant 0 : index
      %c0_834 = arith.constant 0 : index
      %1564 = vector.load %arg7[%c12_832, %c0_833, %c0_834] : memref<16x8x256xf32, #tpu.memory_space<vmem>>, vector<1x8x256xf32>
      %1565 = vector.shape_cast %1564 : vector<1x8x256xf32> to vector<8x256xf32>
      %1566 = vector.extract_strided_slice %1491 {offsets = [12, 0], sizes = [1, 256], strides = [1, 1]} : vector<16x256xf32> to vector<1x256xf32>
      %1567 = vector.broadcast %1566 : vector<1x256xf32> to vector<8x256xf32>
      %1568 = arith.mulf %1565, %1567 : vector<8x256xf32>
      %1569 = arith.addf %1563, %1568 : vector<8x256xf32>
      %c13_835 = arith.constant 13 : index
      %c0_836 = arith.constant 0 : index
      %c0_837 = arith.constant 0 : index
      %1570 = vector.load %arg7[%c13_835, %c0_836, %c0_837] : memref<16x8x256xf32, #tpu.memory_space<vmem>>, vector<1x8x256xf32>
      %1571 = vector.shape_cast %1570 : vector<1x8x256xf32> to vector<8x256xf32>
      %1572 = vector.extract_strided_slice %1491 {offsets = [13, 0], sizes = [1, 256], strides = [1, 1]} : vector<16x256xf32> to vector<1x256xf32>
      %1573 = vector.broadcast %1572 : vector<1x256xf32> to vector<8x256xf32>
      %1574 = arith.mulf %1571, %1573 : vector<8x256xf32>
      %1575 = arith.addf %1569, %1574 : vector<8x256xf32>
      %c14_838 = arith.constant 14 : index
      %c0_839 = arith.constant 0 : index
      %c0_840 = arith.constant 0 : index
      %1576 = vector.load %arg7[%c14_838, %c0_839, %c0_840] : memref<16x8x256xf32, #tpu.memory_space<vmem>>, vector<1x8x256xf32>
      %1577 = vector.shape_cast %1576 : vector<1x8x256xf32> to vector<8x256xf32>
      %1578 = vector.extract_strided_slice %1491 {offsets = [14, 0], sizes = [1, 256], strides = [1, 1]} : vector<16x256xf32> to vector<1x256xf32>
      %1579 = vector.broadcast %1578 : vector<1x256xf32> to vector<8x256xf32>
      %1580 = arith.mulf %1577, %1579 : vector<8x256xf32>
      %1581 = arith.addf %1575, %1580 : vector<8x256xf32>
      %c15_841 = arith.constant 15 : index
      %c0_842 = arith.constant 0 : index
      %c0_843 = arith.constant 0 : index
      %1582 = vector.load %arg7[%c15_841, %c0_842, %c0_843] : memref<16x8x256xf32, #tpu.memory_space<vmem>>, vector<1x8x256xf32>
      %1583 = vector.shape_cast %1582 : vector<1x8x256xf32> to vector<8x256xf32>
      %1584 = vector.extract_strided_slice %1491 {offsets = [15, 0], sizes = [1, 256], strides = [1, 1]} : vector<16x256xf32> to vector<1x256xf32>
      %1585 = vector.broadcast %1584 : vector<1x256xf32> to vector<8x256xf32>
      %1586 = arith.mulf %1583, %1585 : vector<8x256xf32>
      %1587 = arith.addf %1581, %1586 : vector<8x256xf32>
      %1588 = arith.addf %1435, %1587 : vector<8x256xf32>
      %cst_844 = arith.constant 0.000000e+00 : f32
      %1589 = vector.broadcast %cst_844 : f32 to vector<8x256xf32>
      %1590 = arith.maximumf %1588, %1589 : vector<8x256xf32>
      %c0_845 = arith.constant 0 : index
      %c0_846 = arith.constant 0 : index
      %c0_847 = arith.constant 0 : index
      %1591 = vector.load %arg6[%c0_845, %c0_846, %c0_847] : memref<8x16x256xf32, #tpu.memory_space<vmem>>, vector<1x16x256xf32>
      %1592 = vector.shape_cast %1591 : vector<1x16x256xf32> to vector<16x256xf32>
      %1593 = vector.extract_strided_slice %1590 {offsets = [0, 0], sizes = [1, 256], strides = [1, 1]} : vector<8x256xf32> to vector<1x256xf32>
      %1594 = vector.broadcast %1593 : vector<1x256xf32> to vector<16x256xf32>
      %1595 = arith.mulf %1592, %1594 : vector<16x256xf32>
      %1596 = arith.addf %249, %1595 : vector<16x256xf32>
      %c1_848 = arith.constant 1 : index
      %c0_849 = arith.constant 0 : index
      %c0_850 = arith.constant 0 : index
      %1597 = vector.load %arg6[%c1_848, %c0_849, %c0_850] : memref<8x16x256xf32, #tpu.memory_space<vmem>>, vector<1x16x256xf32>
      %1598 = vector.shape_cast %1597 : vector<1x16x256xf32> to vector<16x256xf32>
      %1599 = vector.extract_strided_slice %1590 {offsets = [1, 0], sizes = [1, 256], strides = [1, 1]} : vector<8x256xf32> to vector<1x256xf32>
      %1600 = vector.broadcast %1599 : vector<1x256xf32> to vector<16x256xf32>
      %1601 = arith.mulf %1598, %1600 : vector<16x256xf32>
      %1602 = arith.addf %1596, %1601 : vector<16x256xf32>
      %c2_851 = arith.constant 2 : index
      %c0_852 = arith.constant 0 : index
      %c0_853 = arith.constant 0 : index
      %1603 = vector.load %arg6[%c2_851, %c0_852, %c0_853] : memref<8x16x256xf32, #tpu.memory_space<vmem>>, vector<1x16x256xf32>
      %1604 = vector.shape_cast %1603 : vector<1x16x256xf32> to vector<16x256xf32>
      %1605 = vector.extract_strided_slice %1590 {offsets = [2, 0], sizes = [1, 256], strides = [1, 1]} : vector<8x256xf32> to vector<1x256xf32>
      %1606 = vector.broadcast %1605 : vector<1x256xf32> to vector<16x256xf32>
      %1607 = arith.mulf %1604, %1606 : vector<16x256xf32>
      %1608 = arith.addf %1602, %1607 : vector<16x256xf32>
      %c3_854 = arith.constant 3 : index
      %c0_855 = arith.constant 0 : index
      %c0_856 = arith.constant 0 : index
      %1609 = vector.load %arg6[%c3_854, %c0_855, %c0_856] : memref<8x16x256xf32, #tpu.memory_space<vmem>>, vector<1x16x256xf32>
      %1610 = vector.shape_cast %1609 : vector<1x16x256xf32> to vector<16x256xf32>
      %1611 = vector.extract_strided_slice %1590 {offsets = [3, 0], sizes = [1, 256], strides = [1, 1]} : vector<8x256xf32> to vector<1x256xf32>
      %1612 = vector.broadcast %1611 : vector<1x256xf32> to vector<16x256xf32>
      %1613 = arith.mulf %1610, %1612 : vector<16x256xf32>
      %1614 = arith.addf %1608, %1613 : vector<16x256xf32>
      %c4_857 = arith.constant 4 : index
      %c0_858 = arith.constant 0 : index
      %c0_859 = arith.constant 0 : index
      %1615 = vector.load %arg6[%c4_857, %c0_858, %c0_859] : memref<8x16x256xf32, #tpu.memory_space<vmem>>, vector<1x16x256xf32>
      %1616 = vector.shape_cast %1615 : vector<1x16x256xf32> to vector<16x256xf32>
      %1617 = vector.extract_strided_slice %1590 {offsets = [4, 0], sizes = [1, 256], strides = [1, 1]} : vector<8x256xf32> to vector<1x256xf32>
      %1618 = vector.broadcast %1617 : vector<1x256xf32> to vector<16x256xf32>
      %1619 = arith.mulf %1616, %1618 : vector<16x256xf32>
      %1620 = arith.addf %1614, %1619 : vector<16x256xf32>
      %c5_860 = arith.constant 5 : index
      %c0_861 = arith.constant 0 : index
      %c0_862 = arith.constant 0 : index
      %1621 = vector.load %arg6[%c5_860, %c0_861, %c0_862] : memref<8x16x256xf32, #tpu.memory_space<vmem>>, vector<1x16x256xf32>
      %1622 = vector.shape_cast %1621 : vector<1x16x256xf32> to vector<16x256xf32>
      %1623 = vector.extract_strided_slice %1590 {offsets = [5, 0], sizes = [1, 256], strides = [1, 1]} : vector<8x256xf32> to vector<1x256xf32>
      %1624 = vector.broadcast %1623 : vector<1x256xf32> to vector<16x256xf32>
      %1625 = arith.mulf %1622, %1624 : vector<16x256xf32>
      %1626 = arith.addf %1620, %1625 : vector<16x256xf32>
      %c6_863 = arith.constant 6 : index
      %c0_864 = arith.constant 0 : index
      %c0_865 = arith.constant 0 : index
      %1627 = vector.load %arg6[%c6_863, %c0_864, %c0_865] : memref<8x16x256xf32, #tpu.memory_space<vmem>>, vector<1x16x256xf32>
      %1628 = vector.shape_cast %1627 : vector<1x16x256xf32> to vector<16x256xf32>
      %1629 = vector.extract_strided_slice %1590 {offsets = [6, 0], sizes = [1, 256], strides = [1, 1]} : vector<8x256xf32> to vector<1x256xf32>
      %1630 = vector.broadcast %1629 : vector<1x256xf32> to vector<16x256xf32>
      %1631 = arith.mulf %1628, %1630 : vector<16x256xf32>
      %1632 = arith.addf %1626, %1631 : vector<16x256xf32>
      %c7_866 = arith.constant 7 : index
      %c0_867 = arith.constant 0 : index
      %c0_868 = arith.constant 0 : index
      %1633 = vector.load %arg6[%c7_866, %c0_867, %c0_868] : memref<8x16x256xf32, #tpu.memory_space<vmem>>, vector<1x16x256xf32>
      %1634 = vector.shape_cast %1633 : vector<1x16x256xf32> to vector<16x256xf32>
      %1635 = vector.extract_strided_slice %1590 {offsets = [7, 0], sizes = [1, 256], strides = [1, 1]} : vector<8x256xf32> to vector<1x256xf32>
      %1636 = vector.broadcast %1635 : vector<1x256xf32> to vector<16x256xf32>
      %1637 = arith.mulf %1634, %1636 : vector<16x256xf32>
      %1638 = arith.addf %1632, %1637 : vector<16x256xf32>
      %1639 = arith.subf %1488, %1638 : vector<16x256xf32>
      %cst_869 = arith.constant 0.000000e+00 : f32
      %cst_870 = arith.constant 1.000000e+00 : f32
      %1640 = vector.broadcast %cst_869 : f32 to vector<16x256xf32>
      %1641 = arith.maximumf %1640, %1639 : vector<16x256xf32>
      %1642 = vector.broadcast %cst_870 : f32 to vector<16x256xf32>
      %1643 = arith.minimumf %1642, %1641 : vector<16x256xf32>
      %cst_871 = arith.constant 2.000000e+00 : f32
      %1644 = vector.broadcast %cst_871 : f32 to vector<16x256xf32>
      %1645 = arith.mulf %1644, %1643 : vector<16x256xf32>
      %1646 = arith.subf %1645, %1488 : vector<16x256xf32>
      %c0_872 = arith.constant 0 : index
      %c0_873 = arith.constant 0 : index
      %c0_874 = arith.constant 0 : index
      %1647 = vector.load %arg7[%c0_872, %c0_873, %c0_874] : memref<16x8x256xf32, #tpu.memory_space<vmem>>, vector<1x8x256xf32>
      %1648 = vector.shape_cast %1647 : vector<1x8x256xf32> to vector<8x256xf32>
      %1649 = vector.extract_strided_slice %1646 {offsets = [0, 0], sizes = [1, 256], strides = [1, 1]} : vector<16x256xf32> to vector<1x256xf32>
      %1650 = vector.broadcast %1649 : vector<1x256xf32> to vector<8x256xf32>
      %1651 = arith.mulf %1648, %1650 : vector<8x256xf32>
      %1652 = arith.addf %246, %1651 : vector<8x256xf32>
      %c1_875 = arith.constant 1 : index
      %c0_876 = arith.constant 0 : index
      %c0_877 = arith.constant 0 : index
      %1653 = vector.load %arg7[%c1_875, %c0_876, %c0_877] : memref<16x8x256xf32, #tpu.memory_space<vmem>>, vector<1x8x256xf32>
      %1654 = vector.shape_cast %1653 : vector<1x8x256xf32> to vector<8x256xf32>
      %1655 = vector.extract_strided_slice %1646 {offsets = [1, 0], sizes = [1, 256], strides = [1, 1]} : vector<16x256xf32> to vector<1x256xf32>
      %1656 = vector.broadcast %1655 : vector<1x256xf32> to vector<8x256xf32>
      %1657 = arith.mulf %1654, %1656 : vector<8x256xf32>
      %1658 = arith.addf %1652, %1657 : vector<8x256xf32>
      %c2_878 = arith.constant 2 : index
      %c0_879 = arith.constant 0 : index
      %c0_880 = arith.constant 0 : index
      %1659 = vector.load %arg7[%c2_878, %c0_879, %c0_880] : memref<16x8x256xf32, #tpu.memory_space<vmem>>, vector<1x8x256xf32>
      %1660 = vector.shape_cast %1659 : vector<1x8x256xf32> to vector<8x256xf32>
      %1661 = vector.extract_strided_slice %1646 {offsets = [2, 0], sizes = [1, 256], strides = [1, 1]} : vector<16x256xf32> to vector<1x256xf32>
      %1662 = vector.broadcast %1661 : vector<1x256xf32> to vector<8x256xf32>
      %1663 = arith.mulf %1660, %1662 : vector<8x256xf32>
      %1664 = arith.addf %1658, %1663 : vector<8x256xf32>
      %c3_881 = arith.constant 3 : index
      %c0_882 = arith.constant 0 : index
      %c0_883 = arith.constant 0 : index
      %1665 = vector.load %arg7[%c3_881, %c0_882, %c0_883] : memref<16x8x256xf32, #tpu.memory_space<vmem>>, vector<1x8x256xf32>
      %1666 = vector.shape_cast %1665 : vector<1x8x256xf32> to vector<8x256xf32>
      %1667 = vector.extract_strided_slice %1646 {offsets = [3, 0], sizes = [1, 256], strides = [1, 1]} : vector<16x256xf32> to vector<1x256xf32>
      %1668 = vector.broadcast %1667 : vector<1x256xf32> to vector<8x256xf32>
      %1669 = arith.mulf %1666, %1668 : vector<8x256xf32>
      %1670 = arith.addf %1664, %1669 : vector<8x256xf32>
      %c4_884 = arith.constant 4 : index
      %c0_885 = arith.constant 0 : index
      %c0_886 = arith.constant 0 : index
      %1671 = vector.load %arg7[%c4_884, %c0_885, %c0_886] : memref<16x8x256xf32, #tpu.memory_space<vmem>>, vector<1x8x256xf32>
      %1672 = vector.shape_cast %1671 : vector<1x8x256xf32> to vector<8x256xf32>
      %1673 = vector.extract_strided_slice %1646 {offsets = [4, 0], sizes = [1, 256], strides = [1, 1]} : vector<16x256xf32> to vector<1x256xf32>
      %1674 = vector.broadcast %1673 : vector<1x256xf32> to vector<8x256xf32>
      %1675 = arith.mulf %1672, %1674 : vector<8x256xf32>
      %1676 = arith.addf %1670, %1675 : vector<8x256xf32>
      %c5_887 = arith.constant 5 : index
      %c0_888 = arith.constant 0 : index
      %c0_889 = arith.constant 0 : index
      %1677 = vector.load %arg7[%c5_887, %c0_888, %c0_889] : memref<16x8x256xf32, #tpu.memory_space<vmem>>, vector<1x8x256xf32>
      %1678 = vector.shape_cast %1677 : vector<1x8x256xf32> to vector<8x256xf32>
      %1679 = vector.extract_strided_slice %1646 {offsets = [5, 0], sizes = [1, 256], strides = [1, 1]} : vector<16x256xf32> to vector<1x256xf32>
      %1680 = vector.broadcast %1679 : vector<1x256xf32> to vector<8x256xf32>
      %1681 = arith.mulf %1678, %1680 : vector<8x256xf32>
      %1682 = arith.addf %1676, %1681 : vector<8x256xf32>
      %c6_890 = arith.constant 6 : index
      %c0_891 = arith.constant 0 : index
      %c0_892 = arith.constant 0 : index
      %1683 = vector.load %arg7[%c6_890, %c0_891, %c0_892] : memref<16x8x256xf32, #tpu.memory_space<vmem>>, vector<1x8x256xf32>
      %1684 = vector.shape_cast %1683 : vector<1x8x256xf32> to vector<8x256xf32>
      %1685 = vector.extract_strided_slice %1646 {offsets = [6, 0], sizes = [1, 256], strides = [1, 1]} : vector<16x256xf32> to vector<1x256xf32>
      %1686 = vector.broadcast %1685 : vector<1x256xf32> to vector<8x256xf32>
      %1687 = arith.mulf %1684, %1686 : vector<8x256xf32>
      %1688 = arith.addf %1682, %1687 : vector<8x256xf32>
      %c7_893 = arith.constant 7 : index
      %c0_894 = arith.constant 0 : index
      %c0_895 = arith.constant 0 : index
      %1689 = vector.load %arg7[%c7_893, %c0_894, %c0_895] : memref<16x8x256xf32, #tpu.memory_space<vmem>>, vector<1x8x256xf32>
      %1690 = vector.shape_cast %1689 : vector<1x8x256xf32> to vector<8x256xf32>
      %1691 = vector.extract_strided_slice %1646 {offsets = [7, 0], sizes = [1, 256], strides = [1, 1]} : vector<16x256xf32> to vector<1x256xf32>
      %1692 = vector.broadcast %1691 : vector<1x256xf32> to vector<8x256xf32>
      %1693 = arith.mulf %1690, %1692 : vector<8x256xf32>
      %1694 = arith.addf %1688, %1693 : vector<8x256xf32>
      %c8_896 = arith.constant 8 : index
      %c0_897 = arith.constant 0 : index
      %c0_898 = arith.constant 0 : index
      %1695 = vector.load %arg7[%c8_896, %c0_897, %c0_898] : memref<16x8x256xf32, #tpu.memory_space<vmem>>, vector<1x8x256xf32>
      %1696 = vector.shape_cast %1695 : vector<1x8x256xf32> to vector<8x256xf32>
      %1697 = vector.extract_strided_slice %1646 {offsets = [8, 0], sizes = [1, 256], strides = [1, 1]} : vector<16x256xf32> to vector<1x256xf32>
      %1698 = vector.broadcast %1697 : vector<1x256xf32> to vector<8x256xf32>
      %1699 = arith.mulf %1696, %1698 : vector<8x256xf32>
      %1700 = arith.addf %1694, %1699 : vector<8x256xf32>
      %c9_899 = arith.constant 9 : index
      %c0_900 = arith.constant 0 : index
      %c0_901 = arith.constant 0 : index
      %1701 = vector.load %arg7[%c9_899, %c0_900, %c0_901] : memref<16x8x256xf32, #tpu.memory_space<vmem>>, vector<1x8x256xf32>
      %1702 = vector.shape_cast %1701 : vector<1x8x256xf32> to vector<8x256xf32>
      %1703 = vector.extract_strided_slice %1646 {offsets = [9, 0], sizes = [1, 256], strides = [1, 1]} : vector<16x256xf32> to vector<1x256xf32>
      %1704 = vector.broadcast %1703 : vector<1x256xf32> to vector<8x256xf32>
      %1705 = arith.mulf %1702, %1704 : vector<8x256xf32>
      %1706 = arith.addf %1700, %1705 : vector<8x256xf32>
      %c10_902 = arith.constant 10 : index
      %c0_903 = arith.constant 0 : index
      %c0_904 = arith.constant 0 : index
      %1707 = vector.load %arg7[%c10_902, %c0_903, %c0_904] : memref<16x8x256xf32, #tpu.memory_space<vmem>>, vector<1x8x256xf32>
      %1708 = vector.shape_cast %1707 : vector<1x8x256xf32> to vector<8x256xf32>
      %1709 = vector.extract_strided_slice %1646 {offsets = [10, 0], sizes = [1, 256], strides = [1, 1]} : vector<16x256xf32> to vector<1x256xf32>
      %1710 = vector.broadcast %1709 : vector<1x256xf32> to vector<8x256xf32>
      %1711 = arith.mulf %1708, %1710 : vector<8x256xf32>
      %1712 = arith.addf %1706, %1711 : vector<8x256xf32>
      %c11_905 = arith.constant 11 : index
      %c0_906 = arith.constant 0 : index
      %c0_907 = arith.constant 0 : index
      %1713 = vector.load %arg7[%c11_905, %c0_906, %c0_907] : memref<16x8x256xf32, #tpu.memory_space<vmem>>, vector<1x8x256xf32>
      %1714 = vector.shape_cast %1713 : vector<1x8x256xf32> to vector<8x256xf32>
      %1715 = vector.extract_strided_slice %1646 {offsets = [11, 0], sizes = [1, 256], strides = [1, 1]} : vector<16x256xf32> to vector<1x256xf32>
      %1716 = vector.broadcast %1715 : vector<1x256xf32> to vector<8x256xf32>
      %1717 = arith.mulf %1714, %1716 : vector<8x256xf32>
      %1718 = arith.addf %1712, %1717 : vector<8x256xf32>
      %c12_908 = arith.constant 12 : index
      %c0_909 = arith.constant 0 : index
      %c0_910 = arith.constant 0 : index
      %1719 = vector.load %arg7[%c12_908, %c0_909, %c0_910] : memref<16x8x256xf32, #tpu.memory_space<vmem>>, vector<1x8x256xf32>
      %1720 = vector.shape_cast %1719 : vector<1x8x256xf32> to vector<8x256xf32>
      %1721 = vector.extract_strided_slice %1646 {offsets = [12, 0], sizes = [1, 256], strides = [1, 1]} : vector<16x256xf32> to vector<1x256xf32>
      %1722 = vector.broadcast %1721 : vector<1x256xf32> to vector<8x256xf32>
      %1723 = arith.mulf %1720, %1722 : vector<8x256xf32>
      %1724 = arith.addf %1718, %1723 : vector<8x256xf32>
      %c13_911 = arith.constant 13 : index
      %c0_912 = arith.constant 0 : index
      %c0_913 = arith.constant 0 : index
      %1725 = vector.load %arg7[%c13_911, %c0_912, %c0_913] : memref<16x8x256xf32, #tpu.memory_space<vmem>>, vector<1x8x256xf32>
      %1726 = vector.shape_cast %1725 : vector<1x8x256xf32> to vector<8x256xf32>
      %1727 = vector.extract_strided_slice %1646 {offsets = [13, 0], sizes = [1, 256], strides = [1, 1]} : vector<16x256xf32> to vector<1x256xf32>
      %1728 = vector.broadcast %1727 : vector<1x256xf32> to vector<8x256xf32>
      %1729 = arith.mulf %1726, %1728 : vector<8x256xf32>
      %1730 = arith.addf %1724, %1729 : vector<8x256xf32>
      %c14_914 = arith.constant 14 : index
      %c0_915 = arith.constant 0 : index
      %c0_916 = arith.constant 0 : index
      %1731 = vector.load %arg7[%c14_914, %c0_915, %c0_916] : memref<16x8x256xf32, #tpu.memory_space<vmem>>, vector<1x8x256xf32>
      %1732 = vector.shape_cast %1731 : vector<1x8x256xf32> to vector<8x256xf32>
      %1733 = vector.extract_strided_slice %1646 {offsets = [14, 0], sizes = [1, 256], strides = [1, 1]} : vector<16x256xf32> to vector<1x256xf32>
      %1734 = vector.broadcast %1733 : vector<1x256xf32> to vector<8x256xf32>
      %1735 = arith.mulf %1732, %1734 : vector<8x256xf32>
      %1736 = arith.addf %1730, %1735 : vector<8x256xf32>
      %c15_917 = arith.constant 15 : index
      %c0_918 = arith.constant 0 : index
      %c0_919 = arith.constant 0 : index
      %1737 = vector.load %arg7[%c15_917, %c0_918, %c0_919] : memref<16x8x256xf32, #tpu.memory_space<vmem>>, vector<1x8x256xf32>
      %1738 = vector.shape_cast %1737 : vector<1x8x256xf32> to vector<8x256xf32>
      %1739 = vector.extract_strided_slice %1646 {offsets = [15, 0], sizes = [1, 256], strides = [1, 1]} : vector<16x256xf32> to vector<1x256xf32>
      %1740 = vector.broadcast %1739 : vector<1x256xf32> to vector<8x256xf32>
      %1741 = arith.mulf %1738, %1740 : vector<8x256xf32>
      %1742 = arith.addf %1736, %1741 : vector<8x256xf32>
      %1743 = arith.addf %1590, %1742 : vector<8x256xf32>
      %cst_920 = arith.constant 0.000000e+00 : f32
      %1744 = vector.broadcast %cst_920 : f32 to vector<8x256xf32>
      %1745 = arith.maximumf %1743, %1744 : vector<8x256xf32>
      %c0_921 = arith.constant 0 : index
      %c0_922 = arith.constant 0 : index
      %c0_923 = arith.constant 0 : index
      %1746 = vector.load %arg6[%c0_921, %c0_922, %c0_923] : memref<8x16x256xf32, #tpu.memory_space<vmem>>, vector<1x16x256xf32>
      %1747 = vector.shape_cast %1746 : vector<1x16x256xf32> to vector<16x256xf32>
      %1748 = vector.extract_strided_slice %1745 {offsets = [0, 0], sizes = [1, 256], strides = [1, 1]} : vector<8x256xf32> to vector<1x256xf32>
      %1749 = vector.broadcast %1748 : vector<1x256xf32> to vector<16x256xf32>
      %1750 = arith.mulf %1747, %1749 : vector<16x256xf32>
      %1751 = arith.addf %249, %1750 : vector<16x256xf32>
      %c1_924 = arith.constant 1 : index
      %c0_925 = arith.constant 0 : index
      %c0_926 = arith.constant 0 : index
      %1752 = vector.load %arg6[%c1_924, %c0_925, %c0_926] : memref<8x16x256xf32, #tpu.memory_space<vmem>>, vector<1x16x256xf32>
      %1753 = vector.shape_cast %1752 : vector<1x16x256xf32> to vector<16x256xf32>
      %1754 = vector.extract_strided_slice %1745 {offsets = [1, 0], sizes = [1, 256], strides = [1, 1]} : vector<8x256xf32> to vector<1x256xf32>
      %1755 = vector.broadcast %1754 : vector<1x256xf32> to vector<16x256xf32>
      %1756 = arith.mulf %1753, %1755 : vector<16x256xf32>
      %1757 = arith.addf %1751, %1756 : vector<16x256xf32>
      %c2_927 = arith.constant 2 : index
      %c0_928 = arith.constant 0 : index
      %c0_929 = arith.constant 0 : index
      %1758 = vector.load %arg6[%c2_927, %c0_928, %c0_929] : memref<8x16x256xf32, #tpu.memory_space<vmem>>, vector<1x16x256xf32>
      %1759 = vector.shape_cast %1758 : vector<1x16x256xf32> to vector<16x256xf32>
      %1760 = vector.extract_strided_slice %1745 {offsets = [2, 0], sizes = [1, 256], strides = [1, 1]} : vector<8x256xf32> to vector<1x256xf32>
      %1761 = vector.broadcast %1760 : vector<1x256xf32> to vector<16x256xf32>
      %1762 = arith.mulf %1759, %1761 : vector<16x256xf32>
      %1763 = arith.addf %1757, %1762 : vector<16x256xf32>
      %c3_930 = arith.constant 3 : index
      %c0_931 = arith.constant 0 : index
      %c0_932 = arith.constant 0 : index
      %1764 = vector.load %arg6[%c3_930, %c0_931, %c0_932] : memref<8x16x256xf32, #tpu.memory_space<vmem>>, vector<1x16x256xf32>
      %1765 = vector.shape_cast %1764 : vector<1x16x256xf32> to vector<16x256xf32>
      %1766 = vector.extract_strided_slice %1745 {offsets = [3, 0], sizes = [1, 256], strides = [1, 1]} : vector<8x256xf32> to vector<1x256xf32>
      %1767 = vector.broadcast %1766 : vector<1x256xf32> to vector<16x256xf32>
      %1768 = arith.mulf %1765, %1767 : vector<16x256xf32>
      %1769 = arith.addf %1763, %1768 : vector<16x256xf32>
      %c4_933 = arith.constant 4 : index
      %c0_934 = arith.constant 0 : index
      %c0_935 = arith.constant 0 : index
      %1770 = vector.load %arg6[%c4_933, %c0_934, %c0_935] : memref<8x16x256xf32, #tpu.memory_space<vmem>>, vector<1x16x256xf32>
      %1771 = vector.shape_cast %1770 : vector<1x16x256xf32> to vector<16x256xf32>
      %1772 = vector.extract_strided_slice %1745 {offsets = [4, 0], sizes = [1, 256], strides = [1, 1]} : vector<8x256xf32> to vector<1x256xf32>
      %1773 = vector.broadcast %1772 : vector<1x256xf32> to vector<16x256xf32>
      %1774 = arith.mulf %1771, %1773 : vector<16x256xf32>
      %1775 = arith.addf %1769, %1774 : vector<16x256xf32>
      %c5_936 = arith.constant 5 : index
      %c0_937 = arith.constant 0 : index
      %c0_938 = arith.constant 0 : index
      %1776 = vector.load %arg6[%c5_936, %c0_937, %c0_938] : memref<8x16x256xf32, #tpu.memory_space<vmem>>, vector<1x16x256xf32>
      %1777 = vector.shape_cast %1776 : vector<1x16x256xf32> to vector<16x256xf32>
      %1778 = vector.extract_strided_slice %1745 {offsets = [5, 0], sizes = [1, 256], strides = [1, 1]} : vector<8x256xf32> to vector<1x256xf32>
      %1779 = vector.broadcast %1778 : vector<1x256xf32> to vector<16x256xf32>
      %1780 = arith.mulf %1777, %1779 : vector<16x256xf32>
      %1781 = arith.addf %1775, %1780 : vector<16x256xf32>
      %c6_939 = arith.constant 6 : index
      %c0_940 = arith.constant 0 : index
      %c0_941 = arith.constant 0 : index
      %1782 = vector.load %arg6[%c6_939, %c0_940, %c0_941] : memref<8x16x256xf32, #tpu.memory_space<vmem>>, vector<1x16x256xf32>
      %1783 = vector.shape_cast %1782 : vector<1x16x256xf32> to vector<16x256xf32>
      %1784 = vector.extract_strided_slice %1745 {offsets = [6, 0], sizes = [1, 256], strides = [1, 1]} : vector<8x256xf32> to vector<1x256xf32>
      %1785 = vector.broadcast %1784 : vector<1x256xf32> to vector<16x256xf32>
      %1786 = arith.mulf %1783, %1785 : vector<16x256xf32>
      %1787 = arith.addf %1781, %1786 : vector<16x256xf32>
      %c7_942 = arith.constant 7 : index
      %c0_943 = arith.constant 0 : index
      %c0_944 = arith.constant 0 : index
      %1788 = vector.load %arg6[%c7_942, %c0_943, %c0_944] : memref<8x16x256xf32, #tpu.memory_space<vmem>>, vector<1x16x256xf32>
      %1789 = vector.shape_cast %1788 : vector<1x16x256xf32> to vector<16x256xf32>
      %1790 = vector.extract_strided_slice %1745 {offsets = [7, 0], sizes = [1, 256], strides = [1, 1]} : vector<8x256xf32> to vector<1x256xf32>
      %1791 = vector.broadcast %1790 : vector<1x256xf32> to vector<16x256xf32>
      %1792 = arith.mulf %1789, %1791 : vector<16x256xf32>
      %1793 = arith.addf %1787, %1792 : vector<16x256xf32>
      %1794 = arith.subf %1643, %1793 : vector<16x256xf32>
      %cst_945 = arith.constant 0.000000e+00 : f32
      %cst_946 = arith.constant 1.000000e+00 : f32
      %1795 = vector.broadcast %cst_945 : f32 to vector<16x256xf32>
      %1796 = arith.maximumf %1795, %1794 : vector<16x256xf32>
      %1797 = vector.broadcast %cst_946 : f32 to vector<16x256xf32>
      %1798 = arith.minimumf %1797, %1796 : vector<16x256xf32>
      %cst_947 = arith.constant 2.000000e+00 : f32
      %1799 = vector.broadcast %cst_947 : f32 to vector<16x256xf32>
      %1800 = arith.mulf %1799, %1798 : vector<16x256xf32>
      %1801 = arith.subf %1800, %1643 : vector<16x256xf32>
      %c0_948 = arith.constant 0 : index
      %c0_949 = arith.constant 0 : index
      %c0_950 = arith.constant 0 : index
      %1802 = vector.load %arg7[%c0_948, %c0_949, %c0_950] : memref<16x8x256xf32, #tpu.memory_space<vmem>>, vector<1x8x256xf32>
      %1803 = vector.shape_cast %1802 : vector<1x8x256xf32> to vector<8x256xf32>
      %1804 = vector.extract_strided_slice %1801 {offsets = [0, 0], sizes = [1, 256], strides = [1, 1]} : vector<16x256xf32> to vector<1x256xf32>
      %1805 = vector.broadcast %1804 : vector<1x256xf32> to vector<8x256xf32>
      %1806 = arith.mulf %1803, %1805 : vector<8x256xf32>
      %1807 = arith.addf %246, %1806 : vector<8x256xf32>
      %c1_951 = arith.constant 1 : index
      %c0_952 = arith.constant 0 : index
      %c0_953 = arith.constant 0 : index
      %1808 = vector.load %arg7[%c1_951, %c0_952, %c0_953] : memref<16x8x256xf32, #tpu.memory_space<vmem>>, vector<1x8x256xf32>
      %1809 = vector.shape_cast %1808 : vector<1x8x256xf32> to vector<8x256xf32>
      %1810 = vector.extract_strided_slice %1801 {offsets = [1, 0], sizes = [1, 256], strides = [1, 1]} : vector<16x256xf32> to vector<1x256xf32>
      %1811 = vector.broadcast %1810 : vector<1x256xf32> to vector<8x256xf32>
      %1812 = arith.mulf %1809, %1811 : vector<8x256xf32>
      %1813 = arith.addf %1807, %1812 : vector<8x256xf32>
      %c2_954 = arith.constant 2 : index
      %c0_955 = arith.constant 0 : index
      %c0_956 = arith.constant 0 : index
      %1814 = vector.load %arg7[%c2_954, %c0_955, %c0_956] : memref<16x8x256xf32, #tpu.memory_space<vmem>>, vector<1x8x256xf32>
      %1815 = vector.shape_cast %1814 : vector<1x8x256xf32> to vector<8x256xf32>
      %1816 = vector.extract_strided_slice %1801 {offsets = [2, 0], sizes = [1, 256], strides = [1, 1]} : vector<16x256xf32> to vector<1x256xf32>
      %1817 = vector.broadcast %1816 : vector<1x256xf32> to vector<8x256xf32>
      %1818 = arith.mulf %1815, %1817 : vector<8x256xf32>
      %1819 = arith.addf %1813, %1818 : vector<8x256xf32>
      %c3_957 = arith.constant 3 : index
      %c0_958 = arith.constant 0 : index
      %c0_959 = arith.constant 0 : index
      %1820 = vector.load %arg7[%c3_957, %c0_958, %c0_959] : memref<16x8x256xf32, #tpu.memory_space<vmem>>, vector<1x8x256xf32>
      %1821 = vector.shape_cast %1820 : vector<1x8x256xf32> to vector<8x256xf32>
      %1822 = vector.extract_strided_slice %1801 {offsets = [3, 0], sizes = [1, 256], strides = [1, 1]} : vector<16x256xf32> to vector<1x256xf32>
      %1823 = vector.broadcast %1822 : vector<1x256xf32> to vector<8x256xf32>
      %1824 = arith.mulf %1821, %1823 : vector<8x256xf32>
      %1825 = arith.addf %1819, %1824 : vector<8x256xf32>
      %c4_960 = arith.constant 4 : index
      %c0_961 = arith.constant 0 : index
      %c0_962 = arith.constant 0 : index
      %1826 = vector.load %arg7[%c4_960, %c0_961, %c0_962] : memref<16x8x256xf32, #tpu.memory_space<vmem>>, vector<1x8x256xf32>
      %1827 = vector.shape_cast %1826 : vector<1x8x256xf32> to vector<8x256xf32>
      %1828 = vector.extract_strided_slice %1801 {offsets = [4, 0], sizes = [1, 256], strides = [1, 1]} : vector<16x256xf32> to vector<1x256xf32>
      %1829 = vector.broadcast %1828 : vector<1x256xf32> to vector<8x256xf32>
      %1830 = arith.mulf %1827, %1829 : vector<8x256xf32>
      %1831 = arith.addf %1825, %1830 : vector<8x256xf32>
      %c5_963 = arith.constant 5 : index
      %c0_964 = arith.constant 0 : index
      %c0_965 = arith.constant 0 : index
      %1832 = vector.load %arg7[%c5_963, %c0_964, %c0_965] : memref<16x8x256xf32, #tpu.memory_space<vmem>>, vector<1x8x256xf32>
      %1833 = vector.shape_cast %1832 : vector<1x8x256xf32> to vector<8x256xf32>
      %1834 = vector.extract_strided_slice %1801 {offsets = [5, 0], sizes = [1, 256], strides = [1, 1]} : vector<16x256xf32> to vector<1x256xf32>
      %1835 = vector.broadcast %1834 : vector<1x256xf32> to vector<8x256xf32>
      %1836 = arith.mulf %1833, %1835 : vector<8x256xf32>
      %1837 = arith.addf %1831, %1836 : vector<8x256xf32>
      %c6_966 = arith.constant 6 : index
      %c0_967 = arith.constant 0 : index
      %c0_968 = arith.constant 0 : index
      %1838 = vector.load %arg7[%c6_966, %c0_967, %c0_968] : memref<16x8x256xf32, #tpu.memory_space<vmem>>, vector<1x8x256xf32>
      %1839 = vector.shape_cast %1838 : vector<1x8x256xf32> to vector<8x256xf32>
      %1840 = vector.extract_strided_slice %1801 {offsets = [6, 0], sizes = [1, 256], strides = [1, 1]} : vector<16x256xf32> to vector<1x256xf32>
      %1841 = vector.broadcast %1840 : vector<1x256xf32> to vector<8x256xf32>
      %1842 = arith.mulf %1839, %1841 : vector<8x256xf32>
      %1843 = arith.addf %1837, %1842 : vector<8x256xf32>
      %c7_969 = arith.constant 7 : index
      %c0_970 = arith.constant 0 : index
      %c0_971 = arith.constant 0 : index
      %1844 = vector.load %arg7[%c7_969, %c0_970, %c0_971] : memref<16x8x256xf32, #tpu.memory_space<vmem>>, vector<1x8x256xf32>
      %1845 = vector.shape_cast %1844 : vector<1x8x256xf32> to vector<8x256xf32>
      %1846 = vector.extract_strided_slice %1801 {offsets = [7, 0], sizes = [1, 256], strides = [1, 1]} : vector<16x256xf32> to vector<1x256xf32>
      %1847 = vector.broadcast %1846 : vector<1x256xf32> to vector<8x256xf32>
      %1848 = arith.mulf %1845, %1847 : vector<8x256xf32>
      %1849 = arith.addf %1843, %1848 : vector<8x256xf32>
      %c8_972 = arith.constant 8 : index
      %c0_973 = arith.constant 0 : index
      %c0_974 = arith.constant 0 : index
      %1850 = vector.load %arg7[%c8_972, %c0_973, %c0_974] : memref<16x8x256xf32, #tpu.memory_space<vmem>>, vector<1x8x256xf32>
      %1851 = vector.shape_cast %1850 : vector<1x8x256xf32> to vector<8x256xf32>
      %1852 = vector.extract_strided_slice %1801 {offsets = [8, 0], sizes = [1, 256], strides = [1, 1]} : vector<16x256xf32> to vector<1x256xf32>
      %1853 = vector.broadcast %1852 : vector<1x256xf32> to vector<8x256xf32>
      %1854 = arith.mulf %1851, %1853 : vector<8x256xf32>
      %1855 = arith.addf %1849, %1854 : vector<8x256xf32>
      %c9_975 = arith.constant 9 : index
      %c0_976 = arith.constant 0 : index
      %c0_977 = arith.constant 0 : index
      %1856 = vector.load %arg7[%c9_975, %c0_976, %c0_977] : memref<16x8x256xf32, #tpu.memory_space<vmem>>, vector<1x8x256xf32>
      %1857 = vector.shape_cast %1856 : vector<1x8x256xf32> to vector<8x256xf32>
      %1858 = vector.extract_strided_slice %1801 {offsets = [9, 0], sizes = [1, 256], strides = [1, 1]} : vector<16x256xf32> to vector<1x256xf32>
      %1859 = vector.broadcast %1858 : vector<1x256xf32> to vector<8x256xf32>
      %1860 = arith.mulf %1857, %1859 : vector<8x256xf32>
      %1861 = arith.addf %1855, %1860 : vector<8x256xf32>
      %c10_978 = arith.constant 10 : index
      %c0_979 = arith.constant 0 : index
      %c0_980 = arith.constant 0 : index
      %1862 = vector.load %arg7[%c10_978, %c0_979, %c0_980] : memref<16x8x256xf32, #tpu.memory_space<vmem>>, vector<1x8x256xf32>
      %1863 = vector.shape_cast %1862 : vector<1x8x256xf32> to vector<8x256xf32>
      %1864 = vector.extract_strided_slice %1801 {offsets = [10, 0], sizes = [1, 256], strides = [1, 1]} : vector<16x256xf32> to vector<1x256xf32>
      %1865 = vector.broadcast %1864 : vector<1x256xf32> to vector<8x256xf32>
      %1866 = arith.mulf %1863, %1865 : vector<8x256xf32>
      %1867 = arith.addf %1861, %1866 : vector<8x256xf32>
      %c11_981 = arith.constant 11 : index
      %c0_982 = arith.constant 0 : index
      %c0_983 = arith.constant 0 : index
      %1868 = vector.load %arg7[%c11_981, %c0_982, %c0_983] : memref<16x8x256xf32, #tpu.memory_space<vmem>>, vector<1x8x256xf32>
      %1869 = vector.shape_cast %1868 : vector<1x8x256xf32> to vector<8x256xf32>
      %1870 = vector.extract_strided_slice %1801 {offsets = [11, 0], sizes = [1, 256], strides = [1, 1]} : vector<16x256xf32> to vector<1x256xf32>
      %1871 = vector.broadcast %1870 : vector<1x256xf32> to vector<8x256xf32>
      %1872 = arith.mulf %1869, %1871 : vector<8x256xf32>
      %1873 = arith.addf %1867, %1872 : vector<8x256xf32>
      %c12_984 = arith.constant 12 : index
      %c0_985 = arith.constant 0 : index
      %c0_986 = arith.constant 0 : index
      %1874 = vector.load %arg7[%c12_984, %c0_985, %c0_986] : memref<16x8x256xf32, #tpu.memory_space<vmem>>, vector<1x8x256xf32>
      %1875 = vector.shape_cast %1874 : vector<1x8x256xf32> to vector<8x256xf32>
      %1876 = vector.extract_strided_slice %1801 {offsets = [12, 0], sizes = [1, 256], strides = [1, 1]} : vector<16x256xf32> to vector<1x256xf32>
      %1877 = vector.broadcast %1876 : vector<1x256xf32> to vector<8x256xf32>
      %1878 = arith.mulf %1875, %1877 : vector<8x256xf32>
      %1879 = arith.addf %1873, %1878 : vector<8x256xf32>
      %c13_987 = arith.constant 13 : index
      %c0_988 = arith.constant 0 : index
      %c0_989 = arith.constant 0 : index
      %1880 = vector.load %arg7[%c13_987, %c0_988, %c0_989] : memref<16x8x256xf32, #tpu.memory_space<vmem>>, vector<1x8x256xf32>
      %1881 = vector.shape_cast %1880 : vector<1x8x256xf32> to vector<8x256xf32>
      %1882 = vector.extract_strided_slice %1801 {offsets = [13, 0], sizes = [1, 256], strides = [1, 1]} : vector<16x256xf32> to vector<1x256xf32>
      %1883 = vector.broadcast %1882 : vector<1x256xf32> to vector<8x256xf32>
      %1884 = arith.mulf %1881, %1883 : vector<8x256xf32>
      %1885 = arith.addf %1879, %1884 : vector<8x256xf32>
      %c14_990 = arith.constant 14 : index
      %c0_991 = arith.constant 0 : index
      %c0_992 = arith.constant 0 : index
      %1886 = vector.load %arg7[%c14_990, %c0_991, %c0_992] : memref<16x8x256xf32, #tpu.memory_space<vmem>>, vector<1x8x256xf32>
      %1887 = vector.shape_cast %1886 : vector<1x8x256xf32> to vector<8x256xf32>
      %1888 = vector.extract_strided_slice %1801 {offsets = [14, 0], sizes = [1, 256], strides = [1, 1]} : vector<16x256xf32> to vector<1x256xf32>
      %1889 = vector.broadcast %1888 : vector<1x256xf32> to vector<8x256xf32>
      %1890 = arith.mulf %1887, %1889 : vector<8x256xf32>
      %1891 = arith.addf %1885, %1890 : vector<8x256xf32>
      %c15_993 = arith.constant 15 : index
      %c0_994 = arith.constant 0 : index
      %c0_995 = arith.constant 0 : index
      %1892 = vector.load %arg7[%c15_993, %c0_994, %c0_995] : memref<16x8x256xf32, #tpu.memory_space<vmem>>, vector<1x8x256xf32>
      %1893 = vector.shape_cast %1892 : vector<1x8x256xf32> to vector<8x256xf32>
      %1894 = vector.extract_strided_slice %1801 {offsets = [15, 0], sizes = [1, 256], strides = [1, 1]} : vector<16x256xf32> to vector<1x256xf32>
      %1895 = vector.broadcast %1894 : vector<1x256xf32> to vector<8x256xf32>
      %1896 = arith.mulf %1893, %1895 : vector<8x256xf32>
      %1897 = arith.addf %1891, %1896 : vector<8x256xf32>
      %1898 = arith.addf %1745, %1897 : vector<8x256xf32>
      %cst_996 = arith.constant 0.000000e+00 : f32
      %1899 = vector.broadcast %cst_996 : f32 to vector<8x256xf32>
      %1900 = arith.maximumf %1898, %1899 : vector<8x256xf32>
      %c0_997 = arith.constant 0 : index
      %c0_998 = arith.constant 0 : index
      %c0_999 = arith.constant 0 : index
      %1901 = vector.load %arg6[%c0_997, %c0_998, %c0_999] : memref<8x16x256xf32, #tpu.memory_space<vmem>>, vector<1x16x256xf32>
      %1902 = vector.shape_cast %1901 : vector<1x16x256xf32> to vector<16x256xf32>
      %1903 = vector.extract_strided_slice %1900 {offsets = [0, 0], sizes = [1, 256], strides = [1, 1]} : vector<8x256xf32> to vector<1x256xf32>
      %1904 = vector.broadcast %1903 : vector<1x256xf32> to vector<16x256xf32>
      %1905 = arith.mulf %1902, %1904 : vector<16x256xf32>
      %1906 = arith.addf %249, %1905 : vector<16x256xf32>
      %c1_1000 = arith.constant 1 : index
      %c0_1001 = arith.constant 0 : index
      %c0_1002 = arith.constant 0 : index
      %1907 = vector.load %arg6[%c1_1000, %c0_1001, %c0_1002] : memref<8x16x256xf32, #tpu.memory_space<vmem>>, vector<1x16x256xf32>
      %1908 = vector.shape_cast %1907 : vector<1x16x256xf32> to vector<16x256xf32>
      %1909 = vector.extract_strided_slice %1900 {offsets = [1, 0], sizes = [1, 256], strides = [1, 1]} : vector<8x256xf32> to vector<1x256xf32>
      %1910 = vector.broadcast %1909 : vector<1x256xf32> to vector<16x256xf32>
      %1911 = arith.mulf %1908, %1910 : vector<16x256xf32>
      %1912 = arith.addf %1906, %1911 : vector<16x256xf32>
      %c2_1003 = arith.constant 2 : index
      %c0_1004 = arith.constant 0 : index
      %c0_1005 = arith.constant 0 : index
      %1913 = vector.load %arg6[%c2_1003, %c0_1004, %c0_1005] : memref<8x16x256xf32, #tpu.memory_space<vmem>>, vector<1x16x256xf32>
      %1914 = vector.shape_cast %1913 : vector<1x16x256xf32> to vector<16x256xf32>
      %1915 = vector.extract_strided_slice %1900 {offsets = [2, 0], sizes = [1, 256], strides = [1, 1]} : vector<8x256xf32> to vector<1x256xf32>
      %1916 = vector.broadcast %1915 : vector<1x256xf32> to vector<16x256xf32>
      %1917 = arith.mulf %1914, %1916 : vector<16x256xf32>
      %1918 = arith.addf %1912, %1917 : vector<16x256xf32>
      %c3_1006 = arith.constant 3 : index
      %c0_1007 = arith.constant 0 : index
      %c0_1008 = arith.constant 0 : index
      %1919 = vector.load %arg6[%c3_1006, %c0_1007, %c0_1008] : memref<8x16x256xf32, #tpu.memory_space<vmem>>, vector<1x16x256xf32>
      %1920 = vector.shape_cast %1919 : vector<1x16x256xf32> to vector<16x256xf32>
      %1921 = vector.extract_strided_slice %1900 {offsets = [3, 0], sizes = [1, 256], strides = [1, 1]} : vector<8x256xf32> to vector<1x256xf32>
      %1922 = vector.broadcast %1921 : vector<1x256xf32> to vector<16x256xf32>
      %1923 = arith.mulf %1920, %1922 : vector<16x256xf32>
      %1924 = arith.addf %1918, %1923 : vector<16x256xf32>
      %c4_1009 = arith.constant 4 : index
      %c0_1010 = arith.constant 0 : index
      %c0_1011 = arith.constant 0 : index
      %1925 = vector.load %arg6[%c4_1009, %c0_1010, %c0_1011] : memref<8x16x256xf32, #tpu.memory_space<vmem>>, vector<1x16x256xf32>
      %1926 = vector.shape_cast %1925 : vector<1x16x256xf32> to vector<16x256xf32>
      %1927 = vector.extract_strided_slice %1900 {offsets = [4, 0], sizes = [1, 256], strides = [1, 1]} : vector<8x256xf32> to vector<1x256xf32>
      %1928 = vector.broadcast %1927 : vector<1x256xf32> to vector<16x256xf32>
      %1929 = arith.mulf %1926, %1928 : vector<16x256xf32>
      %1930 = arith.addf %1924, %1929 : vector<16x256xf32>
      %c5_1012 = arith.constant 5 : index
      %c0_1013 = arith.constant 0 : index
      %c0_1014 = arith.constant 0 : index
      %1931 = vector.load %arg6[%c5_1012, %c0_1013, %c0_1014] : memref<8x16x256xf32, #tpu.memory_space<vmem>>, vector<1x16x256xf32>
      %1932 = vector.shape_cast %1931 : vector<1x16x256xf32> to vector<16x256xf32>
      %1933 = vector.extract_strided_slice %1900 {offsets = [5, 0], sizes = [1, 256], strides = [1, 1]} : vector<8x256xf32> to vector<1x256xf32>
      %1934 = vector.broadcast %1933 : vector<1x256xf32> to vector<16x256xf32>
      %1935 = arith.mulf %1932, %1934 : vector<16x256xf32>
      %1936 = arith.addf %1930, %1935 : vector<16x256xf32>
      %c6_1015 = arith.constant 6 : index
      %c0_1016 = arith.constant 0 : index
      %c0_1017 = arith.constant 0 : index
      %1937 = vector.load %arg6[%c6_1015, %c0_1016, %c0_1017] : memref<8x16x256xf32, #tpu.memory_space<vmem>>, vector<1x16x256xf32>
      %1938 = vector.shape_cast %1937 : vector<1x16x256xf32> to vector<16x256xf32>
      %1939 = vector.extract_strided_slice %1900 {offsets = [6, 0], sizes = [1, 256], strides = [1, 1]} : vector<8x256xf32> to vector<1x256xf32>
      %1940 = vector.broadcast %1939 : vector<1x256xf32> to vector<16x256xf32>
      %1941 = arith.mulf %1938, %1940 : vector<16x256xf32>
      %1942 = arith.addf %1936, %1941 : vector<16x256xf32>
      %c7_1018 = arith.constant 7 : index
      %c0_1019 = arith.constant 0 : index
      %c0_1020 = arith.constant 0 : index
      %1943 = vector.load %arg6[%c7_1018, %c0_1019, %c0_1020] : memref<8x16x256xf32, #tpu.memory_space<vmem>>, vector<1x16x256xf32>
      %1944 = vector.shape_cast %1943 : vector<1x16x256xf32> to vector<16x256xf32>
      %1945 = vector.extract_strided_slice %1900 {offsets = [7, 0], sizes = [1, 256], strides = [1, 1]} : vector<8x256xf32> to vector<1x256xf32>
      %1946 = vector.broadcast %1945 : vector<1x256xf32> to vector<16x256xf32>
      %1947 = arith.mulf %1944, %1946 : vector<16x256xf32>
      %1948 = arith.addf %1942, %1947 : vector<16x256xf32>
      %1949 = arith.subf %1798, %1948 : vector<16x256xf32>
      %cst_1021 = arith.constant 0.000000e+00 : f32
      %cst_1022 = arith.constant 1.000000e+00 : f32
      %1950 = vector.broadcast %cst_1021 : f32 to vector<16x256xf32>
      %1951 = arith.maximumf %1950, %1949 : vector<16x256xf32>
      %1952 = vector.broadcast %cst_1022 : f32 to vector<16x256xf32>
      %1953 = arith.minimumf %1952, %1951 : vector<16x256xf32>
      %cst_1023 = arith.constant 2.000000e+00 : f32
      %1954 = vector.broadcast %cst_1023 : f32 to vector<16x256xf32>
      %1955 = arith.mulf %1954, %1953 : vector<16x256xf32>
      %1956 = arith.subf %1955, %1798 : vector<16x256xf32>
      %c0_1024 = arith.constant 0 : index
      %c0_1025 = arith.constant 0 : index
      %c0_1026 = arith.constant 0 : index
      %1957 = vector.load %arg7[%c0_1024, %c0_1025, %c0_1026] : memref<16x8x256xf32, #tpu.memory_space<vmem>>, vector<1x8x256xf32>
      %1958 = vector.shape_cast %1957 : vector<1x8x256xf32> to vector<8x256xf32>
      %1959 = vector.extract_strided_slice %1956 {offsets = [0, 0], sizes = [1, 256], strides = [1, 1]} : vector<16x256xf32> to vector<1x256xf32>
      %1960 = vector.broadcast %1959 : vector<1x256xf32> to vector<8x256xf32>
      %1961 = arith.mulf %1958, %1960 : vector<8x256xf32>
      %1962 = arith.addf %246, %1961 : vector<8x256xf32>
      %c1_1027 = arith.constant 1 : index
      %c0_1028 = arith.constant 0 : index
      %c0_1029 = arith.constant 0 : index
      %1963 = vector.load %arg7[%c1_1027, %c0_1028, %c0_1029] : memref<16x8x256xf32, #tpu.memory_space<vmem>>, vector<1x8x256xf32>
      %1964 = vector.shape_cast %1963 : vector<1x8x256xf32> to vector<8x256xf32>
      %1965 = vector.extract_strided_slice %1956 {offsets = [1, 0], sizes = [1, 256], strides = [1, 1]} : vector<16x256xf32> to vector<1x256xf32>
      %1966 = vector.broadcast %1965 : vector<1x256xf32> to vector<8x256xf32>
      %1967 = arith.mulf %1964, %1966 : vector<8x256xf32>
      %1968 = arith.addf %1962, %1967 : vector<8x256xf32>
      %c2_1030 = arith.constant 2 : index
      %c0_1031 = arith.constant 0 : index
      %c0_1032 = arith.constant 0 : index
      %1969 = vector.load %arg7[%c2_1030, %c0_1031, %c0_1032] : memref<16x8x256xf32, #tpu.memory_space<vmem>>, vector<1x8x256xf32>
      %1970 = vector.shape_cast %1969 : vector<1x8x256xf32> to vector<8x256xf32>
      %1971 = vector.extract_strided_slice %1956 {offsets = [2, 0], sizes = [1, 256], strides = [1, 1]} : vector<16x256xf32> to vector<1x256xf32>
      %1972 = vector.broadcast %1971 : vector<1x256xf32> to vector<8x256xf32>
      %1973 = arith.mulf %1970, %1972 : vector<8x256xf32>
      %1974 = arith.addf %1968, %1973 : vector<8x256xf32>
      %c3_1033 = arith.constant 3 : index
      %c0_1034 = arith.constant 0 : index
      %c0_1035 = arith.constant 0 : index
      %1975 = vector.load %arg7[%c3_1033, %c0_1034, %c0_1035] : memref<16x8x256xf32, #tpu.memory_space<vmem>>, vector<1x8x256xf32>
      %1976 = vector.shape_cast %1975 : vector<1x8x256xf32> to vector<8x256xf32>
      %1977 = vector.extract_strided_slice %1956 {offsets = [3, 0], sizes = [1, 256], strides = [1, 1]} : vector<16x256xf32> to vector<1x256xf32>
      %1978 = vector.broadcast %1977 : vector<1x256xf32> to vector<8x256xf32>
      %1979 = arith.mulf %1976, %1978 : vector<8x256xf32>
      %1980 = arith.addf %1974, %1979 : vector<8x256xf32>
      %c4_1036 = arith.constant 4 : index
      %c0_1037 = arith.constant 0 : index
      %c0_1038 = arith.constant 0 : index
      %1981 = vector.load %arg7[%c4_1036, %c0_1037, %c0_1038] : memref<16x8x256xf32, #tpu.memory_space<vmem>>, vector<1x8x256xf32>
      %1982 = vector.shape_cast %1981 : vector<1x8x256xf32> to vector<8x256xf32>
      %1983 = vector.extract_strided_slice %1956 {offsets = [4, 0], sizes = [1, 256], strides = [1, 1]} : vector<16x256xf32> to vector<1x256xf32>
      %1984 = vector.broadcast %1983 : vector<1x256xf32> to vector<8x256xf32>
      %1985 = arith.mulf %1982, %1984 : vector<8x256xf32>
      %1986 = arith.addf %1980, %1985 : vector<8x256xf32>
      %c5_1039 = arith.constant 5 : index
      %c0_1040 = arith.constant 0 : index
      %c0_1041 = arith.constant 0 : index
      %1987 = vector.load %arg7[%c5_1039, %c0_1040, %c0_1041] : memref<16x8x256xf32, #tpu.memory_space<vmem>>, vector<1x8x256xf32>
      %1988 = vector.shape_cast %1987 : vector<1x8x256xf32> to vector<8x256xf32>
      %1989 = vector.extract_strided_slice %1956 {offsets = [5, 0], sizes = [1, 256], strides = [1, 1]} : vector<16x256xf32> to vector<1x256xf32>
      %1990 = vector.broadcast %1989 : vector<1x256xf32> to vector<8x256xf32>
      %1991 = arith.mulf %1988, %1990 : vector<8x256xf32>
      %1992 = arith.addf %1986, %1991 : vector<8x256xf32>
      %c6_1042 = arith.constant 6 : index
      %c0_1043 = arith.constant 0 : index
      %c0_1044 = arith.constant 0 : index
      %1993 = vector.load %arg7[%c6_1042, %c0_1043, %c0_1044] : memref<16x8x256xf32, #tpu.memory_space<vmem>>, vector<1x8x256xf32>
      %1994 = vector.shape_cast %1993 : vector<1x8x256xf32> to vector<8x256xf32>
      %1995 = vector.extract_strided_slice %1956 {offsets = [6, 0], sizes = [1, 256], strides = [1, 1]} : vector<16x256xf32> to vector<1x256xf32>
      %1996 = vector.broadcast %1995 : vector<1x256xf32> to vector<8x256xf32>
      %1997 = arith.mulf %1994, %1996 : vector<8x256xf32>
      %1998 = arith.addf %1992, %1997 : vector<8x256xf32>
      %c7_1045 = arith.constant 7 : index
      %c0_1046 = arith.constant 0 : index
      %c0_1047 = arith.constant 0 : index
      %1999 = vector.load %arg7[%c7_1045, %c0_1046, %c0_1047] : memref<16x8x256xf32, #tpu.memory_space<vmem>>, vector<1x8x256xf32>
      %2000 = vector.shape_cast %1999 : vector<1x8x256xf32> to vector<8x256xf32>
      %2001 = vector.extract_strided_slice %1956 {offsets = [7, 0], sizes = [1, 256], strides = [1, 1]} : vector<16x256xf32> to vector<1x256xf32>
      %2002 = vector.broadcast %2001 : vector<1x256xf32> to vector<8x256xf32>
      %2003 = arith.mulf %2000, %2002 : vector<8x256xf32>
      %2004 = arith.addf %1998, %2003 : vector<8x256xf32>
      %c8_1048 = arith.constant 8 : index
      %c0_1049 = arith.constant 0 : index
      %c0_1050 = arith.constant 0 : index
      %2005 = vector.load %arg7[%c8_1048, %c0_1049, %c0_1050] : memref<16x8x256xf32, #tpu.memory_space<vmem>>, vector<1x8x256xf32>
      %2006 = vector.shape_cast %2005 : vector<1x8x256xf32> to vector<8x256xf32>
      %2007 = vector.extract_strided_slice %1956 {offsets = [8, 0], sizes = [1, 256], strides = [1, 1]} : vector<16x256xf32> to vector<1x256xf32>
      %2008 = vector.broadcast %2007 : vector<1x256xf32> to vector<8x256xf32>
      %2009 = arith.mulf %2006, %2008 : vector<8x256xf32>
      %2010 = arith.addf %2004, %2009 : vector<8x256xf32>
      %c9_1051 = arith.constant 9 : index
      %c0_1052 = arith.constant 0 : index
      %c0_1053 = arith.constant 0 : index
      %2011 = vector.load %arg7[%c9_1051, %c0_1052, %c0_1053] : memref<16x8x256xf32, #tpu.memory_space<vmem>>, vector<1x8x256xf32>
      %2012 = vector.shape_cast %2011 : vector<1x8x256xf32> to vector<8x256xf32>
      %2013 = vector.extract_strided_slice %1956 {offsets = [9, 0], sizes = [1, 256], strides = [1, 1]} : vector<16x256xf32> to vector<1x256xf32>
      %2014 = vector.broadcast %2013 : vector<1x256xf32> to vector<8x256xf32>
      %2015 = arith.mulf %2012, %2014 : vector<8x256xf32>
      %2016 = arith.addf %2010, %2015 : vector<8x256xf32>
      %c10_1054 = arith.constant 10 : index
      %c0_1055 = arith.constant 0 : index
      %c0_1056 = arith.constant 0 : index
      %2017 = vector.load %arg7[%c10_1054, %c0_1055, %c0_1056] : memref<16x8x256xf32, #tpu.memory_space<vmem>>, vector<1x8x256xf32>
      %2018 = vector.shape_cast %2017 : vector<1x8x256xf32> to vector<8x256xf32>
      %2019 = vector.extract_strided_slice %1956 {offsets = [10, 0], sizes = [1, 256], strides = [1, 1]} : vector<16x256xf32> to vector<1x256xf32>
      %2020 = vector.broadcast %2019 : vector<1x256xf32> to vector<8x256xf32>
      %2021 = arith.mulf %2018, %2020 : vector<8x256xf32>
      %2022 = arith.addf %2016, %2021 : vector<8x256xf32>
      %c11_1057 = arith.constant 11 : index
      %c0_1058 = arith.constant 0 : index
      %c0_1059 = arith.constant 0 : index
      %2023 = vector.load %arg7[%c11_1057, %c0_1058, %c0_1059] : memref<16x8x256xf32, #tpu.memory_space<vmem>>, vector<1x8x256xf32>
      %2024 = vector.shape_cast %2023 : vector<1x8x256xf32> to vector<8x256xf32>
      %2025 = vector.extract_strided_slice %1956 {offsets = [11, 0], sizes = [1, 256], strides = [1, 1]} : vector<16x256xf32> to vector<1x256xf32>
      %2026 = vector.broadcast %2025 : vector<1x256xf32> to vector<8x256xf32>
      %2027 = arith.mulf %2024, %2026 : vector<8x256xf32>
      %2028 = arith.addf %2022, %2027 : vector<8x256xf32>
      %c12_1060 = arith.constant 12 : index
      %c0_1061 = arith.constant 0 : index
      %c0_1062 = arith.constant 0 : index
      %2029 = vector.load %arg7[%c12_1060, %c0_1061, %c0_1062] : memref<16x8x256xf32, #tpu.memory_space<vmem>>, vector<1x8x256xf32>
      %2030 = vector.shape_cast %2029 : vector<1x8x256xf32> to vector<8x256xf32>
      %2031 = vector.extract_strided_slice %1956 {offsets = [12, 0], sizes = [1, 256], strides = [1, 1]} : vector<16x256xf32> to vector<1x256xf32>
      %2032 = vector.broadcast %2031 : vector<1x256xf32> to vector<8x256xf32>
      %2033 = arith.mulf %2030, %2032 : vector<8x256xf32>
      %2034 = arith.addf %2028, %2033 : vector<8x256xf32>
      %c13_1063 = arith.constant 13 : index
      %c0_1064 = arith.constant 0 : index
      %c0_1065 = arith.constant 0 : index
      %2035 = vector.load %arg7[%c13_1063, %c0_1064, %c0_1065] : memref<16x8x256xf32, #tpu.memory_space<vmem>>, vector<1x8x256xf32>
      %2036 = vector.shape_cast %2035 : vector<1x8x256xf32> to vector<8x256xf32>
      %2037 = vector.extract_strided_slice %1956 {offsets = [13, 0], sizes = [1, 256], strides = [1, 1]} : vector<16x256xf32> to vector<1x256xf32>
      %2038 = vector.broadcast %2037 : vector<1x256xf32> to vector<8x256xf32>
      %2039 = arith.mulf %2036, %2038 : vector<8x256xf32>
      %2040 = arith.addf %2034, %2039 : vector<8x256xf32>
      %c14_1066 = arith.constant 14 : index
      %c0_1067 = arith.constant 0 : index
      %c0_1068 = arith.constant 0 : index
      %2041 = vector.load %arg7[%c14_1066, %c0_1067, %c0_1068] : memref<16x8x256xf32, #tpu.memory_space<vmem>>, vector<1x8x256xf32>
      %2042 = vector.shape_cast %2041 : vector<1x8x256xf32> to vector<8x256xf32>
      %2043 = vector.extract_strided_slice %1956 {offsets = [14, 0], sizes = [1, 256], strides = [1, 1]} : vector<16x256xf32> to vector<1x256xf32>
      %2044 = vector.broadcast %2043 : vector<1x256xf32> to vector<8x256xf32>
      %2045 = arith.mulf %2042, %2044 : vector<8x256xf32>
      %2046 = arith.addf %2040, %2045 : vector<8x256xf32>
      %c15_1069 = arith.constant 15 : index
      %c0_1070 = arith.constant 0 : index
      %c0_1071 = arith.constant 0 : index
      %2047 = vector.load %arg7[%c15_1069, %c0_1070, %c0_1071] : memref<16x8x256xf32, #tpu.memory_space<vmem>>, vector<1x8x256xf32>
      %2048 = vector.shape_cast %2047 : vector<1x8x256xf32> to vector<8x256xf32>
      %2049 = vector.extract_strided_slice %1956 {offsets = [15, 0], sizes = [1, 256], strides = [1, 1]} : vector<16x256xf32> to vector<1x256xf32>
      %2050 = vector.broadcast %2049 : vector<1x256xf32> to vector<8x256xf32>
      %2051 = arith.mulf %2048, %2050 : vector<8x256xf32>
      %2052 = arith.addf %2046, %2051 : vector<8x256xf32>
      %2053 = arith.addf %1900, %2052 : vector<8x256xf32>
      %cst_1072 = arith.constant 0.000000e+00 : f32
      %2054 = vector.broadcast %cst_1072 : f32 to vector<8x256xf32>
      %2055 = arith.maximumf %2053, %2054 : vector<8x256xf32>
      %c0_1073 = arith.constant 0 : index
      %c0_1074 = arith.constant 0 : index
      %c0_1075 = arith.constant 0 : index
      %2056 = vector.load %arg6[%c0_1073, %c0_1074, %c0_1075] : memref<8x16x256xf32, #tpu.memory_space<vmem>>, vector<1x16x256xf32>
      %2057 = vector.shape_cast %2056 : vector<1x16x256xf32> to vector<16x256xf32>
      %2058 = vector.extract_strided_slice %2055 {offsets = [0, 0], sizes = [1, 256], strides = [1, 1]} : vector<8x256xf32> to vector<1x256xf32>
      %2059 = vector.broadcast %2058 : vector<1x256xf32> to vector<16x256xf32>
      %2060 = arith.mulf %2057, %2059 : vector<16x256xf32>
      %2061 = arith.addf %249, %2060 : vector<16x256xf32>
      %c1_1076 = arith.constant 1 : index
      %c0_1077 = arith.constant 0 : index
      %c0_1078 = arith.constant 0 : index
      %2062 = vector.load %arg6[%c1_1076, %c0_1077, %c0_1078] : memref<8x16x256xf32, #tpu.memory_space<vmem>>, vector<1x16x256xf32>
      %2063 = vector.shape_cast %2062 : vector<1x16x256xf32> to vector<16x256xf32>
      %2064 = vector.extract_strided_slice %2055 {offsets = [1, 0], sizes = [1, 256], strides = [1, 1]} : vector<8x256xf32> to vector<1x256xf32>
      %2065 = vector.broadcast %2064 : vector<1x256xf32> to vector<16x256xf32>
      %2066 = arith.mulf %2063, %2065 : vector<16x256xf32>
      %2067 = arith.addf %2061, %2066 : vector<16x256xf32>
      %c2_1079 = arith.constant 2 : index
      %c0_1080 = arith.constant 0 : index
      %c0_1081 = arith.constant 0 : index
      %2068 = vector.load %arg6[%c2_1079, %c0_1080, %c0_1081] : memref<8x16x256xf32, #tpu.memory_space<vmem>>, vector<1x16x256xf32>
      %2069 = vector.shape_cast %2068 : vector<1x16x256xf32> to vector<16x256xf32>
      %2070 = vector.extract_strided_slice %2055 {offsets = [2, 0], sizes = [1, 256], strides = [1, 1]} : vector<8x256xf32> to vector<1x256xf32>
      %2071 = vector.broadcast %2070 : vector<1x256xf32> to vector<16x256xf32>
      %2072 = arith.mulf %2069, %2071 : vector<16x256xf32>
      %2073 = arith.addf %2067, %2072 : vector<16x256xf32>
      %c3_1082 = arith.constant 3 : index
      %c0_1083 = arith.constant 0 : index
      %c0_1084 = arith.constant 0 : index
      %2074 = vector.load %arg6[%c3_1082, %c0_1083, %c0_1084] : memref<8x16x256xf32, #tpu.memory_space<vmem>>, vector<1x16x256xf32>
      %2075 = vector.shape_cast %2074 : vector<1x16x256xf32> to vector<16x256xf32>
      %2076 = vector.extract_strided_slice %2055 {offsets = [3, 0], sizes = [1, 256], strides = [1, 1]} : vector<8x256xf32> to vector<1x256xf32>
      %2077 = vector.broadcast %2076 : vector<1x256xf32> to vector<16x256xf32>
      %2078 = arith.mulf %2075, %2077 : vector<16x256xf32>
      %2079 = arith.addf %2073, %2078 : vector<16x256xf32>
      %c4_1085 = arith.constant 4 : index
      %c0_1086 = arith.constant 0 : index
      %c0_1087 = arith.constant 0 : index
      %2080 = vector.load %arg6[%c4_1085, %c0_1086, %c0_1087] : memref<8x16x256xf32, #tpu.memory_space<vmem>>, vector<1x16x256xf32>
      %2081 = vector.shape_cast %2080 : vector<1x16x256xf32> to vector<16x256xf32>
      %2082 = vector.extract_strided_slice %2055 {offsets = [4, 0], sizes = [1, 256], strides = [1, 1]} : vector<8x256xf32> to vector<1x256xf32>
      %2083 = vector.broadcast %2082 : vector<1x256xf32> to vector<16x256xf32>
      %2084 = arith.mulf %2081, %2083 : vector<16x256xf32>
      %2085 = arith.addf %2079, %2084 : vector<16x256xf32>
      %c5_1088 = arith.constant 5 : index
      %c0_1089 = arith.constant 0 : index
      %c0_1090 = arith.constant 0 : index
      %2086 = vector.load %arg6[%c5_1088, %c0_1089, %c0_1090] : memref<8x16x256xf32, #tpu.memory_space<vmem>>, vector<1x16x256xf32>
      %2087 = vector.shape_cast %2086 : vector<1x16x256xf32> to vector<16x256xf32>
      %2088 = vector.extract_strided_slice %2055 {offsets = [5, 0], sizes = [1, 256], strides = [1, 1]} : vector<8x256xf32> to vector<1x256xf32>
      %2089 = vector.broadcast %2088 : vector<1x256xf32> to vector<16x256xf32>
      %2090 = arith.mulf %2087, %2089 : vector<16x256xf32>
      %2091 = arith.addf %2085, %2090 : vector<16x256xf32>
      %c6_1091 = arith.constant 6 : index
      %c0_1092 = arith.constant 0 : index
      %c0_1093 = arith.constant 0 : index
      %2092 = vector.load %arg6[%c6_1091, %c0_1092, %c0_1093] : memref<8x16x256xf32, #tpu.memory_space<vmem>>, vector<1x16x256xf32>
      %2093 = vector.shape_cast %2092 : vector<1x16x256xf32> to vector<16x256xf32>
      %2094 = vector.extract_strided_slice %2055 {offsets = [6, 0], sizes = [1, 256], strides = [1, 1]} : vector<8x256xf32> to vector<1x256xf32>
      %2095 = vector.broadcast %2094 : vector<1x256xf32> to vector<16x256xf32>
      %2096 = arith.mulf %2093, %2095 : vector<16x256xf32>
      %2097 = arith.addf %2091, %2096 : vector<16x256xf32>
      %c7_1094 = arith.constant 7 : index
      %c0_1095 = arith.constant 0 : index
      %c0_1096 = arith.constant 0 : index
      %2098 = vector.load %arg6[%c7_1094, %c0_1095, %c0_1096] : memref<8x16x256xf32, #tpu.memory_space<vmem>>, vector<1x16x256xf32>
      %2099 = vector.shape_cast %2098 : vector<1x16x256xf32> to vector<16x256xf32>
      %2100 = vector.extract_strided_slice %2055 {offsets = [7, 0], sizes = [1, 256], strides = [1, 1]} : vector<8x256xf32> to vector<1x256xf32>
      %2101 = vector.broadcast %2100 : vector<1x256xf32> to vector<16x256xf32>
      %2102 = arith.mulf %2099, %2101 : vector<16x256xf32>
      %2103 = arith.addf %2097, %2102 : vector<16x256xf32>
      %2104 = arith.subf %1953, %2103 : vector<16x256xf32>
      %cst_1097 = arith.constant 0.000000e+00 : f32
      %cst_1098 = arith.constant 1.000000e+00 : f32
      %2105 = vector.broadcast %cst_1097 : f32 to vector<16x256xf32>
      %2106 = arith.maximumf %2105, %2104 : vector<16x256xf32>
      %2107 = vector.broadcast %cst_1098 : f32 to vector<16x256xf32>
      %2108 = arith.minimumf %2107, %2106 : vector<16x256xf32>
      %cst_1099 = arith.constant 2.000000e+00 : f32
      %2109 = vector.broadcast %cst_1099 : f32 to vector<16x256xf32>
      %2110 = arith.mulf %2109, %2108 : vector<16x256xf32>
      %2111 = arith.subf %2110, %1953 : vector<16x256xf32>
      scf.yield %2108, %2111, %2055 : vector<16x256xf32>, vector<16x256xf32>, vector<8x256xf32>
    }
    %c0_187 = arith.constant 0 : index
    %c0_188 = arith.constant 0 : index
    %c0_189 = arith.constant 0 : index
    %254 = vector.load %arg7[%c0_187, %c0_188, %c0_189] : memref<16x8x256xf32, #tpu.memory_space<vmem>>, vector<1x8x256xf32>
    %255 = vector.shape_cast %254 : vector<1x8x256xf32> to vector<8x256xf32>
    %256 = vector.extract_strided_slice %253#1 {offsets = [0, 0], sizes = [1, 256], strides = [1, 1]} : vector<16x256xf32> to vector<1x256xf32>
    %257 = vector.broadcast %256 : vector<1x256xf32> to vector<8x256xf32>
    %258 = arith.mulf %255, %257 : vector<8x256xf32>
    %259 = arith.addf %246, %258 : vector<8x256xf32>
    %c1_190 = arith.constant 1 : index
    %c0_191 = arith.constant 0 : index
    %c0_192 = arith.constant 0 : index
    %260 = vector.load %arg7[%c1_190, %c0_191, %c0_192] : memref<16x8x256xf32, #tpu.memory_space<vmem>>, vector<1x8x256xf32>
    %261 = vector.shape_cast %260 : vector<1x8x256xf32> to vector<8x256xf32>
    %262 = vector.extract_strided_slice %253#1 {offsets = [1, 0], sizes = [1, 256], strides = [1, 1]} : vector<16x256xf32> to vector<1x256xf32>
    %263 = vector.broadcast %262 : vector<1x256xf32> to vector<8x256xf32>
    %264 = arith.mulf %261, %263 : vector<8x256xf32>
    %265 = arith.addf %259, %264 : vector<8x256xf32>
    %c2_193 = arith.constant 2 : index
    %c0_194 = arith.constant 0 : index
    %c0_195 = arith.constant 0 : index
    %266 = vector.load %arg7[%c2_193, %c0_194, %c0_195] : memref<16x8x256xf32, #tpu.memory_space<vmem>>, vector<1x8x256xf32>
    %267 = vector.shape_cast %266 : vector<1x8x256xf32> to vector<8x256xf32>
    %268 = vector.extract_strided_slice %253#1 {offsets = [2, 0], sizes = [1, 256], strides = [1, 1]} : vector<16x256xf32> to vector<1x256xf32>
    %269 = vector.broadcast %268 : vector<1x256xf32> to vector<8x256xf32>
    %270 = arith.mulf %267, %269 : vector<8x256xf32>
    %271 = arith.addf %265, %270 : vector<8x256xf32>
    %c3_196 = arith.constant 3 : index
    %c0_197 = arith.constant 0 : index
    %c0_198 = arith.constant 0 : index
    %272 = vector.load %arg7[%c3_196, %c0_197, %c0_198] : memref<16x8x256xf32, #tpu.memory_space<vmem>>, vector<1x8x256xf32>
    %273 = vector.shape_cast %272 : vector<1x8x256xf32> to vector<8x256xf32>
    %274 = vector.extract_strided_slice %253#1 {offsets = [3, 0], sizes = [1, 256], strides = [1, 1]} : vector<16x256xf32> to vector<1x256xf32>
    %275 = vector.broadcast %274 : vector<1x256xf32> to vector<8x256xf32>
    %276 = arith.mulf %273, %275 : vector<8x256xf32>
    %277 = arith.addf %271, %276 : vector<8x256xf32>
    %c4_199 = arith.constant 4 : index
    %c0_200 = arith.constant 0 : index
    %c0_201 = arith.constant 0 : index
    %278 = vector.load %arg7[%c4_199, %c0_200, %c0_201] : memref<16x8x256xf32, #tpu.memory_space<vmem>>, vector<1x8x256xf32>
    %279 = vector.shape_cast %278 : vector<1x8x256xf32> to vector<8x256xf32>
    %280 = vector.extract_strided_slice %253#1 {offsets = [4, 0], sizes = [1, 256], strides = [1, 1]} : vector<16x256xf32> to vector<1x256xf32>
    %281 = vector.broadcast %280 : vector<1x256xf32> to vector<8x256xf32>
    %282 = arith.mulf %279, %281 : vector<8x256xf32>
    %283 = arith.addf %277, %282 : vector<8x256xf32>
    %c5_202 = arith.constant 5 : index
    %c0_203 = arith.constant 0 : index
    %c0_204 = arith.constant 0 : index
    %284 = vector.load %arg7[%c5_202, %c0_203, %c0_204] : memref<16x8x256xf32, #tpu.memory_space<vmem>>, vector<1x8x256xf32>
    %285 = vector.shape_cast %284 : vector<1x8x256xf32> to vector<8x256xf32>
    %286 = vector.extract_strided_slice %253#1 {offsets = [5, 0], sizes = [1, 256], strides = [1, 1]} : vector<16x256xf32> to vector<1x256xf32>
    %287 = vector.broadcast %286 : vector<1x256xf32> to vector<8x256xf32>
    %288 = arith.mulf %285, %287 : vector<8x256xf32>
    %289 = arith.addf %283, %288 : vector<8x256xf32>
    %c6_205 = arith.constant 6 : index
    %c0_206 = arith.constant 0 : index
    %c0_207 = arith.constant 0 : index
    %290 = vector.load %arg7[%c6_205, %c0_206, %c0_207] : memref<16x8x256xf32, #tpu.memory_space<vmem>>, vector<1x8x256xf32>
    %291 = vector.shape_cast %290 : vector<1x8x256xf32> to vector<8x256xf32>
    %292 = vector.extract_strided_slice %253#1 {offsets = [6, 0], sizes = [1, 256], strides = [1, 1]} : vector<16x256xf32> to vector<1x256xf32>
    %293 = vector.broadcast %292 : vector<1x256xf32> to vector<8x256xf32>
    %294 = arith.mulf %291, %293 : vector<8x256xf32>
    %295 = arith.addf %289, %294 : vector<8x256xf32>
    %c7_208 = arith.constant 7 : index
    %c0_209 = arith.constant 0 : index
    %c0_210 = arith.constant 0 : index
    %296 = vector.load %arg7[%c7_208, %c0_209, %c0_210] : memref<16x8x256xf32, #tpu.memory_space<vmem>>, vector<1x8x256xf32>
    %297 = vector.shape_cast %296 : vector<1x8x256xf32> to vector<8x256xf32>
    %298 = vector.extract_strided_slice %253#1 {offsets = [7, 0], sizes = [1, 256], strides = [1, 1]} : vector<16x256xf32> to vector<1x256xf32>
    %299 = vector.broadcast %298 : vector<1x256xf32> to vector<8x256xf32>
    %300 = arith.mulf %297, %299 : vector<8x256xf32>
    %301 = arith.addf %295, %300 : vector<8x256xf32>
    %c8_211 = arith.constant 8 : index
    %c0_212 = arith.constant 0 : index
    %c0_213 = arith.constant 0 : index
    %302 = vector.load %arg7[%c8_211, %c0_212, %c0_213] : memref<16x8x256xf32, #tpu.memory_space<vmem>>, vector<1x8x256xf32>
    %303 = vector.shape_cast %302 : vector<1x8x256xf32> to vector<8x256xf32>
    %304 = vector.extract_strided_slice %253#1 {offsets = [8, 0], sizes = [1, 256], strides = [1, 1]} : vector<16x256xf32> to vector<1x256xf32>
    %305 = vector.broadcast %304 : vector<1x256xf32> to vector<8x256xf32>
    %306 = arith.mulf %303, %305 : vector<8x256xf32>
    %307 = arith.addf %301, %306 : vector<8x256xf32>
    %c9_214 = arith.constant 9 : index
    %c0_215 = arith.constant 0 : index
    %c0_216 = arith.constant 0 : index
    %308 = vector.load %arg7[%c9_214, %c0_215, %c0_216] : memref<16x8x256xf32, #tpu.memory_space<vmem>>, vector<1x8x256xf32>
    %309 = vector.shape_cast %308 : vector<1x8x256xf32> to vector<8x256xf32>
    %310 = vector.extract_strided_slice %253#1 {offsets = [9, 0], sizes = [1, 256], strides = [1, 1]} : vector<16x256xf32> to vector<1x256xf32>
    %311 = vector.broadcast %310 : vector<1x256xf32> to vector<8x256xf32>
    %312 = arith.mulf %309, %311 : vector<8x256xf32>
    %313 = arith.addf %307, %312 : vector<8x256xf32>
    %c10_217 = arith.constant 10 : index
    %c0_218 = arith.constant 0 : index
    %c0_219 = arith.constant 0 : index
    %314 = vector.load %arg7[%c10_217, %c0_218, %c0_219] : memref<16x8x256xf32, #tpu.memory_space<vmem>>, vector<1x8x256xf32>
    %315 = vector.shape_cast %314 : vector<1x8x256xf32> to vector<8x256xf32>
    %316 = vector.extract_strided_slice %253#1 {offsets = [10, 0], sizes = [1, 256], strides = [1, 1]} : vector<16x256xf32> to vector<1x256xf32>
    %317 = vector.broadcast %316 : vector<1x256xf32> to vector<8x256xf32>
    %318 = arith.mulf %315, %317 : vector<8x256xf32>
    %319 = arith.addf %313, %318 : vector<8x256xf32>
    %c11_220 = arith.constant 11 : index
    %c0_221 = arith.constant 0 : index
    %c0_222 = arith.constant 0 : index
    %320 = vector.load %arg7[%c11_220, %c0_221, %c0_222] : memref<16x8x256xf32, #tpu.memory_space<vmem>>, vector<1x8x256xf32>
    %321 = vector.shape_cast %320 : vector<1x8x256xf32> to vector<8x256xf32>
    %322 = vector.extract_strided_slice %253#1 {offsets = [11, 0], sizes = [1, 256], strides = [1, 1]} : vector<16x256xf32> to vector<1x256xf32>
    %323 = vector.broadcast %322 : vector<1x256xf32> to vector<8x256xf32>
    %324 = arith.mulf %321, %323 : vector<8x256xf32>
    %325 = arith.addf %319, %324 : vector<8x256xf32>
    %c12_223 = arith.constant 12 : index
    %c0_224 = arith.constant 0 : index
    %c0_225 = arith.constant 0 : index
    %326 = vector.load %arg7[%c12_223, %c0_224, %c0_225] : memref<16x8x256xf32, #tpu.memory_space<vmem>>, vector<1x8x256xf32>
    %327 = vector.shape_cast %326 : vector<1x8x256xf32> to vector<8x256xf32>
    %328 = vector.extract_strided_slice %253#1 {offsets = [12, 0], sizes = [1, 256], strides = [1, 1]} : vector<16x256xf32> to vector<1x256xf32>
    %329 = vector.broadcast %328 : vector<1x256xf32> to vector<8x256xf32>
    %330 = arith.mulf %327, %329 : vector<8x256xf32>
    %331 = arith.addf %325, %330 : vector<8x256xf32>
    %c13_226 = arith.constant 13 : index
    %c0_227 = arith.constant 0 : index
    %c0_228 = arith.constant 0 : index
    %332 = vector.load %arg7[%c13_226, %c0_227, %c0_228] : memref<16x8x256xf32, #tpu.memory_space<vmem>>, vector<1x8x256xf32>
    %333 = vector.shape_cast %332 : vector<1x8x256xf32> to vector<8x256xf32>
    %334 = vector.extract_strided_slice %253#1 {offsets = [13, 0], sizes = [1, 256], strides = [1, 1]} : vector<16x256xf32> to vector<1x256xf32>
    %335 = vector.broadcast %334 : vector<1x256xf32> to vector<8x256xf32>
    %336 = arith.mulf %333, %335 : vector<8x256xf32>
    %337 = arith.addf %331, %336 : vector<8x256xf32>
    %c14_229 = arith.constant 14 : index
    %c0_230 = arith.constant 0 : index
    %c0_231 = arith.constant 0 : index
    %338 = vector.load %arg7[%c14_229, %c0_230, %c0_231] : memref<16x8x256xf32, #tpu.memory_space<vmem>>, vector<1x8x256xf32>
    %339 = vector.shape_cast %338 : vector<1x8x256xf32> to vector<8x256xf32>
    %340 = vector.extract_strided_slice %253#1 {offsets = [14, 0], sizes = [1, 256], strides = [1, 1]} : vector<16x256xf32> to vector<1x256xf32>
    %341 = vector.broadcast %340 : vector<1x256xf32> to vector<8x256xf32>
    %342 = arith.mulf %339, %341 : vector<8x256xf32>
    %343 = arith.addf %337, %342 : vector<8x256xf32>
    %c15_232 = arith.constant 15 : index
    %c0_233 = arith.constant 0 : index
    %c0_234 = arith.constant 0 : index
    %344 = vector.load %arg7[%c15_232, %c0_233, %c0_234] : memref<16x8x256xf32, #tpu.memory_space<vmem>>, vector<1x8x256xf32>
    %345 = vector.shape_cast %344 : vector<1x8x256xf32> to vector<8x256xf32>
    %346 = vector.extract_strided_slice %253#1 {offsets = [15, 0], sizes = [1, 256], strides = [1, 1]} : vector<16x256xf32> to vector<1x256xf32>
    %347 = vector.broadcast %346 : vector<1x256xf32> to vector<8x256xf32>
    %348 = arith.mulf %345, %347 : vector<8x256xf32>
    %349 = arith.addf %343, %348 : vector<8x256xf32>
    %350 = arith.addf %253#2, %349 : vector<8x256xf32>
    %cst_235 = arith.constant 0.000000e+00 : f32
    %351 = vector.broadcast %cst_235 : f32 to vector<8x256xf32>
    %352 = arith.maximumf %350, %351 : vector<8x256xf32>
    %c0_236 = arith.constant 0 : index
    %c0_237 = arith.constant 0 : index
    %c0_238 = arith.constant 0 : index
    %353 = vector.load %arg6[%c0_236, %c0_237, %c0_238] : memref<8x16x256xf32, #tpu.memory_space<vmem>>, vector<1x16x256xf32>
    %354 = vector.shape_cast %353 : vector<1x16x256xf32> to vector<16x256xf32>
    %355 = vector.extract_strided_slice %352 {offsets = [0, 0], sizes = [1, 256], strides = [1, 1]} : vector<8x256xf32> to vector<1x256xf32>
    %356 = vector.broadcast %355 : vector<1x256xf32> to vector<16x256xf32>
    %357 = arith.mulf %354, %356 : vector<16x256xf32>
    %358 = arith.addf %249, %357 : vector<16x256xf32>
    %c1_239 = arith.constant 1 : index
    %c0_240 = arith.constant 0 : index
    %c0_241 = arith.constant 0 : index
    %359 = vector.load %arg6[%c1_239, %c0_240, %c0_241] : memref<8x16x256xf32, #tpu.memory_space<vmem>>, vector<1x16x256xf32>
    %360 = vector.shape_cast %359 : vector<1x16x256xf32> to vector<16x256xf32>
    %361 = vector.extract_strided_slice %352 {offsets = [1, 0], sizes = [1, 256], strides = [1, 1]} : vector<8x256xf32> to vector<1x256xf32>
    %362 = vector.broadcast %361 : vector<1x256xf32> to vector<16x256xf32>
    %363 = arith.mulf %360, %362 : vector<16x256xf32>
    %364 = arith.addf %358, %363 : vector<16x256xf32>
    %c2_242 = arith.constant 2 : index
    %c0_243 = arith.constant 0 : index
    %c0_244 = arith.constant 0 : index
    %365 = vector.load %arg6[%c2_242, %c0_243, %c0_244] : memref<8x16x256xf32, #tpu.memory_space<vmem>>, vector<1x16x256xf32>
    %366 = vector.shape_cast %365 : vector<1x16x256xf32> to vector<16x256xf32>
    %367 = vector.extract_strided_slice %352 {offsets = [2, 0], sizes = [1, 256], strides = [1, 1]} : vector<8x256xf32> to vector<1x256xf32>
    %368 = vector.broadcast %367 : vector<1x256xf32> to vector<16x256xf32>
    %369 = arith.mulf %366, %368 : vector<16x256xf32>
    %370 = arith.addf %364, %369 : vector<16x256xf32>
    %c3_245 = arith.constant 3 : index
    %c0_246 = arith.constant 0 : index
    %c0_247 = arith.constant 0 : index
    %371 = vector.load %arg6[%c3_245, %c0_246, %c0_247] : memref<8x16x256xf32, #tpu.memory_space<vmem>>, vector<1x16x256xf32>
    %372 = vector.shape_cast %371 : vector<1x16x256xf32> to vector<16x256xf32>
    %373 = vector.extract_strided_slice %352 {offsets = [3, 0], sizes = [1, 256], strides = [1, 1]} : vector<8x256xf32> to vector<1x256xf32>
    %374 = vector.broadcast %373 : vector<1x256xf32> to vector<16x256xf32>
    %375 = arith.mulf %372, %374 : vector<16x256xf32>
    %376 = arith.addf %370, %375 : vector<16x256xf32>
    %c4_248 = arith.constant 4 : index
    %c0_249 = arith.constant 0 : index
    %c0_250 = arith.constant 0 : index
    %377 = vector.load %arg6[%c4_248, %c0_249, %c0_250] : memref<8x16x256xf32, #tpu.memory_space<vmem>>, vector<1x16x256xf32>
    %378 = vector.shape_cast %377 : vector<1x16x256xf32> to vector<16x256xf32>
    %379 = vector.extract_strided_slice %352 {offsets = [4, 0], sizes = [1, 256], strides = [1, 1]} : vector<8x256xf32> to vector<1x256xf32>
    %380 = vector.broadcast %379 : vector<1x256xf32> to vector<16x256xf32>
    %381 = arith.mulf %378, %380 : vector<16x256xf32>
    %382 = arith.addf %376, %381 : vector<16x256xf32>
    %c5_251 = arith.constant 5 : index
    %c0_252 = arith.constant 0 : index
    %c0_253 = arith.constant 0 : index
    %383 = vector.load %arg6[%c5_251, %c0_252, %c0_253] : memref<8x16x256xf32, #tpu.memory_space<vmem>>, vector<1x16x256xf32>
    %384 = vector.shape_cast %383 : vector<1x16x256xf32> to vector<16x256xf32>
    %385 = vector.extract_strided_slice %352 {offsets = [5, 0], sizes = [1, 256], strides = [1, 1]} : vector<8x256xf32> to vector<1x256xf32>
    %386 = vector.broadcast %385 : vector<1x256xf32> to vector<16x256xf32>
    %387 = arith.mulf %384, %386 : vector<16x256xf32>
    %388 = arith.addf %382, %387 : vector<16x256xf32>
    %c6_254 = arith.constant 6 : index
    %c0_255 = arith.constant 0 : index
    %c0_256 = arith.constant 0 : index
    %389 = vector.load %arg6[%c6_254, %c0_255, %c0_256] : memref<8x16x256xf32, #tpu.memory_space<vmem>>, vector<1x16x256xf32>
    %390 = vector.shape_cast %389 : vector<1x16x256xf32> to vector<16x256xf32>
    %391 = vector.extract_strided_slice %352 {offsets = [6, 0], sizes = [1, 256], strides = [1, 1]} : vector<8x256xf32> to vector<1x256xf32>
    %392 = vector.broadcast %391 : vector<1x256xf32> to vector<16x256xf32>
    %393 = arith.mulf %390, %392 : vector<16x256xf32>
    %394 = arith.addf %388, %393 : vector<16x256xf32>
    %c7_257 = arith.constant 7 : index
    %c0_258 = arith.constant 0 : index
    %c0_259 = arith.constant 0 : index
    %395 = vector.load %arg6[%c7_257, %c0_258, %c0_259] : memref<8x16x256xf32, #tpu.memory_space<vmem>>, vector<1x16x256xf32>
    %396 = vector.shape_cast %395 : vector<1x16x256xf32> to vector<16x256xf32>
    %397 = vector.extract_strided_slice %352 {offsets = [7, 0], sizes = [1, 256], strides = [1, 1]} : vector<8x256xf32> to vector<1x256xf32>
    %398 = vector.broadcast %397 : vector<1x256xf32> to vector<16x256xf32>
    %399 = arith.mulf %396, %398 : vector<16x256xf32>
    %400 = arith.addf %394, %399 : vector<16x256xf32>
    %401 = arith.subf %253#0, %400 : vector<16x256xf32>
    %cst_260 = arith.constant 0.000000e+00 : f32
    %cst_261 = arith.constant 1.000000e+00 : f32
    %402 = vector.broadcast %cst_260 : f32 to vector<16x256xf32>
    %403 = arith.maximumf %402, %401 : vector<16x256xf32>
    %404 = vector.broadcast %cst_261 : f32 to vector<16x256xf32>
    %405 = arith.minimumf %404, %403 : vector<16x256xf32>
    %cst_262 = arith.constant 2.000000e+00 : f32
    %406 = vector.broadcast %cst_262 : f32 to vector<16x256xf32>
    %407 = arith.mulf %406, %405 : vector<16x256xf32>
    %408 = arith.subf %407, %253#0 : vector<16x256xf32>
    %c0_263 = arith.constant 0 : index
    %c0_264 = arith.constant 0 : index
    %c0_265 = arith.constant 0 : index
    %409 = vector.load %arg7[%c0_263, %c0_264, %c0_265] : memref<16x8x256xf32, #tpu.memory_space<vmem>>, vector<1x8x256xf32>
    %410 = vector.shape_cast %409 : vector<1x8x256xf32> to vector<8x256xf32>
    %411 = vector.extract_strided_slice %408 {offsets = [0, 0], sizes = [1, 256], strides = [1, 1]} : vector<16x256xf32> to vector<1x256xf32>
    %412 = vector.broadcast %411 : vector<1x256xf32> to vector<8x256xf32>
    %413 = arith.mulf %410, %412 : vector<8x256xf32>
    %414 = arith.addf %246, %413 : vector<8x256xf32>
    %c1_266 = arith.constant 1 : index
    %c0_267 = arith.constant 0 : index
    %c0_268 = arith.constant 0 : index
    %415 = vector.load %arg7[%c1_266, %c0_267, %c0_268] : memref<16x8x256xf32, #tpu.memory_space<vmem>>, vector<1x8x256xf32>
    %416 = vector.shape_cast %415 : vector<1x8x256xf32> to vector<8x256xf32>
    %417 = vector.extract_strided_slice %408 {offsets = [1, 0], sizes = [1, 256], strides = [1, 1]} : vector<16x256xf32> to vector<1x256xf32>
    %418 = vector.broadcast %417 : vector<1x256xf32> to vector<8x256xf32>
    %419 = arith.mulf %416, %418 : vector<8x256xf32>
    %420 = arith.addf %414, %419 : vector<8x256xf32>
    %c2_269 = arith.constant 2 : index
    %c0_270 = arith.constant 0 : index
    %c0_271 = arith.constant 0 : index
    %421 = vector.load %arg7[%c2_269, %c0_270, %c0_271] : memref<16x8x256xf32, #tpu.memory_space<vmem>>, vector<1x8x256xf32>
    %422 = vector.shape_cast %421 : vector<1x8x256xf32> to vector<8x256xf32>
    %423 = vector.extract_strided_slice %408 {offsets = [2, 0], sizes = [1, 256], strides = [1, 1]} : vector<16x256xf32> to vector<1x256xf32>
    %424 = vector.broadcast %423 : vector<1x256xf32> to vector<8x256xf32>
    %425 = arith.mulf %422, %424 : vector<8x256xf32>
    %426 = arith.addf %420, %425 : vector<8x256xf32>
    %c3_272 = arith.constant 3 : index
    %c0_273 = arith.constant 0 : index
    %c0_274 = arith.constant 0 : index
    %427 = vector.load %arg7[%c3_272, %c0_273, %c0_274] : memref<16x8x256xf32, #tpu.memory_space<vmem>>, vector<1x8x256xf32>
    %428 = vector.shape_cast %427 : vector<1x8x256xf32> to vector<8x256xf32>
    %429 = vector.extract_strided_slice %408 {offsets = [3, 0], sizes = [1, 256], strides = [1, 1]} : vector<16x256xf32> to vector<1x256xf32>
    %430 = vector.broadcast %429 : vector<1x256xf32> to vector<8x256xf32>
    %431 = arith.mulf %428, %430 : vector<8x256xf32>
    %432 = arith.addf %426, %431 : vector<8x256xf32>
    %c4_275 = arith.constant 4 : index
    %c0_276 = arith.constant 0 : index
    %c0_277 = arith.constant 0 : index
    %433 = vector.load %arg7[%c4_275, %c0_276, %c0_277] : memref<16x8x256xf32, #tpu.memory_space<vmem>>, vector<1x8x256xf32>
    %434 = vector.shape_cast %433 : vector<1x8x256xf32> to vector<8x256xf32>
    %435 = vector.extract_strided_slice %408 {offsets = [4, 0], sizes = [1, 256], strides = [1, 1]} : vector<16x256xf32> to vector<1x256xf32>
    %436 = vector.broadcast %435 : vector<1x256xf32> to vector<8x256xf32>
    %437 = arith.mulf %434, %436 : vector<8x256xf32>
    %438 = arith.addf %432, %437 : vector<8x256xf32>
    %c5_278 = arith.constant 5 : index
    %c0_279 = arith.constant 0 : index
    %c0_280 = arith.constant 0 : index
    %439 = vector.load %arg7[%c5_278, %c0_279, %c0_280] : memref<16x8x256xf32, #tpu.memory_space<vmem>>, vector<1x8x256xf32>
    %440 = vector.shape_cast %439 : vector<1x8x256xf32> to vector<8x256xf32>
    %441 = vector.extract_strided_slice %408 {offsets = [5, 0], sizes = [1, 256], strides = [1, 1]} : vector<16x256xf32> to vector<1x256xf32>
    %442 = vector.broadcast %441 : vector<1x256xf32> to vector<8x256xf32>
    %443 = arith.mulf %440, %442 : vector<8x256xf32>
    %444 = arith.addf %438, %443 : vector<8x256xf32>
    %c6_281 = arith.constant 6 : index
    %c0_282 = arith.constant 0 : index
    %c0_283 = arith.constant 0 : index
    %445 = vector.load %arg7[%c6_281, %c0_282, %c0_283] : memref<16x8x256xf32, #tpu.memory_space<vmem>>, vector<1x8x256xf32>
    %446 = vector.shape_cast %445 : vector<1x8x256xf32> to vector<8x256xf32>
    %447 = vector.extract_strided_slice %408 {offsets = [6, 0], sizes = [1, 256], strides = [1, 1]} : vector<16x256xf32> to vector<1x256xf32>
    %448 = vector.broadcast %447 : vector<1x256xf32> to vector<8x256xf32>
    %449 = arith.mulf %446, %448 : vector<8x256xf32>
    %450 = arith.addf %444, %449 : vector<8x256xf32>
    %c7_284 = arith.constant 7 : index
    %c0_285 = arith.constant 0 : index
    %c0_286 = arith.constant 0 : index
    %451 = vector.load %arg7[%c7_284, %c0_285, %c0_286] : memref<16x8x256xf32, #tpu.memory_space<vmem>>, vector<1x8x256xf32>
    %452 = vector.shape_cast %451 : vector<1x8x256xf32> to vector<8x256xf32>
    %453 = vector.extract_strided_slice %408 {offsets = [7, 0], sizes = [1, 256], strides = [1, 1]} : vector<16x256xf32> to vector<1x256xf32>
    %454 = vector.broadcast %453 : vector<1x256xf32> to vector<8x256xf32>
    %455 = arith.mulf %452, %454 : vector<8x256xf32>
    %456 = arith.addf %450, %455 : vector<8x256xf32>
    %c8_287 = arith.constant 8 : index
    %c0_288 = arith.constant 0 : index
    %c0_289 = arith.constant 0 : index
    %457 = vector.load %arg7[%c8_287, %c0_288, %c0_289] : memref<16x8x256xf32, #tpu.memory_space<vmem>>, vector<1x8x256xf32>
    %458 = vector.shape_cast %457 : vector<1x8x256xf32> to vector<8x256xf32>
    %459 = vector.extract_strided_slice %408 {offsets = [8, 0], sizes = [1, 256], strides = [1, 1]} : vector<16x256xf32> to vector<1x256xf32>
    %460 = vector.broadcast %459 : vector<1x256xf32> to vector<8x256xf32>
    %461 = arith.mulf %458, %460 : vector<8x256xf32>
    %462 = arith.addf %456, %461 : vector<8x256xf32>
    %c9_290 = arith.constant 9 : index
    %c0_291 = arith.constant 0 : index
    %c0_292 = arith.constant 0 : index
    %463 = vector.load %arg7[%c9_290, %c0_291, %c0_292] : memref<16x8x256xf32, #tpu.memory_space<vmem>>, vector<1x8x256xf32>
    %464 = vector.shape_cast %463 : vector<1x8x256xf32> to vector<8x256xf32>
    %465 = vector.extract_strided_slice %408 {offsets = [9, 0], sizes = [1, 256], strides = [1, 1]} : vector<16x256xf32> to vector<1x256xf32>
    %466 = vector.broadcast %465 : vector<1x256xf32> to vector<8x256xf32>
    %467 = arith.mulf %464, %466 : vector<8x256xf32>
    %468 = arith.addf %462, %467 : vector<8x256xf32>
    %c10_293 = arith.constant 10 : index
    %c0_294 = arith.constant 0 : index
    %c0_295 = arith.constant 0 : index
    %469 = vector.load %arg7[%c10_293, %c0_294, %c0_295] : memref<16x8x256xf32, #tpu.memory_space<vmem>>, vector<1x8x256xf32>
    %470 = vector.shape_cast %469 : vector<1x8x256xf32> to vector<8x256xf32>
    %471 = vector.extract_strided_slice %408 {offsets = [10, 0], sizes = [1, 256], strides = [1, 1]} : vector<16x256xf32> to vector<1x256xf32>
    %472 = vector.broadcast %471 : vector<1x256xf32> to vector<8x256xf32>
    %473 = arith.mulf %470, %472 : vector<8x256xf32>
    %474 = arith.addf %468, %473 : vector<8x256xf32>
    %c11_296 = arith.constant 11 : index
    %c0_297 = arith.constant 0 : index
    %c0_298 = arith.constant 0 : index
    %475 = vector.load %arg7[%c11_296, %c0_297, %c0_298] : memref<16x8x256xf32, #tpu.memory_space<vmem>>, vector<1x8x256xf32>
    %476 = vector.shape_cast %475 : vector<1x8x256xf32> to vector<8x256xf32>
    %477 = vector.extract_strided_slice %408 {offsets = [11, 0], sizes = [1, 256], strides = [1, 1]} : vector<16x256xf32> to vector<1x256xf32>
    %478 = vector.broadcast %477 : vector<1x256xf32> to vector<8x256xf32>
    %479 = arith.mulf %476, %478 : vector<8x256xf32>
    %480 = arith.addf %474, %479 : vector<8x256xf32>
    %c12_299 = arith.constant 12 : index
    %c0_300 = arith.constant 0 : index
    %c0_301 = arith.constant 0 : index
    %481 = vector.load %arg7[%c12_299, %c0_300, %c0_301] : memref<16x8x256xf32, #tpu.memory_space<vmem>>, vector<1x8x256xf32>
    %482 = vector.shape_cast %481 : vector<1x8x256xf32> to vector<8x256xf32>
    %483 = vector.extract_strided_slice %408 {offsets = [12, 0], sizes = [1, 256], strides = [1, 1]} : vector<16x256xf32> to vector<1x256xf32>
    %484 = vector.broadcast %483 : vector<1x256xf32> to vector<8x256xf32>
    %485 = arith.mulf %482, %484 : vector<8x256xf32>
    %486 = arith.addf %480, %485 : vector<8x256xf32>
    %c13_302 = arith.constant 13 : index
    %c0_303 = arith.constant 0 : index
    %c0_304 = arith.constant 0 : index
    %487 = vector.load %arg7[%c13_302, %c0_303, %c0_304] : memref<16x8x256xf32, #tpu.memory_space<vmem>>, vector<1x8x256xf32>
    %488 = vector.shape_cast %487 : vector<1x8x256xf32> to vector<8x256xf32>
    %489 = vector.extract_strided_slice %408 {offsets = [13, 0], sizes = [1, 256], strides = [1, 1]} : vector<16x256xf32> to vector<1x256xf32>
    %490 = vector.broadcast %489 : vector<1x256xf32> to vector<8x256xf32>
    %491 = arith.mulf %488, %490 : vector<8x256xf32>
    %492 = arith.addf %486, %491 : vector<8x256xf32>
    %c14_305 = arith.constant 14 : index
    %c0_306 = arith.constant 0 : index
    %c0_307 = arith.constant 0 : index
    %493 = vector.load %arg7[%c14_305, %c0_306, %c0_307] : memref<16x8x256xf32, #tpu.memory_space<vmem>>, vector<1x8x256xf32>
    %494 = vector.shape_cast %493 : vector<1x8x256xf32> to vector<8x256xf32>
    %495 = vector.extract_strided_slice %408 {offsets = [14, 0], sizes = [1, 256], strides = [1, 1]} : vector<16x256xf32> to vector<1x256xf32>
    %496 = vector.broadcast %495 : vector<1x256xf32> to vector<8x256xf32>
    %497 = arith.mulf %494, %496 : vector<8x256xf32>
    %498 = arith.addf %492, %497 : vector<8x256xf32>
    %c15_308 = arith.constant 15 : index
    %c0_309 = arith.constant 0 : index
    %c0_310 = arith.constant 0 : index
    %499 = vector.load %arg7[%c15_308, %c0_309, %c0_310] : memref<16x8x256xf32, #tpu.memory_space<vmem>>, vector<1x8x256xf32>
    %500 = vector.shape_cast %499 : vector<1x8x256xf32> to vector<8x256xf32>
    %501 = vector.extract_strided_slice %408 {offsets = [15, 0], sizes = [1, 256], strides = [1, 1]} : vector<16x256xf32> to vector<1x256xf32>
    %502 = vector.broadcast %501 : vector<1x256xf32> to vector<8x256xf32>
    %503 = arith.mulf %500, %502 : vector<8x256xf32>
    %504 = arith.addf %498, %503 : vector<8x256xf32>
    %505 = arith.addf %352, %504 : vector<8x256xf32>
    %cst_311 = arith.constant 0.000000e+00 : f32
    %506 = vector.broadcast %cst_311 : f32 to vector<8x256xf32>
    %507 = arith.maximumf %505, %506 : vector<8x256xf32>
    %c0_312 = arith.constant 0 : index
    %c0_313 = arith.constant 0 : index
    %c0_314 = arith.constant 0 : index
    %508 = vector.load %arg6[%c0_312, %c0_313, %c0_314] : memref<8x16x256xf32, #tpu.memory_space<vmem>>, vector<1x16x256xf32>
    %509 = vector.shape_cast %508 : vector<1x16x256xf32> to vector<16x256xf32>
    %510 = vector.extract_strided_slice %507 {offsets = [0, 0], sizes = [1, 256], strides = [1, 1]} : vector<8x256xf32> to vector<1x256xf32>
    %511 = vector.broadcast %510 : vector<1x256xf32> to vector<16x256xf32>
    %512 = arith.mulf %509, %511 : vector<16x256xf32>
    %513 = arith.addf %249, %512 : vector<16x256xf32>
    %c1_315 = arith.constant 1 : index
    %c0_316 = arith.constant 0 : index
    %c0_317 = arith.constant 0 : index
    %514 = vector.load %arg6[%c1_315, %c0_316, %c0_317] : memref<8x16x256xf32, #tpu.memory_space<vmem>>, vector<1x16x256xf32>
    %515 = vector.shape_cast %514 : vector<1x16x256xf32> to vector<16x256xf32>
    %516 = vector.extract_strided_slice %507 {offsets = [1, 0], sizes = [1, 256], strides = [1, 1]} : vector<8x256xf32> to vector<1x256xf32>
    %517 = vector.broadcast %516 : vector<1x256xf32> to vector<16x256xf32>
    %518 = arith.mulf %515, %517 : vector<16x256xf32>
    %519 = arith.addf %513, %518 : vector<16x256xf32>
    %c2_318 = arith.constant 2 : index
    %c0_319 = arith.constant 0 : index
    %c0_320 = arith.constant 0 : index
    %520 = vector.load %arg6[%c2_318, %c0_319, %c0_320] : memref<8x16x256xf32, #tpu.memory_space<vmem>>, vector<1x16x256xf32>
    %521 = vector.shape_cast %520 : vector<1x16x256xf32> to vector<16x256xf32>
    %522 = vector.extract_strided_slice %507 {offsets = [2, 0], sizes = [1, 256], strides = [1, 1]} : vector<8x256xf32> to vector<1x256xf32>
    %523 = vector.broadcast %522 : vector<1x256xf32> to vector<16x256xf32>
    %524 = arith.mulf %521, %523 : vector<16x256xf32>
    %525 = arith.addf %519, %524 : vector<16x256xf32>
    %c3_321 = arith.constant 3 : index
    %c0_322 = arith.constant 0 : index
    %c0_323 = arith.constant 0 : index
    %526 = vector.load %arg6[%c3_321, %c0_322, %c0_323] : memref<8x16x256xf32, #tpu.memory_space<vmem>>, vector<1x16x256xf32>
    %527 = vector.shape_cast %526 : vector<1x16x256xf32> to vector<16x256xf32>
    %528 = vector.extract_strided_slice %507 {offsets = [3, 0], sizes = [1, 256], strides = [1, 1]} : vector<8x256xf32> to vector<1x256xf32>
    %529 = vector.broadcast %528 : vector<1x256xf32> to vector<16x256xf32>
    %530 = arith.mulf %527, %529 : vector<16x256xf32>
    %531 = arith.addf %525, %530 : vector<16x256xf32>
    %c4_324 = arith.constant 4 : index
    %c0_325 = arith.constant 0 : index
    %c0_326 = arith.constant 0 : index
    %532 = vector.load %arg6[%c4_324, %c0_325, %c0_326] : memref<8x16x256xf32, #tpu.memory_space<vmem>>, vector<1x16x256xf32>
    %533 = vector.shape_cast %532 : vector<1x16x256xf32> to vector<16x256xf32>
    %534 = vector.extract_strided_slice %507 {offsets = [4, 0], sizes = [1, 256], strides = [1, 1]} : vector<8x256xf32> to vector<1x256xf32>
    %535 = vector.broadcast %534 : vector<1x256xf32> to vector<16x256xf32>
    %536 = arith.mulf %533, %535 : vector<16x256xf32>
    %537 = arith.addf %531, %536 : vector<16x256xf32>
    %c5_327 = arith.constant 5 : index
    %c0_328 = arith.constant 0 : index
    %c0_329 = arith.constant 0 : index
    %538 = vector.load %arg6[%c5_327, %c0_328, %c0_329] : memref<8x16x256xf32, #tpu.memory_space<vmem>>, vector<1x16x256xf32>
    %539 = vector.shape_cast %538 : vector<1x16x256xf32> to vector<16x256xf32>
    %540 = vector.extract_strided_slice %507 {offsets = [5, 0], sizes = [1, 256], strides = [1, 1]} : vector<8x256xf32> to vector<1x256xf32>
    %541 = vector.broadcast %540 : vector<1x256xf32> to vector<16x256xf32>
    %542 = arith.mulf %539, %541 : vector<16x256xf32>
    %543 = arith.addf %537, %542 : vector<16x256xf32>
    %c6_330 = arith.constant 6 : index
    %c0_331 = arith.constant 0 : index
    %c0_332 = arith.constant 0 : index
    %544 = vector.load %arg6[%c6_330, %c0_331, %c0_332] : memref<8x16x256xf32, #tpu.memory_space<vmem>>, vector<1x16x256xf32>
    %545 = vector.shape_cast %544 : vector<1x16x256xf32> to vector<16x256xf32>
    %546 = vector.extract_strided_slice %507 {offsets = [6, 0], sizes = [1, 256], strides = [1, 1]} : vector<8x256xf32> to vector<1x256xf32>
    %547 = vector.broadcast %546 : vector<1x256xf32> to vector<16x256xf32>
    %548 = arith.mulf %545, %547 : vector<16x256xf32>
    %549 = arith.addf %543, %548 : vector<16x256xf32>
    %c7_333 = arith.constant 7 : index
    %c0_334 = arith.constant 0 : index
    %c0_335 = arith.constant 0 : index
    %550 = vector.load %arg6[%c7_333, %c0_334, %c0_335] : memref<8x16x256xf32, #tpu.memory_space<vmem>>, vector<1x16x256xf32>
    %551 = vector.shape_cast %550 : vector<1x16x256xf32> to vector<16x256xf32>
    %552 = vector.extract_strided_slice %507 {offsets = [7, 0], sizes = [1, 256], strides = [1, 1]} : vector<8x256xf32> to vector<1x256xf32>
    %553 = vector.broadcast %552 : vector<1x256xf32> to vector<16x256xf32>
    %554 = arith.mulf %551, %553 : vector<16x256xf32>
    %555 = arith.addf %549, %554 : vector<16x256xf32>
    %556 = arith.subf %405, %555 : vector<16x256xf32>
    %cst_336 = arith.constant 0.000000e+00 : f32
    %cst_337 = arith.constant 1.000000e+00 : f32
    %557 = vector.broadcast %cst_336 : f32 to vector<16x256xf32>
    %558 = arith.maximumf %557, %556 : vector<16x256xf32>
    %559 = vector.broadcast %cst_337 : f32 to vector<16x256xf32>
    %560 = arith.minimumf %559, %558 : vector<16x256xf32>
    %cst_338 = arith.constant 2.000000e+00 : f32
    %561 = vector.broadcast %cst_338 : f32 to vector<16x256xf32>
    %562 = arith.mulf %561, %560 : vector<16x256xf32>
    %563 = arith.subf %562, %405 : vector<16x256xf32>
    %c0_339 = arith.constant 0 : index
    %c0_340 = arith.constant 0 : index
    %c0_341 = arith.constant 0 : index
    %564 = vector.load %arg7[%c0_339, %c0_340, %c0_341] : memref<16x8x256xf32, #tpu.memory_space<vmem>>, vector<1x8x256xf32>
    %565 = vector.shape_cast %564 : vector<1x8x256xf32> to vector<8x256xf32>
    %566 = vector.extract_strided_slice %563 {offsets = [0, 0], sizes = [1, 256], strides = [1, 1]} : vector<16x256xf32> to vector<1x256xf32>
    %567 = vector.broadcast %566 : vector<1x256xf32> to vector<8x256xf32>
    %568 = arith.mulf %565, %567 : vector<8x256xf32>
    %569 = arith.addf %246, %568 : vector<8x256xf32>
    %c1_342 = arith.constant 1 : index
    %c0_343 = arith.constant 0 : index
    %c0_344 = arith.constant 0 : index
    %570 = vector.load %arg7[%c1_342, %c0_343, %c0_344] : memref<16x8x256xf32, #tpu.memory_space<vmem>>, vector<1x8x256xf32>
    %571 = vector.shape_cast %570 : vector<1x8x256xf32> to vector<8x256xf32>
    %572 = vector.extract_strided_slice %563 {offsets = [1, 0], sizes = [1, 256], strides = [1, 1]} : vector<16x256xf32> to vector<1x256xf32>
    %573 = vector.broadcast %572 : vector<1x256xf32> to vector<8x256xf32>
    %574 = arith.mulf %571, %573 : vector<8x256xf32>
    %575 = arith.addf %569, %574 : vector<8x256xf32>
    %c2_345 = arith.constant 2 : index
    %c0_346 = arith.constant 0 : index
    %c0_347 = arith.constant 0 : index
    %576 = vector.load %arg7[%c2_345, %c0_346, %c0_347] : memref<16x8x256xf32, #tpu.memory_space<vmem>>, vector<1x8x256xf32>
    %577 = vector.shape_cast %576 : vector<1x8x256xf32> to vector<8x256xf32>
    %578 = vector.extract_strided_slice %563 {offsets = [2, 0], sizes = [1, 256], strides = [1, 1]} : vector<16x256xf32> to vector<1x256xf32>
    %579 = vector.broadcast %578 : vector<1x256xf32> to vector<8x256xf32>
    %580 = arith.mulf %577, %579 : vector<8x256xf32>
    %581 = arith.addf %575, %580 : vector<8x256xf32>
    %c3_348 = arith.constant 3 : index
    %c0_349 = arith.constant 0 : index
    %c0_350 = arith.constant 0 : index
    %582 = vector.load %arg7[%c3_348, %c0_349, %c0_350] : memref<16x8x256xf32, #tpu.memory_space<vmem>>, vector<1x8x256xf32>
    %583 = vector.shape_cast %582 : vector<1x8x256xf32> to vector<8x256xf32>
    %584 = vector.extract_strided_slice %563 {offsets = [3, 0], sizes = [1, 256], strides = [1, 1]} : vector<16x256xf32> to vector<1x256xf32>
    %585 = vector.broadcast %584 : vector<1x256xf32> to vector<8x256xf32>
    %586 = arith.mulf %583, %585 : vector<8x256xf32>
    %587 = arith.addf %581, %586 : vector<8x256xf32>
    %c4_351 = arith.constant 4 : index
    %c0_352 = arith.constant 0 : index
    %c0_353 = arith.constant 0 : index
    %588 = vector.load %arg7[%c4_351, %c0_352, %c0_353] : memref<16x8x256xf32, #tpu.memory_space<vmem>>, vector<1x8x256xf32>
    %589 = vector.shape_cast %588 : vector<1x8x256xf32> to vector<8x256xf32>
    %590 = vector.extract_strided_slice %563 {offsets = [4, 0], sizes = [1, 256], strides = [1, 1]} : vector<16x256xf32> to vector<1x256xf32>
    %591 = vector.broadcast %590 : vector<1x256xf32> to vector<8x256xf32>
    %592 = arith.mulf %589, %591 : vector<8x256xf32>
    %593 = arith.addf %587, %592 : vector<8x256xf32>
    %c5_354 = arith.constant 5 : index
    %c0_355 = arith.constant 0 : index
    %c0_356 = arith.constant 0 : index
    %594 = vector.load %arg7[%c5_354, %c0_355, %c0_356] : memref<16x8x256xf32, #tpu.memory_space<vmem>>, vector<1x8x256xf32>
    %595 = vector.shape_cast %594 : vector<1x8x256xf32> to vector<8x256xf32>
    %596 = vector.extract_strided_slice %563 {offsets = [5, 0], sizes = [1, 256], strides = [1, 1]} : vector<16x256xf32> to vector<1x256xf32>
    %597 = vector.broadcast %596 : vector<1x256xf32> to vector<8x256xf32>
    %598 = arith.mulf %595, %597 : vector<8x256xf32>
    %599 = arith.addf %593, %598 : vector<8x256xf32>
    %c6_357 = arith.constant 6 : index
    %c0_358 = arith.constant 0 : index
    %c0_359 = arith.constant 0 : index
    %600 = vector.load %arg7[%c6_357, %c0_358, %c0_359] : memref<16x8x256xf32, #tpu.memory_space<vmem>>, vector<1x8x256xf32>
    %601 = vector.shape_cast %600 : vector<1x8x256xf32> to vector<8x256xf32>
    %602 = vector.extract_strided_slice %563 {offsets = [6, 0], sizes = [1, 256], strides = [1, 1]} : vector<16x256xf32> to vector<1x256xf32>
    %603 = vector.broadcast %602 : vector<1x256xf32> to vector<8x256xf32>
    %604 = arith.mulf %601, %603 : vector<8x256xf32>
    %605 = arith.addf %599, %604 : vector<8x256xf32>
    %c7_360 = arith.constant 7 : index
    %c0_361 = arith.constant 0 : index
    %c0_362 = arith.constant 0 : index
    %606 = vector.load %arg7[%c7_360, %c0_361, %c0_362] : memref<16x8x256xf32, #tpu.memory_space<vmem>>, vector<1x8x256xf32>
    %607 = vector.shape_cast %606 : vector<1x8x256xf32> to vector<8x256xf32>
    %608 = vector.extract_strided_slice %563 {offsets = [7, 0], sizes = [1, 256], strides = [1, 1]} : vector<16x256xf32> to vector<1x256xf32>
    %609 = vector.broadcast %608 : vector<1x256xf32> to vector<8x256xf32>
    %610 = arith.mulf %607, %609 : vector<8x256xf32>
    %611 = arith.addf %605, %610 : vector<8x256xf32>
    %c8_363 = arith.constant 8 : index
    %c0_364 = arith.constant 0 : index
    %c0_365 = arith.constant 0 : index
    %612 = vector.load %arg7[%c8_363, %c0_364, %c0_365] : memref<16x8x256xf32, #tpu.memory_space<vmem>>, vector<1x8x256xf32>
    %613 = vector.shape_cast %612 : vector<1x8x256xf32> to vector<8x256xf32>
    %614 = vector.extract_strided_slice %563 {offsets = [8, 0], sizes = [1, 256], strides = [1, 1]} : vector<16x256xf32> to vector<1x256xf32>
    %615 = vector.broadcast %614 : vector<1x256xf32> to vector<8x256xf32>
    %616 = arith.mulf %613, %615 : vector<8x256xf32>
    %617 = arith.addf %611, %616 : vector<8x256xf32>
    %c9_366 = arith.constant 9 : index
    %c0_367 = arith.constant 0 : index
    %c0_368 = arith.constant 0 : index
    %618 = vector.load %arg7[%c9_366, %c0_367, %c0_368] : memref<16x8x256xf32, #tpu.memory_space<vmem>>, vector<1x8x256xf32>
    %619 = vector.shape_cast %618 : vector<1x8x256xf32> to vector<8x256xf32>
    %620 = vector.extract_strided_slice %563 {offsets = [9, 0], sizes = [1, 256], strides = [1, 1]} : vector<16x256xf32> to vector<1x256xf32>
    %621 = vector.broadcast %620 : vector<1x256xf32> to vector<8x256xf32>
    %622 = arith.mulf %619, %621 : vector<8x256xf32>
    %623 = arith.addf %617, %622 : vector<8x256xf32>
    %c10_369 = arith.constant 10 : index
    %c0_370 = arith.constant 0 : index
    %c0_371 = arith.constant 0 : index
    %624 = vector.load %arg7[%c10_369, %c0_370, %c0_371] : memref<16x8x256xf32, #tpu.memory_space<vmem>>, vector<1x8x256xf32>
    %625 = vector.shape_cast %624 : vector<1x8x256xf32> to vector<8x256xf32>
    %626 = vector.extract_strided_slice %563 {offsets = [10, 0], sizes = [1, 256], strides = [1, 1]} : vector<16x256xf32> to vector<1x256xf32>
    %627 = vector.broadcast %626 : vector<1x256xf32> to vector<8x256xf32>
    %628 = arith.mulf %625, %627 : vector<8x256xf32>
    %629 = arith.addf %623, %628 : vector<8x256xf32>
    %c11_372 = arith.constant 11 : index
    %c0_373 = arith.constant 0 : index
    %c0_374 = arith.constant 0 : index
    %630 = vector.load %arg7[%c11_372, %c0_373, %c0_374] : memref<16x8x256xf32, #tpu.memory_space<vmem>>, vector<1x8x256xf32>
    %631 = vector.shape_cast %630 : vector<1x8x256xf32> to vector<8x256xf32>
    %632 = vector.extract_strided_slice %563 {offsets = [11, 0], sizes = [1, 256], strides = [1, 1]} : vector<16x256xf32> to vector<1x256xf32>
    %633 = vector.broadcast %632 : vector<1x256xf32> to vector<8x256xf32>
    %634 = arith.mulf %631, %633 : vector<8x256xf32>
    %635 = arith.addf %629, %634 : vector<8x256xf32>
    %c12_375 = arith.constant 12 : index
    %c0_376 = arith.constant 0 : index
    %c0_377 = arith.constant 0 : index
    %636 = vector.load %arg7[%c12_375, %c0_376, %c0_377] : memref<16x8x256xf32, #tpu.memory_space<vmem>>, vector<1x8x256xf32>
    %637 = vector.shape_cast %636 : vector<1x8x256xf32> to vector<8x256xf32>
    %638 = vector.extract_strided_slice %563 {offsets = [12, 0], sizes = [1, 256], strides = [1, 1]} : vector<16x256xf32> to vector<1x256xf32>
    %639 = vector.broadcast %638 : vector<1x256xf32> to vector<8x256xf32>
    %640 = arith.mulf %637, %639 : vector<8x256xf32>
    %641 = arith.addf %635, %640 : vector<8x256xf32>
    %c13_378 = arith.constant 13 : index
    %c0_379 = arith.constant 0 : index
    %c0_380 = arith.constant 0 : index
    %642 = vector.load %arg7[%c13_378, %c0_379, %c0_380] : memref<16x8x256xf32, #tpu.memory_space<vmem>>, vector<1x8x256xf32>
    %643 = vector.shape_cast %642 : vector<1x8x256xf32> to vector<8x256xf32>
    %644 = vector.extract_strided_slice %563 {offsets = [13, 0], sizes = [1, 256], strides = [1, 1]} : vector<16x256xf32> to vector<1x256xf32>
    %645 = vector.broadcast %644 : vector<1x256xf32> to vector<8x256xf32>
    %646 = arith.mulf %643, %645 : vector<8x256xf32>
    %647 = arith.addf %641, %646 : vector<8x256xf32>
    %c14_381 = arith.constant 14 : index
    %c0_382 = arith.constant 0 : index
    %c0_383 = arith.constant 0 : index
    %648 = vector.load %arg7[%c14_381, %c0_382, %c0_383] : memref<16x8x256xf32, #tpu.memory_space<vmem>>, vector<1x8x256xf32>
    %649 = vector.shape_cast %648 : vector<1x8x256xf32> to vector<8x256xf32>
    %650 = vector.extract_strided_slice %563 {offsets = [14, 0], sizes = [1, 256], strides = [1, 1]} : vector<16x256xf32> to vector<1x256xf32>
    %651 = vector.broadcast %650 : vector<1x256xf32> to vector<8x256xf32>
    %652 = arith.mulf %649, %651 : vector<8x256xf32>
    %653 = arith.addf %647, %652 : vector<8x256xf32>
    %c15_384 = arith.constant 15 : index
    %c0_385 = arith.constant 0 : index
    %c0_386 = arith.constant 0 : index
    %654 = vector.load %arg7[%c15_384, %c0_385, %c0_386] : memref<16x8x256xf32, #tpu.memory_space<vmem>>, vector<1x8x256xf32>
    %655 = vector.shape_cast %654 : vector<1x8x256xf32> to vector<8x256xf32>
    %656 = vector.extract_strided_slice %563 {offsets = [15, 0], sizes = [1, 256], strides = [1, 1]} : vector<16x256xf32> to vector<1x256xf32>
    %657 = vector.broadcast %656 : vector<1x256xf32> to vector<8x256xf32>
    %658 = arith.mulf %655, %657 : vector<8x256xf32>
    %659 = arith.addf %653, %658 : vector<8x256xf32>
    %660 = arith.addf %507, %659 : vector<8x256xf32>
    %cst_387 = arith.constant 0.000000e+00 : f32
    %661 = vector.broadcast %cst_387 : f32 to vector<8x256xf32>
    %662 = arith.maximumf %660, %661 : vector<8x256xf32>
    %c0_388 = arith.constant 0 : index
    %c0_389 = arith.constant 0 : index
    %c0_390 = arith.constant 0 : index
    %663 = vector.load %arg6[%c0_388, %c0_389, %c0_390] : memref<8x16x256xf32, #tpu.memory_space<vmem>>, vector<1x16x256xf32>
    %664 = vector.shape_cast %663 : vector<1x16x256xf32> to vector<16x256xf32>
    %665 = vector.extract_strided_slice %662 {offsets = [0, 0], sizes = [1, 256], strides = [1, 1]} : vector<8x256xf32> to vector<1x256xf32>
    %666 = vector.broadcast %665 : vector<1x256xf32> to vector<16x256xf32>
    %667 = arith.mulf %664, %666 : vector<16x256xf32>
    %668 = arith.addf %249, %667 : vector<16x256xf32>
    %c1_391 = arith.constant 1 : index
    %c0_392 = arith.constant 0 : index
    %c0_393 = arith.constant 0 : index
    %669 = vector.load %arg6[%c1_391, %c0_392, %c0_393] : memref<8x16x256xf32, #tpu.memory_space<vmem>>, vector<1x16x256xf32>
    %670 = vector.shape_cast %669 : vector<1x16x256xf32> to vector<16x256xf32>
    %671 = vector.extract_strided_slice %662 {offsets = [1, 0], sizes = [1, 256], strides = [1, 1]} : vector<8x256xf32> to vector<1x256xf32>
    %672 = vector.broadcast %671 : vector<1x256xf32> to vector<16x256xf32>
    %673 = arith.mulf %670, %672 : vector<16x256xf32>
    %674 = arith.addf %668, %673 : vector<16x256xf32>
    %c2_394 = arith.constant 2 : index
    %c0_395 = arith.constant 0 : index
    %c0_396 = arith.constant 0 : index
    %675 = vector.load %arg6[%c2_394, %c0_395, %c0_396] : memref<8x16x256xf32, #tpu.memory_space<vmem>>, vector<1x16x256xf32>
    %676 = vector.shape_cast %675 : vector<1x16x256xf32> to vector<16x256xf32>
    %677 = vector.extract_strided_slice %662 {offsets = [2, 0], sizes = [1, 256], strides = [1, 1]} : vector<8x256xf32> to vector<1x256xf32>
    %678 = vector.broadcast %677 : vector<1x256xf32> to vector<16x256xf32>
    %679 = arith.mulf %676, %678 : vector<16x256xf32>
    %680 = arith.addf %674, %679 : vector<16x256xf32>
    %c3_397 = arith.constant 3 : index
    %c0_398 = arith.constant 0 : index
    %c0_399 = arith.constant 0 : index
    %681 = vector.load %arg6[%c3_397, %c0_398, %c0_399] : memref<8x16x256xf32, #tpu.memory_space<vmem>>, vector<1x16x256xf32>
    %682 = vector.shape_cast %681 : vector<1x16x256xf32> to vector<16x256xf32>
    %683 = vector.extract_strided_slice %662 {offsets = [3, 0], sizes = [1, 256], strides = [1, 1]} : vector<8x256xf32> to vector<1x256xf32>
    %684 = vector.broadcast %683 : vector<1x256xf32> to vector<16x256xf32>
    %685 = arith.mulf %682, %684 : vector<16x256xf32>
    %686 = arith.addf %680, %685 : vector<16x256xf32>
    %c4_400 = arith.constant 4 : index
    %c0_401 = arith.constant 0 : index
    %c0_402 = arith.constant 0 : index
    %687 = vector.load %arg6[%c4_400, %c0_401, %c0_402] : memref<8x16x256xf32, #tpu.memory_space<vmem>>, vector<1x16x256xf32>
    %688 = vector.shape_cast %687 : vector<1x16x256xf32> to vector<16x256xf32>
    %689 = vector.extract_strided_slice %662 {offsets = [4, 0], sizes = [1, 256], strides = [1, 1]} : vector<8x256xf32> to vector<1x256xf32>
    %690 = vector.broadcast %689 : vector<1x256xf32> to vector<16x256xf32>
    %691 = arith.mulf %688, %690 : vector<16x256xf32>
    %692 = arith.addf %686, %691 : vector<16x256xf32>
    %c5_403 = arith.constant 5 : index
    %c0_404 = arith.constant 0 : index
    %c0_405 = arith.constant 0 : index
    %693 = vector.load %arg6[%c5_403, %c0_404, %c0_405] : memref<8x16x256xf32, #tpu.memory_space<vmem>>, vector<1x16x256xf32>
    %694 = vector.shape_cast %693 : vector<1x16x256xf32> to vector<16x256xf32>
    %695 = vector.extract_strided_slice %662 {offsets = [5, 0], sizes = [1, 256], strides = [1, 1]} : vector<8x256xf32> to vector<1x256xf32>
    %696 = vector.broadcast %695 : vector<1x256xf32> to vector<16x256xf32>
    %697 = arith.mulf %694, %696 : vector<16x256xf32>
    %698 = arith.addf %692, %697 : vector<16x256xf32>
    %c6_406 = arith.constant 6 : index
    %c0_407 = arith.constant 0 : index
    %c0_408 = arith.constant 0 : index
    %699 = vector.load %arg6[%c6_406, %c0_407, %c0_408] : memref<8x16x256xf32, #tpu.memory_space<vmem>>, vector<1x16x256xf32>
    %700 = vector.shape_cast %699 : vector<1x16x256xf32> to vector<16x256xf32>
    %701 = vector.extract_strided_slice %662 {offsets = [6, 0], sizes = [1, 256], strides = [1, 1]} : vector<8x256xf32> to vector<1x256xf32>
    %702 = vector.broadcast %701 : vector<1x256xf32> to vector<16x256xf32>
    %703 = arith.mulf %700, %702 : vector<16x256xf32>
    %704 = arith.addf %698, %703 : vector<16x256xf32>
    %c7_409 = arith.constant 7 : index
    %c0_410 = arith.constant 0 : index
    %c0_411 = arith.constant 0 : index
    %705 = vector.load %arg6[%c7_409, %c0_410, %c0_411] : memref<8x16x256xf32, #tpu.memory_space<vmem>>, vector<1x16x256xf32>
    %706 = vector.shape_cast %705 : vector<1x16x256xf32> to vector<16x256xf32>
    %707 = vector.extract_strided_slice %662 {offsets = [7, 0], sizes = [1, 256], strides = [1, 1]} : vector<8x256xf32> to vector<1x256xf32>
    %708 = vector.broadcast %707 : vector<1x256xf32> to vector<16x256xf32>
    %709 = arith.mulf %706, %708 : vector<16x256xf32>
    %710 = arith.addf %704, %709 : vector<16x256xf32>
    %711 = arith.subf %560, %710 : vector<16x256xf32>
    %cst_412 = arith.constant 0.000000e+00 : f32
    %cst_413 = arith.constant 1.000000e+00 : f32
    %712 = vector.broadcast %cst_412 : f32 to vector<16x256xf32>
    %713 = arith.maximumf %712, %711 : vector<16x256xf32>
    %714 = vector.broadcast %cst_413 : f32 to vector<16x256xf32>
    %715 = arith.minimumf %714, %713 : vector<16x256xf32>
    %cst_414 = arith.constant 2.000000e+00 : f32
    %716 = vector.broadcast %cst_414 : f32 to vector<16x256xf32>
    %717 = arith.mulf %716, %715 : vector<16x256xf32>
    %718 = arith.subf %717, %560 : vector<16x256xf32>
    %c0_415 = arith.constant 0 : index
    %c0_416 = arith.constant 0 : index
    %c0_417 = arith.constant 0 : index
    %719 = vector.load %arg7[%c0_415, %c0_416, %c0_417] : memref<16x8x256xf32, #tpu.memory_space<vmem>>, vector<1x8x256xf32>
    %720 = vector.shape_cast %719 : vector<1x8x256xf32> to vector<8x256xf32>
    %721 = vector.extract_strided_slice %718 {offsets = [0, 0], sizes = [1, 256], strides = [1, 1]} : vector<16x256xf32> to vector<1x256xf32>
    %722 = vector.broadcast %721 : vector<1x256xf32> to vector<8x256xf32>
    %723 = arith.mulf %720, %722 : vector<8x256xf32>
    %724 = arith.addf %246, %723 : vector<8x256xf32>
    %c1_418 = arith.constant 1 : index
    %c0_419 = arith.constant 0 : index
    %c0_420 = arith.constant 0 : index
    %725 = vector.load %arg7[%c1_418, %c0_419, %c0_420] : memref<16x8x256xf32, #tpu.memory_space<vmem>>, vector<1x8x256xf32>
    %726 = vector.shape_cast %725 : vector<1x8x256xf32> to vector<8x256xf32>
    %727 = vector.extract_strided_slice %718 {offsets = [1, 0], sizes = [1, 256], strides = [1, 1]} : vector<16x256xf32> to vector<1x256xf32>
    %728 = vector.broadcast %727 : vector<1x256xf32> to vector<8x256xf32>
    %729 = arith.mulf %726, %728 : vector<8x256xf32>
    %730 = arith.addf %724, %729 : vector<8x256xf32>
    %c2_421 = arith.constant 2 : index
    %c0_422 = arith.constant 0 : index
    %c0_423 = arith.constant 0 : index
    %731 = vector.load %arg7[%c2_421, %c0_422, %c0_423] : memref<16x8x256xf32, #tpu.memory_space<vmem>>, vector<1x8x256xf32>
    %732 = vector.shape_cast %731 : vector<1x8x256xf32> to vector<8x256xf32>
    %733 = vector.extract_strided_slice %718 {offsets = [2, 0], sizes = [1, 256], strides = [1, 1]} : vector<16x256xf32> to vector<1x256xf32>
    %734 = vector.broadcast %733 : vector<1x256xf32> to vector<8x256xf32>
    %735 = arith.mulf %732, %734 : vector<8x256xf32>
    %736 = arith.addf %730, %735 : vector<8x256xf32>
    %c3_424 = arith.constant 3 : index
    %c0_425 = arith.constant 0 : index
    %c0_426 = arith.constant 0 : index
    %737 = vector.load %arg7[%c3_424, %c0_425, %c0_426] : memref<16x8x256xf32, #tpu.memory_space<vmem>>, vector<1x8x256xf32>
    %738 = vector.shape_cast %737 : vector<1x8x256xf32> to vector<8x256xf32>
    %739 = vector.extract_strided_slice %718 {offsets = [3, 0], sizes = [1, 256], strides = [1, 1]} : vector<16x256xf32> to vector<1x256xf32>
    %740 = vector.broadcast %739 : vector<1x256xf32> to vector<8x256xf32>
    %741 = arith.mulf %738, %740 : vector<8x256xf32>
    %742 = arith.addf %736, %741 : vector<8x256xf32>
    %c4_427 = arith.constant 4 : index
    %c0_428 = arith.constant 0 : index
    %c0_429 = arith.constant 0 : index
    %743 = vector.load %arg7[%c4_427, %c0_428, %c0_429] : memref<16x8x256xf32, #tpu.memory_space<vmem>>, vector<1x8x256xf32>
    %744 = vector.shape_cast %743 : vector<1x8x256xf32> to vector<8x256xf32>
    %745 = vector.extract_strided_slice %718 {offsets = [4, 0], sizes = [1, 256], strides = [1, 1]} : vector<16x256xf32> to vector<1x256xf32>
    %746 = vector.broadcast %745 : vector<1x256xf32> to vector<8x256xf32>
    %747 = arith.mulf %744, %746 : vector<8x256xf32>
    %748 = arith.addf %742, %747 : vector<8x256xf32>
    %c5_430 = arith.constant 5 : index
    %c0_431 = arith.constant 0 : index
    %c0_432 = arith.constant 0 : index
    %749 = vector.load %arg7[%c5_430, %c0_431, %c0_432] : memref<16x8x256xf32, #tpu.memory_space<vmem>>, vector<1x8x256xf32>
    %750 = vector.shape_cast %749 : vector<1x8x256xf32> to vector<8x256xf32>
    %751 = vector.extract_strided_slice %718 {offsets = [5, 0], sizes = [1, 256], strides = [1, 1]} : vector<16x256xf32> to vector<1x256xf32>
    %752 = vector.broadcast %751 : vector<1x256xf32> to vector<8x256xf32>
    %753 = arith.mulf %750, %752 : vector<8x256xf32>
    %754 = arith.addf %748, %753 : vector<8x256xf32>
    %c6_433 = arith.constant 6 : index
    %c0_434 = arith.constant 0 : index
    %c0_435 = arith.constant 0 : index
    %755 = vector.load %arg7[%c6_433, %c0_434, %c0_435] : memref<16x8x256xf32, #tpu.memory_space<vmem>>, vector<1x8x256xf32>
    %756 = vector.shape_cast %755 : vector<1x8x256xf32> to vector<8x256xf32>
    %757 = vector.extract_strided_slice %718 {offsets = [6, 0], sizes = [1, 256], strides = [1, 1]} : vector<16x256xf32> to vector<1x256xf32>
    %758 = vector.broadcast %757 : vector<1x256xf32> to vector<8x256xf32>
    %759 = arith.mulf %756, %758 : vector<8x256xf32>
    %760 = arith.addf %754, %759 : vector<8x256xf32>
    %c7_436 = arith.constant 7 : index
    %c0_437 = arith.constant 0 : index
    %c0_438 = arith.constant 0 : index
    %761 = vector.load %arg7[%c7_436, %c0_437, %c0_438] : memref<16x8x256xf32, #tpu.memory_space<vmem>>, vector<1x8x256xf32>
    %762 = vector.shape_cast %761 : vector<1x8x256xf32> to vector<8x256xf32>
    %763 = vector.extract_strided_slice %718 {offsets = [7, 0], sizes = [1, 256], strides = [1, 1]} : vector<16x256xf32> to vector<1x256xf32>
    %764 = vector.broadcast %763 : vector<1x256xf32> to vector<8x256xf32>
    %765 = arith.mulf %762, %764 : vector<8x256xf32>
    %766 = arith.addf %760, %765 : vector<8x256xf32>
    %c8_439 = arith.constant 8 : index
    %c0_440 = arith.constant 0 : index
    %c0_441 = arith.constant 0 : index
    %767 = vector.load %arg7[%c8_439, %c0_440, %c0_441] : memref<16x8x256xf32, #tpu.memory_space<vmem>>, vector<1x8x256xf32>
    %768 = vector.shape_cast %767 : vector<1x8x256xf32> to vector<8x256xf32>
    %769 = vector.extract_strided_slice %718 {offsets = [8, 0], sizes = [1, 256], strides = [1, 1]} : vector<16x256xf32> to vector<1x256xf32>
    %770 = vector.broadcast %769 : vector<1x256xf32> to vector<8x256xf32>
    %771 = arith.mulf %768, %770 : vector<8x256xf32>
    %772 = arith.addf %766, %771 : vector<8x256xf32>
    %c9_442 = arith.constant 9 : index
    %c0_443 = arith.constant 0 : index
    %c0_444 = arith.constant 0 : index
    %773 = vector.load %arg7[%c9_442, %c0_443, %c0_444] : memref<16x8x256xf32, #tpu.memory_space<vmem>>, vector<1x8x256xf32>
    %774 = vector.shape_cast %773 : vector<1x8x256xf32> to vector<8x256xf32>
    %775 = vector.extract_strided_slice %718 {offsets = [9, 0], sizes = [1, 256], strides = [1, 1]} : vector<16x256xf32> to vector<1x256xf32>
    %776 = vector.broadcast %775 : vector<1x256xf32> to vector<8x256xf32>
    %777 = arith.mulf %774, %776 : vector<8x256xf32>
    %778 = arith.addf %772, %777 : vector<8x256xf32>
    %c10_445 = arith.constant 10 : index
    %c0_446 = arith.constant 0 : index
    %c0_447 = arith.constant 0 : index
    %779 = vector.load %arg7[%c10_445, %c0_446, %c0_447] : memref<16x8x256xf32, #tpu.memory_space<vmem>>, vector<1x8x256xf32>
    %780 = vector.shape_cast %779 : vector<1x8x256xf32> to vector<8x256xf32>
    %781 = vector.extract_strided_slice %718 {offsets = [10, 0], sizes = [1, 256], strides = [1, 1]} : vector<16x256xf32> to vector<1x256xf32>
    %782 = vector.broadcast %781 : vector<1x256xf32> to vector<8x256xf32>
    %783 = arith.mulf %780, %782 : vector<8x256xf32>
    %784 = arith.addf %778, %783 : vector<8x256xf32>
    %c11_448 = arith.constant 11 : index
    %c0_449 = arith.constant 0 : index
    %c0_450 = arith.constant 0 : index
    %785 = vector.load %arg7[%c11_448, %c0_449, %c0_450] : memref<16x8x256xf32, #tpu.memory_space<vmem>>, vector<1x8x256xf32>
    %786 = vector.shape_cast %785 : vector<1x8x256xf32> to vector<8x256xf32>
    %787 = vector.extract_strided_slice %718 {offsets = [11, 0], sizes = [1, 256], strides = [1, 1]} : vector<16x256xf32> to vector<1x256xf32>
    %788 = vector.broadcast %787 : vector<1x256xf32> to vector<8x256xf32>
    %789 = arith.mulf %786, %788 : vector<8x256xf32>
    %790 = arith.addf %784, %789 : vector<8x256xf32>
    %c12_451 = arith.constant 12 : index
    %c0_452 = arith.constant 0 : index
    %c0_453 = arith.constant 0 : index
    %791 = vector.load %arg7[%c12_451, %c0_452, %c0_453] : memref<16x8x256xf32, #tpu.memory_space<vmem>>, vector<1x8x256xf32>
    %792 = vector.shape_cast %791 : vector<1x8x256xf32> to vector<8x256xf32>
    %793 = vector.extract_strided_slice %718 {offsets = [12, 0], sizes = [1, 256], strides = [1, 1]} : vector<16x256xf32> to vector<1x256xf32>
    %794 = vector.broadcast %793 : vector<1x256xf32> to vector<8x256xf32>
    %795 = arith.mulf %792, %794 : vector<8x256xf32>
    %796 = arith.addf %790, %795 : vector<8x256xf32>
    %c13_454 = arith.constant 13 : index
    %c0_455 = arith.constant 0 : index
    %c0_456 = arith.constant 0 : index
    %797 = vector.load %arg7[%c13_454, %c0_455, %c0_456] : memref<16x8x256xf32, #tpu.memory_space<vmem>>, vector<1x8x256xf32>
    %798 = vector.shape_cast %797 : vector<1x8x256xf32> to vector<8x256xf32>
    %799 = vector.extract_strided_slice %718 {offsets = [13, 0], sizes = [1, 256], strides = [1, 1]} : vector<16x256xf32> to vector<1x256xf32>
    %800 = vector.broadcast %799 : vector<1x256xf32> to vector<8x256xf32>
    %801 = arith.mulf %798, %800 : vector<8x256xf32>
    %802 = arith.addf %796, %801 : vector<8x256xf32>
    %c14_457 = arith.constant 14 : index
    %c0_458 = arith.constant 0 : index
    %c0_459 = arith.constant 0 : index
    %803 = vector.load %arg7[%c14_457, %c0_458, %c0_459] : memref<16x8x256xf32, #tpu.memory_space<vmem>>, vector<1x8x256xf32>
    %804 = vector.shape_cast %803 : vector<1x8x256xf32> to vector<8x256xf32>
    %805 = vector.extract_strided_slice %718 {offsets = [14, 0], sizes = [1, 256], strides = [1, 1]} : vector<16x256xf32> to vector<1x256xf32>
    %806 = vector.broadcast %805 : vector<1x256xf32> to vector<8x256xf32>
    %807 = arith.mulf %804, %806 : vector<8x256xf32>
    %808 = arith.addf %802, %807 : vector<8x256xf32>
    %c15_460 = arith.constant 15 : index
    %c0_461 = arith.constant 0 : index
    %c0_462 = arith.constant 0 : index
    %809 = vector.load %arg7[%c15_460, %c0_461, %c0_462] : memref<16x8x256xf32, #tpu.memory_space<vmem>>, vector<1x8x256xf32>
    %810 = vector.shape_cast %809 : vector<1x8x256xf32> to vector<8x256xf32>
    %811 = vector.extract_strided_slice %718 {offsets = [15, 0], sizes = [1, 256], strides = [1, 1]} : vector<16x256xf32> to vector<1x256xf32>
    %812 = vector.broadcast %811 : vector<1x256xf32> to vector<8x256xf32>
    %813 = arith.mulf %810, %812 : vector<8x256xf32>
    %814 = arith.addf %808, %813 : vector<8x256xf32>
    %815 = arith.addf %662, %814 : vector<8x256xf32>
    %cst_463 = arith.constant 0.000000e+00 : f32
    %816 = vector.broadcast %cst_463 : f32 to vector<8x256xf32>
    %817 = arith.maximumf %815, %816 : vector<8x256xf32>
    %c0_464 = arith.constant 0 : index
    %c0_465 = arith.constant 0 : index
    %c0_466 = arith.constant 0 : index
    %818 = vector.load %arg6[%c0_464, %c0_465, %c0_466] : memref<8x16x256xf32, #tpu.memory_space<vmem>>, vector<1x16x256xf32>
    %819 = vector.shape_cast %818 : vector<1x16x256xf32> to vector<16x256xf32>
    %820 = vector.extract_strided_slice %817 {offsets = [0, 0], sizes = [1, 256], strides = [1, 1]} : vector<8x256xf32> to vector<1x256xf32>
    %821 = vector.broadcast %820 : vector<1x256xf32> to vector<16x256xf32>
    %822 = arith.mulf %819, %821 : vector<16x256xf32>
    %823 = arith.addf %249, %822 : vector<16x256xf32>
    %c1_467 = arith.constant 1 : index
    %c0_468 = arith.constant 0 : index
    %c0_469 = arith.constant 0 : index
    %824 = vector.load %arg6[%c1_467, %c0_468, %c0_469] : memref<8x16x256xf32, #tpu.memory_space<vmem>>, vector<1x16x256xf32>
    %825 = vector.shape_cast %824 : vector<1x16x256xf32> to vector<16x256xf32>
    %826 = vector.extract_strided_slice %817 {offsets = [1, 0], sizes = [1, 256], strides = [1, 1]} : vector<8x256xf32> to vector<1x256xf32>
    %827 = vector.broadcast %826 : vector<1x256xf32> to vector<16x256xf32>
    %828 = arith.mulf %825, %827 : vector<16x256xf32>
    %829 = arith.addf %823, %828 : vector<16x256xf32>
    %c2_470 = arith.constant 2 : index
    %c0_471 = arith.constant 0 : index
    %c0_472 = arith.constant 0 : index
    %830 = vector.load %arg6[%c2_470, %c0_471, %c0_472] : memref<8x16x256xf32, #tpu.memory_space<vmem>>, vector<1x16x256xf32>
    %831 = vector.shape_cast %830 : vector<1x16x256xf32> to vector<16x256xf32>
    %832 = vector.extract_strided_slice %817 {offsets = [2, 0], sizes = [1, 256], strides = [1, 1]} : vector<8x256xf32> to vector<1x256xf32>
    %833 = vector.broadcast %832 : vector<1x256xf32> to vector<16x256xf32>
    %834 = arith.mulf %831, %833 : vector<16x256xf32>
    %835 = arith.addf %829, %834 : vector<16x256xf32>
    %c3_473 = arith.constant 3 : index
    %c0_474 = arith.constant 0 : index
    %c0_475 = arith.constant 0 : index
    %836 = vector.load %arg6[%c3_473, %c0_474, %c0_475] : memref<8x16x256xf32, #tpu.memory_space<vmem>>, vector<1x16x256xf32>
    %837 = vector.shape_cast %836 : vector<1x16x256xf32> to vector<16x256xf32>
    %838 = vector.extract_strided_slice %817 {offsets = [3, 0], sizes = [1, 256], strides = [1, 1]} : vector<8x256xf32> to vector<1x256xf32>
    %839 = vector.broadcast %838 : vector<1x256xf32> to vector<16x256xf32>
    %840 = arith.mulf %837, %839 : vector<16x256xf32>
    %841 = arith.addf %835, %840 : vector<16x256xf32>
    %c4_476 = arith.constant 4 : index
    %c0_477 = arith.constant 0 : index
    %c0_478 = arith.constant 0 : index
    %842 = vector.load %arg6[%c4_476, %c0_477, %c0_478] : memref<8x16x256xf32, #tpu.memory_space<vmem>>, vector<1x16x256xf32>
    %843 = vector.shape_cast %842 : vector<1x16x256xf32> to vector<16x256xf32>
    %844 = vector.extract_strided_slice %817 {offsets = [4, 0], sizes = [1, 256], strides = [1, 1]} : vector<8x256xf32> to vector<1x256xf32>
    %845 = vector.broadcast %844 : vector<1x256xf32> to vector<16x256xf32>
    %846 = arith.mulf %843, %845 : vector<16x256xf32>
    %847 = arith.addf %841, %846 : vector<16x256xf32>
    %c5_479 = arith.constant 5 : index
    %c0_480 = arith.constant 0 : index
    %c0_481 = arith.constant 0 : index
    %848 = vector.load %arg6[%c5_479, %c0_480, %c0_481] : memref<8x16x256xf32, #tpu.memory_space<vmem>>, vector<1x16x256xf32>
    %849 = vector.shape_cast %848 : vector<1x16x256xf32> to vector<16x256xf32>
    %850 = vector.extract_strided_slice %817 {offsets = [5, 0], sizes = [1, 256], strides = [1, 1]} : vector<8x256xf32> to vector<1x256xf32>
    %851 = vector.broadcast %850 : vector<1x256xf32> to vector<16x256xf32>
    %852 = arith.mulf %849, %851 : vector<16x256xf32>
    %853 = arith.addf %847, %852 : vector<16x256xf32>
    %c6_482 = arith.constant 6 : index
    %c0_483 = arith.constant 0 : index
    %c0_484 = arith.constant 0 : index
    %854 = vector.load %arg6[%c6_482, %c0_483, %c0_484] : memref<8x16x256xf32, #tpu.memory_space<vmem>>, vector<1x16x256xf32>
    %855 = vector.shape_cast %854 : vector<1x16x256xf32> to vector<16x256xf32>
    %856 = vector.extract_strided_slice %817 {offsets = [6, 0], sizes = [1, 256], strides = [1, 1]} : vector<8x256xf32> to vector<1x256xf32>
    %857 = vector.broadcast %856 : vector<1x256xf32> to vector<16x256xf32>
    %858 = arith.mulf %855, %857 : vector<16x256xf32>
    %859 = arith.addf %853, %858 : vector<16x256xf32>
    %c7_485 = arith.constant 7 : index
    %c0_486 = arith.constant 0 : index
    %c0_487 = arith.constant 0 : index
    %860 = vector.load %arg6[%c7_485, %c0_486, %c0_487] : memref<8x16x256xf32, #tpu.memory_space<vmem>>, vector<1x16x256xf32>
    %861 = vector.shape_cast %860 : vector<1x16x256xf32> to vector<16x256xf32>
    %862 = vector.extract_strided_slice %817 {offsets = [7, 0], sizes = [1, 256], strides = [1, 1]} : vector<8x256xf32> to vector<1x256xf32>
    %863 = vector.broadcast %862 : vector<1x256xf32> to vector<16x256xf32>
    %864 = arith.mulf %861, %863 : vector<16x256xf32>
    %865 = arith.addf %859, %864 : vector<16x256xf32>
    %866 = arith.subf %715, %865 : vector<16x256xf32>
    %cst_488 = arith.constant 0.000000e+00 : f32
    %cst_489 = arith.constant 1.000000e+00 : f32
    %867 = vector.broadcast %cst_488 : f32 to vector<16x256xf32>
    %868 = arith.maximumf %867, %866 : vector<16x256xf32>
    %869 = vector.broadcast %cst_489 : f32 to vector<16x256xf32>
    %870 = arith.minimumf %869, %868 : vector<16x256xf32>
    %c0_490 = arith.constant 0 : index
    %c0_491 = arith.constant 0 : index
    %871 = vector.load %arg5[%c0_490, %c0_491] : memref<16x256xf32, #tpu.memory_space<vmem>>, vector<16x256xf32>
    tpu.vector_store %arg5[%c0_490, %c0_491], %870 {strides = array<i32>} : memref<16x256xf32, #tpu.memory_space<vmem>>, vector<16x256xf32>,
    return
  }
  func.func @transform_0(%arg0: i32) -> (i32, i32, i32) {
    %c0_i32 = arith.constant 0 : i32
    %c0_i32_0 = arith.constant 0 : i32
    %c0_i32_1 = arith.constant 0 : i32
    return %c0_i32, %c0_i32_0, %arg0 : i32, i32, i32
  }
  func.func @transform_1(%arg0: i32) -> (i32, i32, i32) {
    %c0_i32 = arith.constant 0 : i32
    %c0_i32_0 = arith.constant 0 : i32
    %c0_i32_1 = arith.constant 0 : i32
    return %c0_i32, %c0_i32_0, %arg0 : i32, i32, i32
  }
  func.func @transform_2(%arg0: i32) -> (i32, i32) {
    %c0_i32 = arith.constant 0 : i32
    %c0_i32_0 = arith.constant 0 : i32
    return %c0_i32, %arg0 : i32, i32
  }
  func.func @transform_3(%arg0: i32) -> (i32, i32) {
    %c0_i32 = arith.constant 0 : i32
    %c0_i32_0 = arith.constant 0 : i32
    return %c0_i32, %arg0 : i32, i32
  }
  func.func @transform_4(%arg0: i32) -> (i32, i32) {
    %c0_i32 = arith.constant 0 : i32
    %c0_i32_0 = arith.constant 0 : i32
    return %c0_i32, %arg0 : i32, i32
  }
}

</mosaic_0001>

<llo_original>
// kernel: tpu_custom_call.1
$region0: #{tpu_custom_call.1}
  #allocation0 [shape = 'u32[]', space=smem, size = 0x4, offset = 0x4, fixed_abs, tag = 'smem constant byte address 0x4 - core index']
  #allocation1 [shape = 'u32[144,128]{1,0:T(1,128)}', space=vmem, size = 0x12000, scoped, tag = 'internal scratch']
  #allocation2 [shape = 'f32[8,16,256]{2,1,0:T(8,128)}', space=vmem, size = 0x20000, scoped, tag = 'scratch operand']
  #allocation3 [shape = 'f32[16,8,256]{2,1,0:T(8,128)}', space=vmem, size = 0x20000, scoped, tag = 'scratch operand']
  %s0 = inlined_call_operand.hbm [shape: f32[8,16,256], index: 0, kind: input, shape index: {}]
  %s1 = inlined_call_operand.hbm [shape: f32[16,8,256], index: 1, kind: input, shape index: {}]
  %s2 = inlined_call_operand.hbm [shape: f32[8,256], index: 2, kind: input, shape index: {}]
  %s3 = inlined_call_operand.hbm [shape: f32[16,256], index: 3, kind: input, shape index: {}]
  %s4 = inlined_call_operand.hbm [shape: f32[16,256], index: 4, kind: output, shape index: {}]
  %s5 = sld [smem:[#allocation0]]
  $region49: #{tpu_custom_call.1} parent=0
    _
  %s7 = ssub.s32 1, %s5
  %s8 = scalar_select 0, %s7, %s5
  $region1: #{tpu_custom_call.1} parent=0
    #allocation4 [shape = 'u8[131072]{0}', space=vmem, size = 0x20000, scoped, tag = 'input window, operand 0, single buffered']
    #allocation5 [shape = 's32[1]{0}', space=sflag, size = 0x4, scoped, tag = 'scoped memory for tpu_custom_call.1']
    #allocation6 [shape = 's32[1]{0}', space=sflag, size = 0x4, scoped, tag = 'scoped memory for tpu_custom_call.1']
    #allocation7 [shape = 'u8[131072]{0}', space=vmem, size = 0x20000, scoped, tag = 'input window, operand 1, single buffered']
    #allocation8 [shape = 's32[1]{0}', space=sflag, size = 0x4, scoped, tag = 'scoped memory for tpu_custom_call.1']
    #allocation9 [shape = 'u8[8192]{0}', space=vmem, size = 0x2000, scoped, tag = 'input window, operand 2, single buffered']
    #allocation10 [shape = 'u8[16384]{0}', space=vmem, size = 0x4000, scoped, tag = 'input window, operand 3, single buffered']
    #allocation11 [shape = 's32[1]{0}', space=sflag, size = 0x4, scoped, tag = 'scoped memory for tpu_custom_call.1']
    #allocation12 [shape = 'u8[16384]{0}', space=vmem, size = 0x4000, scoped, tag = 'output window, operand 0, single buffered']
    %9 = vsyncpa [#allocation5], 0
    %10 = vsyncpa [#allocation8], 0
    %11 = vsyncpa [#allocation11], 0
    %12 = vsyncpa [#allocation6], 0
    // Predicated region
    $region2: #{tpu_custom_call.1} parent=1 // pred_check
      _
    $region3: #{tpu_custom_call.1} parent=1 // pred_check_branch
      %14 = sbr.rel (0) target = $region5
    $region4: #{tpu_custom_call.1} parent=1 // pred_region
      %s16 = ssub.s32 4096, 4096
      %17 = vsyncadd [#allocation5], %s16
      %s18 = sshll.u32 [#allocation4], 4
      %s19 = int_to_ptr.vmem [resolvable:$true] %s18
      %24 = dma.hbm_to_vmem [thread:$0]  %s0, 4096, %s19, [#allocation5], 256, 256, 16
    $region5: #{tpu_custom_call.1} parent=1 // pred_fallthru
      _
    // Predicated region
    $region6: #{tpu_custom_call.1} parent=1 // pred_check
      _
    $region7: #{tpu_custom_call.1} parent=1 // pred_check_branch
      %26 = sbr.rel (0) target = $region9
    $region8: #{tpu_custom_call.1} parent=1 // pred_region
      %s28 = ssub.s32 4096, 4096
      %29 = vsyncadd [#allocation8], %s28
      %s30 = sshll.u32 [#allocation7], 4
      %s31 = int_to_ptr.vmem [resolvable:$true] %s30
      %36 = dma.hbm_to_vmem [thread:$0]  %s1, 4096, %s31, [#allocation8], 256, 256, 16
    $region9: #{tpu_custom_call.1} parent=1 // pred_fallthru
      _
    // Predicated region
    $region10: #{tpu_custom_call.1} parent=1 // pred_check
      _
    $region11: #{tpu_custom_call.1} parent=1 // pred_check_branch
      %38 = sbr.rel (0) target = $region13
    $region12: #{tpu_custom_call.1} parent=1 // pred_region
      %s40 = ssub.s32 256, 256
      %41 = vsyncadd [#allocation8], %s40
      %s43 = sshll.u32 [#allocation9], 4
      %s44 = int_to_ptr.vmem [resolvable:$true] %s43
      %46 = dma.hbm_to_vmem [thread:$0]  %s2, 256, %s44, [#allocation8]
    $region13: #{tpu_custom_call.1} parent=1 // pred_fallthru
      _
    // Predicated region
    $region14: #{tpu_custom_call.1} parent=1 // pred_check
      _
    $region15: #{tpu_custom_call.1} parent=1 // pred_check_branch
      %48 = sbr.rel (0) target = $region17
    $region16: #{tpu_custom_call.1} parent=1 // pred_region
      %s50 = ssub.s32 512, 512
      %51 = vsyncadd [#allocation11], %s50
      %s52 = sshll.u32 [#allocation10], 4
      %s53 = int_to_ptr.vmem [resolvable:$true] %s52
      %58 = dma.hbm_to_vmem [thread:$0]  %s3, 512, %s53, [#allocation11], 256, 256, 16
    $region17: #{tpu_custom_call.1} parent=1 // pred_fallthru
      _
    // Predicated region
    $region18: #{tpu_custom_call.1} parent=1 // pred_check
      _
    $region19: #{tpu_custom_call.1} parent=1 // pred_check_branch
      %60 = sbr.rel (0) target = $region21
    $region20: #{tpu_custom_call.1} parent=1 // pred_region
      %61 = dma.done [#allocation5], 4096
    $region21: #{tpu_custom_call.1} parent=1 // pred_fallthru
      _
    // Predicated region
    $region22: #{tpu_custom_call.1} parent=1 // pred_check
      _
    $region23: #{tpu_custom_call.1} parent=1 // pred_check_branch
      %63 = sbr.rel (0) target = $region25
    $region24: #{tpu_custom_call.1} parent=1 // pred_region
      %64 = dma.done [#allocation8], 4096
    $region25: #{tpu_custom_call.1} parent=1 // pred_fallthru
      _
    // Predicated region
    $region26: #{tpu_custom_call.1} parent=1 // pred_check
      _
    $region27: #{tpu_custom_call.1} parent=1 // pred_check_branch
      %66 = sbr.rel (0) target = $region29
    $region28: #{tpu_custom_call.1} parent=1 // pred_region
      %67 = dma.done [#allocation8], 256
    $region29: #{tpu_custom_call.1} parent=1 // pred_fallthru
      _
    // Predicated region
    $region30: #{tpu_custom_call.1} parent=1 // pred_check
      _
    $region31: #{tpu_custom_call.1} parent=1 // pred_check_branch
      %69 = sbr.rel (0) target = $region33
    $region32: #{tpu_custom_call.1} parent=1 // pred_region
      %70 = dma.done [#allocation11], 512
    $region33: #{tpu_custom_call.1} parent=1 // pred_fallthru
      _
    %v71 = vld [vmem:[#allocation7] sm:$0xff]
    %v72 = vld [vmem:[#allocation7 + $0x8] sm:$0xff]
    %v73 = vmul.f32 %v71, %v71
    %v74 = vmul.f32 %v72, %v72
    %v75 = vadd.f32 %v73, 0.0
    %v76 = vadd.f32 %v74, 0.0
    %s77 = scalar_lea.vmem [#allocation7], 16
    %v78 = vld [vmem:[%s77] sm:$0xff]
    %v79 = vld [vmem:[%s77 + $0x8] sm:$0xff]
    %v80 = vmul.f32 %v78, %v78
    %v81 = vmul.f32 %v79, %v79
    %v82 = vadd.f32 %v75, %v80
    %v83 = vadd.f32 %v76, %v81
    %s84 = scalar_lea.vmem [#allocation7], 32
    %v85 = vld [vmem:[%s84] sm:$0xff]
    %v86 = vld [vmem:[%s84 + $0x8] sm:$0xff]
    %v87 = vmul.f32 %v85, %v85
    %v88 = vmul.f32 %v86, %v86
    %v89 = vadd.f32 %v82, %v87
    %v90 = vadd.f32 %v83, %v88
    %s91 = scalar_lea.vmem [#allocation7], 48
    %v92 = vld [vmem:[%s91] sm:$0xff]
    %v93 = vld [vmem:[%s91 + $0x8] sm:$0xff]
    %v94 = vmul.f32 %v92, %v92
    %v95 = vmul.f32 %v93, %v93
    %v96 = vadd.f32 %v89, %v94
    %v97 = vadd.f32 %v90, %v95
    %s98 = scalar_lea.vmem [#allocation7], 64
    %v99 = vld [vmem:[%s98] sm:$0xff]
    %v100 = vld [vmem:[%s98 + $0x8] sm:$0xff]
    %v101 = vmul.f32 %v99, %v99
    %v102 = vmul.f32 %v100, %v100
    %v103 = vadd.f32 %v96, %v101
    %v104 = vadd.f32 %v97, %v102
    %s105 = scalar_lea.vmem [#allocation7], 80
    %v106 = vld [vmem:[%s105] sm:$0xff]
    %v107 = vld [vmem:[%s105 + $0x8] sm:$0xff]
    %v108 = vmul.f32 %v106, %v106
    %v109 = vmul.f32 %v107, %v107
    %v110 = vadd.f32 %v103, %v108
    %v111 = vadd.f32 %v104, %v109
    %s112 = scalar_lea.vmem [#allocation7], 96
    %v113 = vld [vmem:[%s112] sm:$0xff]
    %v114 = vld [vmem:[%s112 + $0x8] sm:$0xff]
    %v115 = vmul.f32 %v113, %v113
    %v116 = vmul.f32 %v114, %v114
    %v117 = vadd.f32 %v110, %v115
    %v118 = vadd.f32 %v111, %v116
    %s119 = scalar_lea.vmem [#allocation7], 112
    %v120 = vld [vmem:[%s119] sm:$0xff]
    %v121 = vld [vmem:[%s119 + $0x8] sm:$0xff]
    %v122 = vmul.f32 %v120, %v120
    %v123 = vmul.f32 %v121, %v121
    %v124 = vadd.f32 %v117, %v122
    %v125 = vadd.f32 %v118, %v123
    %s126 = scalar_lea.vmem [#allocation7], 128
    %v127 = vld [vmem:[%s126] sm:$0xff]
    %v128 = vld [vmem:[%s126 + $0x8] sm:$0xff]
    %v129 = vmul.f32 %v127, %v127
    %v130 = vmul.f32 %v128, %v128
    %v131 = vadd.f32 %v124, %v129
    %v132 = vadd.f32 %v125, %v130
    %s133 = scalar_lea.vmem [#allocation7], 144
    %v134 = vld [vmem:[%s133] sm:$0xff]
    %v135 = vld [vmem:[%s133 + $0x8] sm:$0xff]
    %v136 = vmul.f32 %v134, %v134
    %v137 = vmul.f32 %v135, %v135
    %v138 = vadd.f32 %v131, %v136
    %v139 = vadd.f32 %v132, %v137
    %s140 = scalar_lea.vmem [#allocation7], 160
    %v141 = vld [vmem:[%s140] sm:$0xff]
    %v142 = vld [vmem:[%s140 + $0x8] sm:$0xff]
    %v143 = vmul.f32 %v141, %v141
    %v144 = vmul.f32 %v142, %v142
    %v145 = vadd.f32 %v138, %v143
    %v146 = vadd.f32 %v139, %v144
    %s147 = scalar_lea.vmem [#allocation7], 176
    %v148 = vld [vmem:[%s147] sm:$0xff]
    %v149 = vld [vmem:[%s147 + $0x8] sm:$0xff]
    %v150 = vmul.f32 %v148, %v148
    %v151 = vmul.f32 %v149, %v149
    %v152 = vadd.f32 %v145, %v150
    %v153 = vadd.f32 %v146, %v151
    %s154 = scalar_lea.vmem [#allocation7], 192
    %v155 = vld [vmem:[%s154] sm:$0xff]
    %v156 = vld [vmem:[%s154 + $0x8] sm:$0xff]
    %v157 = vmul.f32 %v155, %v155
    %v158 = vmul.f32 %v156, %v156
    %v159 = vadd.f32 %v152, %v157
    %v160 = vadd.f32 %v153, %v158
    %s161 = scalar_lea.vmem [#allocation7], 208
    %v162 = vld [vmem:[%s161] sm:$0xff]
    %v163 = vld [vmem:[%s161 + $0x8] sm:$0xff]
    %v164 = vmul.f32 %v162, %v162
    %v165 = vmul.f32 %v163, %v163
    %v166 = vadd.f32 %v159, %v164
    %v167 = vadd.f32 %v160, %v165
    %s168 = scalar_lea.vmem [#allocation7], 224
    %v169 = vld [vmem:[%s168] sm:$0xff]
    %v170 = vld [vmem:[%s168 + $0x8] sm:$0xff]
    %v171 = vmul.f32 %v169, %v169
    %v172 = vmul.f32 %v170, %v170
    %v173 = vadd.f32 %v166, %v171
    %v174 = vadd.f32 %v167, %v172
    %s175 = scalar_lea.vmem [#allocation7], 240
    %v176 = vld [vmem:[%s175] sm:$0xff]
    %v177 = vld [vmem:[%s175 + $0x8] sm:$0xff]
    %v178 = vmul.f32 %v176, %v176
    %v179 = vmul.f32 %v177, %v177
    %v180 = vadd.f32 %v173, %v178
    %v181 = vadd.f32 %v174, %v179
    %v182 = vrot.slane %v180, 4
    %v183 = vadd.f32 %v180, %v182
    %v184 = vrot.slane %v183, 2
    %v185 = vadd.f32 %v183, %v184
    %v186 = vrot.slane %v185, 1
    %v187 = vadd.f32 %v185, %v186
    %v188 = vrot.slane %v181, 4
    %v189 = vadd.f32 %v181, %v188
    %v190 = vrot.slane %v189, 2
    %v191 = vadd.f32 %v189, %v190
    %v192 = vrot.slane %v191, 1
    %v193 = vadd.f32 %v191, %v192
    %v194 = vrsqrt.pop %v187
    %v195 = vmul.f32 %v187, %v194
    %vm196 = vcmp.eq.f32.partialorder %v187, inf
    %v197 = vsel %vm196, %v187, %v195
    %vm198 = vcmp.eq.f32.partialorder %v187, 0.0
    %v199 = vand.u32 %v187, 2147483648
    %v200 = vsel %vm198, %v199, %v197
    %v201 = vrsqrt.pop %v193
    %v202 = vmul.f32 %v193, %v201
    %vm203 = vcmp.eq.f32.partialorder %v193, inf
    %v204 = vsel %vm203, %v193, %v202
    %vm205 = vcmp.eq.f32.partialorder %v193, 0.0
    %v206 = vand.u32 %v193, 2147483648
    %v207 = vsel %vm205, %v206, %v204
    %vm208 = vcmp.gt.f32.partialorder %v200, 1e-06
    %vm209 = vcmp.gt.f32.partialorder %v207, 1e-06
    %v210 = vmax.f32 %v200, 1e-06
    %v211 = vmax.f32 %v207, 1e-06
    %v212 = vrcp.pop %v210
    %v213 = vmul.f32 0.9, %v212
    %v214 = vrcp.pop %v211
    %v215 = vmul.f32 0.9, %v214
    %v216 = vsel %vm208, %v213, 1.0
    %v217 = vsel %vm209, %v215, 1.0
    %v218 = vmul.f32 %v71, %v216
    %v219 = vmul.f32 %v72, %v217
    %220 = vst [vmem:[#allocation3] sm:$0xff] %v218
    %221 = vst [vmem:[#allocation3 + $0x8] sm:$0xff] %v219
    %v222 = vld [vmem:[%s77] sm:$0xff]
    %v223 = vld [vmem:[%s77 + $0x8] sm:$0xff]
    %v224 = vmul.f32 %v222, %v216
    %v225 = vmul.f32 %v223, %v217
    %s226 = scalar_lea.vmem [#allocation3], 16
    %227 = vst [vmem:[%s226] sm:$0xff] %v224
    %228 = vst [vmem:[%s226 + $0x8] sm:$0xff] %v225
    %v229 = vld [vmem:[%s84] sm:$0xff]
    %v230 = vld [vmem:[%s84 + $0x8] sm:$0xff]
    %v231 = vmul.f32 %v229, %v216
    %v232 = vmul.f32 %v230, %v217
    %s233 = scalar_lea.vmem [#allocation3], 32
    %234 = vst [vmem:[%s233] sm:$0xff] %v231
    %235 = vst [vmem:[%s233 + $0x8] sm:$0xff] %v232
    %v236 = vld [vmem:[%s91] sm:$0xff]
    %v237 = vld [vmem:[%s91 + $0x8] sm:$0xff]
    %v238 = vmul.f32 %v236, %v216
    %v239 = vmul.f32 %v237, %v217
    %s240 = scalar_lea.vmem [#allocation3], 48
    %241 = vst [vmem:[%s240] sm:$0xff] %v238
    %242 = vst [vmem:[%s240 + $0x8] sm:$0xff] %v239
    %v243 = vld [vmem:[%s98] sm:$0xff]
    %v244 = vld [vmem:[%s98 + $0x8] sm:$0xff]
    %v245 = vmul.f32 %v243, %v216
    %v246 = vmul.f32 %v244, %v217
    %s247 = scalar_lea.vmem [#allocation3], 64
    %248 = vst [vmem:[%s247] sm:$0xff] %v245
    %249 = vst [vmem:[%s247 + $0x8] sm:$0xff] %v246
    %v250 = vld [vmem:[%s105] sm:$0xff]
    %v251 = vld [vmem:[%s105 + $0x8] sm:$0xff]
    %v252 = vmul.f32 %v250, %v216
    %v253 = vmul.f32 %v251, %v217
    %s254 = scalar_lea.vmem [#allocation3], 80
    %255 = vst [vmem:[%s254] sm:$0xff] %v252
    %256 = vst [vmem:[%s254 + $0x8] sm:$0xff] %v253
    %v257 = vld [vmem:[%s112] sm:$0xff]
    %v258 = vld [vmem:[%s112 + $0x8] sm:$0xff]
    %v259 = vmul.f32 %v257, %v216
    %v260 = vmul.f32 %v258, %v217
    %s261 = scalar_lea.vmem [#allocation3], 96
    %262 = vst [vmem:[%s261] sm:$0xff] %v259
    %263 = vst [vmem:[%s261 + $0x8] sm:$0xff] %v260
    %v264 = vld [vmem:[%s119] sm:$0xff]
    %v265 = vld [vmem:[%s119 + $0x8] sm:$0xff]
    %v266 = vmul.f32 %v264, %v216
    %v267 = vmul.f32 %v265, %v217
    %s268 = scalar_lea.vmem [#allocation3], 112
    %269 = vst [vmem:[%s268] sm:$0xff] %v266
    %270 = vst [vmem:[%s268 + $0x8] sm:$0xff] %v267
    %v271 = vld [vmem:[%s126] sm:$0xff]
    %v272 = vld [vmem:[%s126 + $0x8] sm:$0xff]
    %v273 = vmul.f32 %v271, %v216
    %v274 = vmul.f32 %v272, %v217
    %s275 = scalar_lea.vmem [#allocation3], 128
    %276 = vst [vmem:[%s275] sm:$0xff] %v273
    %277 = vst [vmem:[%s275 + $0x8] sm:$0xff] %v274
    %v278 = vld [vmem:[%s133] sm:$0xff]
    %v279 = vld [vmem:[%s133 + $0x8] sm:$0xff]
    %v280 = vmul.f32 %v278, %v216
    %v281 = vmul.f32 %v279, %v217
    %s282 = scalar_lea.vmem [#allocation3], 144
    %283 = vst [vmem:[%s282] sm:$0xff] %v280
    %284 = vst [vmem:[%s282 + $0x8] sm:$0xff] %v281
    %v285 = vld [vmem:[%s140] sm:$0xff]
    %v286 = vld [vmem:[%s140 + $0x8] sm:$0xff]
    %v287 = vmul.f32 %v285, %v216
    %v288 = vmul.f32 %v286, %v217
    %s289 = scalar_lea.vmem [#allocation3], 160
    %290 = vst [vmem:[%s289] sm:$0xff] %v287
    %291 = vst [vmem:[%s289 + $0x8] sm:$0xff] %v288
    %v292 = vld [vmem:[%s147] sm:$0xff]
    %v293 = vld [vmem:[%s147 + $0x8] sm:$0xff]
    %v294 = vmul.f32 %v292, %v216
    %v295 = vmul.f32 %v293, %v217
    %s296 = scalar_lea.vmem [#allocation3], 176
    %297 = vst [vmem:[%s296] sm:$0xff] %v294
    %298 = vst [vmem:[%s296 + $0x8] sm:$0xff] %v295
    %v299 = vld [vmem:[%s154] sm:$0xff]
    %v300 = vld [vmem:[%s154 + $0x8] sm:$0xff]
    %v301 = vmul.f32 %v299, %v216
    %v302 = vmul.f32 %v300, %v217
    %s303 = scalar_lea.vmem [#allocation3], 192
    %304 = vst [vmem:[%s303] sm:$0xff] %v301
    %305 = vst [vmem:[%s303 + $0x8] sm:$0xff] %v302
    %v306 = vld [vmem:[%s161] sm:$0xff]
    %v307 = vld [vmem:[%s161 + $0x8] sm:$0xff]
    %v308 = vmul.f32 %v306, %v216
    %v309 = vmul.f32 %v307, %v217
    %s310 = scalar_lea.vmem [#allocation3], 208
    %311 = vst [vmem:[%s310] sm:$0xff] %v308
    %312 = vst [vmem:[%s310 + $0x8] sm:$0xff] %v309
    %v313 = vld [vmem:[%s168] sm:$0xff]
    %v314 = vld [vmem:[%s168 + $0x8] sm:$0xff]
    %v315 = vmul.f32 %v313, %v216
    %v316 = vmul.f32 %v314, %v217
    %s317 = scalar_lea.vmem [#allocation3], 224
    %318 = vst [vmem:[%s317] sm:$0xff] %v315
    %319 = vst [vmem:[%s317 + $0x8] sm:$0xff] %v316
    %v320 = vld [vmem:[%s175] sm:$0xff]
    %v321 = vld [vmem:[%s175 + $0x8] sm:$0xff]
    %v322 = vmul.f32 %v320, %v216
    %v323 = vmul.f32 %v321, %v217
    %s324 = scalar_lea.vmem [#allocation3], 240
    %325 = vst [vmem:[%s324] sm:$0xff] %v322
    %326 = vst [vmem:[%s324 + $0x8] sm:$0xff] %v323
    %v327 = vld [vmem:[#allocation4] sm:$0xff]
    %v328 = vld [vmem:[#allocation4 + $0x8] sm:$0xff]
    %v329 = vld [vmem:[#allocation4 + $0x10] sm:$0xff]
    %v330 = vld [vmem:[#allocation4 + $0x18] sm:$0xff]
    %v331 = vmul.f32 %v327, %v216
    %v332 = vmul.f32 %v328, %v217
    %v333 = vmul.f32 %v329, %v216
    %v334 = vmul.f32 %v330, %v217
    %335 = vst [vmem:[#allocation2] sm:$0xff] %v331
    %336 = vst [vmem:[#allocation2 + $0x8] sm:$0xff] %v332
    %337 = vst [vmem:[#allocation2 + $0x10] sm:$0xff] %v333
    %338 = vst [vmem:[#allocation2 + $0x18] sm:$0xff] %v334
    %s339 = scalar_lea.vmem [#allocation4], 32
    %v340 = vld [vmem:[%s339] sm:$0xff]
    %v341 = vld [vmem:[%s339 + $0x8] sm:$0xff]
    %v342 = vld [vmem:[%s339 + $0x10] sm:$0xff]
    %v343 = vld [vmem:[%s339 + $0x18] sm:$0xff]
    %v344 = vmul.f32 %v340, %v216
    %v345 = vmul.f32 %v341, %v217
    %v346 = vmul.f32 %v342, %v216
    %v347 = vmul.f32 %v343, %v217
    %s348 = scalar_lea.vmem [#allocation2], 32
    %349 = vst [vmem:[%s348] sm:$0xff] %v344
    %350 = vst [vmem:[%s348 + $0x8] sm:$0xff] %v345
    %351 = vst [vmem:[%s348 + $0x10] sm:$0xff] %v346
    %352 = vst [vmem:[%s348 + $0x18] sm:$0xff] %v347
    %s353 = scalar_lea.vmem [#allocation4], 64
    %v354 = vld [vmem:[%s353] sm:$0xff]
    %v355 = vld [vmem:[%s353 + $0x8] sm:$0xff]
    %v356 = vld [vmem:[%s353 + $0x10] sm:$0xff]
    %v357 = vld [vmem:[%s353 + $0x18] sm:$0xff]
    %v358 = vmul.f32 %v354, %v216
    %v359 = vmul.f32 %v355, %v217
    %v360 = vmul.f32 %v356, %v216
    %v361 = vmul.f32 %v357, %v217
    %s362 = scalar_lea.vmem [#allocation2], 64
    %363 = vst [vmem:[%s362] sm:$0xff] %v358
    %364 = vst [vmem:[%s362 + $0x8] sm:$0xff] %v359
    %365 = vst [vmem:[%s362 + $0x10] sm:$0xff] %v360
    %366 = vst [vmem:[%s362 + $0x18] sm:$0xff] %v361
    %s367 = scalar_lea.vmem [#allocation4], 96
    %v368 = vld [vmem:[%s367] sm:$0xff]
    %v369 = vld [vmem:[%s367 + $0x8] sm:$0xff]
    %v370 = vld [vmem:[%s367 + $0x10] sm:$0xff]
    %v371 = vld [vmem:[%s367 + $0x18] sm:$0xff]
    %v372 = vmul.f32 %v368, %v216
    %v373 = vmul.f32 %v369, %v217
    %v374 = vmul.f32 %v370, %v216
    %v375 = vmul.f32 %v371, %v217
    %s376 = scalar_lea.vmem [#allocation2], 96
    %377 = vst [vmem:[%s376] sm:$0xff] %v372
    %378 = vst [vmem:[%s376 + $0x8] sm:$0xff] %v373
    %379 = vst [vmem:[%s376 + $0x10] sm:$0xff] %v374
    %380 = vst [vmem:[%s376 + $0x18] sm:$0xff] %v375
    %s381 = scalar_lea.vmem [#allocation4], 128
    %v382 = vld [vmem:[%s381] sm:$0xff]
    %v383 = vld [vmem:[%s381 + $0x8] sm:$0xff]
    %v384 = vld [vmem:[%s381 + $0x10] sm:$0xff]
    %v385 = vld [vmem:[%s381 + $0x18] sm:$0xff]
    %v386 = vmul.f32 %v382, %v216
    %v387 = vmul.f32 %v383, %v217
    %v388 = vmul.f32 %v384, %v216
    %v389 = vmul.f32 %v385, %v217
    %s390 = scalar_lea.vmem [#allocation2], 128
    %391 = vst [vmem:[%s390] sm:$0xff] %v386
    %392 = vst [vmem:[%s390 + $0x8] sm:$0xff] %v387
    %393 = vst [vmem:[%s390 + $0x10] sm:$0xff] %v388
    %394 = vst [vmem:[%s390 + $0x18] sm:$0xff] %v389
    %s395 = scalar_lea.vmem [#allocation4], 160
    %v396 = vld [vmem:[%s395] sm:$0xff]
    %v397 = vld [vmem:[%s395 + $0x8] sm:$0xff]
    %v398 = vld [vmem:[%s395 + $0x10] sm:$0xff]
    %v399 = vld [vmem:[%s395 + $0x18] sm:$0xff]
    %v400 = vmul.f32 %v396, %v216
    %v401 = vmul.f32 %v397, %v217
    %v402 = vmul.f32 %v398, %v216
    %v403 = vmul.f32 %v399, %v217
    %s404 = scalar_lea.vmem [#allocation2], 160
    %405 = vst [vmem:[%s404] sm:$0xff] %v400
    %406 = vst [vmem:[%s404 + $0x8] sm:$0xff] %v401
    %407 = vst [vmem:[%s404 + $0x10] sm:$0xff] %v402
    %408 = vst [vmem:[%s404 + $0x18] sm:$0xff] %v403
    %s409 = scalar_lea.vmem [#allocation4], 192
    %v410 = vld [vmem:[%s409] sm:$0xff]
    %v411 = vld [vmem:[%s409 + $0x8] sm:$0xff]
    %v412 = vld [vmem:[%s409 + $0x10] sm:$0xff]
    %v413 = vld [vmem:[%s409 + $0x18] sm:$0xff]
    %v414 = vmul.f32 %v410, %v216
    %v415 = vmul.f32 %v411, %v217
    %v416 = vmul.f32 %v412, %v216
    %v417 = vmul.f32 %v413, %v217
    %s418 = scalar_lea.vmem [#allocation2], 192
    %419 = vst [vmem:[%s418] sm:$0xff] %v414
    %420 = vst [vmem:[%s418 + $0x8] sm:$0xff] %v415
    %421 = vst [vmem:[%s418 + $0x10] sm:$0xff] %v416
    %422 = vst [vmem:[%s418 + $0x18] sm:$0xff] %v417
    %s423 = scalar_lea.vmem [#allocation4], 224
    %v424 = vld [vmem:[%s423] sm:$0xff]
    %v425 = vld [vmem:[%s423 + $0x8] sm:$0xff]
    %v426 = vld [vmem:[%s423 + $0x10] sm:$0xff]
    %v427 = vld [vmem:[%s423 + $0x18] sm:$0xff]
    %v428 = vmul.f32 %v424, %v216
    %v429 = vmul.f32 %v425, %v217
    %v430 = vmul.f32 %v426, %v216
    %v431 = vmul.f32 %v427, %v217
    %s432 = scalar_lea.vmem [#allocation2], 224
    %433 = vst [vmem:[%s432] sm:$0xff] %v428
    %434 = vst [vmem:[%s432 + $0x8] sm:$0xff] %v429
    %435 = vst [vmem:[%s432 + $0x10] sm:$0xff] %v430
    %436 = vst [vmem:[%s432 + $0x18] sm:$0xff] %v431
    %v437 = vld [vmem:[#allocation9] sm:$0xff]
    %v438 = vld [vmem:[#allocation9 + $0x8] sm:$0xff]
    %v439 = vmul.f32 %v437, %v216
    %v440 = vmul.f32 %v438, %v217
    %v441 = vld [vmem:[#allocation10] sm:$0xff]
    %v442 = vld [vmem:[#allocation10 + $0x8] sm:$0xff]
    %v443 = vld [vmem:[#allocation10 + $0x10] sm:$0xff]
    %v444 = vld [vmem:[#allocation10 + $0x18] sm:$0xff]
    %v445 = vmul.f32 %v441, %v216
    %v446 = vmul.f32 %v442, %v217
    %v447 = vmul.f32 %v443, %v216
    %v448 = vmul.f32 %v444, %v217
    loop: start=0, step=1, limit=187
    $region34: #{tpu_custom_call.1} parent=1 // loop_pre_header
      _
    $region35: #{tpu_custom_call.1} parent=1 // loop_header
      %s450 = sphi 0, %s454
      %p451 = scmp.ge.s32.totalorder %s450, 187
      %v455 = vphi 0.5, %v3269
      %v456 = vphi 0.5, %v3270
      %v457 = vphi 0.5, %v3271
      %v458 = vphi 0.5, %v3272
      %v459 = vphi 0.5, %v3277
      %v460 = vphi 0.5, %v3278
      %v461 = vphi 0.5, %v3279
      %v462 = vphi 0.5, %v3280
      %v463 = vphi 0.0, %v3131
      %v464 = vphi 0.0, %v3132
    $region36: #{tpu_custom_call.1} parent=1 // loop_header_branch
      %453 = sbr.rel (%p451) target = $region40
    $region37: #{tpu_custom_call.1} parent=1 // loop_body
      %v465 = vld [vmem:[#allocation3] sm:$0xff]
      %v466 = vld [vmem:[#allocation3 + $0x8] sm:$0xff]
      %v467 = vlaneseq
      %v468 = vshrl.u32 %v467, 7
      %v469 = vsub.s32 0, %v468
      %v470 = vrot.slane %v459, %v469
      %v471 = vlaneseq
      %v472 = vshrl.u32 %v471, 7
      %v473 = vsub.s32 0, %v472
      %v474 = vrot.slane %v460, %v473
      %v475 = vmul.f32 %v465, %v470
      %v476 = vmul.f32 %v466, %v474
      %v477 = vadd.f32 %v439, %v475
      %v478 = vadd.f32 %v440, %v476
      %v479 = vld [vmem:[%s226] sm:$0xff]
      %v480 = vld [vmem:[%s226 + $0x8] sm:$0xff]
      %v481 = vlaneseq
      %v482 = vshrl.u32 %v481, 7
      %v483 = vsub.s32 1, %v482
      %v484 = vrot.slane %v459, %v483
      %v485 = vlaneseq
      %v486 = vshrl.u32 %v485, 7
      %v487 = vsub.s32 1, %v486
      %v488 = vrot.slane %v460, %v487
      %v489 = vmul.f32 %v479, %v484
      %v490 = vmul.f32 %v480, %v488
      %v491 = vadd.f32 %v477, %v489
      %v492 = vadd.f32 %v478, %v490
      %v493 = vld [vmem:[%s233] sm:$0xff]
      %v494 = vld [vmem:[%s233 + $0x8] sm:$0xff]
      %v495 = vlaneseq
      %v496 = vshrl.u32 %v495, 7
      %v497 = vsub.s32 2, %v496
      %v498 = vrot.slane %v459, %v497
      %v499 = vlaneseq
      %v500 = vshrl.u32 %v499, 7
      %v501 = vsub.s32 2, %v500
      %v502 = vrot.slane %v460, %v501
      %v503 = vmul.f32 %v493, %v498
      %v504 = vmul.f32 %v494, %v502
      %v505 = vadd.f32 %v491, %v503
      %v506 = vadd.f32 %v492, %v504
      %v507 = vld [vmem:[%s240] sm:$0xff]
      %v508 = vld [vmem:[%s240 + $0x8] sm:$0xff]
      %v509 = vlaneseq
      %v510 = vshrl.u32 %v509, 7
      %v511 = vsub.s32 3, %v510
      %v512 = vrot.slane %v459, %v511
      %v513 = vlaneseq
      %v514 = vshrl.u32 %v513, 7
      %v515 = vsub.s32 3, %v514
      %v516 = vrot.slane %v460, %v515
      %v517 = vmul.f32 %v507, %v512
      %v518 = vmul.f32 %v508, %v516
      %v519 = vadd.f32 %v505, %v517
      %v520 = vadd.f32 %v506, %v518
      %v521 = vld [vmem:[%s247] sm:$0xff]
      %v522 = vld [vmem:[%s247 + $0x8] sm:$0xff]
      %v523 = vlaneseq
      %v524 = vshrl.u32 %v523, 7
      %v525 = vsub.s32 4, %v524
      %v526 = vrot.slane %v459, %v525
      %v527 = vlaneseq
      %v528 = vshrl.u32 %v527, 7
      %v529 = vsub.s32 4, %v528
      %v530 = vrot.slane %v460, %v529
      %v531 = vmul.f32 %v521, %v526
      %v532 = vmul.f32 %v522, %v530
      %v533 = vadd.f32 %v519, %v531
      %v534 = vadd.f32 %v520, %v532
      %v535 = vld [vmem:[%s254] sm:$0xff]
      %v536 = vld [vmem:[%s254 + $0x8] sm:$0xff]
      %v537 = vlaneseq
      %v538 = vshrl.u32 %v537, 7
      %v539 = vsub.s32 5, %v538
      %v540 = vrot.slane %v459, %v539
      %v541 = vlaneseq
      %v542 = vshrl.u32 %v541, 7
      %v543 = vsub.s32 5, %v542
      %v544 = vrot.slane %v460, %v543
      %v545 = vmul.f32 %v535, %v540
      %v546 = vmul.f32 %v536, %v544
      %v547 = vadd.f32 %v533, %v545
      %v548 = vadd.f32 %v534, %v546
      %v549 = vld [vmem:[%s261] sm:$0xff]
      %v550 = vld [vmem:[%s261 + $0x8] sm:$0xff]
      %v551 = vlaneseq
      %v552 = vshrl.u32 %v551, 7
      %v553 = vsub.s32 6, %v552
      %v554 = vrot.slane %v459, %v553
      %v555 = vlaneseq
      %v556 = vshrl.u32 %v555, 7
      %v557 = vsub.s32 6, %v556
      %v558 = vrot.slane %v460, %v557
      %v559 = vmul.f32 %v549, %v554
      %v560 = vmul.f32 %v550, %v558
      %v561 = vadd.f32 %v547, %v559
      %v562 = vadd.f32 %v548, %v560
      %v563 = vld [vmem:[%s268] sm:$0xff]
      %v564 = vld [vmem:[%s268 + $0x8] sm:$0xff]
      %v565 = vlaneseq
      %v566 = vshrl.u32 %v565, 7
      %v567 = vsub.s32 7, %v566
      %v568 = vrot.slane %v459, %v567
      %v569 = vlaneseq
      %v570 = vshrl.u32 %v569, 7
      %v571 = vsub.s32 7, %v570
      %v572 = vrot.slane %v460, %v571
      %v573 = vmul.f32 %v563, %v568
      %v574 = vmul.f32 %v564, %v572
      %v575 = vadd.f32 %v561, %v573
      %v576 = vadd.f32 %v562, %v574
      %v577 = vld [vmem:[%s275] sm:$0xff]
      %v578 = vld [vmem:[%s275 + $0x8] sm:$0xff]
      %v579 = vlaneseq
      %v580 = vshrl.u32 %v579, 7
      %v581 = vsub.s32 0, %v580
      %v582 = vrot.slane %v461, %v581
      %v583 = vlaneseq
      %v584 = vshrl.u32 %v583, 7
      %v585 = vsub.s32 0, %v584
      %v586 = vrot.slane %v462, %v585
      %v587 = vmul.f32 %v577, %v582
      %v588 = vmul.f32 %v578, %v586
      %v589 = vadd.f32 %v575, %v587
      %v590 = vadd.f32 %v576, %v588
      %v591 = vld [vmem:[%s282] sm:$0xff]
      %v592 = vld [vmem:[%s282 + $0x8] sm:$0xff]
      %v593 = vlaneseq
      %v594 = vshrl.u32 %v593, 7
      %v595 = vsub.s32 1, %v594
      %v596 = vrot.slane %v461, %v595
      %v597 = vlaneseq
      %v598 = vshrl.u32 %v597, 7
      %v599 = vsub.s32 1, %v598
      %v600 = vrot.slane %v462, %v599
      %v601 = vmul.f32 %v591, %v596
      %v602 = vmul.f32 %v592, %v600
      %v603 = vadd.f32 %v589, %v601
      %v604 = vadd.f32 %v590, %v602
      %v605 = vld [vmem:[%s289] sm:$0xff]
      %v606 = vld [vmem:[%s289 + $0x8] sm:$0xff]
      %v607 = vlaneseq
      %v608 = vshrl.u32 %v607, 7
      %v609 = vsub.s32 2, %v608
      %v610 = vrot.slane %v461, %v609
      %v611 = vlaneseq
      %v612 = vshrl.u32 %v611, 7
      %v613 = vsub.s32 2, %v612
      %v614 = vrot.slane %v462, %v613
      %v615 = vmul.f32 %v605, %v610
      %v616 = vmul.f32 %v606, %v614
      %v617 = vadd.f32 %v603, %v615
      %v618 = vadd.f32 %v604, %v616
      %v619 = vld [vmem:[%s296] sm:$0xff]
      %v620 = vld [vmem:[%s296 + $0x8] sm:$0xff]
      %v621 = vlaneseq
      %v622 = vshrl.u32 %v621, 7
      %v623 = vsub.s32 3, %v622
      %v624 = vrot.slane %v461, %v623
      %v625 = vlaneseq
      %v626 = vshrl.u32 %v625, 7
      %v627 = vsub.s32 3, %v626
      %v628 = vrot.slane %v462, %v627
      %v629 = vmul.f32 %v619, %v624
      %v630 = vmul.f32 %v620, %v628
      %v631 = vadd.f32 %v617, %v629
      %v632 = vadd.f32 %v618, %v630
      %v633 = vld [vmem:[%s303] sm:$0xff]
      %v634 = vld [vmem:[%s303 + $0x8] sm:$0xff]
      %v635 = vlaneseq
      %v636 = vshrl.u32 %v635, 7
      %v637 = vsub.s32 4, %v636
      %v638 = vrot.slane %v461, %v637
      %v639 = vlaneseq
      %v640 = vshrl.u32 %v639, 7
      %v641 = vsub.s32 4, %v640
      %v642 = vrot.slane %v462, %v641
      %v643 = vmul.f32 %v633, %v638
      %v644 = vmul.f32 %v634, %v642
      %v645 = vadd.f32 %v631, %v643
      %v646 = vadd.f32 %v632, %v644
      %v647 = vld [vmem:[%s310] sm:$0xff]
      %v648 = vld [vmem:[%s310 + $0x8] sm:$0xff]
      %v649 = vlaneseq
      %v650 = vshrl.u32 %v649, 7
      %v651 = vsub.s32 5, %v650
      %v652 = vrot.slane %v461, %v651
      %v653 = vlaneseq
      %v654 = vshrl.u32 %v653, 7
      %v655 = vsub.s32 5, %v654
      %v656 = vrot.slane %v462, %v655
      %v657 = vmul.f32 %v647, %v652
      %v658 = vmul.f32 %v648, %v656
      %v659 = vadd.f32 %v645, %v657
      %v660 = vadd.f32 %v646, %v658
      %v661 = vld [vmem:[%s317] sm:$0xff]
      %v662 = vld [vmem:[%s317 + $0x8] sm:$0xff]
      %v663 = vlaneseq
      %v664 = vshrl.u32 %v663, 7
      %v665 = vsub.s32 6, %v664
      %v666 = vrot.slane %v461, %v665
      %v667 = vlaneseq
      %v668 = vshrl.u32 %v667, 7
      %v669 = vsub.s32 6, %v668
      %v670 = vrot.slane %v462, %v669
      %v671 = vmul.f32 %v661, %v666
      %v672 = vmul.f32 %v662, %v670
      %v673 = vadd.f32 %v659, %v671
      %v674 = vadd.f32 %v660, %v672
      %v675 = vld [vmem:[%s324] sm:$0xff]
      %v676 = vld [vmem:[%s324 + $0x8] sm:$0xff]
      %v677 = vlaneseq
      %v678 = vshrl.u32 %v677, 7
      %v679 = vsub.s32 7, %v678
      %v680 = vrot.slane %v461, %v679
      %v681 = vlaneseq
      %v682 = vshrl.u32 %v681, 7
      %v683 = vsub.s32 7, %v682
      %v684 = vrot.slane %v462, %v683
      %v685 = vmul.f32 %v675, %v680
      %v686 = vmul.f32 %v676, %v684
      %v687 = vadd.f32 %v673, %v685
      %v688 = vadd.f32 %v674, %v686
      %v689 = vadd.f32 %v463, %v687
      %v690 = vadd.f32 %v464, %v688
      %v691 = vmax.f32 %v689, 0.0
      %v692 = vmax.f32 %v690, 0.0
      %v693 = vld [vmem:[#allocation2] sm:$0xff]
      %v694 = vld [vmem:[#allocation2 + $0x8] sm:$0xff]
      %v695 = vld [vmem:[#allocation2 + $0x10] sm:$0xff]
      %v696 = vld [vmem:[#allocation2 + $0x18] sm:$0xff]
      %v697 = vlaneseq
      %v698 = vshrl.u32 %v697, 7
      %v699 = vsub.s32 0, %v698
      %v700 = vrot.slane %v691, %v699
      %v701 = vlaneseq
      %v702 = vshrl.u32 %v701, 7
      %v703 = vsub.s32 0, %v702
      %v704 = vrot.slane %v692, %v703
      %v705 = vmul.f32 %v693, %v700
      %v706 = vmul.f32 %v694, %v704
      %v707 = vmul.f32 %v695, %v700
      %v708 = vmul.f32 %v696, %v704
      %v709 = vadd.f32 %v445, %v705
      %v710 = vadd.f32 %v446, %v706
      %v711 = vadd.f32 %v447, %v707
      %v712 = vadd.f32 %v448, %v708
      %v713 = vld [vmem:[%s348] sm:$0xff]
      %v714 = vld [vmem:[%s348 + $0x8] sm:$0xff]
      %v715 = vld [vmem:[%s348 + $0x10] sm:$0xff]
      %v716 = vld [vmem:[%s348 + $0x18] sm:$0xff]
      %v717 = vlaneseq
      %v718 = vshrl.u32 %v717, 7
      %v719 = vsub.s32 1, %v718
      %v720 = vrot.slane %v691, %v719
      %v721 = vlaneseq
      %v722 = vshrl.u32 %v721, 7
      %v723 = vsub.s32 1, %v722
      %v724 = vrot.slane %v692, %v723
      %v725 = vmul.f32 %v713, %v720
      %v726 = vmul.f32 %v714, %v724
      %v727 = vmul.f32 %v715, %v720
      %v728 = vmul.f32 %v716, %v724
      %v729 = vadd.f32 %v709, %v725
      %v730 = vadd.f32 %v710, %v726
      %v731 = vadd.f32 %v711, %v727
      %v732 = vadd.f32 %v712, %v728
      %v733 = vld [vmem:[%s362] sm:$0xff]
      %v734 = vld [vmem:[%s362 + $0x8] sm:$0xff]
      %v735 = vld [vmem:[%s362 + $0x10] sm:$0xff]
      %v736 = vld [vmem:[%s362 + $0x18] sm:$0xff]
      %v737 = vlaneseq
      %v738 = vshrl.u32 %v737, 7
      %v739 = vsub.s32 2, %v738
      %v740 = vrot.slane %v691, %v739
      %v741 = vlaneseq
      %v742 = vshrl.u32 %v741, 7
      %v743 = vsub.s32 2, %v742
      %v744 = vrot.slane %v692, %v743
      %v745 = vmul.f32 %v733, %v740
      %v746 = vmul.f32 %v734, %v744
      %v747 = vmul.f32 %v735, %v740
      %v748 = vmul.f32 %v736, %v744
      %v749 = vadd.f32 %v729, %v745
      %v750 = vadd.f32 %v730, %v746
      %v751 = vadd.f32 %v731, %v747
      %v752 = vadd.f32 %v732, %v748
      %v753 = vld [vmem:[%s376] sm:$0xff]
      %v754 = vld [vmem:[%s376 + $0x8] sm:$0xff]
      %v755 = vld [vmem:[%s376 + $0x10] sm:$0xff]
      %v756 = vld [vmem:[%s376 + $0x18] sm:$0xff]
      %v757 = vlaneseq
      %v758 = vshrl.u32 %v757, 7
      %v759 = vsub.s32 3, %v758
      %v760 = vrot.slane %v691, %v759
      %v761 = vlaneseq
      %v762 = vshrl.u32 %v761, 7
      %v763 = vsub.s32 3, %v762
      %v764 = vrot.slane %v692, %v763
      %v765 = vmul.f32 %v753, %v760
      %v766 = vmul.f32 %v754, %v764
      %v767 = vmul.f32 %v755, %v760
      %v768 = vmul.f32 %v756, %v764
      %v769 = vadd.f32 %v749, %v765
      %v770 = vadd.f32 %v750, %v766
      %v771 = vadd.f32 %v751, %v767
      %v772 = vadd.f32 %v752, %v768
      %v773 = vld [vmem:[%s390] sm:$0xff]
      %v774 = vld [vmem:[%s390 + $0x8] sm:$0xff]
      %v775 = vld [vmem:[%s390 + $0x10] sm:$0xff]
      %v776 = vld [vmem:[%s390 + $0x18] sm:$0xff]
      %v777 = vlaneseq
      %v778 = vshrl.u32 %v777, 7
      %v779 = vsub.s32 4, %v778
      %v780 = vrot.slane %v691, %v779
      %v781 = vlaneseq
      %v782 = vshrl.u32 %v781, 7
      %v783 = vsub.s32 4, %v782
      %v784 = vrot.slane %v692, %v783
      %v785 = vmul.f32 %v773, %v780
      %v786 = vmul.f32 %v774, %v784
      %v787 = vmul.f32 %v775, %v780
      %v788 = vmul.f32 %v776, %v784
      %v789 = vadd.f32 %v769, %v785
      %v790 = vadd.f32 %v770, %v786
      %v791 = vadd.f32 %v771, %v787
      %v792 = vadd.f32 %v772, %v788
      %v793 = vld [vmem:[%s404] sm:$0xff]
      %v794 = vld [vmem:[%s404 + $0x8] sm:$0xff]
      %v795 = vld [vmem:[%s404 + $0x10] sm:$0xff]
      %v796 = vld [vmem:[%s404 + $0x18] sm:$0xff]
      %v797 = vlaneseq
      %v798 = vshrl.u32 %v797, 7
      %v799 = vsub.s32 5, %v798
      %v800 = vrot.slane %v691, %v799
      %v801 = vlaneseq
      %v802 = vshrl.u32 %v801, 7
      %v803 = vsub.s32 5, %v802
      %v804 = vrot.slane %v692, %v803
      %v805 = vmul.f32 %v793, %v800
      %v806 = vmul.f32 %v794, %v804
      %v807 = vmul.f32 %v795, %v800
      %v808 = vmul.f32 %v796, %v804
      %v809 = vadd.f32 %v789, %v805
      %v810 = vadd.f32 %v790, %v806
      %v811 = vadd.f32 %v791, %v807
      %v812 = vadd.f32 %v792, %v808
      %v813 = vld [vmem:[%s418] sm:$0xff]
      %v814 = vld [vmem:[%s418 + $0x8] sm:$0xff]
      %v815 = vld [vmem:[%s418 + $0x10] sm:$0xff]
      %v816 = vld [vmem:[%s418 + $0x18] sm:$0xff]
      %v817 = vlaneseq
      %v818 = vshrl.u32 %v817, 7
      %v819 = vsub.s32 6, %v818
      %v820 = vrot.slane %v691, %v819
      %v821 = vlaneseq
      %v822 = vshrl.u32 %v821, 7
      %v823 = vsub.s32 6, %v822
      %v824 = vrot.slane %v692, %v823
      %v825 = vmul.f32 %v813, %v820
      %v826 = vmul.f32 %v814, %v824
      %v827 = vmul.f32 %v815, %v820
      %v828 = vmul.f32 %v816, %v824
      %v829 = vadd.f32 %v809, %v825
      %v830 = vadd.f32 %v810, %v826
      %v831 = vadd.f32 %v811, %v827
      %v832 = vadd.f32 %v812, %v828
      %v833 = vld [vmem:[%s432] sm:$0xff]
      %v834 = vld [vmem:[%s432 + $0x8] sm:$0xff]
      %v835 = vld [vmem:[%s432 + $0x10] sm:$0xff]
      %v836 = vld [vmem:[%s432 + $0x18] sm:$0xff]
      %v837 = vlaneseq
      %v838 = vshrl.u32 %v837, 7
      %v839 = vsub.s32 7, %v838
      %v840 = vrot.slane %v691, %v839
      %v841 = vlaneseq
      %v842 = vshrl.u32 %v841, 7
      %v843 = vsub.s32 7, %v842
      %v844 = vrot.slane %v692, %v843
      %v845 = vmul.f32 %v833, %v840
      %v846 = vmul.f32 %v834, %v844
      %v847 = vmul.f32 %v835, %v840
      %v848 = vmul.f32 %v836, %v844
      %v849 = vadd.f32 %v829, %v845
      %v850 = vadd.f32 %v830, %v846
      %v851 = vadd.f32 %v831, %v847
      %v852 = vadd.f32 %v832, %v848
      %v853 = vsub.f32 %v455, %v849
      %v854 = vsub.f32 %v456, %v850
      %v855 = vsub.f32 %v457, %v851
      %v856 = vsub.f32 %v458, %v852
      %v857 = vmax.f32 %v853, 0.0
      %v858 = vmax.f32 %v854, 0.0
      %v859 = vmax.f32 %v855, 0.0
      %v860 = vmax.f32 %v856, 0.0
      %v861 = vmin.f32 %v857, 1.0
      %v862 = vmin.f32 %v858, 1.0
      %v863 = vmin.f32 %v859, 1.0
      %v864 = vmin.f32 %v860, 1.0
      %v865 = vmul.f32 %v861, 2.0
      %v866 = vmul.f32 %v862, 2.0
      %v867 = vmul.f32 %v863, 2.0
      %v868 = vmul.f32 %v864, 2.0
      %v869 = vsub.f32 %v865, %v455
      %v870 = vsub.f32 %v866, %v456
      %v871 = vsub.f32 %v867, %v457
      %v872 = vsub.f32 %v868, %v458
      %v873 = vlaneseq
      %v874 = vshrl.u32 %v873, 7
      %v875 = vsub.s32 0, %v874
      %v876 = vrot.slane %v869, %v875
      %v877 = vlaneseq
      %v878 = vshrl.u32 %v877, 7
      %v879 = vsub.s32 0, %v878
      %v880 = vrot.slane %v870, %v879
      %v881 = vmul.f32 %v465, %v876
      %v882 = vmul.f32 %v466, %v880
      %v883 = vadd.f32 %v439, %v881
      %v884 = vadd.f32 %v440, %v882
      %v885 = vlaneseq
      %v886 = vshrl.u32 %v885, 7
      %v887 = vsub.s32 1, %v886
      %v888 = vrot.slane %v869, %v887
      %v889 = vlaneseq
      %v890 = vshrl.u32 %v889, 7
      %v891 = vsub.s32 1, %v890
      %v892 = vrot.slane %v870, %v891
      %v893 = vmul.f32 %v479, %v888
      %v894 = vmul.f32 %v480, %v892
      %v895 = vadd.f32 %v883, %v893
      %v896 = vadd.f32 %v884, %v894
      %v897 = vlaneseq
      %v898 = vshrl.u32 %v897, 7
      %v899 = vsub.s32 2, %v898
      %v900 = vrot.slane %v869, %v899
      %v901 = vlaneseq
      %v902 = vshrl.u32 %v901, 7
      %v903 = vsub.s32 2, %v902
      %v904 = vrot.slane %v870, %v903
      %v905 = vmul.f32 %v493, %v900
      %v906 = vmul.f32 %v494, %v904
      %v907 = vadd.f32 %v895, %v905
      %v908 = vadd.f32 %v896, %v906
      %v909 = vlaneseq
      %v910 = vshrl.u32 %v909, 7
      %v911 = vsub.s32 3, %v910
      %v912 = vrot.slane %v869, %v911
      %v913 = vlaneseq
      %v914 = vshrl.u32 %v913, 7
      %v915 = vsub.s32 3, %v914
      %v916 = vrot.slane %v870, %v915
      %v917 = vmul.f32 %v507, %v912
      %v918 = vmul.f32 %v508, %v916
      %v919 = vadd.f32 %v907, %v917
      %v920 = vadd.f32 %v908, %v918
      %v921 = vlaneseq
      %v922 = vshrl.u32 %v921, 7
      %v923 = vsub.s32 4, %v922
      %v924 = vrot.slane %v869, %v923
      %v925 = vlaneseq
      %v926 = vshrl.u32 %v925, 7
      %v927 = vsub.s32 4, %v926
      %v928 = vrot.slane %v870, %v927
      %v929 = vmul.f32 %v521, %v924
      %v930 = vmul.f32 %v522, %v928
      %v931 = vadd.f32 %v919, %v929
      %v932 = vadd.f32 %v920, %v930
      %v933 = vlaneseq
      %v934 = vshrl.u32 %v933, 7
      %v935 = vsub.s32 5, %v934
      %v936 = vrot.slane %v869, %v935
      %v937 = vlaneseq
      %v938 = vshrl.u32 %v937, 7
      %v939 = vsub.s32 5, %v938
      %v940 = vrot.slane %v870, %v939
      %v941 = vmul.f32 %v535, %v936
      %v942 = vmul.f32 %v536, %v940
      %v943 = vadd.f32 %v931, %v941
      %v944 = vadd.f32 %v932, %v942
      %v945 = vlaneseq
      %v946 = vshrl.u32 %v945, 7
      %v947 = vsub.s32 6, %v946
      %v948 = vrot.slane %v869, %v947
      %v949 = vlaneseq
      %v950 = vshrl.u32 %v949, 7
      %v951 = vsub.s32 6, %v950
      %v952 = vrot.slane %v870, %v951
      %v953 = vmul.f32 %v549, %v948
      %v954 = vmul.f32 %v550, %v952
      %v955 = vadd.f32 %v943, %v953
      %v956 = vadd.f32 %v944, %v954
      %v957 = vlaneseq
      %v958 = vshrl.u32 %v957, 7
      %v959 = vsub.s32 7, %v958
      %v960 = vrot.slane %v869, %v959
      %v961 = vlaneseq
      %v962 = vshrl.u32 %v961, 7
      %v963 = vsub.s32 7, %v962
      %v964 = vrot.slane %v870, %v963
      %v965 = vmul.f32 %v563, %v960
      %v966 = vmul.f32 %v564, %v964
      %v967 = vadd.f32 %v955, %v965
      %v968 = vadd.f32 %v956, %v966
      %v969 = vlaneseq
      %v970 = vshrl.u32 %v969, 7
      %v971 = vsub.s32 0, %v970
      %v972 = vrot.slane %v871, %v971
      %v973 = vlaneseq
      %v974 = vshrl.u32 %v973, 7
      %v975 = vsub.s32 0, %v974
      %v976 = vrot.slane %v872, %v975
      %v977 = vmul.f32 %v577, %v972
      %v978 = vmul.f32 %v578, %v976
      %v979 = vadd.f32 %v967, %v977
      %v980 = vadd.f32 %v968, %v978
      %v981 = vlaneseq
      %v982 = vshrl.u32 %v981, 7
      %v983 = vsub.s32 1, %v982
      %v984 = vrot.slane %v871, %v983
      %v985 = vlaneseq
      %v986 = vshrl.u32 %v985, 7
      %v987 = vsub.s32 1, %v986
      %v988 = vrot.slane %v872, %v987
      %v989 = vmul.f32 %v591, %v984
      %v990 = vmul.f32 %v592, %v988
      %v991 = vadd.f32 %v979, %v989
      %v992 = vadd.f32 %v980, %v990
      %v993 = vlaneseq
      %v994 = vshrl.u32 %v993, 7
      %v995 = vsub.s32 2, %v994
      %v996 = vrot.slane %v871, %v995
      %v997 = vlaneseq
      %v998 = vshrl.u32 %v997, 7
      %v999 = vsub.s32 2, %v998
      %v1000 = vrot.slane %v872, %v999
      %v1001 = vmul.f32 %v605, %v996
      %v1002 = vmul.f32 %v606, %v1000
      %v1003 = vadd.f32 %v991, %v1001
      %v1004 = vadd.f32 %v992, %v1002
      %v1005 = vlaneseq
      %v1006 = vshrl.u32 %v1005, 7
      %v1007 = vsub.s32 3, %v1006
      %v1008 = vrot.slane %v871, %v1007
      %v1009 = vlaneseq
      %v1010 = vshrl.u32 %v1009, 7
      %v1011 = vsub.s32 3, %v1010
      %v1012 = vrot.slane %v872, %v1011
      %v1013 = vmul.f32 %v619, %v1008
      %v1014 = vmul.f32 %v620, %v1012
      %v1015 = vadd.f32 %v1003, %v1013
      %v1016 = vadd.f32 %v1004, %v1014
      %v1017 = vlaneseq
      %v1018 = vshrl.u32 %v1017, 7
      %v1019 = vsub.s32 4, %v1018
      %v1020 = vrot.slane %v871, %v1019
      %v1021 = vlaneseq
      %v1022 = vshrl.u32 %v1021, 7
      %v1023 = vsub.s32 4, %v1022
      %v1024 = vrot.slane %v872, %v1023
      %v1025 = vmul.f32 %v633, %v1020
      %v1026 = vmul.f32 %v634, %v1024
      %v1027 = vadd.f32 %v1015, %v1025
      %v1028 = vadd.f32 %v1016, %v1026
      %v1029 = vlaneseq
      %v1030 = vshrl.u32 %v1029, 7
      %v1031 = vsub.s32 5, %v1030
      %v1032 = vrot.slane %v871, %v1031
      %v1033 = vlaneseq
      %v1034 = vshrl.u32 %v1033, 7
      %v1035 = vsub.s32 5, %v1034
      %v1036 = vrot.slane %v872, %v1035
      %v1037 = vmul.f32 %v647, %v1032
      %v1038 = vmul.f32 %v648, %v1036
      %v1039 = vadd.f32 %v1027, %v1037
      %v1040 = vadd.f32 %v1028, %v1038
      %v1041 = vlaneseq
      %v1042 = vshrl.u32 %v1041, 7
      %v1043 = vsub.s32 6, %v1042
      %v1044 = vrot.slane %v871, %v1043
      %v1045 = vlaneseq
      %v1046 = vshrl.u32 %v1045, 7
      %v1047 = vsub.s32 6, %v1046
      %v1048 = vrot.slane %v872, %v1047
      %v1049 = vmul.f32 %v661, %v1044
      %v1050 = vmul.f32 %v662, %v1048
      %v1051 = vadd.f32 %v1039, %v1049
      %v1052 = vadd.f32 %v1040, %v1050
      %v1053 = vlaneseq
      %v1054 = vshrl.u32 %v1053, 7
      %v1055 = vsub.s32 7, %v1054
      %v1056 = vrot.slane %v871, %v1055
      %v1057 = vlaneseq
      %v1058 = vshrl.u32 %v1057, 7
      %v1059 = vsub.s32 7, %v1058
      %v1060 = vrot.slane %v872, %v1059
      %v1061 = vmul.f32 %v675, %v1056
      %v1062 = vmul.f32 %v676, %v1060
      %v1063 = vadd.f32 %v1051, %v1061
      %v1064 = vadd.f32 %v1052, %v1062
      %v1065 = vadd.f32 %v691, %v1063
      %v1066 = vadd.f32 %v692, %v1064
      %v1067 = vmax.f32 %v1065, 0.0
      %v1068 = vmax.f32 %v1066, 0.0
      %v1069 = vlaneseq
      %v1070 = vshrl.u32 %v1069, 7
      %v1071 = vsub.s32 0, %v1070
      %v1072 = vrot.slane %v1067, %v1071
      %v1073 = vlaneseq
      %v1074 = vshrl.u32 %v1073, 7
      %v1075 = vsub.s32 0, %v1074
      %v1076 = vrot.slane %v1068, %v1075
      %v1077 = vmul.f32 %v693, %v1072
      %v1078 = vmul.f32 %v694, %v1076
      %v1079 = vmul.f32 %v695, %v1072
      %v1080 = vmul.f32 %v696, %v1076
      %v1081 = vadd.f32 %v445, %v1077
      %v1082 = vadd.f32 %v446, %v1078
      %v1083 = vadd.f32 %v447, %v1079
      %v1084 = vadd.f32 %v448, %v1080
      %v1085 = vlaneseq
      %v1086 = vshrl.u32 %v1085, 7
      %v1087 = vsub.s32 1, %v1086
      %v1088 = vrot.slane %v1067, %v1087
      %v1089 = vlaneseq
      %v1090 = vshrl.u32 %v1089, 7
      %v1091 = vsub.s32 1, %v1090
      %v1092 = vrot.slane %v1068, %v1091
      %v1093 = vmul.f32 %v713, %v1088
      %v1094 = vmul.f32 %v714, %v1092
      %v1095 = vmul.f32 %v715, %v1088
      %v1096 = vmul.f32 %v716, %v1092
      %v1097 = vadd.f32 %v1081, %v1093
      %v1098 = vadd.f32 %v1082, %v1094
      %v1099 = vadd.f32 %v1083, %v1095
      %v1100 = vadd.f32 %v1084, %v1096
      %v1101 = vlaneseq
      %v1102 = vshrl.u32 %v1101, 7
      %v1103 = vsub.s32 2, %v1102
      %v1104 = vrot.slane %v1067, %v1103
      %v1105 = vlaneseq
      %v1106 = vshrl.u32 %v1105, 7
      %v1107 = vsub.s32 2, %v1106
      %v1108 = vrot.slane %v1068, %v1107
      %v1109 = vmul.f32 %v733, %v1104
      %v1110 = vmul.f32 %v734, %v1108
      %v1111 = vmul.f32 %v735, %v1104
      %v1112 = vmul.f32 %v736, %v1108
      %v1113 = vadd.f32 %v1097, %v1109
      %v1114 = vadd.f32 %v1098, %v1110
      %v1115 = vadd.f32 %v1099, %v1111
      %v1116 = vadd.f32 %v1100, %v1112
      %v1117 = vlaneseq
      %v1118 = vshrl.u32 %v1117, 7
      %v1119 = vsub.s32 3, %v1118
      %v1120 = vrot.slane %v1067, %v1119
      %v1121 = vlaneseq
      %v1122 = vshrl.u32 %v1121, 7
      %v1123 = vsub.s32 3, %v1122
      %v1124 = vrot.slane %v1068, %v1123
      %v1125 = vmul.f32 %v753, %v1120
      %v1126 = vmul.f32 %v754, %v1124
      %v1127 = vmul.f32 %v755, %v1120
      %v1128 = vmul.f32 %v756, %v1124
      %v1129 = vadd.f32 %v1113, %v1125
      %v1130 = vadd.f32 %v1114, %v1126
      %v1131 = vadd.f32 %v1115, %v1127
      %v1132 = vadd.f32 %v1116, %v1128
      %v1133 = vlaneseq
      %v1134 = vshrl.u32 %v1133, 7
      %v1135 = vsub.s32 4, %v1134
      %v1136 = vrot.slane %v1067, %v1135
      %v1137 = vlaneseq
      %v1138 = vshrl.u32 %v1137, 7
      %v1139 = vsub.s32 4, %v1138
      %v1140 = vrot.slane %v1068, %v1139
      %v1141 = vmul.f32 %v773, %v1136
      %v1142 = vmul.f32 %v774, %v1140
      %v1143 = vmul.f32 %v775, %v1136
      %v1144 = vmul.f32 %v776, %v1140
      %v1145 = vadd.f32 %v1129, %v1141
      %v1146 = vadd.f32 %v1130, %v1142
      %v1147 = vadd.f32 %v1131, %v1143
      %v1148 = vadd.f32 %v1132, %v1144
      %v1149 = vlaneseq
      %v1150 = vshrl.u32 %v1149, 7
      %v1151 = vsub.s32 5, %v1150
      %v1152 = vrot.slane %v1067, %v1151
      %v1153 = vlaneseq
      %v1154 = vshrl.u32 %v1153, 7
      %v1155 = vsub.s32 5, %v1154
      %v1156 = vrot.slane %v1068, %v1155
      %v1157 = vmul.f32 %v793, %v1152
      %v1158 = vmul.f32 %v794, %v1156
      %v1159 = vmul.f32 %v795, %v1152
      %v1160 = vmul.f32 %v796, %v1156
      %v1161 = vadd.f32 %v1145, %v1157
      %v1162 = vadd.f32 %v1146, %v1158
      %v1163 = vadd.f32 %v1147, %v1159
      %v1164 = vadd.f32 %v1148, %v1160
      %v1165 = vlaneseq
      %v1166 = vshrl.u32 %v1165, 7
      %v1167 = vsub.s32 6, %v1166
      %v1168 = vrot.slane %v1067, %v1167
      %v1169 = vlaneseq
      %v1170 = vshrl.u32 %v1169, 7
      %v1171 = vsub.s32 6, %v1170
      %v1172 = vrot.slane %v1068, %v1171
      %v1173 = vmul.f32 %v813, %v1168
      %v1174 = vmul.f32 %v814, %v1172
      %v1175 = vmul.f32 %v815, %v1168
      %v1176 = vmul.f32 %v816, %v1172
      %v1177 = vadd.f32 %v1161, %v1173
      %v1178 = vadd.f32 %v1162, %v1174
      %v1179 = vadd.f32 %v1163, %v1175
      %v1180 = vadd.f32 %v1164, %v1176
      %v1181 = vlaneseq
      %v1182 = vshrl.u32 %v1181, 7
      %v1183 = vsub.s32 7, %v1182
      %v1184 = vrot.slane %v1067, %v1183
      %v1185 = vlaneseq
      %v1186 = vshrl.u32 %v1185, 7
      %v1187 = vsub.s32 7, %v1186
      %v1188 = vrot.slane %v1068, %v1187
      %v1189 = vmul.f32 %v833, %v1184
      %v1190 = vmul.f32 %v834, %v1188
      %v1191 = vmul.f32 %v835, %v1184
      %v1192 = vmul.f32 %v836, %v1188
      %v1193 = vadd.f32 %v1177, %v1189
      %v1194 = vadd.f32 %v1178, %v1190
      %v1195 = vadd.f32 %v1179, %v1191
      %v1196 = vadd.f32 %v1180, %v1192
      %v1197 = vsub.f32 %v861, %v1193
      %v1198 = vsub.f32 %v862, %v1194
      %v1199 = vsub.f32 %v863, %v1195
      %v1200 = vsub.f32 %v864, %v1196
      %v1201 = vmax.f32 %v1197, 0.0
      %v1202 = vmax.f32 %v1198, 0.0
      %v1203 = vmax.f32 %v1199, 0.0
      %v1204 = vmax.f32 %v1200, 0.0
      %v1205 = vmin.f32 %v1201, 1.0
      %v1206 = vmin.f32 %v1202, 1.0
      %v1207 = vmin.f32 %v1203, 1.0
      %v1208 = vmin.f32 %v1204, 1.0
      %v1209 = vmul.f32 %v1205, 2.0
      %v1210 = vmul.f32 %v1206, 2.0
      %v1211 = vmul.f32 %v1207, 2.0
      %v1212 = vmul.f32 %v1208, 2.0
      %v1213 = vsub.f32 %v1209, %v861
      %v1214 = vsub.f32 %v1210, %v862
      %v1215 = vsub.f32 %v1211, %v863
      %v1216 = vsub.f32 %v1212, %v864
      %v1217 = vlaneseq
      %v1218 = vshrl.u32 %v1217, 7
      %v1219 = vsub.s32 0, %v1218
      %v1220 = vrot.slane %v1213, %v1219
      %v1221 = vlaneseq
      %v1222 = vshrl.u32 %v1221, 7
      %v1223 = vsub.s32 0, %v1222
      %v1224 = vrot.slane %v1214, %v1223
      %v1225 = vmul.f32 %v465, %v1220
      %v1226 = vmul.f32 %v466, %v1224
      %v1227 = vadd.f32 %v439, %v1225
      %v1228 = vadd.f32 %v440, %v1226
      %v1229 = vlaneseq
      %v1230 = vshrl.u32 %v1229, 7
      %v1231 = vsub.s32 1, %v1230
      %v1232 = vrot.slane %v1213, %v1231
      %v1233 = vlaneseq
      %v1234 = vshrl.u32 %v1233, 7
      %v1235 = vsub.s32 1, %v1234
      %v1236 = vrot.slane %v1214, %v1235
      %v1237 = vmul.f32 %v479, %v1232
      %v1238 = vmul.f32 %v480, %v1236
      %v1239 = vadd.f32 %v1227, %v1237
      %v1240 = vadd.f32 %v1228, %v1238
      %v1241 = vlaneseq
      %v1242 = vshrl.u32 %v1241, 7
      %v1243 = vsub.s32 2, %v1242
      %v1244 = vrot.slane %v1213, %v1243
      %v1245 = vlaneseq
      %v1246 = vshrl.u32 %v1245, 7
      %v1247 = vsub.s32 2, %v1246
      %v1248 = vrot.slane %v1214, %v1247
      %v1249 = vmul.f32 %v493, %v1244
      %v1250 = vmul.f32 %v494, %v1248
      %v1251 = vadd.f32 %v1239, %v1249
      %v1252 = vadd.f32 %v1240, %v1250
      %v1253 = vlaneseq
      %v1254 = vshrl.u32 %v1253, 7
      %v1255 = vsub.s32 3, %v1254
      %v1256 = vrot.slane %v1213, %v1255
      %v1257 = vlaneseq
      %v1258 = vshrl.u32 %v1257, 7
      %v1259 = vsub.s32 3, %v1258
      %v1260 = vrot.slane %v1214, %v1259
      %v1261 = vmul.f32 %v507, %v1256
      %v1262 = vmul.f32 %v508, %v1260
      %v1263 = vadd.f32 %v1251, %v1261
      %v1264 = vadd.f32 %v1252, %v1262
      %v1265 = vlaneseq
      %v1266 = vshrl.u32 %v1265, 7
      %v1267 = vsub.s32 4, %v1266
      %v1268 = vrot.slane %v1213, %v1267
      %v1269 = vlaneseq
      %v1270 = vshrl.u32 %v1269, 7
      %v1271 = vsub.s32 4, %v1270
      %v1272 = vrot.slane %v1214, %v1271
      %v1273 = vmul.f32 %v521, %v1268
      %v1274 = vmul.f32 %v522, %v1272
      %v1275 = vadd.f32 %v1263, %v1273
      %v1276 = vadd.f32 %v1264, %v1274
      %v1277 = vlaneseq
      %v1278 = vshrl.u32 %v1277, 7
      %v1279 = vsub.s32 5, %v1278
      %v1280 = vrot.slane %v1213, %v1279
      %v1281 = vlaneseq
      %v1282 = vshrl.u32 %v1281, 7
      %v1283 = vsub.s32 5, %v1282
      %v1284 = vrot.slane %v1214, %v1283
      %v1285 = vmul.f32 %v535, %v1280
      %v1286 = vmul.f32 %v536, %v1284
      %v1287 = vadd.f32 %v1275, %v1285
      %v1288 = vadd.f32 %v1276, %v1286
      %v1289 = vlaneseq
      %v1290 = vshrl.u32 %v1289, 7
      %v1291 = vsub.s32 6, %v1290
      %v1292 = vrot.slane %v1213, %v1291
      %v1293 = vlaneseq
      %v1294 = vshrl.u32 %v1293, 7
      %v1295 = vsub.s32 6, %v1294
      %v1296 = vrot.slane %v1214, %v1295
      %v1297 = vmul.f32 %v549, %v1292
      %v1298 = vmul.f32 %v550, %v1296
      %v1299 = vadd.f32 %v1287, %v1297
      %v1300 = vadd.f32 %v1288, %v1298
      %v1301 = vlaneseq
      %v1302 = vshrl.u32 %v1301, 7
      %v1303 = vsub.s32 7, %v1302
      %v1304 = vrot.slane %v1213, %v1303
      %v1305 = vlaneseq
      %v1306 = vshrl.u32 %v1305, 7
      %v1307 = vsub.s32 7, %v1306
      %v1308 = vrot.slane %v1214, %v1307
      %v1309 = vmul.f32 %v563, %v1304
      %v1310 = vmul.f32 %v564, %v1308
      %v1311 = vadd.f32 %v1299, %v1309
      %v1312 = vadd.f32 %v1300, %v1310
      %v1313 = vlaneseq
      %v1314 = vshrl.u32 %v1313, 7
      %v1315 = vsub.s32 0, %v1314
      %v1316 = vrot.slane %v1215, %v1315
      %v1317 = vlaneseq
      %v1318 = vshrl.u32 %v1317, 7
      %v1319 = vsub.s32 0, %v1318
      %v1320 = vrot.slane %v1216, %v1319
      %v1321 = vmul.f32 %v577, %v1316
      %v1322 = vmul.f32 %v578, %v1320
      %v1323 = vadd.f32 %v1311, %v1321
      %v1324 = vadd.f32 %v1312, %v1322
      %v1325 = vlaneseq
      %v1326 = vshrl.u32 %v1325, 7
      %v1327 = vsub.s32 1, %v1326
      %v1328 = vrot.slane %v1215, %v1327
      %v1329 = vlaneseq
      %v1330 = vshrl.u32 %v1329, 7
      %v1331 = vsub.s32 1, %v1330
      %v1332 = vrot.slane %v1216, %v1331
      %v1333 = vmul.f32 %v591, %v1328
      %v1334 = vmul.f32 %v592, %v1332
      %v1335 = vadd.f32 %v1323, %v1333
      %v1336 = vadd.f32 %v1324, %v1334
      %v1337 = vlaneseq
      %v1338 = vshrl.u32 %v1337, 7
      %v1339 = vsub.s32 2, %v1338
      %v1340 = vrot.slane %v1215, %v1339
      %v1341 = vlaneseq
      %v1342 = vshrl.u32 %v1341, 7
      %v1343 = vsub.s32 2, %v1342
      %v1344 = vrot.slane %v1216, %v1343
      %v1345 = vmul.f32 %v605, %v1340
      %v1346 = vmul.f32 %v606, %v1344
      %v1347 = vadd.f32 %v1335, %v1345
      %v1348 = vadd.f32 %v1336, %v1346
      %v1349 = vlaneseq
      %v1350 = vshrl.u32 %v1349, 7
      %v1351 = vsub.s32 3, %v1350
      %v1352 = vrot.slane %v1215, %v1351
      %v1353 = vlaneseq
      %v1354 = vshrl.u32 %v1353, 7
      %v1355 = vsub.s32 3, %v1354
      %v1356 = vrot.slane %v1216, %v1355
      %v1357 = vmul.f32 %v619, %v1352
      %v1358 = vmul.f32 %v620, %v1356
      %v1359 = vadd.f32 %v1347, %v1357
      %v1360 = vadd.f32 %v1348, %v1358
      %v1361 = vlaneseq
      %v1362 = vshrl.u32 %v1361, 7
      %v1363 = vsub.s32 4, %v1362
      %v1364 = vrot.slane %v1215, %v1363
      %v1365 = vlaneseq
      %v1366 = vshrl.u32 %v1365, 7
      %v1367 = vsub.s32 4, %v1366
      %v1368 = vrot.slane %v1216, %v1367
      %v1369 = vmul.f32 %v633, %v1364
      %v1370 = vmul.f32 %v634, %v1368
      %v1371 = vadd.f32 %v1359, %v1369
      %v1372 = vadd.f32 %v1360, %v1370
      %v1373 = vlaneseq
      %v1374 = vshrl.u32 %v1373, 7
      %v1375 = vsub.s32 5, %v1374
      %v1376 = vrot.slane %v1215, %v1375
      %v1377 = vlaneseq
      %v1378 = vshrl.u32 %v1377, 7
      %v1379 = vsub.s32 5, %v1378
      %v1380 = vrot.slane %v1216, %v1379
      %v1381 = vmul.f32 %v647, %v1376
      %v1382 = vmul.f32 %v648, %v1380
      %v1383 = vadd.f32 %v1371, %v1381
      %v1384 = vadd.f32 %v1372, %v1382
      %v1385 = vlaneseq
      %v1386 = vshrl.u32 %v1385, 7
      %v1387 = vsub.s32 6, %v1386
      %v1388 = vrot.slane %v1215, %v1387
      %v1389 = vlaneseq
      %v1390 = vshrl.u32 %v1389, 7
      %v1391 = vsub.s32 6, %v1390
      %v1392 = vrot.slane %v1216, %v1391
      %v1393 = vmul.f32 %v661, %v1388
      %v1394 = vmul.f32 %v662, %v1392
      %v1395 = vadd.f32 %v1383, %v1393
      %v1396 = vadd.f32 %v1384, %v1394
      %v1397 = vlaneseq
      %v1398 = vshrl.u32 %v1397, 7
      %v1399 = vsub.s32 7, %v1398
      %v1400 = vrot.slane %v1215, %v1399
      %v1401 = vlaneseq
      %v1402 = vshrl.u32 %v1401, 7
      %v1403 = vsub.s32 7, %v1402
      %v1404 = vrot.slane %v1216, %v1403
      %v1405 = vmul.f32 %v675, %v1400
      %v1406 = vmul.f32 %v676, %v1404
      %v1407 = vadd.f32 %v1395, %v1405
      %v1408 = vadd.f32 %v1396, %v1406
      %v1409 = vadd.f32 %v1067, %v1407
      %v1410 = vadd.f32 %v1068, %v1408
      %v1411 = vmax.f32 %v1409, 0.0
      %v1412 = vmax.f32 %v1410, 0.0
      %v1413 = vlaneseq
      %v1414 = vshrl.u32 %v1413, 7
      %v1415 = vsub.s32 0, %v1414
      %v1416 = vrot.slane %v1411, %v1415
      %v1417 = vlaneseq
      %v1418 = vshrl.u32 %v1417, 7
      %v1419 = vsub.s32 0, %v1418
      %v1420 = vrot.slane %v1412, %v1419
      %v1421 = vmul.f32 %v693, %v1416
      %v1422 = vmul.f32 %v694, %v1420
      %v1423 = vmul.f32 %v695, %v1416
      %v1424 = vmul.f32 %v696, %v1420
      %v1425 = vadd.f32 %v445, %v1421
      %v1426 = vadd.f32 %v446, %v1422
      %v1427 = vadd.f32 %v447, %v1423
      %v1428 = vadd.f32 %v448, %v1424
      %v1429 = vlaneseq
      %v1430 = vshrl.u32 %v1429, 7
      %v1431 = vsub.s32 1, %v1430
      %v1432 = vrot.slane %v1411, %v1431
      %v1433 = vlaneseq
      %v1434 = vshrl.u32 %v1433, 7
      %v1435 = vsub.s32 1, %v1434
      %v1436 = vrot.slane %v1412, %v1435
      %v1437 = vmul.f32 %v713, %v1432
      %v1438 = vmul.f32 %v714, %v1436
      %v1439 = vmul.f32 %v715, %v1432
      %v1440 = vmul.f32 %v716, %v1436
      %v1441 = vadd.f32 %v1425, %v1437
      %v1442 = vadd.f32 %v1426, %v1438
      %v1443 = vadd.f32 %v1427, %v1439
      %v1444 = vadd.f32 %v1428, %v1440
      %v1445 = vlaneseq
      %v1446 = vshrl.u32 %v1445, 7
      %v1447 = vsub.s32 2, %v1446
      %v1448 = vrot.slane %v1411, %v1447
      %v1449 = vlaneseq
      %v1450 = vshrl.u32 %v1449, 7
      %v1451 = vsub.s32 2, %v1450
      %v1452 = vrot.slane %v1412, %v1451
      %v1453 = vmul.f32 %v733, %v1448
      %v1454 = vmul.f32 %v734, %v1452
      %v1455 = vmul.f32 %v735, %v1448
      %v1456 = vmul.f32 %v736, %v1452
      %v1457 = vadd.f32 %v1441, %v1453
      %v1458 = vadd.f32 %v1442, %v1454
      %v1459 = vadd.f32 %v1443, %v1455
      %v1460 = vadd.f32 %v1444, %v1456
      %v1461 = vlaneseq
      %v1462 = vshrl.u32 %v1461, 7
      %v1463 = vsub.s32 3, %v1462
      %v1464 = vrot.slane %v1411, %v1463
      %v1465 = vlaneseq
      %v1466 = vshrl.u32 %v1465, 7
      %v1467 = vsub.s32 3, %v1466
      %v1468 = vrot.slane %v1412, %v1467
      %v1469 = vmul.f32 %v753, %v1464
      %v1470 = vmul.f32 %v754, %v1468
      %v1471 = vmul.f32 %v755, %v1464
      %v1472 = vmul.f32 %v756, %v1468
      %v1473 = vadd.f32 %v1457, %v1469
      %v1474 = vadd.f32 %v1458, %v1470
      %v1475 = vadd.f32 %v1459, %v1471
      %v1476 = vadd.f32 %v1460, %v1472
      %v1477 = vlaneseq
      %v1478 = vshrl.u32 %v1477, 7
      %v1479 = vsub.s32 4, %v1478
      %v1480 = vrot.slane %v1411, %v1479
      %v1481 = vlaneseq
      %v1482 = vshrl.u32 %v1481, 7
      %v1483 = vsub.s32 4, %v1482
      %v1484 = vrot.slane %v1412, %v1483
      %v1485 = vmul.f32 %v773, %v1480
      %v1486 = vmul.f32 %v774, %v1484
      %v1487 = vmul.f32 %v775, %v1480
      %v1488 = vmul.f32 %v776, %v1484
      %v1489 = vadd.f32 %v1473, %v1485
      %v1490 = vadd.f32 %v1474, %v1486
      %v1491 = vadd.f32 %v1475, %v1487
      %v1492 = vadd.f32 %v1476, %v1488
      %v1493 = vlaneseq
      %v1494 = vshrl.u32 %v1493, 7
      %v1495 = vsub.s32 5, %v1494
      %v1496 = vrot.slane %v1411, %v1495
      %v1497 = vlaneseq
      %v1498 = vshrl.u32 %v1497, 7
      %v1499 = vsub.s32 5, %v1498
      %v1500 = vrot.slane %v1412, %v1499
      %v1501 = vmul.f32 %v793, %v1496
      %v1502 = vmul.f32 %v794, %v1500
      %v1503 = vmul.f32 %v795, %v1496
      %v1504 = vmul.f32 %v796, %v1500
      %v1505 = vadd.f32 %v1489, %v1501
      %v1506 = vadd.f32 %v1490, %v1502
      %v1507 = vadd.f32 %v1491, %v1503
      %v1508 = vadd.f32 %v1492, %v1504
      %v1509 = vlaneseq
      %v1510 = vshrl.u32 %v1509, 7
      %v1511 = vsub.s32 6, %v1510
      %v1512 = vrot.slane %v1411, %v1511
      %v1513 = vlaneseq
      %v1514 = vshrl.u32 %v1513, 7
      %v1515 = vsub.s32 6, %v1514
      %v1516 = vrot.slane %v1412, %v1515
      %v1517 = vmul.f32 %v813, %v1512
      %v1518 = vmul.f32 %v814, %v1516
      %v1519 = vmul.f32 %v815, %v1512
      %v1520 = vmul.f32 %v816, %v1516
      %v1521 = vadd.f32 %v1505, %v1517
      %v1522 = vadd.f32 %v1506, %v1518
      %v1523 = vadd.f32 %v1507, %v1519
      %v1524 = vadd.f32 %v1508, %v1520
      %v1525 = vlaneseq
      %v1526 = vshrl.u32 %v1525, 7
      %v1527 = vsub.s32 7, %v1526
      %v1528 = vrot.slane %v1411, %v1527
      %v1529 = vlaneseq
      %v1530 = vshrl.u32 %v1529, 7
      %v1531 = vsub.s32 7, %v1530
      %v1532 = vrot.slane %v1412, %v1531
      %v1533 = vmul.f32 %v833, %v1528
      %v1534 = vmul.f32 %v834, %v1532
      %v1535 = vmul.f32 %v835, %v1528
      %v1536 = vmul.f32 %v836, %v1532
      %v1537 = vadd.f32 %v1521, %v1533
      %v1538 = vadd.f32 %v1522, %v1534
      %v1539 = vadd.f32 %v1523, %v1535
      %v1540 = vadd.f32 %v1524, %v1536
      %v1541 = vsub.f32 %v1205, %v1537
      %v1542 = vsub.f32 %v1206, %v1538
      %v1543 = vsub.f32 %v1207, %v1539
      %v1544 = vsub.f32 %v1208, %v1540
      %v1545 = vmax.f32 %v1541, 0.0
      %v1546 = vmax.f32 %v1542, 0.0
      %v1547 = vmax.f32 %v1543, 0.0
      %v1548 = vmax.f32 %v1544, 0.0
      %v1549 = vmin.f32 %v1545, 1.0
      %v1550 = vmin.f32 %v1546, 1.0
      %v1551 = vmin.f32 %v1547, 1.0
      %v1552 = vmin.f32 %v1548, 1.0
      %v1553 = vmul.f32 %v1549, 2.0
      %v1554 = vmul.f32 %v1550, 2.0
      %v1555 = vmul.f32 %v1551, 2.0
      %v1556 = vmul.f32 %v1552, 2.0
      %v1557 = vsub.f32 %v1553, %v1205
      %v1558 = vsub.f32 %v1554, %v1206
      %v1559 = vsub.f32 %v1555, %v1207
      %v1560 = vsub.f32 %v1556, %v1208
      %v1561 = vlaneseq
      %v1562 = vshrl.u32 %v1561, 7
      %v1563 = vsub.s32 0, %v1562
      %v1564 = vrot.slane %v1557, %v1563
      %v1565 = vlaneseq
      %v1566 = vshrl.u32 %v1565, 7
      %v1567 = vsub.s32 0, %v1566
      %v1568 = vrot.slane %v1558, %v1567
      %v1569 = vmul.f32 %v465, %v1564
      %v1570 = vmul.f32 %v466, %v1568
      %v1571 = vadd.f32 %v439, %v1569
      %v1572 = vadd.f32 %v440, %v1570
      %v1573 = vlaneseq
      %v1574 = vshrl.u32 %v1573, 7
      %v1575 = vsub.s32 1, %v1574
      %v1576 = vrot.slane %v1557, %v1575
      %v1577 = vlaneseq
      %v1578 = vshrl.u32 %v1577, 7
      %v1579 = vsub.s32 1, %v1578
      %v1580 = vrot.slane %v1558, %v1579
      %v1581 = vmul.f32 %v479, %v1576
      %v1582 = vmul.f32 %v480, %v1580
      %v1583 = vadd.f32 %v1571, %v1581
      %v1584 = vadd.f32 %v1572, %v1582
      %v1585 = vlaneseq
      %v1586 = vshrl.u32 %v1585, 7
      %v1587 = vsub.s32 2, %v1586
      %v1588 = vrot.slane %v1557, %v1587
      %v1589 = vlaneseq
      %v1590 = vshrl.u32 %v1589, 7
      %v1591 = vsub.s32 2, %v1590
      %v1592 = vrot.slane %v1558, %v1591
      %v1593 = vmul.f32 %v493, %v1588
      %v1594 = vmul.f32 %v494, %v1592
      %v1595 = vadd.f32 %v1583, %v1593
      %v1596 = vadd.f32 %v1584, %v1594
      %v1597 = vlaneseq
      %v1598 = vshrl.u32 %v1597, 7
      %v1599 = vsub.s32 3, %v1598
      %v1600 = vrot.slane %v1557, %v1599
      %v1601 = vlaneseq
      %v1602 = vshrl.u32 %v1601, 7
      %v1603 = vsub.s32 3, %v1602
      %v1604 = vrot.slane %v1558, %v1603
      %v1605 = vmul.f32 %v507, %v1600
      %v1606 = vmul.f32 %v508, %v1604
      %v1607 = vadd.f32 %v1595, %v1605
      %v1608 = vadd.f32 %v1596, %v1606
      %v1609 = vlaneseq
      %v1610 = vshrl.u32 %v1609, 7
      %v1611 = vsub.s32 4, %v1610
      %v1612 = vrot.slane %v1557, %v1611
      %v1613 = vlaneseq
      %v1614 = vshrl.u32 %v1613, 7
      %v1615 = vsub.s32 4, %v1614
      %v1616 = vrot.slane %v1558, %v1615
      %v1617 = vmul.f32 %v521, %v1612
      %v1618 = vmul.f32 %v522, %v1616
      %v1619 = vadd.f32 %v1607, %v1617
      %v1620 = vadd.f32 %v1608, %v1618
      %v1621 = vlaneseq
      %v1622 = vshrl.u32 %v1621, 7
      %v1623 = vsub.s32 5, %v1622
      %v1624 = vrot.slane %v1557, %v1623
      %v1625 = vlaneseq
      %v1626 = vshrl.u32 %v1625, 7
      %v1627 = vsub.s32 5, %v1626
      %v1628 = vrot.slane %v1558, %v1627
      %v1629 = vmul.f32 %v535, %v1624
      %v1630 = vmul.f32 %v536, %v1628
      %v1631 = vadd.f32 %v1619, %v1629
      %v1632 = vadd.f32 %v1620, %v1630
      %v1633 = vlaneseq
      %v1634 = vshrl.u32 %v1633, 7
      %v1635 = vsub.s32 6, %v1634
      %v1636 = vrot.slane %v1557, %v1635
      %v1637 = vlaneseq
      %v1638 = vshrl.u32 %v1637, 7
      %v1639 = vsub.s32 6, %v1638
      %v1640 = vrot.slane %v1558, %v1639
      %v1641 = vmul.f32 %v549, %v1636
      %v1642 = vmul.f32 %v550, %v1640
      %v1643 = vadd.f32 %v1631, %v1641
      %v1644 = vadd.f32 %v1632, %v1642
      %v1645 = vlaneseq
      %v1646 = vshrl.u32 %v1645, 7
      %v1647 = vsub.s32 7, %v1646
      %v1648 = vrot.slane %v1557, %v1647
      %v1649 = vlaneseq
      %v1650 = vshrl.u32 %v1649, 7
      %v1651 = vsub.s32 7, %v1650
      %v1652 = vrot.slane %v1558, %v1651
      %v1653 = vmul.f32 %v563, %v1648
      %v1654 = vmul.f32 %v564, %v1652
      %v1655 = vadd.f32 %v1643, %v1653
      %v1656 = vadd.f32 %v1644, %v1654
      %v1657 = vlaneseq
      %v1658 = vshrl.u32 %v1657, 7
      %v1659 = vsub.s32 0, %v1658
      %v1660 = vrot.slane %v1559, %v1659
      %v1661 = vlaneseq
      %v1662 = vshrl.u32 %v1661, 7
      %v1663 = vsub.s32 0, %v1662
      %v1664 = vrot.slane %v1560, %v1663
      %v1665 = vmul.f32 %v577, %v1660
      %v1666 = vmul.f32 %v578, %v1664
      %v1667 = vadd.f32 %v1655, %v1665
      %v1668 = vadd.f32 %v1656, %v1666
      %v1669 = vlaneseq
      %v1670 = vshrl.u32 %v1669, 7
      %v1671 = vsub.s32 1, %v1670
      %v1672 = vrot.slane %v1559, %v1671
      %v1673 = vlaneseq
      %v1674 = vshrl.u32 %v1673, 7
      %v1675 = vsub.s32 1, %v1674
      %v1676 = vrot.slane %v1560, %v1675
      %v1677 = vmul.f32 %v591, %v1672
      %v1678 = vmul.f32 %v592, %v1676
      %v1679 = vadd.f32 %v1667, %v1677
      %v1680 = vadd.f32 %v1668, %v1678
      %v1681 = vlaneseq
      %v1682 = vshrl.u32 %v1681, 7
      %v1683 = vsub.s32 2, %v1682
      %v1684 = vrot.slane %v1559, %v1683
      %v1685 = vlaneseq
      %v1686 = vshrl.u32 %v1685, 7
      %v1687 = vsub.s32 2, %v1686
      %v1688 = vrot.slane %v1560, %v1687
      %v1689 = vmul.f32 %v605, %v1684
      %v1690 = vmul.f32 %v606, %v1688
      %v1691 = vadd.f32 %v1679, %v1689
      %v1692 = vadd.f32 %v1680, %v1690
      %v1693 = vlaneseq
      %v1694 = vshrl.u32 %v1693, 7
      %v1695 = vsub.s32 3, %v1694
      %v1696 = vrot.slane %v1559, %v1695
      %v1697 = vlaneseq
      %v1698 = vshrl.u32 %v1697, 7
      %v1699 = vsub.s32 3, %v1698
      %v1700 = vrot.slane %v1560, %v1699
      %v1701 = vmul.f32 %v619, %v1696
      %v1702 = vmul.f32 %v620, %v1700
      %v1703 = vadd.f32 %v1691, %v1701
      %v1704 = vadd.f32 %v1692, %v1702
      %v1705 = vlaneseq
      %v1706 = vshrl.u32 %v1705, 7
      %v1707 = vsub.s32 4, %v1706
      %v1708 = vrot.slane %v1559, %v1707
      %v1709 = vlaneseq
      %v1710 = vshrl.u32 %v1709, 7
      %v1711 = vsub.s32 4, %v1710
      %v1712 = vrot.slane %v1560, %v1711
      %v1713 = vmul.f32 %v633, %v1708
      %v1714 = vmul.f32 %v634, %v1712
      %v1715 = vadd.f32 %v1703, %v1713
      %v1716 = vadd.f32 %v1704, %v1714
      %v1717 = vlaneseq
      %v1718 = vshrl.u32 %v1717, 7
      %v1719 = vsub.s32 5, %v1718
      %v1720 = vrot.slane %v1559, %v1719
      %v1721 = vlaneseq
      %v1722 = vshrl.u32 %v1721, 7
      %v1723 = vsub.s32 5, %v1722
      %v1724 = vrot.slane %v1560, %v1723
      %v1725 = vmul.f32 %v647, %v1720
      %v1726 = vmul.f32 %v648, %v1724
      %v1727 = vadd.f32 %v1715, %v1725
      %v1728 = vadd.f32 %v1716, %v1726
      %v1729 = vlaneseq
      %v1730 = vshrl.u32 %v1729, 7
      %v1731 = vsub.s32 6, %v1730
      %v1732 = vrot.slane %v1559, %v1731
      %v1733 = vlaneseq
      %v1734 = vshrl.u32 %v1733, 7
      %v1735 = vsub.s32 6, %v1734
      %v1736 = vrot.slane %v1560, %v1735
      %v1737 = vmul.f32 %v661, %v1732
      %v1738 = vmul.f32 %v662, %v1736
      %v1739 = vadd.f32 %v1727, %v1737
      %v1740 = vadd.f32 %v1728, %v1738
      %v1741 = vlaneseq
      %v1742 = vshrl.u32 %v1741, 7
      %v1743 = vsub.s32 7, %v1742
      %v1744 = vrot.slane %v1559, %v1743
      %v1745 = vlaneseq
      %v1746 = vshrl.u32 %v1745, 7
      %v1747 = vsub.s32 7, %v1746
      %v1748 = vrot.slane %v1560, %v1747
      %v1749 = vmul.f32 %v675, %v1744
      %v1750 = vmul.f32 %v676, %v1748
      %v1751 = vadd.f32 %v1739, %v1749
      %v1752 = vadd.f32 %v1740, %v1750
      %v1753 = vadd.f32 %v1411, %v1751
      %v1754 = vadd.f32 %v1412, %v1752
      %v1755 = vmax.f32 %v1753, 0.0
      %v1756 = vmax.f32 %v1754, 0.0
      %v1757 = vlaneseq
      %v1758 = vshrl.u32 %v1757, 7
      %v1759 = vsub.s32 0, %v1758
      %v1760 = vrot.slane %v1755, %v1759
      %v1761 = vlaneseq
      %v1762 = vshrl.u32 %v1761, 7
      %v1763 = vsub.s32 0, %v1762
      %v1764 = vrot.slane %v1756, %v1763
      %v1765 = vmul.f32 %v693, %v1760
      %v1766 = vmul.f32 %v694, %v1764
      %v1767 = vmul.f32 %v695, %v1760
      %v1768 = vmul.f32 %v696, %v1764
      %v1769 = vadd.f32 %v445, %v1765
      %v1770 = vadd.f32 %v446, %v1766
      %v1771 = vadd.f32 %v447, %v1767
      %v1772 = vadd.f32 %v448, %v1768
      %v1773 = vlaneseq
      %v1774 = vshrl.u32 %v1773, 7
      %v1775 = vsub.s32 1, %v1774
      %v1776 = vrot.slane %v1755, %v1775
      %v1777 = vlaneseq
      %v1778 = vshrl.u32 %v1777, 7
      %v1779 = vsub.s32 1, %v1778
      %v1780 = vrot.slane %v1756, %v1779
      %v1781 = vmul.f32 %v713, %v1776
      %v1782 = vmul.f32 %v714, %v1780
      %v1783 = vmul.f32 %v715, %v1776
      %v1784 = vmul.f32 %v716, %v1780
      %v1785 = vadd.f32 %v1769, %v1781
      %v1786 = vadd.f32 %v1770, %v1782
      %v1787 = vadd.f32 %v1771, %v1783
      %v1788 = vadd.f32 %v1772, %v1784
      %v1789 = vlaneseq
      %v1790 = vshrl.u32 %v1789, 7
      %v1791 = vsub.s32 2, %v1790
      %v1792 = vrot.slane %v1755, %v1791
      %v1793 = vlaneseq
      %v1794 = vshrl.u32 %v1793, 7
      %v1795 = vsub.s32 2, %v1794
      %v1796 = vrot.slane %v1756, %v1795
      %v1797 = vmul.f32 %v733, %v1792
      %v1798 = vmul.f32 %v734, %v1796
      %v1799 = vmul.f32 %v735, %v1792
      %v1800 = vmul.f32 %v736, %v1796
      %v1801 = vadd.f32 %v1785, %v1797
      %v1802 = vadd.f32 %v1786, %v1798
      %v1803 = vadd.f32 %v1787, %v1799
      %v1804 = vadd.f32 %v1788, %v1800
      %v1805 = vlaneseq
      %v1806 = vshrl.u32 %v1805, 7
      %v1807 = vsub.s32 3, %v1806
      %v1808 = vrot.slane %v1755, %v1807
      %v1809 = vlaneseq
      %v1810 = vshrl.u32 %v1809, 7
      %v1811 = vsub.s32 3, %v1810
      %v1812 = vrot.slane %v1756, %v1811
      %v1813 = vmul.f32 %v753, %v1808
      %v1814 = vmul.f32 %v754, %v1812
      %v1815 = vmul.f32 %v755, %v1808
      %v1816 = vmul.f32 %v756, %v1812
      %v1817 = vadd.f32 %v1801, %v1813
      %v1818 = vadd.f32 %v1802, %v1814
      %v1819 = vadd.f32 %v1803, %v1815
      %v1820 = vadd.f32 %v1804, %v1816
      %v1821 = vlaneseq
      %v1822 = vshrl.u32 %v1821, 7
      %v1823 = vsub.s32 4, %v1822
      %v1824 = vrot.slane %v1755, %v1823
      %v1825 = vlaneseq
      %v1826 = vshrl.u32 %v1825, 7
      %v1827 = vsub.s32 4, %v1826
      %v1828 = vrot.slane %v1756, %v1827
      %v1829 = vmul.f32 %v773, %v1824
      %v1830 = vmul.f32 %v774, %v1828
      %v1831 = vmul.f32 %v775, %v1824
      %v1832 = vmul.f32 %v776, %v1828
      %v1833 = vadd.f32 %v1817, %v1829
      %v1834 = vadd.f32 %v1818, %v1830
      %v1835 = vadd.f32 %v1819, %v1831
      %v1836 = vadd.f32 %v1820, %v1832
      %v1837 = vlaneseq
      %v1838 = vshrl.u32 %v1837, 7
      %v1839 = vsub.s32 5, %v1838
      %v1840 = vrot.slane %v1755, %v1839
      %v1841 = vlaneseq
      %v1842 = vshrl.u32 %v1841, 7
      %v1843 = vsub.s32 5, %v1842
      %v1844 = vrot.slane %v1756, %v1843
      %v1845 = vmul.f32 %v793, %v1840
      %v1846 = vmul.f32 %v794, %v1844
      %v1847 = vmul.f32 %v795, %v1840
      %v1848 = vmul.f32 %v796, %v1844
      %v1849 = vadd.f32 %v1833, %v1845
      %v1850 = vadd.f32 %v1834, %v1846
      %v1851 = vadd.f32 %v1835, %v1847
      %v1852 = vadd.f32 %v1836, %v1848
      %v1853 = vlaneseq
      %v1854 = vshrl.u32 %v1853, 7
      %v1855 = vsub.s32 6, %v1854
      %v1856 = vrot.slane %v1755, %v1855
      %v1857 = vlaneseq
      %v1858 = vshrl.u32 %v1857, 7
      %v1859 = vsub.s32 6, %v1858
      %v1860 = vrot.slane %v1756, %v1859
      %v1861 = vmul.f32 %v813, %v1856
      %v1862 = vmul.f32 %v814, %v1860
      %v1863 = vmul.f32 %v815, %v1856
      %v1864 = vmul.f32 %v816, %v1860
      %v1865 = vadd.f32 %v1849, %v1861
      %v1866 = vadd.f32 %v1850, %v1862
      %v1867 = vadd.f32 %v1851, %v1863
      %v1868 = vadd.f32 %v1852, %v1864
      %v1869 = vlaneseq
      %v1870 = vshrl.u32 %v1869, 7
      %v1871 = vsub.s32 7, %v1870
      %v1872 = vrot.slane %v1755, %v1871
      %v1873 = vlaneseq
      %v1874 = vshrl.u32 %v1873, 7
      %v1875 = vsub.s32 7, %v1874
      %v1876 = vrot.slane %v1756, %v1875
      %v1877 = vmul.f32 %v833, %v1872
      %v1878 = vmul.f32 %v834, %v1876
      %v1879 = vmul.f32 %v835, %v1872
      %v1880 = vmul.f32 %v836, %v1876
      %v1881 = vadd.f32 %v1865, %v1877
      %v1882 = vadd.f32 %v1866, %v1878
      %v1883 = vadd.f32 %v1867, %v1879
      %v1884 = vadd.f32 %v1868, %v1880
      %v1885 = vsub.f32 %v1549, %v1881
      %v1886 = vsub.f32 %v1550, %v1882
      %v1887 = vsub.f32 %v1551, %v1883
      %v1888 = vsub.f32 %v1552, %v1884
      %v1889 = vmax.f32 %v1885, 0.0
      %v1890 = vmax.f32 %v1886, 0.0
      %v1891 = vmax.f32 %v1887, 0.0
      %v1892 = vmax.f32 %v1888, 0.0
      %v1893 = vmin.f32 %v1889, 1.0
      %v1894 = vmin.f32 %v1890, 1.0
      %v1895 = vmin.f32 %v1891, 1.0
      %v1896 = vmin.f32 %v1892, 1.0
      %v1897 = vmul.f32 %v1893, 2.0
      %v1898 = vmul.f32 %v1894, 2.0
      %v1899 = vmul.f32 %v1895, 2.0
      %v1900 = vmul.f32 %v1896, 2.0
      %v1901 = vsub.f32 %v1897, %v1549
      %v1902 = vsub.f32 %v1898, %v1550
      %v1903 = vsub.f32 %v1899, %v1551
      %v1904 = vsub.f32 %v1900, %v1552
      %v1905 = vlaneseq
      %v1906 = vshrl.u32 %v1905, 7
      %v1907 = vsub.s32 0, %v1906
      %v1908 = vrot.slane %v1901, %v1907
      %v1909 = vlaneseq
      %v1910 = vshrl.u32 %v1909, 7
      %v1911 = vsub.s32 0, %v1910
      %v1912 = vrot.slane %v1902, %v1911
      %v1913 = vmul.f32 %v465, %v1908
      %v1914 = vmul.f32 %v466, %v1912
      %v1915 = vadd.f32 %v439, %v1913
      %v1916 = vadd.f32 %v440, %v1914
      %v1917 = vlaneseq
      %v1918 = vshrl.u32 %v1917, 7
      %v1919 = vsub.s32 1, %v1918
      %v1920 = vrot.slane %v1901, %v1919
      %v1921 = vlaneseq
      %v1922 = vshrl.u32 %v1921, 7
      %v1923 = vsub.s32 1, %v1922
      %v1924 = vrot.slane %v1902, %v1923
      %v1925 = vmul.f32 %v479, %v1920
      %v1926 = vmul.f32 %v480, %v1924
      %v1927 = vadd.f32 %v1915, %v1925
      %v1928 = vadd.f32 %v1916, %v1926
      %v1929 = vlaneseq
      %v1930 = vshrl.u32 %v1929, 7
      %v1931 = vsub.s32 2, %v1930
      %v1932 = vrot.slane %v1901, %v1931
      %v1933 = vlaneseq
      %v1934 = vshrl.u32 %v1933, 7
      %v1935 = vsub.s32 2, %v1934
      %v1936 = vrot.slane %v1902, %v1935
      %v1937 = vmul.f32 %v493, %v1932
      %v1938 = vmul.f32 %v494, %v1936
      %v1939 = vadd.f32 %v1927, %v1937
      %v1940 = vadd.f32 %v1928, %v1938
      %v1941 = vlaneseq
      %v1942 = vshrl.u32 %v1941, 7
      %v1943 = vsub.s32 3, %v1942
      %v1944 = vrot.slane %v1901, %v1943
      %v1945 = vlaneseq
      %v1946 = vshrl.u32 %v1945, 7
      %v1947 = vsub.s32 3, %v1946
      %v1948 = vrot.slane %v1902, %v1947
      %v1949 = vmul.f32 %v507, %v1944
      %v1950 = vmul.f32 %v508, %v1948
      %v1951 = vadd.f32 %v1939, %v1949
      %v1952 = vadd.f32 %v1940, %v1950
      %v1953 = vlaneseq
      %v1954 = vshrl.u32 %v1953, 7
      %v1955 = vsub.s32 4, %v1954
      %v1956 = vrot.slane %v1901, %v1955
      %v1957 = vlaneseq
      %v1958 = vshrl.u32 %v1957, 7
      %v1959 = vsub.s32 4, %v1958
      %v1960 = vrot.slane %v1902, %v1959
      %v1961 = vmul.f32 %v521, %v1956
      %v1962 = vmul.f32 %v522, %v1960
      %v1963 = vadd.f32 %v1951, %v1961
      %v1964 = vadd.f32 %v1952, %v1962
      %v1965 = vlaneseq
      %v1966 = vshrl.u32 %v1965, 7
      %v1967 = vsub.s32 5, %v1966
      %v1968 = vrot.slane %v1901, %v1967
      %v1969 = vlaneseq
      %v1970 = vshrl.u32 %v1969, 7
      %v1971 = vsub.s32 5, %v1970
      %v1972 = vrot.slane %v1902, %v1971
      %v1973 = vmul.f32 %v535, %v1968
      %v1974 = vmul.f32 %v536, %v1972
      %v1975 = vadd.f32 %v1963, %v1973
      %v1976 = vadd.f32 %v1964, %v1974
      %v1977 = vlaneseq
      %v1978 = vshrl.u32 %v1977, 7
      %v1979 = vsub.s32 6, %v1978
      %v1980 = vrot.slane %v1901, %v1979
      %v1981 = vlaneseq
      %v1982 = vshrl.u32 %v1981, 7
      %v1983 = vsub.s32 6, %v1982
      %v1984 = vrot.slane %v1902, %v1983
      %v1985 = vmul.f32 %v549, %v1980
      %v1986 = vmul.f32 %v550, %v1984
      %v1987 = vadd.f32 %v1975, %v1985
      %v1988 = vadd.f32 %v1976, %v1986
      %v1989 = vlaneseq
      %v1990 = vshrl.u32 %v1989, 7
      %v1991 = vsub.s32 7, %v1990
      %v1992 = vrot.slane %v1901, %v1991
      %v1993 = vlaneseq
      %v1994 = vshrl.u32 %v1993, 7
      %v1995 = vsub.s32 7, %v1994
      %v1996 = vrot.slane %v1902, %v1995
      %v1997 = vmul.f32 %v563, %v1992
      %v1998 = vmul.f32 %v564, %v1996
      %v1999 = vadd.f32 %v1987, %v1997
      %v2000 = vadd.f32 %v1988, %v1998
      %v2001 = vlaneseq
      %v2002 = vshrl.u32 %v2001, 7
      %v2003 = vsub.s32 0, %v2002
      %v2004 = vrot.slane %v1903, %v2003
      %v2005 = vlaneseq
      %v2006 = vshrl.u32 %v2005, 7
      %v2007 = vsub.s32 0, %v2006
      %v2008 = vrot.slane %v1904, %v2007
      %v2009 = vmul.f32 %v577, %v2004
      %v2010 = vmul.f32 %v578, %v2008
      %v2011 = vadd.f32 %v1999, %v2009
      %v2012 = vadd.f32 %v2000, %v2010
      %v2013 = vlaneseq
      %v2014 = vshrl.u32 %v2013, 7
      %v2015 = vsub.s32 1, %v2014
      %v2016 = vrot.slane %v1903, %v2015
      %v2017 = vlaneseq
      %v2018 = vshrl.u32 %v2017, 7
      %v2019 = vsub.s32 1, %v2018
      %v2020 = vrot.slane %v1904, %v2019
      %v2021 = vmul.f32 %v591, %v2016
      %v2022 = vmul.f32 %v592, %v2020
      %v2023 = vadd.f32 %v2011, %v2021
      %v2024 = vadd.f32 %v2012, %v2022
      %v2025 = vlaneseq
      %v2026 = vshrl.u32 %v2025, 7
      %v2027 = vsub.s32 2, %v2026
      %v2028 = vrot.slane %v1903, %v2027
      %v2029 = vlaneseq
      %v2030 = vshrl.u32 %v2029, 7
      %v2031 = vsub.s32 2, %v2030
      %v2032 = vrot.slane %v1904, %v2031
      %v2033 = vmul.f32 %v605, %v2028
      %v2034 = vmul.f32 %v606, %v2032
      %v2035 = vadd.f32 %v2023, %v2033
      %v2036 = vadd.f32 %v2024, %v2034
      %v2037 = vlaneseq
      %v2038 = vshrl.u32 %v2037, 7
      %v2039 = vsub.s32 3, %v2038
      %v2040 = vrot.slane %v1903, %v2039
      %v2041 = vlaneseq
      %v2042 = vshrl.u32 %v2041, 7
      %v2043 = vsub.s32 3, %v2042
      %v2044 = vrot.slane %v1904, %v2043
      %v2045 = vmul.f32 %v619, %v2040
      %v2046 = vmul.f32 %v620, %v2044
      %v2047 = vadd.f32 %v2035, %v2045
      %v2048 = vadd.f32 %v2036, %v2046
      %v2049 = vlaneseq
      %v2050 = vshrl.u32 %v2049, 7
      %v2051 = vsub.s32 4, %v2050
      %v2052 = vrot.slane %v1903, %v2051
      %v2053 = vlaneseq
      %v2054 = vshrl.u32 %v2053, 7
      %v2055 = vsub.s32 4, %v2054
      %v2056 = vrot.slane %v1904, %v2055
      %v2057 = vmul.f32 %v633, %v2052
      %v2058 = vmul.f32 %v634, %v2056
      %v2059 = vadd.f32 %v2047, %v2057
      %v2060 = vadd.f32 %v2048, %v2058
      %v2061 = vlaneseq
      %v2062 = vshrl.u32 %v2061, 7
      %v2063 = vsub.s32 5, %v2062
      %v2064 = vrot.slane %v1903, %v2063
      %v2065 = vlaneseq
      %v2066 = vshrl.u32 %v2065, 7
      %v2067 = vsub.s32 5, %v2066
      %v2068 = vrot.slane %v1904, %v2067
      %v2069 = vmul.f32 %v647, %v2064
      %v2070 = vmul.f32 %v648, %v2068
      %v2071 = vadd.f32 %v2059, %v2069
      %v2072 = vadd.f32 %v2060, %v2070
      %v2073 = vlaneseq
      %v2074 = vshrl.u32 %v2073, 7
      %v2075 = vsub.s32 6, %v2074
      %v2076 = vrot.slane %v1903, %v2075
      %v2077 = vlaneseq
      %v2078 = vshrl.u32 %v2077, 7
      %v2079 = vsub.s32 6, %v2078
      %v2080 = vrot.slane %v1904, %v2079
      %v2081 = vmul.f32 %v661, %v2076
      %v2082 = vmul.f32 %v662, %v2080
      %v2083 = vadd.f32 %v2071, %v2081
      %v2084 = vadd.f32 %v2072, %v2082
      %v2085 = vlaneseq
      %v2086 = vshrl.u32 %v2085, 7
      %v2087 = vsub.s32 7, %v2086
      %v2088 = vrot.slane %v1903, %v2087
      %v2089 = vlaneseq
      %v2090 = vshrl.u32 %v2089, 7
      %v2091 = vsub.s32 7, %v2090
      %v2092 = vrot.slane %v1904, %v2091
      %v2093 = vmul.f32 %v675, %v2088
      %v2094 = vmul.f32 %v676, %v2092
      %v2095 = vadd.f32 %v2083, %v2093
      %v2096 = vadd.f32 %v2084, %v2094
      %v2097 = vadd.f32 %v1755, %v2095
      %v2098 = vadd.f32 %v1756, %v2096
      %v2099 = vmax.f32 %v2097, 0.0
      %v2100 = vmax.f32 %v2098, 0.0
      %v2101 = vlaneseq
      %v2102 = vshrl.u32 %v2101, 7
      %v2103 = vsub.s32 0, %v2102
      %v2104 = vrot.slane %v2099, %v2103
      %v2105 = vlaneseq
      %v2106 = vshrl.u32 %v2105, 7
      %v2107 = vsub.s32 0, %v2106
      %v2108 = vrot.slane %v2100, %v2107
      %v2109 = vmul.f32 %v693, %v2104
      %v2110 = vmul.f32 %v694, %v2108
      %v2111 = vmul.f32 %v695, %v2104
      %v2112 = vmul.f32 %v696, %v2108
      %v2113 = vadd.f32 %v445, %v2109
      %v2114 = vadd.f32 %v446, %v2110
      %v2115 = vadd.f32 %v447, %v2111
      %v2116 = vadd.f32 %v448, %v2112
      %v2117 = vlaneseq
      %v2118 = vshrl.u32 %v2117, 7
      %v2119 = vsub.s32 1, %v2118
      %v2120 = vrot.slane %v2099, %v2119
      %v2121 = vlaneseq
      %v2122 = vshrl.u32 %v2121, 7
      %v2123 = vsub.s32 1, %v2122
      %v2124 = vrot.slane %v2100, %v2123
      %v2125 = vmul.f32 %v713, %v2120
      %v2126 = vmul.f32 %v714, %v2124
      %v2127 = vmul.f32 %v715, %v2120
      %v2128 = vmul.f32 %v716, %v2124
      %v2129 = vadd.f32 %v2113, %v2125
      %v2130 = vadd.f32 %v2114, %v2126
      %v2131 = vadd.f32 %v2115, %v2127
      %v2132 = vadd.f32 %v2116, %v2128
      %v2133 = vlaneseq
      %v2134 = vshrl.u32 %v2133, 7
      %v2135 = vsub.s32 2, %v2134
      %v2136 = vrot.slane %v2099, %v2135
      %v2137 = vlaneseq
      %v2138 = vshrl.u32 %v2137, 7
      %v2139 = vsub.s32 2, %v2138
      %v2140 = vrot.slane %v2100, %v2139
      %v2141 = vmul.f32 %v733, %v2136
      %v2142 = vmul.f32 %v734, %v2140
      %v2143 = vmul.f32 %v735, %v2136
      %v2144 = vmul.f32 %v736, %v2140
      %v2145 = vadd.f32 %v2129, %v2141
      %v2146 = vadd.f32 %v2130, %v2142
      %v2147 = vadd.f32 %v2131, %v2143
      %v2148 = vadd.f32 %v2132, %v2144
      %v2149 = vlaneseq
      %v2150 = vshrl.u32 %v2149, 7
      %v2151 = vsub.s32 3, %v2150
      %v2152 = vrot.slane %v2099, %v2151
      %v2153 = vlaneseq
      %v2154 = vshrl.u32 %v2153, 7
      %v2155 = vsub.s32 3, %v2154
      %v2156 = vrot.slane %v2100, %v2155
      %v2157 = vmul.f32 %v753, %v2152
      %v2158 = vmul.f32 %v754, %v2156
      %v2159 = vmul.f32 %v755, %v2152
      %v2160 = vmul.f32 %v756, %v2156
      %v2161 = vadd.f32 %v2145, %v2157
      %v2162 = vadd.f32 %v2146, %v2158
      %v2163 = vadd.f32 %v2147, %v2159
      %v2164 = vadd.f32 %v2148, %v2160
      %v2165 = vlaneseq
      %v2166 = vshrl.u32 %v2165, 7
      %v2167 = vsub.s32 4, %v2166
      %v2168 = vrot.slane %v2099, %v2167
      %v2169 = vlaneseq
      %v2170 = vshrl.u32 %v2169, 7
      %v2171 = vsub.s32 4, %v2170
      %v2172 = vrot.slane %v2100, %v2171
      %v2173 = vmul.f32 %v773, %v2168
      %v2174 = vmul.f32 %v774, %v2172
      %v2175 = vmul.f32 %v775, %v2168
      %v2176 = vmul.f32 %v776, %v2172
      %v2177 = vadd.f32 %v2161, %v2173
      %v2178 = vadd.f32 %v2162, %v2174
      %v2179 = vadd.f32 %v2163, %v2175
      %v2180 = vadd.f32 %v2164, %v2176
      %v2181 = vlaneseq
      %v2182 = vshrl.u32 %v2181, 7
      %v2183 = vsub.s32 5, %v2182
      %v2184 = vrot.slane %v2099, %v2183
      %v2185 = vlaneseq
      %v2186 = vshrl.u32 %v2185, 7
      %v2187 = vsub.s32 5, %v2186
      %v2188 = vrot.slane %v2100, %v2187
      %v2189 = vmul.f32 %v793, %v2184
      %v2190 = vmul.f32 %v794, %v2188
      %v2191 = vmul.f32 %v795, %v2184
      %v2192 = vmul.f32 %v796, %v2188
      %v2193 = vadd.f32 %v2177, %v2189
      %v2194 = vadd.f32 %v2178, %v2190
      %v2195 = vadd.f32 %v2179, %v2191
      %v2196 = vadd.f32 %v2180, %v2192
      %v2197 = vlaneseq
      %v2198 = vshrl.u32 %v2197, 7
      %v2199 = vsub.s32 6, %v2198
      %v2200 = vrot.slane %v2099, %v2199
      %v2201 = vlaneseq
      %v2202 = vshrl.u32 %v2201, 7
      %v2203 = vsub.s32 6, %v2202
      %v2204 = vrot.slane %v2100, %v2203
      %v2205 = vmul.f32 %v813, %v2200
      %v2206 = vmul.f32 %v814, %v2204
      %v2207 = vmul.f32 %v815, %v2200
      %v2208 = vmul.f32 %v816, %v2204
      %v2209 = vadd.f32 %v2193, %v2205
      %v2210 = vadd.f32 %v2194, %v2206
      %v2211 = vadd.f32 %v2195, %v2207
      %v2212 = vadd.f32 %v2196, %v2208
      %v2213 = vlaneseq
      %v2214 = vshrl.u32 %v2213, 7
      %v2215 = vsub.s32 7, %v2214
      %v2216 = vrot.slane %v2099, %v2215
      %v2217 = vlaneseq
      %v2218 = vshrl.u32 %v2217, 7
      %v2219 = vsub.s32 7, %v2218
      %v2220 = vrot.slane %v2100, %v2219
      %v2221 = vmul.f32 %v833, %v2216
      %v2222 = vmul.f32 %v834, %v2220
      %v2223 = vmul.f32 %v835, %v2216
      %v2224 = vmul.f32 %v836, %v2220
      %v2225 = vadd.f32 %v2209, %v2221
      %v2226 = vadd.f32 %v2210, %v2222
      %v2227 = vadd.f32 %v2211, %v2223
      %v2228 = vadd.f32 %v2212, %v2224
      %v2229 = vsub.f32 %v1893, %v2225
      %v2230 = vsub.f32 %v1894, %v2226
      %v2231 = vsub.f32 %v1895, %v2227
      %v2232 = vsub.f32 %v1896, %v2228
      %v2233 = vmax.f32 %v2229, 0.0
      %v2234 = vmax.f32 %v2230, 0.0
      %v2235 = vmax.f32 %v2231, 0.0
      %v2236 = vmax.f32 %v2232, 0.0
      %v2237 = vmin.f32 %v2233, 1.0
      %v2238 = vmin.f32 %v2234, 1.0
      %v2239 = vmin.f32 %v2235, 1.0
      %v2240 = vmin.f32 %v2236, 1.0
      %v2241 = vmul.f32 %v2237, 2.0
      %v2242 = vmul.f32 %v2238, 2.0
      %v2243 = vmul.f32 %v2239, 2.0
      %v2244 = vmul.f32 %v2240, 2.0
      %v2245 = vsub.f32 %v2241, %v1893
      %v2246 = vsub.f32 %v2242, %v1894
      %v2247 = vsub.f32 %v2243, %v1895
      %v2248 = vsub.f32 %v2244, %v1896
      %v2249 = vlaneseq
      %v2250 = vshrl.u32 %v2249, 7
      %v2251 = vsub.s32 0, %v2250
      %v2252 = vrot.slane %v2245, %v2251
      %v2253 = vlaneseq
      %v2254 = vshrl.u32 %v2253, 7
      %v2255 = vsub.s32 0, %v2254
      %v2256 = vrot.slane %v2246, %v2255
      %v2257 = vmul.f32 %v465, %v2252
      %v2258 = vmul.f32 %v466, %v2256
      %v2259 = vadd.f32 %v439, %v2257
      %v2260 = vadd.f32 %v440, %v2258
      %v2261 = vlaneseq
      %v2262 = vshrl.u32 %v2261, 7
      %v2263 = vsub.s32 1, %v2262
      %v2264 = vrot.slane %v2245, %v2263
      %v2265 = vlaneseq
      %v2266 = vshrl.u32 %v2265, 7
      %v2267 = vsub.s32 1, %v2266
      %v2268 = vrot.slane %v2246, %v2267
      %v2269 = vmul.f32 %v479, %v2264
      %v2270 = vmul.f32 %v480, %v2268
      %v2271 = vadd.f32 %v2259, %v2269
      %v2272 = vadd.f32 %v2260, %v2270
      %v2273 = vlaneseq
      %v2274 = vshrl.u32 %v2273, 7
      %v2275 = vsub.s32 2, %v2274
      %v2276 = vrot.slane %v2245, %v2275
      %v2277 = vlaneseq
      %v2278 = vshrl.u32 %v2277, 7
      %v2279 = vsub.s32 2, %v2278
      %v2280 = vrot.slane %v2246, %v2279
      %v2281 = vmul.f32 %v493, %v2276
      %v2282 = vmul.f32 %v494, %v2280
      %v2283 = vadd.f32 %v2271, %v2281
      %v2284 = vadd.f32 %v2272, %v2282
      %v2285 = vlaneseq
      %v2286 = vshrl.u32 %v2285, 7
      %v2287 = vsub.s32 3, %v2286
      %v2288 = vrot.slane %v2245, %v2287
      %v2289 = vlaneseq
      %v2290 = vshrl.u32 %v2289, 7
      %v2291 = vsub.s32 3, %v2290
      %v2292 = vrot.slane %v2246, %v2291
      %v2293 = vmul.f32 %v507, %v2288
      %v2294 = vmul.f32 %v508, %v2292
      %v2295 = vadd.f32 %v2283, %v2293
      %v2296 = vadd.f32 %v2284, %v2294
      %v2297 = vlaneseq
      %v2298 = vshrl.u32 %v2297, 7
      %v2299 = vsub.s32 4, %v2298
      %v2300 = vrot.slane %v2245, %v2299
      %v2301 = vlaneseq
      %v2302 = vshrl.u32 %v2301, 7
      %v2303 = vsub.s32 4, %v2302
      %v2304 = vrot.slane %v2246, %v2303
      %v2305 = vmul.f32 %v521, %v2300
      %v2306 = vmul.f32 %v522, %v2304
      %v2307 = vadd.f32 %v2295, %v2305
      %v2308 = vadd.f32 %v2296, %v2306
      %v2309 = vlaneseq
      %v2310 = vshrl.u32 %v2309, 7
      %v2311 = vsub.s32 5, %v2310
      %v2312 = vrot.slane %v2245, %v2311
      %v2313 = vlaneseq
      %v2314 = vshrl.u32 %v2313, 7
      %v2315 = vsub.s32 5, %v2314
      %v2316 = vrot.slane %v2246, %v2315
      %v2317 = vmul.f32 %v535, %v2312
      %v2318 = vmul.f32 %v536, %v2316
      %v2319 = vadd.f32 %v2307, %v2317
      %v2320 = vadd.f32 %v2308, %v2318
      %v2321 = vlaneseq
      %v2322 = vshrl.u32 %v2321, 7
      %v2323 = vsub.s32 6, %v2322
      %v2324 = vrot.slane %v2245, %v2323
      %v2325 = vlaneseq
      %v2326 = vshrl.u32 %v2325, 7
      %v2327 = vsub.s32 6, %v2326
      %v2328 = vrot.slane %v2246, %v2327
      %v2329 = vmul.f32 %v549, %v2324
      %v2330 = vmul.f32 %v550, %v2328
      %v2331 = vadd.f32 %v2319, %v2329
      %v2332 = vadd.f32 %v2320, %v2330
      %v2333 = vlaneseq
      %v2334 = vshrl.u32 %v2333, 7
      %v2335 = vsub.s32 7, %v2334
      %v2336 = vrot.slane %v2245, %v2335
      %v2337 = vlaneseq
      %v2338 = vshrl.u32 %v2337, 7
      %v2339 = vsub.s32 7, %v2338
      %v2340 = vrot.slane %v2246, %v2339
      %v2341 = vmul.f32 %v563, %v2336
      %v2342 = vmul.f32 %v564, %v2340
      %v2343 = vadd.f32 %v2331, %v2341
      %v2344 = vadd.f32 %v2332, %v2342
      %v2345 = vlaneseq
      %v2346 = vshrl.u32 %v2345, 7
      %v2347 = vsub.s32 0, %v2346
      %v2348 = vrot.slane %v2247, %v2347
      %v2349 = vlaneseq
      %v2350 = vshrl.u32 %v2349, 7
      %v2351 = vsub.s32 0, %v2350
      %v2352 = vrot.slane %v2248, %v2351
      %v2353 = vmul.f32 %v577, %v2348
      %v2354 = vmul.f32 %v578, %v2352
      %v2355 = vadd.f32 %v2343, %v2353
      %v2356 = vadd.f32 %v2344, %v2354
      %v2357 = vlaneseq
      %v2358 = vshrl.u32 %v2357, 7
      %v2359 = vsub.s32 1, %v2358
      %v2360 = vrot.slane %v2247, %v2359
      %v2361 = vlaneseq
      %v2362 = vshrl.u32 %v2361, 7
      %v2363 = vsub.s32 1, %v2362
      %v2364 = vrot.slane %v2248, %v2363
      %v2365 = vmul.f32 %v591, %v2360
      %v2366 = vmul.f32 %v592, %v2364
      %v2367 = vadd.f32 %v2355, %v2365
      %v2368 = vadd.f32 %v2356, %v2366
      %v2369 = vlaneseq
      %v2370 = vshrl.u32 %v2369, 7
      %v2371 = vsub.s32 2, %v2370
      %v2372 = vrot.slane %v2247, %v2371
      %v2373 = vlaneseq
      %v2374 = vshrl.u32 %v2373, 7
      %v2375 = vsub.s32 2, %v2374
      %v2376 = vrot.slane %v2248, %v2375
      %v2377 = vmul.f32 %v605, %v2372
      %v2378 = vmul.f32 %v606, %v2376
      %v2379 = vadd.f32 %v2367, %v2377
      %v2380 = vadd.f32 %v2368, %v2378
      %v2381 = vlaneseq
      %v2382 = vshrl.u32 %v2381, 7
      %v2383 = vsub.s32 3, %v2382
      %v2384 = vrot.slane %v2247, %v2383
      %v2385 = vlaneseq
      %v2386 = vshrl.u32 %v2385, 7
      %v2387 = vsub.s32 3, %v2386
      %v2388 = vrot.slane %v2248, %v2387
      %v2389 = vmul.f32 %v619, %v2384
      %v2390 = vmul.f32 %v620, %v2388
      %v2391 = vadd.f32 %v2379, %v2389
      %v2392 = vadd.f32 %v2380, %v2390
      %v2393 = vlaneseq
      %v2394 = vshrl.u32 %v2393, 7
      %v2395 = vsub.s32 4, %v2394
      %v2396 = vrot.slane %v2247, %v2395
      %v2397 = vlaneseq
      %v2398 = vshrl.u32 %v2397, 7
      %v2399 = vsub.s32 4, %v2398
      %v2400 = vrot.slane %v2248, %v2399
      %v2401 = vmul.f32 %v633, %v2396
      %v2402 = vmul.f32 %v634, %v2400
      %v2403 = vadd.f32 %v2391, %v2401
      %v2404 = vadd.f32 %v2392, %v2402
      %v2405 = vlaneseq
      %v2406 = vshrl.u32 %v2405, 7
      %v2407 = vsub.s32 5, %v2406
      %v2408 = vrot.slane %v2247, %v2407
      %v2409 = vlaneseq
      %v2410 = vshrl.u32 %v2409, 7
      %v2411 = vsub.s32 5, %v2410
      %v2412 = vrot.slane %v2248, %v2411
      %v2413 = vmul.f32 %v647, %v2408
      %v2414 = vmul.f32 %v648, %v2412
      %v2415 = vadd.f32 %v2403, %v2413
      %v2416 = vadd.f32 %v2404, %v2414
      %v2417 = vlaneseq
      %v2418 = vshrl.u32 %v2417, 7
      %v2419 = vsub.s32 6, %v2418
      %v2420 = vrot.slane %v2247, %v2419
      %v2421 = vlaneseq
      %v2422 = vshrl.u32 %v2421, 7
      %v2423 = vsub.s32 6, %v2422
      %v2424 = vrot.slane %v2248, %v2423
      %v2425 = vmul.f32 %v661, %v2420
      %v2426 = vmul.f32 %v662, %v2424
      %v2427 = vadd.f32 %v2415, %v2425
      %v2428 = vadd.f32 %v2416, %v2426
      %v2429 = vlaneseq
      %v2430 = vshrl.u32 %v2429, 7
      %v2431 = vsub.s32 7, %v2430
      %v2432 = vrot.slane %v2247, %v2431
      %v2433 = vlaneseq
      %v2434 = vshrl.u32 %v2433, 7
      %v2435 = vsub.s32 7, %v2434
      %v2436 = vrot.slane %v2248, %v2435
      %v2437 = vmul.f32 %v675, %v2432
      %v2438 = vmul.f32 %v676, %v2436
      %v2439 = vadd.f32 %v2427, %v2437
      %v2440 = vadd.f32 %v2428, %v2438
      %v2441 = vadd.f32 %v2099, %v2439
      %v2442 = vadd.f32 %v2100, %v2440
      %v2443 = vmax.f32 %v2441, 0.0
      %v2444 = vmax.f32 %v2442, 0.0
      %v2445 = vlaneseq
      %v2446 = vshrl.u32 %v2445, 7
      %v2447 = vsub.s32 0, %v2446
      %v2448 = vrot.slane %v2443, %v2447
      %v2449 = vlaneseq
      %v2450 = vshrl.u32 %v2449, 7
      %v2451 = vsub.s32 0, %v2450
      %v2452 = vrot.slane %v2444, %v2451
      %v2453 = vmul.f32 %v693, %v2448
      %v2454 = vmul.f32 %v694, %v2452
      %v2455 = vmul.f32 %v695, %v2448
      %v2456 = vmul.f32 %v696, %v2452
      %v2457 = vadd.f32 %v445, %v2453
      %v2458 = vadd.f32 %v446, %v2454
      %v2459 = vadd.f32 %v447, %v2455
      %v2460 = vadd.f32 %v448, %v2456
      %v2461 = vlaneseq
      %v2462 = vshrl.u32 %v2461, 7
      %v2463 = vsub.s32 1, %v2462
      %v2464 = vrot.slane %v2443, %v2463
      %v2465 = vlaneseq
      %v2466 = vshrl.u32 %v2465, 7
      %v2467 = vsub.s32 1, %v2466
      %v2468 = vrot.slane %v2444, %v2467
      %v2469 = vmul.f32 %v713, %v2464
      %v2470 = vmul.f32 %v714, %v2468
      %v2471 = vmul.f32 %v715, %v2464
      %v2472 = vmul.f32 %v716, %v2468
      %v2473 = vadd.f32 %v2457, %v2469
      %v2474 = vadd.f32 %v2458, %v2470
      %v2475 = vadd.f32 %v2459, %v2471
      %v2476 = vadd.f32 %v2460, %v2472
      %v2477 = vlaneseq
      %v2478 = vshrl.u32 %v2477, 7
      %v2479 = vsub.s32 2, %v2478
      %v2480 = vrot.slane %v2443, %v2479
      %v2481 = vlaneseq
      %v2482 = vshrl.u32 %v2481, 7
      %v2483 = vsub.s32 2, %v2482
      %v2484 = vrot.slane %v2444, %v2483
      %v2485 = vmul.f32 %v733, %v2480
      %v2486 = vmul.f32 %v734, %v2484
      %v2487 = vmul.f32 %v735, %v2480
      %v2488 = vmul.f32 %v736, %v2484
      %v2489 = vadd.f32 %v2473, %v2485
      %v2490 = vadd.f32 %v2474, %v2486
      %v2491 = vadd.f32 %v2475, %v2487
      %v2492 = vadd.f32 %v2476, %v2488
      %v2493 = vlaneseq
      %v2494 = vshrl.u32 %v2493, 7
      %v2495 = vsub.s32 3, %v2494
      %v2496 = vrot.slane %v2443, %v2495
      %v2497 = vlaneseq
      %v2498 = vshrl.u32 %v2497, 7
      %v2499 = vsub.s32 3, %v2498
      %v2500 = vrot.slane %v2444, %v2499
      %v2501 = vmul.f32 %v753, %v2496
      %v2502 = vmul.f32 %v754, %v2500
      %v2503 = vmul.f32 %v755, %v2496
      %v2504 = vmul.f32 %v756, %v2500
      %v2505 = vadd.f32 %v2489, %v2501
      %v2506 = vadd.f32 %v2490, %v2502
      %v2507 = vadd.f32 %v2491, %v2503
      %v2508 = vadd.f32 %v2492, %v2504
      %v2509 = vlaneseq
      %v2510 = vshrl.u32 %v2509, 7
      %v2511 = vsub.s32 4, %v2510
      %v2512 = vrot.slane %v2443, %v2511
      %v2513 = vlaneseq
      %v2514 = vshrl.u32 %v2513, 7
      %v2515 = vsub.s32 4, %v2514
      %v2516 = vrot.slane %v2444, %v2515
      %v2517 = vmul.f32 %v773, %v2512
      %v2518 = vmul.f32 %v774, %v2516
      %v2519 = vmul.f32 %v775, %v2512
      %v2520 = vmul.f32 %v776, %v2516
      %v2521 = vadd.f32 %v2505, %v2517
      %v2522 = vadd.f32 %v2506, %v2518
      %v2523 = vadd.f32 %v2507, %v2519
      %v2524 = vadd.f32 %v2508, %v2520
      %v2525 = vlaneseq
      %v2526 = vshrl.u32 %v2525, 7
      %v2527 = vsub.s32 5, %v2526
      %v2528 = vrot.slane %v2443, %v2527
      %v2529 = vlaneseq
      %v2530 = vshrl.u32 %v2529, 7
      %v2531 = vsub.s32 5, %v2530
      %v2532 = vrot.slane %v2444, %v2531
      %v2533 = vmul.f32 %v793, %v2528
      %v2534 = vmul.f32 %v794, %v2532
      %v2535 = vmul.f32 %v795, %v2528
      %v2536 = vmul.f32 %v796, %v2532
      %v2537 = vadd.f32 %v2521, %v2533
      %v2538 = vadd.f32 %v2522, %v2534
      %v2539 = vadd.f32 %v2523, %v2535
      %v2540 = vadd.f32 %v2524, %v2536
      %v2541 = vlaneseq
      %v2542 = vshrl.u32 %v2541, 7
      %v2543 = vsub.s32 6, %v2542
      %v2544 = vrot.slane %v2443, %v2543
      %v2545 = vlaneseq
      %v2546 = vshrl.u32 %v2545, 7
      %v2547 = vsub.s32 6, %v2546
      %v2548 = vrot.slane %v2444, %v2547
      %v2549 = vmul.f32 %v813, %v2544
      %v2550 = vmul.f32 %v814, %v2548
      %v2551 = vmul.f32 %v815, %v2544
      %v2552 = vmul.f32 %v816, %v2548
      %v2553 = vadd.f32 %v2537, %v2549
      %v2554 = vadd.f32 %v2538, %v2550
      %v2555 = vadd.f32 %v2539, %v2551
      %v2556 = vadd.f32 %v2540, %v2552
      %v2557 = vlaneseq
      %v2558 = vshrl.u32 %v2557, 7
      %v2559 = vsub.s32 7, %v2558
      %v2560 = vrot.slane %v2443, %v2559
      %v2561 = vlaneseq
      %v2562 = vshrl.u32 %v2561, 7
      %v2563 = vsub.s32 7, %v2562
      %v2564 = vrot.slane %v2444, %v2563
      %v2565 = vmul.f32 %v833, %v2560
      %v2566 = vmul.f32 %v834, %v2564
      %v2567 = vmul.f32 %v835, %v2560
      %v2568 = vmul.f32 %v836, %v2564
      %v2569 = vadd.f32 %v2553, %v2565
      %v2570 = vadd.f32 %v2554, %v2566
      %v2571 = vadd.f32 %v2555, %v2567
      %v2572 = vadd.f32 %v2556, %v2568
      %v2573 = vsub.f32 %v2237, %v2569
      %v2574 = vsub.f32 %v2238, %v2570
      %v2575 = vsub.f32 %v2239, %v2571
      %v2576 = vsub.f32 %v2240, %v2572
      %v2577 = vmax.f32 %v2573, 0.0
      %v2578 = vmax.f32 %v2574, 0.0
      %v2579 = vmax.f32 %v2575, 0.0
      %v2580 = vmax.f32 %v2576, 0.0
      %v2581 = vmin.f32 %v2577, 1.0
      %v2582 = vmin.f32 %v2578, 1.0
      %v2583 = vmin.f32 %v2579, 1.0
      %v2584 = vmin.f32 %v2580, 1.0
      %v2585 = vmul.f32 %v2581, 2.0
      %v2586 = vmul.f32 %v2582, 2.0
      %v2587 = vmul.f32 %v2583, 2.0
      %v2588 = vmul.f32 %v2584, 2.0
      %v2589 = vsub.f32 %v2585, %v2237
      %v2590 = vsub.f32 %v2586, %v2238
      %v2591 = vsub.f32 %v2587, %v2239
      %v2592 = vsub.f32 %v2588, %v2240
      %v2593 = vlaneseq
      %v2594 = vshrl.u32 %v2593, 7
      %v2595 = vsub.s32 0, %v2594
      %v2596 = vrot.slane %v2589, %v2595
      %v2597 = vlaneseq
      %v2598 = vshrl.u32 %v2597, 7
      %v2599 = vsub.s32 0, %v2598
      %v2600 = vrot.slane %v2590, %v2599
      %v2601 = vmul.f32 %v465, %v2596
      %v2602 = vmul.f32 %v466, %v2600
      %v2603 = vadd.f32 %v439, %v2601
      %v2604 = vadd.f32 %v440, %v2602
      %v2605 = vlaneseq
      %v2606 = vshrl.u32 %v2605, 7
      %v2607 = vsub.s32 1, %v2606
      %v2608 = vrot.slane %v2589, %v2607
      %v2609 = vlaneseq
      %v2610 = vshrl.u32 %v2609, 7
      %v2611 = vsub.s32 1, %v2610
      %v2612 = vrot.slane %v2590, %v2611
      %v2613 = vmul.f32 %v479, %v2608
      %v2614 = vmul.f32 %v480, %v2612
      %v2615 = vadd.f32 %v2603, %v2613
      %v2616 = vadd.f32 %v2604, %v2614
      %v2617 = vlaneseq
      %v2618 = vshrl.u32 %v2617, 7
      %v2619 = vsub.s32 2, %v2618
      %v2620 = vrot.slane %v2589, %v2619
      %v2621 = vlaneseq
      %v2622 = vshrl.u32 %v2621, 7
      %v2623 = vsub.s32 2, %v2622
      %v2624 = vrot.slane %v2590, %v2623
      %v2625 = vmul.f32 %v493, %v2620
      %v2626 = vmul.f32 %v494, %v2624
      %v2627 = vadd.f32 %v2615, %v2625
      %v2628 = vadd.f32 %v2616, %v2626
      %v2629 = vlaneseq
      %v2630 = vshrl.u32 %v2629, 7
      %v2631 = vsub.s32 3, %v2630
      %v2632 = vrot.slane %v2589, %v2631
      %v2633 = vlaneseq
      %v2634 = vshrl.u32 %v2633, 7
      %v2635 = vsub.s32 3, %v2634
      %v2636 = vrot.slane %v2590, %v2635
      %v2637 = vmul.f32 %v507, %v2632
      %v2638 = vmul.f32 %v508, %v2636
      %v2639 = vadd.f32 %v2627, %v2637
      %v2640 = vadd.f32 %v2628, %v2638
      %v2641 = vlaneseq
      %v2642 = vshrl.u32 %v2641, 7
      %v2643 = vsub.s32 4, %v2642
      %v2644 = vrot.slane %v2589, %v2643
      %v2645 = vlaneseq
      %v2646 = vshrl.u32 %v2645, 7
      %v2647 = vsub.s32 4, %v2646
      %v2648 = vrot.slane %v2590, %v2647
      %v2649 = vmul.f32 %v521, %v2644
      %v2650 = vmul.f32 %v522, %v2648
      %v2651 = vadd.f32 %v2639, %v2649
      %v2652 = vadd.f32 %v2640, %v2650
      %v2653 = vlaneseq
      %v2654 = vshrl.u32 %v2653, 7
      %v2655 = vsub.s32 5, %v2654
      %v2656 = vrot.slane %v2589, %v2655
      %v2657 = vlaneseq
      %v2658 = vshrl.u32 %v2657, 7
      %v2659 = vsub.s32 5, %v2658
      %v2660 = vrot.slane %v2590, %v2659
      %v2661 = vmul.f32 %v535, %v2656
      %v2662 = vmul.f32 %v536, %v2660
      %v2663 = vadd.f32 %v2651, %v2661
      %v2664 = vadd.f32 %v2652, %v2662
      %v2665 = vlaneseq
      %v2666 = vshrl.u32 %v2665, 7
      %v2667 = vsub.s32 6, %v2666
      %v2668 = vrot.slane %v2589, %v2667
      %v2669 = vlaneseq
      %v2670 = vshrl.u32 %v2669, 7
      %v2671 = vsub.s32 6, %v2670
      %v2672 = vrot.slane %v2590, %v2671
      %v2673 = vmul.f32 %v549, %v2668
      %v2674 = vmul.f32 %v550, %v2672
      %v2675 = vadd.f32 %v2663, %v2673
      %v2676 = vadd.f32 %v2664, %v2674
      %v2677 = vlaneseq
      %v2678 = vshrl.u32 %v2677, 7
      %v2679 = vsub.s32 7, %v2678
      %v2680 = vrot.slane %v2589, %v2679
      %v2681 = vlaneseq
      %v2682 = vshrl.u32 %v2681, 7
      %v2683 = vsub.s32 7, %v2682
      %v2684 = vrot.slane %v2590, %v2683
      %v2685 = vmul.f32 %v563, %v2680
      %v2686 = vmul.f32 %v564, %v2684
      %v2687 = vadd.f32 %v2675, %v2685
      %v2688 = vadd.f32 %v2676, %v2686
      %v2689 = vlaneseq
      %v2690 = vshrl.u32 %v2689, 7
      %v2691 = vsub.s32 0, %v2690
      %v2692 = vrot.slane %v2591, %v2691
      %v2693 = vlaneseq
      %v2694 = vshrl.u32 %v2693, 7
      %v2695 = vsub.s32 0, %v2694
      %v2696 = vrot.slane %v2592, %v2695
      %v2697 = vmul.f32 %v577, %v2692
      %v2698 = vmul.f32 %v578, %v2696
      %v2699 = vadd.f32 %v2687, %v2697
      %v2700 = vadd.f32 %v2688, %v2698
      %v2701 = vlaneseq
      %v2702 = vshrl.u32 %v2701, 7
      %v2703 = vsub.s32 1, %v2702
      %v2704 = vrot.slane %v2591, %v2703
      %v2705 = vlaneseq
      %v2706 = vshrl.u32 %v2705, 7
      %v2707 = vsub.s32 1, %v2706
      %v2708 = vrot.slane %v2592, %v2707
      %v2709 = vmul.f32 %v591, %v2704
      %v2710 = vmul.f32 %v592, %v2708
      %v2711 = vadd.f32 %v2699, %v2709
      %v2712 = vadd.f32 %v2700, %v2710
      %v2713 = vlaneseq
      %v2714 = vshrl.u32 %v2713, 7
      %v2715 = vsub.s32 2, %v2714
      %v2716 = vrot.slane %v2591, %v2715
      %v2717 = vlaneseq
      %v2718 = vshrl.u32 %v2717, 7
      %v2719 = vsub.s32 2, %v2718
      %v2720 = vrot.slane %v2592, %v2719
      %v2721 = vmul.f32 %v605, %v2716
      %v2722 = vmul.f32 %v606, %v2720
      %v2723 = vadd.f32 %v2711, %v2721
      %v2724 = vadd.f32 %v2712, %v2722
      %v2725 = vlaneseq
      %v2726 = vshrl.u32 %v2725, 7
      %v2727 = vsub.s32 3, %v2726
      %v2728 = vrot.slane %v2591, %v2727
      %v2729 = vlaneseq
      %v2730 = vshrl.u32 %v2729, 7
      %v2731 = vsub.s32 3, %v2730
      %v2732 = vrot.slane %v2592, %v2731
      %v2733 = vmul.f32 %v619, %v2728
      %v2734 = vmul.f32 %v620, %v2732
      %v2735 = vadd.f32 %v2723, %v2733
      %v2736 = vadd.f32 %v2724, %v2734
      %v2737 = vlaneseq
      %v2738 = vshrl.u32 %v2737, 7
      %v2739 = vsub.s32 4, %v2738
      %v2740 = vrot.slane %v2591, %v2739
      %v2741 = vlaneseq
      %v2742 = vshrl.u32 %v2741, 7
      %v2743 = vsub.s32 4, %v2742
      %v2744 = vrot.slane %v2592, %v2743
      %v2745 = vmul.f32 %v633, %v2740
      %v2746 = vmul.f32 %v634, %v2744
      %v2747 = vadd.f32 %v2735, %v2745
      %v2748 = vadd.f32 %v2736, %v2746
      %v2749 = vlaneseq
      %v2750 = vshrl.u32 %v2749, 7
      %v2751 = vsub.s32 5, %v2750
      %v2752 = vrot.slane %v2591, %v2751
      %v2753 = vlaneseq
      %v2754 = vshrl.u32 %v2753, 7
      %v2755 = vsub.s32 5, %v2754
      %v2756 = vrot.slane %v2592, %v2755
      %v2757 = vmul.f32 %v647, %v2752
      %v2758 = vmul.f32 %v648, %v2756
      %v2759 = vadd.f32 %v2747, %v2757
      %v2760 = vadd.f32 %v2748, %v2758
      %v2761 = vlaneseq
      %v2762 = vshrl.u32 %v2761, 7
      %v2763 = vsub.s32 6, %v2762
      %v2764 = vrot.slane %v2591, %v2763
      %v2765 = vlaneseq
      %v2766 = vshrl.u32 %v2765, 7
      %v2767 = vsub.s32 6, %v2766
      %v2768 = vrot.slane %v2592, %v2767
      %v2769 = vmul.f32 %v661, %v2764
      %v2770 = vmul.f32 %v662, %v2768
      %v2771 = vadd.f32 %v2759, %v2769
      %v2772 = vadd.f32 %v2760, %v2770
      %v2773 = vlaneseq
      %v2774 = vshrl.u32 %v2773, 7
      %v2775 = vsub.s32 7, %v2774
      %v2776 = vrot.slane %v2591, %v2775
      %v2777 = vlaneseq
      %v2778 = vshrl.u32 %v2777, 7
      %v2779 = vsub.s32 7, %v2778
      %v2780 = vrot.slane %v2592, %v2779
      %v2781 = vmul.f32 %v675, %v2776
      %v2782 = vmul.f32 %v676, %v2780
      %v2783 = vadd.f32 %v2771, %v2781
      %v2784 = vadd.f32 %v2772, %v2782
      %v2785 = vadd.f32 %v2443, %v2783
      %v2786 = vadd.f32 %v2444, %v2784
      %v2787 = vmax.f32 %v2785, 0.0
      %v2788 = vmax.f32 %v2786, 0.0
      %v2789 = vlaneseq
      %v2790 = vshrl.u32 %v2789, 7
      %v2791 = vsub.s32 0, %v2790
      %v2792 = vrot.slane %v2787, %v2791
      %v2793 = vlaneseq
      %v2794 = vshrl.u32 %v2793, 7
      %v2795 = vsub.s32 0, %v2794
      %v2796 = vrot.slane %v2788, %v2795
      %v2797 = vmul.f32 %v693, %v2792
      %v2798 = vmul.f32 %v694, %v2796
      %v2799 = vmul.f32 %v695, %v2792
      %v2800 = vmul.f32 %v696, %v2796
      %v2801 = vadd.f32 %v445, %v2797
      %v2802 = vadd.f32 %v446, %v2798
      %v2803 = vadd.f32 %v447, %v2799
      %v2804 = vadd.f32 %v448, %v2800
      %v2805 = vlaneseq
      %v2806 = vshrl.u32 %v2805, 7
      %v2807 = vsub.s32 1, %v2806
      %v2808 = vrot.slane %v2787, %v2807
      %v2809 = vlaneseq
      %v2810 = vshrl.u32 %v2809, 7
      %v2811 = vsub.s32 1, %v2810
      %v2812 = vrot.slane %v2788, %v2811
      %v2813 = vmul.f32 %v713, %v2808
      %v2814 = vmul.f32 %v714, %v2812
      %v2815 = vmul.f32 %v715, %v2808
      %v2816 = vmul.f32 %v716, %v2812
      %v2817 = vadd.f32 %v2801, %v2813
      %v2818 = vadd.f32 %v2802, %v2814
      %v2819 = vadd.f32 %v2803, %v2815
      %v2820 = vadd.f32 %v2804, %v2816
      %v2821 = vlaneseq
      %v2822 = vshrl.u32 %v2821, 7
      %v2823 = vsub.s32 2, %v2822
      %v2824 = vrot.slane %v2787, %v2823
      %v2825 = vlaneseq
      %v2826 = vshrl.u32 %v2825, 7
      %v2827 = vsub.s32 2, %v2826
      %v2828 = vrot.slane %v2788, %v2827
      %v2829 = vmul.f32 %v733, %v2824
      %v2830 = vmul.f32 %v734, %v2828
      %v2831 = vmul.f32 %v735, %v2824
      %v2832 = vmul.f32 %v736, %v2828
      %v2833 = vadd.f32 %v2817, %v2829
      %v2834 = vadd.f32 %v2818, %v2830
      %v2835 = vadd.f32 %v2819, %v2831
      %v2836 = vadd.f32 %v2820, %v2832
      %v2837 = vlaneseq
      %v2838 = vshrl.u32 %v2837, 7
      %v2839 = vsub.s32 3, %v2838
      %v2840 = vrot.slane %v2787, %v2839
      %v2841 = vlaneseq
      %v2842 = vshrl.u32 %v2841, 7
      %v2843 = vsub.s32 3, %v2842
      %v2844 = vrot.slane %v2788, %v2843
      %v2845 = vmul.f32 %v753, %v2840
      %v2846 = vmul.f32 %v754, %v2844
      %v2847 = vmul.f32 %v755, %v2840
      %v2848 = vmul.f32 %v756, %v2844
      %v2849 = vadd.f32 %v2833, %v2845
      %v2850 = vadd.f32 %v2834, %v2846
      %v2851 = vadd.f32 %v2835, %v2847
      %v2852 = vadd.f32 %v2836, %v2848
      %v2853 = vlaneseq
      %v2854 = vshrl.u32 %v2853, 7
      %v2855 = vsub.s32 4, %v2854
      %v2856 = vrot.slane %v2787, %v2855
      %v2857 = vlaneseq
      %v2858 = vshrl.u32 %v2857, 7
      %v2859 = vsub.s32 4, %v2858
      %v2860 = vrot.slane %v2788, %v2859
      %v2861 = vmul.f32 %v773, %v2856
      %v2862 = vmul.f32 %v774, %v2860
      %v2863 = vmul.f32 %v775, %v2856
      %v2864 = vmul.f32 %v776, %v2860
      %v2865 = vadd.f32 %v2849, %v2861
      %v2866 = vadd.f32 %v2850, %v2862
      %v2867 = vadd.f32 %v2851, %v2863
      %v2868 = vadd.f32 %v2852, %v2864
      %v2869 = vlaneseq
      %v2870 = vshrl.u32 %v2869, 7
      %v2871 = vsub.s32 5, %v2870
      %v2872 = vrot.slane %v2787, %v2871
      %v2873 = vlaneseq
      %v2874 = vshrl.u32 %v2873, 7
      %v2875 = vsub.s32 5, %v2874
      %v2876 = vrot.slane %v2788, %v2875
      %v2877 = vmul.f32 %v793, %v2872
      %v2878 = vmul.f32 %v794, %v2876
      %v2879 = vmul.f32 %v795, %v2872
      %v2880 = vmul.f32 %v796, %v2876
      %v2881 = vadd.f32 %v2865, %v2877
      %v2882 = vadd.f32 %v2866, %v2878
      %v2883 = vadd.f32 %v2867, %v2879
      %v2884 = vadd.f32 %v2868, %v2880
      %v2885 = vlaneseq
      %v2886 = vshrl.u32 %v2885, 7
      %v2887 = vsub.s32 6, %v2886
      %v2888 = vrot.slane %v2787, %v2887
      %v2889 = vlaneseq
      %v2890 = vshrl.u32 %v2889, 7
      %v2891 = vsub.s32 6, %v2890
      %v2892 = vrot.slane %v2788, %v2891
      %v2893 = vmul.f32 %v813, %v2888
      %v2894 = vmul.f32 %v814, %v2892
      %v2895 = vmul.f32 %v815, %v2888
      %v2896 = vmul.f32 %v816, %v2892
      %v2897 = vadd.f32 %v2881, %v2893
      %v2898 = vadd.f32 %v2882, %v2894
      %v2899 = vadd.f32 %v2883, %v2895
      %v2900 = vadd.f32 %v2884, %v2896
      %v2901 = vlaneseq
      %v2902 = vshrl.u32 %v2901, 7
      %v2903 = vsub.s32 7, %v2902
      %v2904 = vrot.slane %v2787, %v2903
      %v2905 = vlaneseq
      %v2906 = vshrl.u32 %v2905, 7
      %v2907 = vsub.s32 7, %v2906
      %v2908 = vrot.slane %v2788, %v2907
      %v2909 = vmul.f32 %v833, %v2904
      %v2910 = vmul.f32 %v834, %v2908
      %v2911 = vmul.f32 %v835, %v2904
      %v2912 = vmul.f32 %v836, %v2908
      %v2913 = vadd.f32 %v2897, %v2909
      %v2914 = vadd.f32 %v2898, %v2910
      %v2915 = vadd.f32 %v2899, %v2911
      %v2916 = vadd.f32 %v2900, %v2912
      %v2917 = vsub.f32 %v2581, %v2913
      %v2918 = vsub.f32 %v2582, %v2914
      %v2919 = vsub.f32 %v2583, %v2915
      %v2920 = vsub.f32 %v2584, %v2916
      %v2921 = vmax.f32 %v2917, 0.0
      %v2922 = vmax.f32 %v2918, 0.0
      %v2923 = vmax.f32 %v2919, 0.0
      %v2924 = vmax.f32 %v2920, 0.0
      %v2925 = vmin.f32 %v2921, 1.0
      %v2926 = vmin.f32 %v2922, 1.0
      %v2927 = vmin.f32 %v2923, 1.0
      %v2928 = vmin.f32 %v2924, 1.0
      %v2929 = vmul.f32 %v2925, 2.0
      %v2930 = vmul.f32 %v2926, 2.0
      %v2931 = vmul.f32 %v2927, 2.0
      %v2932 = vmul.f32 %v2928, 2.0
      %v2933 = vsub.f32 %v2929, %v2581
      %v2934 = vsub.f32 %v2930, %v2582
      %v2935 = vsub.f32 %v2931, %v2583
      %v2936 = vsub.f32 %v2932, %v2584
      %v2937 = vlaneseq
      %v2938 = vshrl.u32 %v2937, 7
      %v2939 = vsub.s32 0, %v2938
      %v2940 = vrot.slane %v2933, %v2939
      %v2941 = vlaneseq
      %v2942 = vshrl.u32 %v2941, 7
      %v2943 = vsub.s32 0, %v2942
      %v2944 = vrot.slane %v2934, %v2943
      %v2945 = vmul.f32 %v465, %v2940
      %v2946 = vmul.f32 %v466, %v2944
      %v2947 = vadd.f32 %v439, %v2945
      %v2948 = vadd.f32 %v440, %v2946
      %v2949 = vlaneseq
      %v2950 = vshrl.u32 %v2949, 7
      %v2951 = vsub.s32 1, %v2950
      %v2952 = vrot.slane %v2933, %v2951
      %v2953 = vlaneseq
      %v2954 = vshrl.u32 %v2953, 7
      %v2955 = vsub.s32 1, %v2954
      %v2956 = vrot.slane %v2934, %v2955
      %v2957 = vmul.f32 %v479, %v2952
      %v2958 = vmul.f32 %v480, %v2956
      %v2959 = vadd.f32 %v2947, %v2957
      %v2960 = vadd.f32 %v2948, %v2958
      %v2961 = vlaneseq
      %v2962 = vshrl.u32 %v2961, 7
      %v2963 = vsub.s32 2, %v2962
      %v2964 = vrot.slane %v2933, %v2963
      %v2965 = vlaneseq
      %v2966 = vshrl.u32 %v2965, 7
      %v2967 = vsub.s32 2, %v2966
      %v2968 = vrot.slane %v2934, %v2967
      %v2969 = vmul.f32 %v493, %v2964
      %v2970 = vmul.f32 %v494, %v2968
      %v2971 = vadd.f32 %v2959, %v2969
      %v2972 = vadd.f32 %v2960, %v2970
      %v2973 = vlaneseq
      %v2974 = vshrl.u32 %v2973, 7
      %v2975 = vsub.s32 3, %v2974
      %v2976 = vrot.slane %v2933, %v2975
      %v2977 = vlaneseq
      %v2978 = vshrl.u32 %v2977, 7
      %v2979 = vsub.s32 3, %v2978
      %v2980 = vrot.slane %v2934, %v2979
      %v2981 = vmul.f32 %v507, %v2976
      %v2982 = vmul.f32 %v508, %v2980
      %v2983 = vadd.f32 %v2971, %v2981
      %v2984 = vadd.f32 %v2972, %v2982
      %v2985 = vlaneseq
      %v2986 = vshrl.u32 %v2985, 7
      %v2987 = vsub.s32 4, %v2986
      %v2988 = vrot.slane %v2933, %v2987
      %v2989 = vlaneseq
      %v2990 = vshrl.u32 %v2989, 7
      %v2991 = vsub.s32 4, %v2990
      %v2992 = vrot.slane %v2934, %v2991
      %v2993 = vmul.f32 %v521, %v2988
      %v2994 = vmul.f32 %v522, %v2992
      %v2995 = vadd.f32 %v2983, %v2993
      %v2996 = vadd.f32 %v2984, %v2994
      %v2997 = vlaneseq
      %v2998 = vshrl.u32 %v2997, 7
      %v2999 = vsub.s32 5, %v2998
      %v3000 = vrot.slane %v2933, %v2999
      %v3001 = vlaneseq
      %v3002 = vshrl.u32 %v3001, 7
      %v3003 = vsub.s32 5, %v3002
      %v3004 = vrot.slane %v2934, %v3003
      %v3005 = vmul.f32 %v535, %v3000
      %v3006 = vmul.f32 %v536, %v3004
      %v3007 = vadd.f32 %v2995, %v3005
      %v3008 = vadd.f32 %v2996, %v3006
      %v3009 = vlaneseq
      %v3010 = vshrl.u32 %v3009, 7
      %v3011 = vsub.s32 6, %v3010
      %v3012 = vrot.slane %v2933, %v3011
      %v3013 = vlaneseq
      %v3014 = vshrl.u32 %v3013, 7
      %v3015 = vsub.s32 6, %v3014
      %v3016 = vrot.slane %v2934, %v3015
      %v3017 = vmul.f32 %v549, %v3012
      %v3018 = vmul.f32 %v550, %v3016
      %v3019 = vadd.f32 %v3007, %v3017
      %v3020 = vadd.f32 %v3008, %v3018
      %v3021 = vlaneseq
      %v3022 = vshrl.u32 %v3021, 7
      %v3023 = vsub.s32 7, %v3022
      %v3024 = vrot.slane %v2933, %v3023
      %v3025 = vlaneseq
      %v3026 = vshrl.u32 %v3025, 7
      %v3027 = vsub.s32 7, %v3026
      %v3028 = vrot.slane %v2934, %v3027
      %v3029 = vmul.f32 %v563, %v3024
      %v3030 = vmul.f32 %v564, %v3028
      %v3031 = vadd.f32 %v3019, %v3029
      %v3032 = vadd.f32 %v3020, %v3030
      %v3033 = vlaneseq
      %v3034 = vshrl.u32 %v3033, 7
      %v3035 = vsub.s32 0, %v3034
      %v3036 = vrot.slane %v2935, %v3035
      %v3037 = vlaneseq
      %v3038 = vshrl.u32 %v3037, 7
      %v3039 = vsub.s32 0, %v3038
      %v3040 = vrot.slane %v2936, %v3039
      %v3041 = vmul.f32 %v577, %v3036
      %v3042 = vmul.f32 %v578, %v3040
      %v3043 = vadd.f32 %v3031, %v3041
      %v3044 = vadd.f32 %v3032, %v3042
      %v3045 = vlaneseq
      %v3046 = vshrl.u32 %v3045, 7
      %v3047 = vsub.s32 1, %v3046
      %v3048 = vrot.slane %v2935, %v3047
      %v3049 = vlaneseq
      %v3050 = vshrl.u32 %v3049, 7
      %v3051 = vsub.s32 1, %v3050
      %v3052 = vrot.slane %v2936, %v3051
      %v3053 = vmul.f32 %v591, %v3048
      %v3054 = vmul.f32 %v592, %v3052
      %v3055 = vadd.f32 %v3043, %v3053
      %v3056 = vadd.f32 %v3044, %v3054
      %v3057 = vlaneseq
      %v3058 = vshrl.u32 %v3057, 7
      %v3059 = vsub.s32 2, %v3058
      %v3060 = vrot.slane %v2935, %v3059
      %v3061 = vlaneseq
      %v3062 = vshrl.u32 %v3061, 7
      %v3063 = vsub.s32 2, %v3062
      %v3064 = vrot.slane %v2936, %v3063
      %v3065 = vmul.f32 %v605, %v3060
      %v3066 = vmul.f32 %v606, %v3064
      %v3067 = vadd.f32 %v3055, %v3065
      %v3068 = vadd.f32 %v3056, %v3066
      %v3069 = vlaneseq
      %v3070 = vshrl.u32 %v3069, 7
      %v3071 = vsub.s32 3, %v3070
      %v3072 = vrot.slane %v2935, %v3071
      %v3073 = vlaneseq
      %v3074 = vshrl.u32 %v3073, 7
      %v3075 = vsub.s32 3, %v3074
      %v3076 = vrot.slane %v2936, %v3075
      %v3077 = vmul.f32 %v619, %v3072
      %v3078 = vmul.f32 %v620, %v3076
      %v3079 = vadd.f32 %v3067, %v3077
      %v3080 = vadd.f32 %v3068, %v3078
      %v3081 = vlaneseq
      %v3082 = vshrl.u32 %v3081, 7
      %v3083 = vsub.s32 4, %v3082
      %v3084 = vrot.slane %v2935, %v3083
      %v3085 = vlaneseq
      %v3086 = vshrl.u32 %v3085, 7
      %v3087 = vsub.s32 4, %v3086
      %v3088 = vrot.slane %v2936, %v3087
      %v3089 = vmul.f32 %v633, %v3084
      %v3090 = vmul.f32 %v634, %v3088
      %v3091 = vadd.f32 %v3079, %v3089
      %v3092 = vadd.f32 %v3080, %v3090
      %v3093 = vlaneseq
      %v3094 = vshrl.u32 %v3093, 7
      %v3095 = vsub.s32 5, %v3094
      %v3096 = vrot.slane %v2935, %v3095
      %v3097 = vlaneseq
      %v3098 = vshrl.u32 %v3097, 7
      %v3099 = vsub.s32 5, %v3098
      %v3100 = vrot.slane %v2936, %v3099
      %v3101 = vmul.f32 %v647, %v3096
      %v3102 = vmul.f32 %v648, %v3100
      %v3103 = vadd.f32 %v3091, %v3101
      %v3104 = vadd.f32 %v3092, %v3102
      %v3105 = vlaneseq
      %v3106 = vshrl.u32 %v3105, 7
      %v3107 = vsub.s32 6, %v3106
      %v3108 = vrot.slane %v2935, %v3107
      %v3109 = vlaneseq
      %v3110 = vshrl.u32 %v3109, 7
      %v3111 = vsub.s32 6, %v3110
      %v3112 = vrot.slane %v2936, %v3111
      %v3113 = vmul.f32 %v661, %v3108
      %v3114 = vmul.f32 %v662, %v3112
      %v3115 = vadd.f32 %v3103, %v3113
      %v3116 = vadd.f32 %v3104, %v3114
      %v3117 = vlaneseq
      %v3118 = vshrl.u32 %v3117, 7
      %v3119 = vsub.s32 7, %v3118
      %v3120 = vrot.slane %v2935, %v3119
      %v3121 = vlaneseq
      %v3122 = vshrl.u32 %v3121, 7
      %v3123 = vsub.s32 7, %v3122
      %v3124 = vrot.slane %v2936, %v3123
      %v3125 = vmul.f32 %v675, %v3120
      %v3126 = vmul.f32 %v676, %v3124
      %v3127 = vadd.f32 %v3115, %v3125
      %v3128 = vadd.f32 %v3116, %v3126
      %v3129 = vadd.f32 %v2787, %v3127
      %v3130 = vadd.f32 %v2788, %v3128
      %v3131 = vmax.f32 %v3129, 0.0
      %v3132 = vmax.f32 %v3130, 0.0
      %v3133 = vlaneseq
      %v3134 = vshrl.u32 %v3133, 7
      %v3135 = vsub.s32 0, %v3134
      %v3136 = vrot.slane %v3131, %v3135
      %v3137 = vlaneseq
      %v3138 = vshrl.u32 %v3137, 7
      %v3139 = vsub.s32 0, %v3138
      %v3140 = vrot.slane %v3132, %v3139
      %v3141 = vmul.f32 %v693, %v3136
      %v3142 = vmul.f32 %v694, %v3140
      %v3143 = vmul.f32 %v695, %v3136
      %v3144 = vmul.f32 %v696, %v3140
      %v3145 = vadd.f32 %v445, %v3141
      %v3146 = vadd.f32 %v446, %v3142
      %v3147 = vadd.f32 %v447, %v3143
      %v3148 = vadd.f32 %v448, %v3144
      %v3149 = vlaneseq
      %v3150 = vshrl.u32 %v3149, 7
      %v3151 = vsub.s32 1, %v3150
      %v3152 = vrot.slane %v3131, %v3151
      %v3153 = vlaneseq
      %v3154 = vshrl.u32 %v3153, 7
      %v3155 = vsub.s32 1, %v3154
      %v3156 = vrot.slane %v3132, %v3155
      %v3157 = vmul.f32 %v713, %v3152
      %v3158 = vmul.f32 %v714, %v3156
      %v3159 = vmul.f32 %v715, %v3152
      %v3160 = vmul.f32 %v716, %v3156
      %v3161 = vadd.f32 %v3145, %v3157
      %v3162 = vadd.f32 %v3146, %v3158
      %v3163 = vadd.f32 %v3147, %v3159
      %v3164 = vadd.f32 %v3148, %v3160
      %v3165 = vlaneseq
      %v3166 = vshrl.u32 %v3165, 7
      %v3167 = vsub.s32 2, %v3166
      %v3168 = vrot.slane %v3131, %v3167
      %v3169 = vlaneseq
      %v3170 = vshrl.u32 %v3169, 7
      %v3171 = vsub.s32 2, %v3170
      %v3172 = vrot.slane %v3132, %v3171
      %v3173 = vmul.f32 %v733, %v3168
      %v3174 = vmul.f32 %v734, %v3172
      %v3175 = vmul.f32 %v735, %v3168
      %v3176 = vmul.f32 %v736, %v3172
      %v3177 = vadd.f32 %v3161, %v3173
      %v3178 = vadd.f32 %v3162, %v3174
      %v3179 = vadd.f32 %v3163, %v3175
      %v3180 = vadd.f32 %v3164, %v3176
      %v3181 = vlaneseq
      %v3182 = vshrl.u32 %v3181, 7
      %v3183 = vsub.s32 3, %v3182
      %v3184 = vrot.slane %v3131, %v3183
      %v3185 = vlaneseq
      %v3186 = vshrl.u32 %v3185, 7
      %v3187 = vsub.s32 3, %v3186
      %v3188 = vrot.slane %v3132, %v3187
      %v3189 = vmul.f32 %v753, %v3184
      %v3190 = vmul.f32 %v754, %v3188
      %v3191 = vmul.f32 %v755, %v3184
      %v3192 = vmul.f32 %v756, %v3188
      %v3193 = vadd.f32 %v3177, %v3189
      %v3194 = vadd.f32 %v3178, %v3190
      %v3195 = vadd.f32 %v3179, %v3191
      %v3196 = vadd.f32 %v3180, %v3192
      %v3197 = vlaneseq
      %v3198 = vshrl.u32 %v3197, 7
      %v3199 = vsub.s32 4, %v3198
      %v3200 = vrot.slane %v3131, %v3199
      %v3201 = vlaneseq
      %v3202 = vshrl.u32 %v3201, 7
      %v3203 = vsub.s32 4, %v3202
      %v3204 = vrot.slane %v3132, %v3203
      %v3205 = vmul.f32 %v773, %v3200
      %v3206 = vmul.f32 %v774, %v3204
      %v3207 = vmul.f32 %v775, %v3200
      %v3208 = vmul.f32 %v776, %v3204
      %v3209 = vadd.f32 %v3193, %v3205
      %v3210 = vadd.f32 %v3194, %v3206
      %v3211 = vadd.f32 %v3195, %v3207
      %v3212 = vadd.f32 %v3196, %v3208
      %v3213 = vlaneseq
      %v3214 = vshrl.u32 %v3213, 7
      %v3215 = vsub.s32 5, %v3214
      %v3216 = vrot.slane %v3131, %v3215
      %v3217 = vlaneseq
      %v3218 = vshrl.u32 %v3217, 7
      %v3219 = vsub.s32 5, %v3218
      %v3220 = vrot.slane %v3132, %v3219
      %v3221 = vmul.f32 %v793, %v3216
      %v3222 = vmul.f32 %v794, %v3220
      %v3223 = vmul.f32 %v795, %v3216
      %v3224 = vmul.f32 %v796, %v3220
      %v3225 = vadd.f32 %v3209, %v3221
      %v3226 = vadd.f32 %v3210, %v3222
      %v3227 = vadd.f32 %v3211, %v3223
      %v3228 = vadd.f32 %v3212, %v3224
      %v3229 = vlaneseq
      %v3230 = vshrl.u32 %v3229, 7
      %v3231 = vsub.s32 6, %v3230
      %v3232 = vrot.slane %v3131, %v3231
      %v3233 = vlaneseq
      %v3234 = vshrl.u32 %v3233, 7
      %v3235 = vsub.s32 6, %v3234
      %v3236 = vrot.slane %v3132, %v3235
      %v3237 = vmul.f32 %v813, %v3232
      %v3238 = vmul.f32 %v814, %v3236
      %v3239 = vmul.f32 %v815, %v3232
      %v3240 = vmul.f32 %v816, %v3236
      %v3241 = vadd.f32 %v3225, %v3237
      %v3242 = vadd.f32 %v3226, %v3238
      %v3243 = vadd.f32 %v3227, %v3239
      %v3244 = vadd.f32 %v3228, %v3240
      %v3245 = vlaneseq
      %v3246 = vshrl.u32 %v3245, 7
      %v3247 = vsub.s32 7, %v3246
      %v3248 = vrot.slane %v3131, %v3247
      %v3249 = vlaneseq
      %v3250 = vshrl.u32 %v3249, 7
      %v3251 = vsub.s32 7, %v3250
      %v3252 = vrot.slane %v3132, %v3251
      %v3253 = vmul.f32 %v833, %v3248
      %v3254 = vmul.f32 %v834, %v3252
      %v3255 = vmul.f32 %v835, %v3248
      %v3256 = vmul.f32 %v836, %v3252
      %v3257 = vadd.f32 %v3241, %v3253
      %v3258 = vadd.f32 %v3242, %v3254
      %v3259 = vadd.f32 %v3243, %v3255
      %v3260 = vadd.f32 %v3244, %v3256
      %v3261 = vsub.f32 %v2925, %v3257
      %v3262 = vsub.f32 %v2926, %v3258
      %v3263 = vsub.f32 %v2927, %v3259
      %v3264 = vsub.f32 %v2928, %v3260
      %v3265 = vmax.f32 %v3261, 0.0
      %v3266 = vmax.f32 %v3262, 0.0
      %v3267 = vmax.f32 %v3263, 0.0
      %v3268 = vmax.f32 %v3264, 0.0
      %v3269 = vmin.f32 %v3265, 1.0
      %v3270 = vmin.f32 %v3266, 1.0
      %v3271 = vmin.f32 %v3267, 1.0
      %v3272 = vmin.f32 %v3268, 1.0
      %v3273 = vmul.f32 %v3269, 2.0
      %v3274 = vmul.f32 %v3270, 2.0
      %v3275 = vmul.f32 %v3271, 2.0
      %v3276 = vmul.f32 %v3272, 2.0
      %v3277 = vsub.f32 %v3273, %v2925
      %v3278 = vsub.f32 %v3274, %v2926
      %v3279 = vsub.f32 %v3275, %v2927
      %v3280 = vsub.f32 %v3276, %v2928
    $region38: #{tpu_custom_call.1} parent=1 // loop_footer
      %s454 = sadd.s32 1, %s450
    $region39: #{tpu_custom_call.1} parent=1 // loop_footer_branch
      %449 = sbr.rel target = $region35
    $region40: #{tpu_custom_call.1} parent=1 // loop_exit
      _
    %v3281 = vld [vmem:[#allocation3] sm:$0xff]
    %v3282 = vld [vmem:[#allocation3 + $0x8] sm:$0xff]
    %v3283 = vlaneseq
    %v3284 = vshrl.u32 %v3283, 7
    %v3285 = vsub.s32 0, %v3284
    %v3286 = vrot.slane %v459, %v3285
    %v3287 = vlaneseq
    %v3288 = vshrl.u32 %v3287, 7
    %v3289 = vsub.s32 0, %v3288
    %v3290 = vrot.slane %v460, %v3289
    %v3291 = vmul.f32 %v3281, %v3286
    %v3292 = vmul.f32 %v3282, %v3290
    %v3293 = vadd.f32 %v439, %v3291
    %v3294 = vadd.f32 %v440, %v3292
    %v3295 = vld [vmem:[%s226] sm:$0xff]
    %v3296 = vld [vmem:[%s226 + $0x8] sm:$0xff]
    %v3297 = vlaneseq
    %v3298 = vshrl.u32 %v3297, 7
    %v3299 = vsub.s32 1, %v3298
    %v3300 = vrot.slane %v459, %v3299
    %v3301 = vlaneseq
    %v3302 = vshrl.u32 %v3301, 7
    %v3303 = vsub.s32 1, %v3302
    %v3304 = vrot.slane %v460, %v3303
    %v3305 = vmul.f32 %v3295, %v3300
    %v3306 = vmul.f32 %v3296, %v3304
    %v3307 = vadd.f32 %v3293, %v3305
    %v3308 = vadd.f32 %v3294, %v3306
    %v3309 = vld [vmem:[%s233] sm:$0xff]
    %v3310 = vld [vmem:[%s233 + $0x8] sm:$0xff]
    %v3311 = vlaneseq
    %v3312 = vshrl.u32 %v3311, 7
    %v3313 = vsub.s32 2, %v3312
    %v3314 = vrot.slane %v459, %v3313
    %v3315 = vlaneseq
    %v3316 = vshrl.u32 %v3315, 7
    %v3317 = vsub.s32 2, %v3316
    %v3318 = vrot.slane %v460, %v3317
    %v3319 = vmul.f32 %v3309, %v3314
    %v3320 = vmul.f32 %v3310, %v3318
    %v3321 = vadd.f32 %v3307, %v3319
    %v3322 = vadd.f32 %v3308, %v3320
    %v3323 = vld [vmem:[%s240] sm:$0xff]
    %v3324 = vld [vmem:[%s240 + $0x8] sm:$0xff]
    %v3325 = vlaneseq
    %v3326 = vshrl.u32 %v3325, 7
    %v3327 = vsub.s32 3, %v3326
    %v3328 = vrot.slane %v459, %v3327
    %v3329 = vlaneseq
    %v3330 = vshrl.u32 %v3329, 7
    %v3331 = vsub.s32 3, %v3330
    %v3332 = vrot.slane %v460, %v3331
    %v3333 = vmul.f32 %v3323, %v3328
    %v3334 = vmul.f32 %v3324, %v3332
    %v3335 = vadd.f32 %v3321, %v3333
    %v3336 = vadd.f32 %v3322, %v3334
    %v3337 = vld [vmem:[%s247] sm:$0xff]
    %v3338 = vld [vmem:[%s247 + $0x8] sm:$0xff]
    %v3339 = vlaneseq
    %v3340 = vshrl.u32 %v3339, 7
    %v3341 = vsub.s32 4, %v3340
    %v3342 = vrot.slane %v459, %v3341
    %v3343 = vlaneseq
    %v3344 = vshrl.u32 %v3343, 7
    %v3345 = vsub.s32 4, %v3344
    %v3346 = vrot.slane %v460, %v3345
    %v3347 = vmul.f32 %v3337, %v3342
    %v3348 = vmul.f32 %v3338, %v3346
    %v3349 = vadd.f32 %v3335, %v3347
    %v3350 = vadd.f32 %v3336, %v3348
    %v3351 = vld [vmem:[%s254] sm:$0xff]
    %v3352 = vld [vmem:[%s254 + $0x8] sm:$0xff]
    %v3353 = vlaneseq
    %v3354 = vshrl.u32 %v3353, 7
    %v3355 = vsub.s32 5, %v3354
    %v3356 = vrot.slane %v459, %v3355
    %v3357 = vlaneseq
    %v3358 = vshrl.u32 %v3357, 7
    %v3359 = vsub.s32 5, %v3358
    %v3360 = vrot.slane %v460, %v3359
    %v3361 = vmul.f32 %v3351, %v3356
    %v3362 = vmul.f32 %v3352, %v3360
    %v3363 = vadd.f32 %v3349, %v3361
    %v3364 = vadd.f32 %v3350, %v3362
    %v3365 = vld [vmem:[%s261] sm:$0xff]
    %v3366 = vld [vmem:[%s261 + $0x8] sm:$0xff]
    %v3367 = vlaneseq
    %v3368 = vshrl.u32 %v3367, 7
    %v3369 = vsub.s32 6, %v3368
    %v3370 = vrot.slane %v459, %v3369
    %v3371 = vlaneseq
    %v3372 = vshrl.u32 %v3371, 7
    %v3373 = vsub.s32 6, %v3372
    %v3374 = vrot.slane %v460, %v3373
    %v3375 = vmul.f32 %v3365, %v3370
    %v3376 = vmul.f32 %v3366, %v3374
    %v3377 = vadd.f32 %v3363, %v3375
    %v3378 = vadd.f32 %v3364, %v3376
    %v3379 = vld [vmem:[%s268] sm:$0xff]
    %v3380 = vld [vmem:[%s268 + $0x8] sm:$0xff]
    %v3381 = vlaneseq
    %v3382 = vshrl.u32 %v3381, 7
    %v3383 = vsub.s32 7, %v3382
    %v3384 = vrot.slane %v459, %v3383
    %v3385 = vlaneseq
    %v3386 = vshrl.u32 %v3385, 7
    %v3387 = vsub.s32 7, %v3386
    %v3388 = vrot.slane %v460, %v3387
    %v3389 = vmul.f32 %v3379, %v3384
    %v3390 = vmul.f32 %v3380, %v3388
    %v3391 = vadd.f32 %v3377, %v3389
    %v3392 = vadd.f32 %v3378, %v3390
    %v3393 = vld [vmem:[%s275] sm:$0xff]
    %v3394 = vld [vmem:[%s275 + $0x8] sm:$0xff]
    %v3395 = vlaneseq
    %v3396 = vshrl.u32 %v3395, 7
    %v3397 = vsub.s32 0, %v3396
    %v3398 = vrot.slane %v461, %v3397
    %v3399 = vlaneseq
    %v3400 = vshrl.u32 %v3399, 7
    %v3401 = vsub.s32 0, %v3400
    %v3402 = vrot.slane %v462, %v3401
    %v3403 = vmul.f32 %v3393, %v3398
    %v3404 = vmul.f32 %v3394, %v3402
    %v3405 = vadd.f32 %v3391, %v3403
    %v3406 = vadd.f32 %v3392, %v3404
    %v3407 = vld [vmem:[%s282] sm:$0xff]
    %v3408 = vld [vmem:[%s282 + $0x8] sm:$0xff]
    %v3409 = vlaneseq
    %v3410 = vshrl.u32 %v3409, 7
    %v3411 = vsub.s32 1, %v3410
    %v3412 = vrot.slane %v461, %v3411
    %v3413 = vlaneseq
    %v3414 = vshrl.u32 %v3413, 7
    %v3415 = vsub.s32 1, %v3414
    %v3416 = vrot.slane %v462, %v3415
    %v3417 = vmul.f32 %v3407, %v3412
    %v3418 = vmul.f32 %v3408, %v3416
    %v3419 = vadd.f32 %v3405, %v3417
    %v3420 = vadd.f32 %v3406, %v3418
    %v3421 = vld [vmem:[%s289] sm:$0xff]
    %v3422 = vld [vmem:[%s289 + $0x8] sm:$0xff]
    %v3423 = vlaneseq
    %v3424 = vshrl.u32 %v3423, 7
    %v3425 = vsub.s32 2, %v3424
    %v3426 = vrot.slane %v461, %v3425
    %v3427 = vlaneseq
    %v3428 = vshrl.u32 %v3427, 7
    %v3429 = vsub.s32 2, %v3428
    %v3430 = vrot.slane %v462, %v3429
    %v3431 = vmul.f32 %v3421, %v3426
    %v3432 = vmul.f32 %v3422, %v3430
    %v3433 = vadd.f32 %v3419, %v3431
    %v3434 = vadd.f32 %v3420, %v3432
    %v3435 = vld [vmem:[%s296] sm:$0xff]
    %v3436 = vld [vmem:[%s296 + $0x8] sm:$0xff]
    %v3437 = vlaneseq
    %v3438 = vshrl.u32 %v3437, 7
    %v3439 = vsub.s32 3, %v3438
    %v3440 = vrot.slane %v461, %v3439
    %v3441 = vlaneseq
    %v3442 = vshrl.u32 %v3441, 7
    %v3443 = vsub.s32 3, %v3442
    %v3444 = vrot.slane %v462, %v3443
    %v3445 = vmul.f32 %v3435, %v3440
    %v3446 = vmul.f32 %v3436, %v3444
    %v3447 = vadd.f32 %v3433, %v3445
    %v3448 = vadd.f32 %v3434, %v3446
    %v3449 = vld [vmem:[%s303] sm:$0xff]
    %v3450 = vld [vmem:[%s303 + $0x8] sm:$0xff]
    %v3451 = vlaneseq
    %v3452 = vshrl.u32 %v3451, 7
    %v3453 = vsub.s32 4, %v3452
    %v3454 = vrot.slane %v461, %v3453
    %v3455 = vlaneseq
    %v3456 = vshrl.u32 %v3455, 7
    %v3457 = vsub.s32 4, %v3456
    %v3458 = vrot.slane %v462, %v3457
    %v3459 = vmul.f32 %v3449, %v3454
    %v3460 = vmul.f32 %v3450, %v3458
    %v3461 = vadd.f32 %v3447, %v3459
    %v3462 = vadd.f32 %v3448, %v3460
    %v3463 = vld [vmem:[%s310] sm:$0xff]
    %v3464 = vld [vmem:[%s310 + $0x8] sm:$0xff]
    %v3465 = vlaneseq
    %v3466 = vshrl.u32 %v3465, 7
    %v3467 = vsub.s32 5, %v3466
    %v3468 = vrot.slane %v461, %v3467
    %v3469 = vlaneseq
    %v3470 = vshrl.u32 %v3469, 7
    %v3471 = vsub.s32 5, %v3470
    %v3472 = vrot.slane %v462, %v3471
    %v3473 = vmul.f32 %v3463, %v3468
    %v3474 = vmul.f32 %v3464, %v3472
    %v3475 = vadd.f32 %v3461, %v3473
    %v3476 = vadd.f32 %v3462, %v3474
    %v3477 = vld [vmem:[%s317] sm:$0xff]
    %v3478 = vld [vmem:[%s317 + $0x8] sm:$0xff]
    %v3479 = vlaneseq
    %v3480 = vshrl.u32 %v3479, 7
    %v3481 = vsub.s32 6, %v3480
    %v3482 = vrot.slane %v461, %v3481
    %v3483 = vlaneseq
    %v3484 = vshrl.u32 %v3483, 7
    %v3485 = vsub.s32 6, %v3484
    %v3486 = vrot.slane %v462, %v3485
    %v3487 = vmul.f32 %v3477, %v3482
    %v3488 = vmul.f32 %v3478, %v3486
    %v3489 = vadd.f32 %v3475, %v3487
    %v3490 = vadd.f32 %v3476, %v3488
    %v3491 = vld [vmem:[%s324] sm:$0xff]
    %v3492 = vld [vmem:[%s324 + $0x8] sm:$0xff]
    %v3493 = vlaneseq
    %v3494 = vshrl.u32 %v3493, 7
    %v3495 = vsub.s32 7, %v3494
    %v3496 = vrot.slane %v461, %v3495
    %v3497 = vlaneseq
    %v3498 = vshrl.u32 %v3497, 7
    %v3499 = vsub.s32 7, %v3498
    %v3500 = vrot.slane %v462, %v3499
    %v3501 = vmul.f32 %v3491, %v3496
    %v3502 = vmul.f32 %v3492, %v3500
    %v3503 = vadd.f32 %v3489, %v3501
    %v3504 = vadd.f32 %v3490, %v3502
    %v3505 = vadd.f32 %v463, %v3503
    %v3506 = vadd.f32 %v464, %v3504
    %v3507 = vmax.f32 %v3505, 0.0
    %v3508 = vmax.f32 %v3506, 0.0
    %v3509 = vld [vmem:[#allocation2] sm:$0xff]
    %v3510 = vld [vmem:[#allocation2 + $0x8] sm:$0xff]
    %v3511 = vld [vmem:[#allocation2 + $0x10] sm:$0xff]
    %v3512 = vld [vmem:[#allocation2 + $0x18] sm:$0xff]
    %v3513 = vlaneseq
    %v3514 = vshrl.u32 %v3513, 7
    %v3515 = vsub.s32 0, %v3514
    %v3516 = vrot.slane %v3507, %v3515
    %v3517 = vlaneseq
    %v3518 = vshrl.u32 %v3517, 7
    %v3519 = vsub.s32 0, %v3518
    %v3520 = vrot.slane %v3508, %v3519
    %v3521 = vmul.f32 %v3509, %v3516
    %v3522 = vmul.f32 %v3510, %v3520
    %v3523 = vmul.f32 %v3511, %v3516
    %v3524 = vmul.f32 %v3512, %v3520
    %v3525 = vadd.f32 %v445, %v3521
    %v3526 = vadd.f32 %v446, %v3522
    %v3527 = vadd.f32 %v447, %v3523
    %v3528 = vadd.f32 %v448, %v3524
    %v3529 = vld [vmem:[%s348] sm:$0xff]
    %v3530 = vld [vmem:[%s348 + $0x8] sm:$0xff]
    %v3531 = vld [vmem:[%s348 + $0x10] sm:$0xff]
    %v3532 = vld [vmem:[%s348 + $0x18] sm:$0xff]
    %v3533 = vlaneseq
    %v3534 = vshrl.u32 %v3533, 7
    %v3535 = vsub.s32 1, %v3534
    %v3536 = vrot.slane %v3507, %v3535
    %v3537 = vlaneseq
    %v3538 = vshrl.u32 %v3537, 7
    %v3539 = vsub.s32 1, %v3538
    %v3540 = vrot.slane %v3508, %v3539
    %v3541 = vmul.f32 %v3529, %v3536
    %v3542 = vmul.f32 %v3530, %v3540
    %v3543 = vmul.f32 %v3531, %v3536
    %v3544 = vmul.f32 %v3532, %v3540
    %v3545 = vadd.f32 %v3525, %v3541
    %v3546 = vadd.f32 %v3526, %v3542
    %v3547 = vadd.f32 %v3527, %v3543
    %v3548 = vadd.f32 %v3528, %v3544
    %v3549 = vld [vmem:[%s362] sm:$0xff]
    %v3550 = vld [vmem:[%s362 + $0x8] sm:$0xff]
    %v3551 = vld [vmem:[%s362 + $0x10] sm:$0xff]
    %v3552 = vld [vmem:[%s362 + $0x18] sm:$0xff]
    %v3553 = vlaneseq
    %v3554 = vshrl.u32 %v3553, 7
    %v3555 = vsub.s32 2, %v3554
    %v3556 = vrot.slane %v3507, %v3555
    %v3557 = vlaneseq
    %v3558 = vshrl.u32 %v3557, 7
    %v3559 = vsub.s32 2, %v3558
    %v3560 = vrot.slane %v3508, %v3559
    %v3561 = vmul.f32 %v3549, %v3556
    %v3562 = vmul.f32 %v3550, %v3560
    %v3563 = vmul.f32 %v3551, %v3556
    %v3564 = vmul.f32 %v3552, %v3560
    %v3565 = vadd.f32 %v3545, %v3561
    %v3566 = vadd.f32 %v3546, %v3562
    %v3567 = vadd.f32 %v3547, %v3563
    %v3568 = vadd.f32 %v3548, %v3564
    %v3569 = vld [vmem:[%s376] sm:$0xff]
    %v3570 = vld [vmem:[%s376 + $0x8] sm:$0xff]
    %v3571 = vld [vmem:[%s376 + $0x10] sm:$0xff]
    %v3572 = vld [vmem:[%s376 + $0x18] sm:$0xff]
    %v3573 = vlaneseq
    %v3574 = vshrl.u32 %v3573, 7
    %v3575 = vsub.s32 3, %v3574
    %v3576 = vrot.slane %v3507, %v3575
    %v3577 = vlaneseq
    %v3578 = vshrl.u32 %v3577, 7
    %v3579 = vsub.s32 3, %v3578
    %v3580 = vrot.slane %v3508, %v3579
    %v3581 = vmul.f32 %v3569, %v3576
    %v3582 = vmul.f32 %v3570, %v3580
    %v3583 = vmul.f32 %v3571, %v3576
    %v3584 = vmul.f32 %v3572, %v3580
    %v3585 = vadd.f32 %v3565, %v3581
    %v3586 = vadd.f32 %v3566, %v3582
    %v3587 = vadd.f32 %v3567, %v3583
    %v3588 = vadd.f32 %v3568, %v3584
    %v3589 = vld [vmem:[%s390] sm:$0xff]
    %v3590 = vld [vmem:[%s390 + $0x8] sm:$0xff]
    %v3591 = vld [vmem:[%s390 + $0x10] sm:$0xff]
    %v3592 = vld [vmem:[%s390 + $0x18] sm:$0xff]
    %v3593 = vlaneseq
    %v3594 = vshrl.u32 %v3593, 7
    %v3595 = vsub.s32 4, %v3594
    %v3596 = vrot.slane %v3507, %v3595
    %v3597 = vlaneseq
    %v3598 = vshrl.u32 %v3597, 7
    %v3599 = vsub.s32 4, %v3598
    %v3600 = vrot.slane %v3508, %v3599
    %v3601 = vmul.f32 %v3589, %v3596
    %v3602 = vmul.f32 %v3590, %v3600
    %v3603 = vmul.f32 %v3591, %v3596
    %v3604 = vmul.f32 %v3592, %v3600
    %v3605 = vadd.f32 %v3585, %v3601
    %v3606 = vadd.f32 %v3586, %v3602
    %v3607 = vadd.f32 %v3587, %v3603
    %v3608 = vadd.f32 %v3588, %v3604
    %v3609 = vld [vmem:[%s404] sm:$0xff]
    %v3610 = vld [vmem:[%s404 + $0x8] sm:$0xff]
    %v3611 = vld [vmem:[%s404 + $0x10] sm:$0xff]
    %v3612 = vld [vmem:[%s404 + $0x18] sm:$0xff]
    %v3613 = vlaneseq
    %v3614 = vshrl.u32 %v3613, 7
    %v3615 = vsub.s32 5, %v3614
    %v3616 = vrot.slane %v3507, %v3615
    %v3617 = vlaneseq
    %v3618 = vshrl.u32 %v3617, 7
    %v3619 = vsub.s32 5, %v3618
    %v3620 = vrot.slane %v3508, %v3619
    %v3621 = vmul.f32 %v3609, %v3616
    %v3622 = vmul.f32 %v3610, %v3620
    %v3623 = vmul.f32 %v3611, %v3616
    %v3624 = vmul.f32 %v3612, %v3620
    %v3625 = vadd.f32 %v3605, %v3621
    %v3626 = vadd.f32 %v3606, %v3622
    %v3627 = vadd.f32 %v3607, %v3623
    %v3628 = vadd.f32 %v3608, %v3624
    %v3629 = vld [vmem:[%s418] sm:$0xff]
    %v3630 = vld [vmem:[%s418 + $0x8] sm:$0xff]
    %v3631 = vld [vmem:[%s418 + $0x10] sm:$0xff]
    %v3632 = vld [vmem:[%s418 + $0x18] sm:$0xff]
    %v3633 = vlaneseq
    %v3634 = vshrl.u32 %v3633, 7
    %v3635 = vsub.s32 6, %v3634
    %v3636 = vrot.slane %v3507, %v3635
    %v3637 = vlaneseq
    %v3638 = vshrl.u32 %v3637, 7
    %v3639 = vsub.s32 6, %v3638
    %v3640 = vrot.slane %v3508, %v3639
    %v3641 = vmul.f32 %v3629, %v3636
    %v3642 = vmul.f32 %v3630, %v3640
    %v3643 = vmul.f32 %v3631, %v3636
    %v3644 = vmul.f32 %v3632, %v3640
    %v3645 = vadd.f32 %v3625, %v3641
    %v3646 = vadd.f32 %v3626, %v3642
    %v3647 = vadd.f32 %v3627, %v3643
    %v3648 = vadd.f32 %v3628, %v3644
    %v3649 = vld [vmem:[%s432] sm:$0xff]
    %v3650 = vld [vmem:[%s432 + $0x8] sm:$0xff]
    %v3651 = vld [vmem:[%s432 + $0x10] sm:$0xff]
    %v3652 = vld [vmem:[%s432 + $0x18] sm:$0xff]
    %v3653 = vlaneseq
    %v3654 = vshrl.u32 %v3653, 7
    %v3655 = vsub.s32 7, %v3654
    %v3656 = vrot.slane %v3507, %v3655
    %v3657 = vlaneseq
    %v3658 = vshrl.u32 %v3657, 7
    %v3659 = vsub.s32 7, %v3658
    %v3660 = vrot.slane %v3508, %v3659
    %v3661 = vmul.f32 %v3649, %v3656
    %v3662 = vmul.f32 %v3650, %v3660
    %v3663 = vmul.f32 %v3651, %v3656
    %v3664 = vmul.f32 %v3652, %v3660
    %v3665 = vadd.f32 %v3645, %v3661
    %v3666 = vadd.f32 %v3646, %v3662
    %v3667 = vadd.f32 %v3647, %v3663
    %v3668 = vadd.f32 %v3648, %v3664
    %v3669 = vsub.f32 %v455, %v3665
    %v3670 = vsub.f32 %v456, %v3666
    %v3671 = vsub.f32 %v457, %v3667
    %v3672 = vsub.f32 %v458, %v3668
    %v3673 = vmax.f32 %v3669, 0.0
    %v3674 = vmax.f32 %v3670, 0.0
    %v3675 = vmax.f32 %v3671, 0.0
    %v3676 = vmax.f32 %v3672, 0.0
    %v3677 = vmin.f32 %v3673, 1.0
    %v3678 = vmin.f32 %v3674, 1.0
    %v3679 = vmin.f32 %v3675, 1.0
    %v3680 = vmin.f32 %v3676, 1.0
    %v3681 = vmul.f32 %v3677, 2.0
    %v3682 = vmul.f32 %v3678, 2.0
    %v3683 = vmul.f32 %v3679, 2.0
    %v3684 = vmul.f32 %v3680, 2.0
    %v3685 = vsub.f32 %v3681, %v455
    %v3686 = vsub.f32 %v3682, %v456
    %v3687 = vsub.f32 %v3683, %v457
    %v3688 = vsub.f32 %v3684, %v458
    %v3689 = vlaneseq
    %v3690 = vshrl.u32 %v3689, 7
    %v3691 = vsub.s32 0, %v3690
    %v3692 = vrot.slane %v3685, %v3691
    %v3693 = vlaneseq
    %v3694 = vshrl.u32 %v3693, 7
    %v3695 = vsub.s32 0, %v3694
    %v3696 = vrot.slane %v3686, %v3695
    %v3697 = vmul.f32 %v3281, %v3692
    %v3698 = vmul.f32 %v3282, %v3696
    %v3699 = vadd.f32 %v439, %v3697
    %v3700 = vadd.f32 %v440, %v3698
    %v3701 = vlaneseq
    %v3702 = vshrl.u32 %v3701, 7
    %v3703 = vsub.s32 1, %v3702
    %v3704 = vrot.slane %v3685, %v3703
    %v3705 = vlaneseq
    %v3706 = vshrl.u32 %v3705, 7
    %v3707 = vsub.s32 1, %v3706
    %v3708 = vrot.slane %v3686, %v3707
    %v3709 = vmul.f32 %v3295, %v3704
    %v3710 = vmul.f32 %v3296, %v3708
    %v3711 = vadd.f32 %v3699, %v3709
    %v3712 = vadd.f32 %v3700, %v3710
    %v3713 = vlaneseq
    %v3714 = vshrl.u32 %v3713, 7
    %v3715 = vsub.s32 2, %v3714
    %v3716 = vrot.slane %v3685, %v3715
    %v3717 = vlaneseq
    %v3718 = vshrl.u32 %v3717, 7
    %v3719 = vsub.s32 2, %v3718
    %v3720 = vrot.slane %v3686, %v3719
    %v3721 = vmul.f32 %v3309, %v3716
    %v3722 = vmul.f32 %v3310, %v3720
    %v3723 = vadd.f32 %v3711, %v3721
    %v3724 = vadd.f32 %v3712, %v3722
    %v3725 = vlaneseq
    %v3726 = vshrl.u32 %v3725, 7
    %v3727 = vsub.s32 3, %v3726
    %v3728 = vrot.slane %v3685, %v3727
    %v3729 = vlaneseq
    %v3730 = vshrl.u32 %v3729, 7
    %v3731 = vsub.s32 3, %v3730
    %v3732 = vrot.slane %v3686, %v3731
    %v3733 = vmul.f32 %v3323, %v3728
    %v3734 = vmul.f32 %v3324, %v3732
    %v3735 = vadd.f32 %v3723, %v3733
    %v3736 = vadd.f32 %v3724, %v3734
    %v3737 = vlaneseq
    %v3738 = vshrl.u32 %v3737, 7
    %v3739 = vsub.s32 4, %v3738
    %v3740 = vrot.slane %v3685, %v3739
    %v3741 = vlaneseq
    %v3742 = vshrl.u32 %v3741, 7
    %v3743 = vsub.s32 4, %v3742
    %v3744 = vrot.slane %v3686, %v3743
    %v3745 = vmul.f32 %v3337, %v3740
    %v3746 = vmul.f32 %v3338, %v3744
    %v3747 = vadd.f32 %v3735, %v3745
    %v3748 = vadd.f32 %v3736, %v3746
    %v3749 = vlaneseq
    %v3750 = vshrl.u32 %v3749, 7
    %v3751 = vsub.s32 5, %v3750
    %v3752 = vrot.slane %v3685, %v3751
    %v3753 = vlaneseq
    %v3754 = vshrl.u32 %v3753, 7
    %v3755 = vsub.s32 5, %v3754
    %v3756 = vrot.slane %v3686, %v3755
    %v3757 = vmul.f32 %v3351, %v3752
    %v3758 = vmul.f32 %v3352, %v3756
    %v3759 = vadd.f32 %v3747, %v3757
    %v3760 = vadd.f32 %v3748, %v3758
    %v3761 = vlaneseq
    %v3762 = vshrl.u32 %v3761, 7
    %v3763 = vsub.s32 6, %v3762
    %v3764 = vrot.slane %v3685, %v3763
    %v3765 = vlaneseq
    %v3766 = vshrl.u32 %v3765, 7
    %v3767 = vsub.s32 6, %v3766
    %v3768 = vrot.slane %v3686, %v3767
    %v3769 = vmul.f32 %v3365, %v3764
    %v3770 = vmul.f32 %v3366, %v3768
    %v3771 = vadd.f32 %v3759, %v3769
    %v3772 = vadd.f32 %v3760, %v3770
    %v3773 = vlaneseq
    %v3774 = vshrl.u32 %v3773, 7
    %v3775 = vsub.s32 7, %v3774
    %v3776 = vrot.slane %v3685, %v3775
    %v3777 = vlaneseq
    %v3778 = vshrl.u32 %v3777, 7
    %v3779 = vsub.s32 7, %v3778
    %v3780 = vrot.slane %v3686, %v3779
    %v3781 = vmul.f32 %v3379, %v3776
    %v3782 = vmul.f32 %v3380, %v3780
    %v3783 = vadd.f32 %v3771, %v3781
    %v3784 = vadd.f32 %v3772, %v3782
    %v3785 = vlaneseq
    %v3786 = vshrl.u32 %v3785, 7
    %v3787 = vsub.s32 0, %v3786
    %v3788 = vrot.slane %v3687, %v3787
    %v3789 = vlaneseq
    %v3790 = vshrl.u32 %v3789, 7
    %v3791 = vsub.s32 0, %v3790
    %v3792 = vrot.slane %v3688, %v3791
    %v3793 = vmul.f32 %v3393, %v3788
    %v3794 = vmul.f32 %v3394, %v3792
    %v3795 = vadd.f32 %v3783, %v3793
    %v3796 = vadd.f32 %v3784, %v3794
    %v3797 = vlaneseq
    %v3798 = vshrl.u32 %v3797, 7
    %v3799 = vsub.s32 1, %v3798
    %v3800 = vrot.slane %v3687, %v3799
    %v3801 = vlaneseq
    %v3802 = vshrl.u32 %v3801, 7
    %v3803 = vsub.s32 1, %v3802
    %v3804 = vrot.slane %v3688, %v3803
    %v3805 = vmul.f32 %v3407, %v3800
    %v3806 = vmul.f32 %v3408, %v3804
    %v3807 = vadd.f32 %v3795, %v3805
    %v3808 = vadd.f32 %v3796, %v3806
    %v3809 = vlaneseq
    %v3810 = vshrl.u32 %v3809, 7
    %v3811 = vsub.s32 2, %v3810
    %v3812 = vrot.slane %v3687, %v3811
    %v3813 = vlaneseq
    %v3814 = vshrl.u32 %v3813, 7
    %v3815 = vsub.s32 2, %v3814
    %v3816 = vrot.slane %v3688, %v3815
    %v3817 = vmul.f32 %v3421, %v3812
    %v3818 = vmul.f32 %v3422, %v3816
    %v3819 = vadd.f32 %v3807, %v3817
    %v3820 = vadd.f32 %v3808, %v3818
    %v3821 = vlaneseq
    %v3822 = vshrl.u32 %v3821, 7
    %v3823 = vsub.s32 3, %v3822
    %v3824 = vrot.slane %v3687, %v3823
    %v3825 = vlaneseq
    %v3826 = vshrl.u32 %v3825, 7
    %v3827 = vsub.s32 3, %v3826
    %v3828 = vrot.slane %v3688, %v3827
    %v3829 = vmul.f32 %v3435, %v3824
    %v3830 = vmul.f32 %v3436, %v3828
    %v3831 = vadd.f32 %v3819, %v3829
    %v3832 = vadd.f32 %v3820, %v3830
    %v3833 = vlaneseq
    %v3834 = vshrl.u32 %v3833, 7
    %v3835 = vsub.s32 4, %v3834
    %v3836 = vrot.slane %v3687, %v3835
    %v3837 = vlaneseq
    %v3838 = vshrl.u32 %v3837, 7
    %v3839 = vsub.s32 4, %v3838
    %v3840 = vrot.slane %v3688, %v3839
    %v3841 = vmul.f32 %v3449, %v3836
    %v3842 = vmul.f32 %v3450, %v3840
    %v3843 = vadd.f32 %v3831, %v3841
    %v3844 = vadd.f32 %v3832, %v3842
    %v3845 = vlaneseq
    %v3846 = vshrl.u32 %v3845, 7
    %v3847 = vsub.s32 5, %v3846
    %v3848 = vrot.slane %v3687, %v3847
    %v3849 = vlaneseq
    %v3850 = vshrl.u32 %v3849, 7
    %v3851 = vsub.s32 5, %v3850
    %v3852 = vrot.slane %v3688, %v3851
    %v3853 = vmul.f32 %v3463, %v3848
    %v3854 = vmul.f32 %v3464, %v3852
    %v3855 = vadd.f32 %v3843, %v3853
    %v3856 = vadd.f32 %v3844, %v3854
    %v3857 = vlaneseq
    %v3858 = vshrl.u32 %v3857, 7
    %v3859 = vsub.s32 6, %v3858
    %v3860 = vrot.slane %v3687, %v3859
    %v3861 = vlaneseq
    %v3862 = vshrl.u32 %v3861, 7
    %v3863 = vsub.s32 6, %v3862
    %v3864 = vrot.slane %v3688, %v3863
    %v3865 = vmul.f32 %v3477, %v3860
    %v3866 = vmul.f32 %v3478, %v3864
    %v3867 = vadd.f32 %v3855, %v3865
    %v3868 = vadd.f32 %v3856, %v3866
    %v3869 = vlaneseq
    %v3870 = vshrl.u32 %v3869, 7
    %v3871 = vsub.s32 7, %v3870
    %v3872 = vrot.slane %v3687, %v3871
    %v3873 = vlaneseq
    %v3874 = vshrl.u32 %v3873, 7
    %v3875 = vsub.s32 7, %v3874
    %v3876 = vrot.slane %v3688, %v3875
    %v3877 = vmul.f32 %v3491, %v3872
    %v3878 = vmul.f32 %v3492, %v3876
    %v3879 = vadd.f32 %v3867, %v3877
    %v3880 = vadd.f32 %v3868, %v3878
    %v3881 = vadd.f32 %v3507, %v3879
    %v3882 = vadd.f32 %v3508, %v3880
    %v3883 = vmax.f32 %v3881, 0.0
    %v3884 = vmax.f32 %v3882, 0.0
    %v3885 = vlaneseq
    %v3886 = vshrl.u32 %v3885, 7
    %v3887 = vsub.s32 0, %v3886
    %v3888 = vrot.slane %v3883, %v3887
    %v3889 = vlaneseq
    %v3890 = vshrl.u32 %v3889, 7
    %v3891 = vsub.s32 0, %v3890
    %v3892 = vrot.slane %v3884, %v3891
    %v3893 = vmul.f32 %v3509, %v3888
    %v3894 = vmul.f32 %v3510, %v3892
    %v3895 = vmul.f32 %v3511, %v3888
    %v3896 = vmul.f32 %v3512, %v3892
    %v3897 = vadd.f32 %v445, %v3893
    %v3898 = vadd.f32 %v446, %v3894
    %v3899 = vadd.f32 %v447, %v3895
    %v3900 = vadd.f32 %v448, %v3896
    %v3901 = vlaneseq
    %v3902 = vshrl.u32 %v3901, 7
    %v3903 = vsub.s32 1, %v3902
    %v3904 = vrot.slane %v3883, %v3903
    %v3905 = vlaneseq
    %v3906 = vshrl.u32 %v3905, 7
    %v3907 = vsub.s32 1, %v3906
    %v3908 = vrot.slane %v3884, %v3907
    %v3909 = vmul.f32 %v3529, %v3904
    %v3910 = vmul.f32 %v3530, %v3908
    %v3911 = vmul.f32 %v3531, %v3904
    %v3912 = vmul.f32 %v3532, %v3908
    %v3913 = vadd.f32 %v3897, %v3909
    %v3914 = vadd.f32 %v3898, %v3910
    %v3915 = vadd.f32 %v3899, %v3911
    %v3916 = vadd.f32 %v3900, %v3912
    %v3917 = vlaneseq
    %v3918 = vshrl.u32 %v3917, 7
    %v3919 = vsub.s32 2, %v3918
    %v3920 = vrot.slane %v3883, %v3919
    %v3921 = vlaneseq
    %v3922 = vshrl.u32 %v3921, 7
    %v3923 = vsub.s32 2, %v3922
    %v3924 = vrot.slane %v3884, %v3923
    %v3925 = vmul.f32 %v3549, %v3920
    %v3926 = vmul.f32 %v3550, %v3924
    %v3927 = vmul.f32 %v3551, %v3920
    %v3928 = vmul.f32 %v3552, %v3924
    %v3929 = vadd.f32 %v3913, %v3925
    %v3930 = vadd.f32 %v3914, %v3926
    %v3931 = vadd.f32 %v3915, %v3927
    %v3932 = vadd.f32 %v3916, %v3928
    %v3933 = vlaneseq
    %v3934 = vshrl.u32 %v3933, 7
    %v3935 = vsub.s32 3, %v3934
    %v3936 = vrot.slane %v3883, %v3935
    %v3937 = vlaneseq
    %v3938 = vshrl.u32 %v3937, 7
    %v3939 = vsub.s32 3, %v3938
    %v3940 = vrot.slane %v3884, %v3939
    %v3941 = vmul.f32 %v3569, %v3936
    %v3942 = vmul.f32 %v3570, %v3940
    %v3943 = vmul.f32 %v3571, %v3936
    %v3944 = vmul.f32 %v3572, %v3940
    %v3945 = vadd.f32 %v3929, %v3941
    %v3946 = vadd.f32 %v3930, %v3942
    %v3947 = vadd.f32 %v3931, %v3943
    %v3948 = vadd.f32 %v3932, %v3944
    %v3949 = vlaneseq
    %v3950 = vshrl.u32 %v3949, 7
    %v3951 = vsub.s32 4, %v3950
    %v3952 = vrot.slane %v3883, %v3951
    %v3953 = vlaneseq
    %v3954 = vshrl.u32 %v3953, 7
    %v3955 = vsub.s32 4, %v3954
    %v3956 = vrot.slane %v3884, %v3955
    %v3957 = vmul.f32 %v3589, %v3952
    %v3958 = vmul.f32 %v3590, %v3956
    %v3959 = vmul.f32 %v3591, %v3952
    %v3960 = vmul.f32 %v3592, %v3956
    %v3961 = vadd.f32 %v3945, %v3957
    %v3962 = vadd.f32 %v3946, %v3958
    %v3963 = vadd.f32 %v3947, %v3959
    %v3964 = vadd.f32 %v3948, %v3960
    %v3965 = vlaneseq
    %v3966 = vshrl.u32 %v3965, 7
    %v3967 = vsub.s32 5, %v3966
    %v3968 = vrot.slane %v3883, %v3967
    %v3969 = vlaneseq
    %v3970 = vshrl.u32 %v3969, 7
    %v3971 = vsub.s32 5, %v3970
    %v3972 = vrot.slane %v3884, %v3971
    %v3973 = vmul.f32 %v3609, %v3968
    %v3974 = vmul.f32 %v3610, %v3972
    %v3975 = vmul.f32 %v3611, %v3968
    %v3976 = vmul.f32 %v3612, %v3972
    %v3977 = vadd.f32 %v3961, %v3973
    %v3978 = vadd.f32 %v3962, %v3974
    %v3979 = vadd.f32 %v3963, %v3975
    %v3980 = vadd.f32 %v3964, %v3976
    %v3981 = vlaneseq
    %v3982 = vshrl.u32 %v3981, 7
    %v3983 = vsub.s32 6, %v3982
    %v3984 = vrot.slane %v3883, %v3983
    %v3985 = vlaneseq
    %v3986 = vshrl.u32 %v3985, 7
    %v3987 = vsub.s32 6, %v3986
    %v3988 = vrot.slane %v3884, %v3987
    %v3989 = vmul.f32 %v3629, %v3984
    %v3990 = vmul.f32 %v3630, %v3988
    %v3991 = vmul.f32 %v3631, %v3984
    %v3992 = vmul.f32 %v3632, %v3988
    %v3993 = vadd.f32 %v3977, %v3989
    %v3994 = vadd.f32 %v3978, %v3990
    %v3995 = vadd.f32 %v3979, %v3991
    %v3996 = vadd.f32 %v3980, %v3992
    %v3997 = vlaneseq
    %v3998 = vshrl.u32 %v3997, 7
    %v3999 = vsub.s32 7, %v3998
    %v4000 = vrot.slane %v3883, %v3999
    %v4001 = vlaneseq
    %v4002 = vshrl.u32 %v4001, 7
    %v4003 = vsub.s32 7, %v4002
    %v4004 = vrot.slane %v3884, %v4003
    %v4005 = vmul.f32 %v3649, %v4000
    %v4006 = vmul.f32 %v3650, %v4004
    %v4007 = vmul.f32 %v3651, %v4000
    %v4008 = vmul.f32 %v3652, %v4004
    %v4009 = vadd.f32 %v3993, %v4005
    %v4010 = vadd.f32 %v3994, %v4006
    %v4011 = vadd.f32 %v3995, %v4007
    %v4012 = vadd.f32 %v3996, %v4008
    %v4013 = vsub.f32 %v3677, %v4009
    %v4014 = vsub.f32 %v3678, %v4010
    %v4015 = vsub.f32 %v3679, %v4011
    %v4016 = vsub.f32 %v3680, %v4012
    %v4017 = vmax.f32 %v4013, 0.0
    %v4018 = vmax.f32 %v4014, 0.0
    %v4019 = vmax.f32 %v4015, 0.0
    %v4020 = vmax.f32 %v4016, 0.0
    %v4021 = vmin.f32 %v4017, 1.0
    %v4022 = vmin.f32 %v4018, 1.0
    %v4023 = vmin.f32 %v4019, 1.0
    %v4024 = vmin.f32 %v4020, 1.0
    %v4025 = vmul.f32 %v4021, 2.0
    %v4026 = vmul.f32 %v4022, 2.0
    %v4027 = vmul.f32 %v4023, 2.0
    %v4028 = vmul.f32 %v4024, 2.0
    %v4029 = vsub.f32 %v4025, %v3677
    %v4030 = vsub.f32 %v4026, %v3678
    %v4031 = vsub.f32 %v4027, %v3679
    %v4032 = vsub.f32 %v4028, %v3680
    %v4033 = vlaneseq
    %v4034 = vshrl.u32 %v4033, 7
    %v4035 = vsub.s32 0, %v4034
    %v4036 = vrot.slane %v4029, %v4035
    %v4037 = vlaneseq
    %v4038 = vshrl.u32 %v4037, 7
    %v4039 = vsub.s32 0, %v4038
    %v4040 = vrot.slane %v4030, %v4039
    %v4041 = vmul.f32 %v3281, %v4036
    %v4042 = vmul.f32 %v3282, %v4040
    %v4043 = vadd.f32 %v439, %v4041
    %v4044 = vadd.f32 %v440, %v4042
    %v4045 = vlaneseq
    %v4046 = vshrl.u32 %v4045, 7
    %v4047 = vsub.s32 1, %v4046
    %v4048 = vrot.slane %v4029, %v4047
    %v4049 = vlaneseq
    %v4050 = vshrl.u32 %v4049, 7
    %v4051 = vsub.s32 1, %v4050
    %v4052 = vrot.slane %v4030, %v4051
    %v4053 = vmul.f32 %v3295, %v4048
    %v4054 = vmul.f32 %v3296, %v4052
    %v4055 = vadd.f32 %v4043, %v4053
    %v4056 = vadd.f32 %v4044, %v4054
    %v4057 = vlaneseq
    %v4058 = vshrl.u32 %v4057, 7
    %v4059 = vsub.s32 2, %v4058
    %v4060 = vrot.slane %v4029, %v4059
    %v4061 = vlaneseq
    %v4062 = vshrl.u32 %v4061, 7
    %v4063 = vsub.s32 2, %v4062
    %v4064 = vrot.slane %v4030, %v4063
    %v4065 = vmul.f32 %v3309, %v4060
    %v4066 = vmul.f32 %v3310, %v4064
    %v4067 = vadd.f32 %v4055, %v4065
    %v4068 = vadd.f32 %v4056, %v4066
    %v4069 = vlaneseq
    %v4070 = vshrl.u32 %v4069, 7
    %v4071 = vsub.s32 3, %v4070
    %v4072 = vrot.slane %v4029, %v4071
    %v4073 = vlaneseq
    %v4074 = vshrl.u32 %v4073, 7
    %v4075 = vsub.s32 3, %v4074
    %v4076 = vrot.slane %v4030, %v4075
    %v4077 = vmul.f32 %v3323, %v4072
    %v4078 = vmul.f32 %v3324, %v4076
    %v4079 = vadd.f32 %v4067, %v4077
    %v4080 = vadd.f32 %v4068, %v4078
    %v4081 = vlaneseq
    %v4082 = vshrl.u32 %v4081, 7
    %v4083 = vsub.s32 4, %v4082
    %v4084 = vrot.slane %v4029, %v4083
    %v4085 = vlaneseq
    %v4086 = vshrl.u32 %v4085, 7
    %v4087 = vsub.s32 4, %v4086
    %v4088 = vrot.slane %v4030, %v4087
    %v4089 = vmul.f32 %v3337, %v4084
    %v4090 = vmul.f32 %v3338, %v4088
    %v4091 = vadd.f32 %v4079, %v4089
    %v4092 = vadd.f32 %v4080, %v4090
    %v4093 = vlaneseq
    %v4094 = vshrl.u32 %v4093, 7
    %v4095 = vsub.s32 5, %v4094
    %v4096 = vrot.slane %v4029, %v4095
    %v4097 = vlaneseq
    %v4098 = vshrl.u32 %v4097, 7
    %v4099 = vsub.s32 5, %v4098
    %v4100 = vrot.slane %v4030, %v4099
    %v4101 = vmul.f32 %v3351, %v4096
    %v4102 = vmul.f32 %v3352, %v4100
    %v4103 = vadd.f32 %v4091, %v4101
    %v4104 = vadd.f32 %v4092, %v4102
    %v4105 = vlaneseq
    %v4106 = vshrl.u32 %v4105, 7
    %v4107 = vsub.s32 6, %v4106
    %v4108 = vrot.slane %v4029, %v4107
    %v4109 = vlaneseq
    %v4110 = vshrl.u32 %v4109, 7
    %v4111 = vsub.s32 6, %v4110
    %v4112 = vrot.slane %v4030, %v4111
    %v4113 = vmul.f32 %v3365, %v4108
    %v4114 = vmul.f32 %v3366, %v4112
    %v4115 = vadd.f32 %v4103, %v4113
    %v4116 = vadd.f32 %v4104, %v4114
    %v4117 = vlaneseq
    %v4118 = vshrl.u32 %v4117, 7
    %v4119 = vsub.s32 7, %v4118
    %v4120 = vrot.slane %v4029, %v4119
    %v4121 = vlaneseq
    %v4122 = vshrl.u32 %v4121, 7
    %v4123 = vsub.s32 7, %v4122
    %v4124 = vrot.slane %v4030, %v4123
    %v4125 = vmul.f32 %v3379, %v4120
    %v4126 = vmul.f32 %v3380, %v4124
    %v4127 = vadd.f32 %v4115, %v4125
    %v4128 = vadd.f32 %v4116, %v4126
    %v4129 = vlaneseq
    %v4130 = vshrl.u32 %v4129, 7
    %v4131 = vsub.s32 0, %v4130
    %v4132 = vrot.slane %v4031, %v4131
    %v4133 = vlaneseq
    %v4134 = vshrl.u32 %v4133, 7
    %v4135 = vsub.s32 0, %v4134
    %v4136 = vrot.slane %v4032, %v4135
    %v4137 = vmul.f32 %v3393, %v4132
    %v4138 = vmul.f32 %v3394, %v4136
    %v4139 = vadd.f32 %v4127, %v4137
    %v4140 = vadd.f32 %v4128, %v4138
    %v4141 = vlaneseq
    %v4142 = vshrl.u32 %v4141, 7
    %v4143 = vsub.s32 1, %v4142
    %v4144 = vrot.slane %v4031, %v4143
    %v4145 = vlaneseq
    %v4146 = vshrl.u32 %v4145, 7
    %v4147 = vsub.s32 1, %v4146
    %v4148 = vrot.slane %v4032, %v4147
    %v4149 = vmul.f32 %v3407, %v4144
    %v4150 = vmul.f32 %v3408, %v4148
    %v4151 = vadd.f32 %v4139, %v4149
    %v4152 = vadd.f32 %v4140, %v4150
    %v4153 = vlaneseq
    %v4154 = vshrl.u32 %v4153, 7
    %v4155 = vsub.s32 2, %v4154
    %v4156 = vrot.slane %v4031, %v4155
    %v4157 = vlaneseq
    %v4158 = vshrl.u32 %v4157, 7
    %v4159 = vsub.s32 2, %v4158
    %v4160 = vrot.slane %v4032, %v4159
    %v4161 = vmul.f32 %v3421, %v4156
    %v4162 = vmul.f32 %v3422, %v4160
    %v4163 = vadd.f32 %v4151, %v4161
    %v4164 = vadd.f32 %v4152, %v4162
    %v4165 = vlaneseq
    %v4166 = vshrl.u32 %v4165, 7
    %v4167 = vsub.s32 3, %v4166
    %v4168 = vrot.slane %v4031, %v4167
    %v4169 = vlaneseq
    %v4170 = vshrl.u32 %v4169, 7
    %v4171 = vsub.s32 3, %v4170
    %v4172 = vrot.slane %v4032, %v4171
    %v4173 = vmul.f32 %v3435, %v4168
    %v4174 = vmul.f32 %v3436, %v4172
    %v4175 = vadd.f32 %v4163, %v4173
    %v4176 = vadd.f32 %v4164, %v4174
    %v4177 = vlaneseq
    %v4178 = vshrl.u32 %v4177, 7
    %v4179 = vsub.s32 4, %v4178
    %v4180 = vrot.slane %v4031, %v4179
    %v4181 = vlaneseq
    %v4182 = vshrl.u32 %v4181, 7
    %v4183 = vsub.s32 4, %v4182
    %v4184 = vrot.slane %v4032, %v4183
    %v4185 = vmul.f32 %v3449, %v4180
    %v4186 = vmul.f32 %v3450, %v4184
    %v4187 = vadd.f32 %v4175, %v4185
    %v4188 = vadd.f32 %v4176, %v4186
    %v4189 = vlaneseq
    %v4190 = vshrl.u32 %v4189, 7
    %v4191 = vsub.s32 5, %v4190
    %v4192 = vrot.slane %v4031, %v4191
    %v4193 = vlaneseq
    %v4194 = vshrl.u32 %v4193, 7
    %v4195 = vsub.s32 5, %v4194
    %v4196 = vrot.slane %v4032, %v4195
    %v4197 = vmul.f32 %v3463, %v4192
    %v4198 = vmul.f32 %v3464, %v4196
    %v4199 = vadd.f32 %v4187, %v4197
    %v4200 = vadd.f32 %v4188, %v4198
    %v4201 = vlaneseq
    %v4202 = vshrl.u32 %v4201, 7
    %v4203 = vsub.s32 6, %v4202
    %v4204 = vrot.slane %v4031, %v4203
    %v4205 = vlaneseq
    %v4206 = vshrl.u32 %v4205, 7
    %v4207 = vsub.s32 6, %v4206
    %v4208 = vrot.slane %v4032, %v4207
    %v4209 = vmul.f32 %v3477, %v4204
    %v4210 = vmul.f32 %v3478, %v4208
    %v4211 = vadd.f32 %v4199, %v4209
    %v4212 = vadd.f32 %v4200, %v4210
    %v4213 = vlaneseq
    %v4214 = vshrl.u32 %v4213, 7
    %v4215 = vsub.s32 7, %v4214
    %v4216 = vrot.slane %v4031, %v4215
    %v4217 = vlaneseq
    %v4218 = vshrl.u32 %v4217, 7
    %v4219 = vsub.s32 7, %v4218
    %v4220 = vrot.slane %v4032, %v4219
    %v4221 = vmul.f32 %v3491, %v4216
    %v4222 = vmul.f32 %v3492, %v4220
    %v4223 = vadd.f32 %v4211, %v4221
    %v4224 = vadd.f32 %v4212, %v4222
    %v4225 = vadd.f32 %v3883, %v4223
    %v4226 = vadd.f32 %v3884, %v4224
    %v4227 = vmax.f32 %v4225, 0.0
    %v4228 = vmax.f32 %v4226, 0.0
    %v4229 = vlaneseq
    %v4230 = vshrl.u32 %v4229, 7
    %v4231 = vsub.s32 0, %v4230
    %v4232 = vrot.slane %v4227, %v4231
    %v4233 = vlaneseq
    %v4234 = vshrl.u32 %v4233, 7
    %v4235 = vsub.s32 0, %v4234
    %v4236 = vrot.slane %v4228, %v4235
    %v4237 = vmul.f32 %v3509, %v4232
    %v4238 = vmul.f32 %v3510, %v4236
    %v4239 = vmul.f32 %v3511, %v4232
    %v4240 = vmul.f32 %v3512, %v4236
    %v4241 = vadd.f32 %v445, %v4237
    %v4242 = vadd.f32 %v446, %v4238
    %v4243 = vadd.f32 %v447, %v4239
    %v4244 = vadd.f32 %v448, %v4240
    %v4245 = vlaneseq
    %v4246 = vshrl.u32 %v4245, 7
    %v4247 = vsub.s32 1, %v4246
    %v4248 = vrot.slane %v4227, %v4247
    %v4249 = vlaneseq
    %v4250 = vshrl.u32 %v4249, 7
    %v4251 = vsub.s32 1, %v4250
    %v4252 = vrot.slane %v4228, %v4251
    %v4253 = vmul.f32 %v3529, %v4248
    %v4254 = vmul.f32 %v3530, %v4252
    %v4255 = vmul.f32 %v3531, %v4248
    %v4256 = vmul.f32 %v3532, %v4252
    %v4257 = vadd.f32 %v4241, %v4253
    %v4258 = vadd.f32 %v4242, %v4254
    %v4259 = vadd.f32 %v4243, %v4255
    %v4260 = vadd.f32 %v4244, %v4256
    %v4261 = vlaneseq
    %v4262 = vshrl.u32 %v4261, 7
    %v4263 = vsub.s32 2, %v4262
    %v4264 = vrot.slane %v4227, %v4263
    %v4265 = vlaneseq
    %v4266 = vshrl.u32 %v4265, 7
    %v4267 = vsub.s32 2, %v4266
    %v4268 = vrot.slane %v4228, %v4267
    %v4269 = vmul.f32 %v3549, %v4264
    %v4270 = vmul.f32 %v3550, %v4268
    %v4271 = vmul.f32 %v3551, %v4264
    %v4272 = vmul.f32 %v3552, %v4268
    %v4273 = vadd.f32 %v4257, %v4269
    %v4274 = vadd.f32 %v4258, %v4270
    %v4275 = vadd.f32 %v4259, %v4271
    %v4276 = vadd.f32 %v4260, %v4272
    %v4277 = vlaneseq
    %v4278 = vshrl.u32 %v4277, 7
    %v4279 = vsub.s32 3, %v4278
    %v4280 = vrot.slane %v4227, %v4279
    %v4281 = vlaneseq
    %v4282 = vshrl.u32 %v4281, 7
    %v4283 = vsub.s32 3, %v4282
    %v4284 = vrot.slane %v4228, %v4283
    %v4285 = vmul.f32 %v3569, %v4280
    %v4286 = vmul.f32 %v3570, %v4284
    %v4287 = vmul.f32 %v3571, %v4280
    %v4288 = vmul.f32 %v3572, %v4284
    %v4289 = vadd.f32 %v4273, %v4285
    %v4290 = vadd.f32 %v4274, %v4286
    %v4291 = vadd.f32 %v4275, %v4287
    %v4292 = vadd.f32 %v4276, %v4288
    %v4293 = vlaneseq
    %v4294 = vshrl.u32 %v4293, 7
    %v4295 = vsub.s32 4, %v4294
    %v4296 = vrot.slane %v4227, %v4295
    %v4297 = vlaneseq
    %v4298 = vshrl.u32 %v4297, 7
    %v4299 = vsub.s32 4, %v4298
    %v4300 = vrot.slane %v4228, %v4299
    %v4301 = vmul.f32 %v3589, %v4296
    %v4302 = vmul.f32 %v3590, %v4300
    %v4303 = vmul.f32 %v3591, %v4296
    %v4304 = vmul.f32 %v3592, %v4300
    %v4305 = vadd.f32 %v4289, %v4301
    %v4306 = vadd.f32 %v4290, %v4302
    %v4307 = vadd.f32 %v4291, %v4303
    %v4308 = vadd.f32 %v4292, %v4304
    %v4309 = vlaneseq
    %v4310 = vshrl.u32 %v4309, 7
    %v4311 = vsub.s32 5, %v4310
    %v4312 = vrot.slane %v4227, %v4311
    %v4313 = vlaneseq
    %v4314 = vshrl.u32 %v4313, 7
    %v4315 = vsub.s32 5, %v4314
    %v4316 = vrot.slane %v4228, %v4315
    %v4317 = vmul.f32 %v3609, %v4312
    %v4318 = vmul.f32 %v3610, %v4316
    %v4319 = vmul.f32 %v3611, %v4312
    %v4320 = vmul.f32 %v3612, %v4316
    %v4321 = vadd.f32 %v4305, %v4317
    %v4322 = vadd.f32 %v4306, %v4318
    %v4323 = vadd.f32 %v4307, %v4319
    %v4324 = vadd.f32 %v4308, %v4320
    %v4325 = vlaneseq
    %v4326 = vshrl.u32 %v4325, 7
    %v4327 = vsub.s32 6, %v4326
    %v4328 = vrot.slane %v4227, %v4327
    %v4329 = vlaneseq
    %v4330 = vshrl.u32 %v4329, 7
    %v4331 = vsub.s32 6, %v4330
    %v4332 = vrot.slane %v4228, %v4331
    %v4333 = vmul.f32 %v3629, %v4328
    %v4334 = vmul.f32 %v3630, %v4332
    %v4335 = vmul.f32 %v3631, %v4328
    %v4336 = vmul.f32 %v3632, %v4332
    %v4337 = vadd.f32 %v4321, %v4333
    %v4338 = vadd.f32 %v4322, %v4334
    %v4339 = vadd.f32 %v4323, %v4335
    %v4340 = vadd.f32 %v4324, %v4336
    %v4341 = vlaneseq
    %v4342 = vshrl.u32 %v4341, 7
    %v4343 = vsub.s32 7, %v4342
    %v4344 = vrot.slane %v4227, %v4343
    %v4345 = vlaneseq
    %v4346 = vshrl.u32 %v4345, 7
    %v4347 = vsub.s32 7, %v4346
    %v4348 = vrot.slane %v4228, %v4347
    %v4349 = vmul.f32 %v3649, %v4344
    %v4350 = vmul.f32 %v3650, %v4348
    %v4351 = vmul.f32 %v3651, %v4344
    %v4352 = vmul.f32 %v3652, %v4348
    %v4353 = vadd.f32 %v4337, %v4349
    %v4354 = vadd.f32 %v4338, %v4350
    %v4355 = vadd.f32 %v4339, %v4351
    %v4356 = vadd.f32 %v4340, %v4352
    %v4357 = vsub.f32 %v4021, %v4353
    %v4358 = vsub.f32 %v4022, %v4354
    %v4359 = vsub.f32 %v4023, %v4355
    %v4360 = vsub.f32 %v4024, %v4356
    %v4361 = vmax.f32 %v4357, 0.0
    %v4362 = vmax.f32 %v4358, 0.0
    %v4363 = vmax.f32 %v4359, 0.0
    %v4364 = vmax.f32 %v4360, 0.0
    %v4365 = vmin.f32 %v4361, 1.0
    %v4366 = vmin.f32 %v4362, 1.0
    %v4367 = vmin.f32 %v4363, 1.0
    %v4368 = vmin.f32 %v4364, 1.0
    %v4369 = vmul.f32 %v4365, 2.0
    %v4370 = vmul.f32 %v4366, 2.0
    %v4371 = vmul.f32 %v4367, 2.0
    %v4372 = vmul.f32 %v4368, 2.0
    %v4373 = vsub.f32 %v4369, %v4021
    %v4374 = vsub.f32 %v4370, %v4022
    %v4375 = vsub.f32 %v4371, %v4023
    %v4376 = vsub.f32 %v4372, %v4024
    %v4377 = vlaneseq
    %v4378 = vshrl.u32 %v4377, 7
    %v4379 = vsub.s32 0, %v4378
    %v4380 = vrot.slane %v4373, %v4379
    %v4381 = vlaneseq
    %v4382 = vshrl.u32 %v4381, 7
    %v4383 = vsub.s32 0, %v4382
    %v4384 = vrot.slane %v4374, %v4383
    %v4385 = vmul.f32 %v3281, %v4380
    %v4386 = vmul.f32 %v3282, %v4384
    %v4387 = vadd.f32 %v439, %v4385
    %v4388 = vadd.f32 %v440, %v4386
    %v4389 = vlaneseq
    %v4390 = vshrl.u32 %v4389, 7
    %v4391 = vsub.s32 1, %v4390
    %v4392 = vrot.slane %v4373, %v4391
    %v4393 = vlaneseq
    %v4394 = vshrl.u32 %v4393, 7
    %v4395 = vsub.s32 1, %v4394
    %v4396 = vrot.slane %v4374, %v4395
    %v4397 = vmul.f32 %v3295, %v4392
    %v4398 = vmul.f32 %v3296, %v4396
    %v4399 = vadd.f32 %v4387, %v4397
    %v4400 = vadd.f32 %v4388, %v4398
    %v4401 = vlaneseq
    %v4402 = vshrl.u32 %v4401, 7
    %v4403 = vsub.s32 2, %v4402
    %v4404 = vrot.slane %v4373, %v4403
    %v4405 = vlaneseq
    %v4406 = vshrl.u32 %v4405, 7
    %v4407 = vsub.s32 2, %v4406
    %v4408 = vrot.slane %v4374, %v4407
    %v4409 = vmul.f32 %v3309, %v4404
    %v4410 = vmul.f32 %v3310, %v4408
    %v4411 = vadd.f32 %v4399, %v4409
    %v4412 = vadd.f32 %v4400, %v4410
    %v4413 = vlaneseq
    %v4414 = vshrl.u32 %v4413, 7
    %v4415 = vsub.s32 3, %v4414
    %v4416 = vrot.slane %v4373, %v4415
    %v4417 = vlaneseq
    %v4418 = vshrl.u32 %v4417, 7
    %v4419 = vsub.s32 3, %v4418
    %v4420 = vrot.slane %v4374, %v4419
    %v4421 = vmul.f32 %v3323, %v4416
    %v4422 = vmul.f32 %v3324, %v4420
    %v4423 = vadd.f32 %v4411, %v4421
    %v4424 = vadd.f32 %v4412, %v4422
    %v4425 = vlaneseq
    %v4426 = vshrl.u32 %v4425, 7
    %v4427 = vsub.s32 4, %v4426
    %v4428 = vrot.slane %v4373, %v4427
    %v4429 = vlaneseq
    %v4430 = vshrl.u32 %v4429, 7
    %v4431 = vsub.s32 4, %v4430
    %v4432 = vrot.slane %v4374, %v4431
    %v4433 = vmul.f32 %v3337, %v4428
    %v4434 = vmul.f32 %v3338, %v4432
    %v4435 = vadd.f32 %v4423, %v4433
    %v4436 = vadd.f32 %v4424, %v4434
    %v4437 = vlaneseq
    %v4438 = vshrl.u32 %v4437, 7
    %v4439 = vsub.s32 5, %v4438
    %v4440 = vrot.slane %v4373, %v4439
    %v4441 = vlaneseq
    %v4442 = vshrl.u32 %v4441, 7
    %v4443 = vsub.s32 5, %v4442
    %v4444 = vrot.slane %v4374, %v4443
    %v4445 = vmul.f32 %v3351, %v4440
    %v4446 = vmul.f32 %v3352, %v4444
    %v4447 = vadd.f32 %v4435, %v4445
    %v4448 = vadd.f32 %v4436, %v4446
    %v4449 = vlaneseq
    %v4450 = vshrl.u32 %v4449, 7
    %v4451 = vsub.s32 6, %v4450
    %v4452 = vrot.slane %v4373, %v4451
    %v4453 = vlaneseq
    %v4454 = vshrl.u32 %v4453, 7
    %v4455 = vsub.s32 6, %v4454
    %v4456 = vrot.slane %v4374, %v4455
    %v4457 = vmul.f32 %v3365, %v4452
    %v4458 = vmul.f32 %v3366, %v4456
    %v4459 = vadd.f32 %v4447, %v4457
    %v4460 = vadd.f32 %v4448, %v4458
    %v4461 = vlaneseq
    %v4462 = vshrl.u32 %v4461, 7
    %v4463 = vsub.s32 7, %v4462
    %v4464 = vrot.slane %v4373, %v4463
    %v4465 = vlaneseq
    %v4466 = vshrl.u32 %v4465, 7
    %v4467 = vsub.s32 7, %v4466
    %v4468 = vrot.slane %v4374, %v4467
    %v4469 = vmul.f32 %v3379, %v4464
    %v4470 = vmul.f32 %v3380, %v4468
    %v4471 = vadd.f32 %v4459, %v4469
    %v4472 = vadd.f32 %v4460, %v4470
    %v4473 = vlaneseq
    %v4474 = vshrl.u32 %v4473, 7
    %v4475 = vsub.s32 0, %v4474
    %v4476 = vrot.slane %v4375, %v4475
    %v4477 = vlaneseq
    %v4478 = vshrl.u32 %v4477, 7
    %v4479 = vsub.s32 0, %v4478
    %v4480 = vrot.slane %v4376, %v4479
    %v4481 = vmul.f32 %v3393, %v4476
    %v4482 = vmul.f32 %v3394, %v4480
    %v4483 = vadd.f32 %v4471, %v4481
    %v4484 = vadd.f32 %v4472, %v4482
    %v4485 = vlaneseq
    %v4486 = vshrl.u32 %v4485, 7
    %v4487 = vsub.s32 1, %v4486
    %v4488 = vrot.slane %v4375, %v4487
    %v4489 = vlaneseq
    %v4490 = vshrl.u32 %v4489, 7
    %v4491 = vsub.s32 1, %v4490
    %v4492 = vrot.slane %v4376, %v4491
    %v4493 = vmul.f32 %v3407, %v4488
    %v4494 = vmul.f32 %v3408, %v4492
    %v4495 = vadd.f32 %v4483, %v4493
    %v4496 = vadd.f32 %v4484, %v4494
    %v4497 = vlaneseq
    %v4498 = vshrl.u32 %v4497, 7
    %v4499 = vsub.s32 2, %v4498
    %v4500 = vrot.slane %v4375, %v4499
    %v4501 = vlaneseq
    %v4502 = vshrl.u32 %v4501, 7
    %v4503 = vsub.s32 2, %v4502
    %v4504 = vrot.slane %v4376, %v4503
    %v4505 = vmul.f32 %v3421, %v4500
    %v4506 = vmul.f32 %v3422, %v4504
    %v4507 = vadd.f32 %v4495, %v4505
    %v4508 = vadd.f32 %v4496, %v4506
    %v4509 = vlaneseq
    %v4510 = vshrl.u32 %v4509, 7
    %v4511 = vsub.s32 3, %v4510
    %v4512 = vrot.slane %v4375, %v4511
    %v4513 = vlaneseq
    %v4514 = vshrl.u32 %v4513, 7
    %v4515 = vsub.s32 3, %v4514
    %v4516 = vrot.slane %v4376, %v4515
    %v4517 = vmul.f32 %v3435, %v4512
    %v4518 = vmul.f32 %v3436, %v4516
    %v4519 = vadd.f32 %v4507, %v4517
    %v4520 = vadd.f32 %v4508, %v4518
    %v4521 = vlaneseq
    %v4522 = vshrl.u32 %v4521, 7
    %v4523 = vsub.s32 4, %v4522
    %v4524 = vrot.slane %v4375, %v4523
    %v4525 = vlaneseq
    %v4526 = vshrl.u32 %v4525, 7
    %v4527 = vsub.s32 4, %v4526
    %v4528 = vrot.slane %v4376, %v4527
    %v4529 = vmul.f32 %v3449, %v4524
    %v4530 = vmul.f32 %v3450, %v4528
    %v4531 = vadd.f32 %v4519, %v4529
    %v4532 = vadd.f32 %v4520, %v4530
    %v4533 = vlaneseq
    %v4534 = vshrl.u32 %v4533, 7
    %v4535 = vsub.s32 5, %v4534
    %v4536 = vrot.slane %v4375, %v4535
    %v4537 = vlaneseq
    %v4538 = vshrl.u32 %v4537, 7
    %v4539 = vsub.s32 5, %v4538
    %v4540 = vrot.slane %v4376, %v4539
    %v4541 = vmul.f32 %v3463, %v4536
    %v4542 = vmul.f32 %v3464, %v4540
    %v4543 = vadd.f32 %v4531, %v4541
    %v4544 = vadd.f32 %v4532, %v4542
    %v4545 = vlaneseq
    %v4546 = vshrl.u32 %v4545, 7
    %v4547 = vsub.s32 6, %v4546
    %v4548 = vrot.slane %v4375, %v4547
    %v4549 = vlaneseq
    %v4550 = vshrl.u32 %v4549, 7
    %v4551 = vsub.s32 6, %v4550
    %v4552 = vrot.slane %v4376, %v4551
    %v4553 = vmul.f32 %v3477, %v4548
    %v4554 = vmul.f32 %v3478, %v4552
    %v4555 = vadd.f32 %v4543, %v4553
    %v4556 = vadd.f32 %v4544, %v4554
    %v4557 = vlaneseq
    %v4558 = vshrl.u32 %v4557, 7
    %v4559 = vsub.s32 7, %v4558
    %v4560 = vrot.slane %v4375, %v4559
    %v4561 = vlaneseq
    %v4562 = vshrl.u32 %v4561, 7
    %v4563 = vsub.s32 7, %v4562
    %v4564 = vrot.slane %v4376, %v4563
    %v4565 = vmul.f32 %v3491, %v4560
    %v4566 = vmul.f32 %v3492, %v4564
    %v4567 = vadd.f32 %v4555, %v4565
    %v4568 = vadd.f32 %v4556, %v4566
    %v4569 = vadd.f32 %v4227, %v4567
    %v4570 = vadd.f32 %v4228, %v4568
    %v4571 = vmax.f32 %v4569, 0.0
    %v4572 = vmax.f32 %v4570, 0.0
    %v4573 = vlaneseq
    %v4574 = vshrl.u32 %v4573, 7
    %v4575 = vsub.s32 0, %v4574
    %v4576 = vrot.slane %v4571, %v4575
    %v4577 = vlaneseq
    %v4578 = vshrl.u32 %v4577, 7
    %v4579 = vsub.s32 0, %v4578
    %v4580 = vrot.slane %v4572, %v4579
    %v4581 = vmul.f32 %v3509, %v4576
    %v4582 = vmul.f32 %v3510, %v4580
    %v4583 = vmul.f32 %v3511, %v4576
    %v4584 = vmul.f32 %v3512, %v4580
    %v4585 = vadd.f32 %v445, %v4581
    %v4586 = vadd.f32 %v446, %v4582
    %v4587 = vadd.f32 %v447, %v4583
    %v4588 = vadd.f32 %v448, %v4584
    %v4589 = vlaneseq
    %v4590 = vshrl.u32 %v4589, 7
    %v4591 = vsub.s32 1, %v4590
    %v4592 = vrot.slane %v4571, %v4591
    %v4593 = vlaneseq
    %v4594 = vshrl.u32 %v4593, 7
    %v4595 = vsub.s32 1, %v4594
    %v4596 = vrot.slane %v4572, %v4595
    %v4597 = vmul.f32 %v3529, %v4592
    %v4598 = vmul.f32 %v3530, %v4596
    %v4599 = vmul.f32 %v3531, %v4592
    %v4600 = vmul.f32 %v3532, %v4596
    %v4601 = vadd.f32 %v4585, %v4597
    %v4602 = vadd.f32 %v4586, %v4598
    %v4603 = vadd.f32 %v4587, %v4599
    %v4604 = vadd.f32 %v4588, %v4600
    %v4605 = vlaneseq
    %v4606 = vshrl.u32 %v4605, 7
    %v4607 = vsub.s32 2, %v4606
    %v4608 = vrot.slane %v4571, %v4607
    %v4609 = vlaneseq
    %v4610 = vshrl.u32 %v4609, 7
    %v4611 = vsub.s32 2, %v4610
    %v4612 = vrot.slane %v4572, %v4611
    %v4613 = vmul.f32 %v3549, %v4608
    %v4614 = vmul.f32 %v3550, %v4612
    %v4615 = vmul.f32 %v3551, %v4608
    %v4616 = vmul.f32 %v3552, %v4612
    %v4617 = vadd.f32 %v4601, %v4613
    %v4618 = vadd.f32 %v4602, %v4614
    %v4619 = vadd.f32 %v4603, %v4615
    %v4620 = vadd.f32 %v4604, %v4616
    %v4621 = vlaneseq
    %v4622 = vshrl.u32 %v4621, 7
    %v4623 = vsub.s32 3, %v4622
    %v4624 = vrot.slane %v4571, %v4623
    %v4625 = vlaneseq
    %v4626 = vshrl.u32 %v4625, 7
    %v4627 = vsub.s32 3, %v4626
    %v4628 = vrot.slane %v4572, %v4627
    %v4629 = vmul.f32 %v3569, %v4624
    %v4630 = vmul.f32 %v3570, %v4628
    %v4631 = vmul.f32 %v3571, %v4624
    %v4632 = vmul.f32 %v3572, %v4628
    %v4633 = vadd.f32 %v4617, %v4629
    %v4634 = vadd.f32 %v4618, %v4630
    %v4635 = vadd.f32 %v4619, %v4631
    %v4636 = vadd.f32 %v4620, %v4632
    %v4637 = vlaneseq
    %v4638 = vshrl.u32 %v4637, 7
    %v4639 = vsub.s32 4, %v4638
    %v4640 = vrot.slane %v4571, %v4639
    %v4641 = vlaneseq
    %v4642 = vshrl.u32 %v4641, 7
    %v4643 = vsub.s32 4, %v4642
    %v4644 = vrot.slane %v4572, %v4643
    %v4645 = vmul.f32 %v3589, %v4640
    %v4646 = vmul.f32 %v3590, %v4644
    %v4647 = vmul.f32 %v3591, %v4640
    %v4648 = vmul.f32 %v3592, %v4644
    %v4649 = vadd.f32 %v4633, %v4645
    %v4650 = vadd.f32 %v4634, %v4646
    %v4651 = vadd.f32 %v4635, %v4647
    %v4652 = vadd.f32 %v4636, %v4648
    %v4653 = vlaneseq
    %v4654 = vshrl.u32 %v4653, 7
    %v4655 = vsub.s32 5, %v4654
    %v4656 = vrot.slane %v4571, %v4655
    %v4657 = vlaneseq
    %v4658 = vshrl.u32 %v4657, 7
    %v4659 = vsub.s32 5, %v4658
    %v4660 = vrot.slane %v4572, %v4659
    %v4661 = vmul.f32 %v3609, %v4656
    %v4662 = vmul.f32 %v3610, %v4660
    %v4663 = vmul.f32 %v3611, %v4656
    %v4664 = vmul.f32 %v3612, %v4660
    %v4665 = vadd.f32 %v4649, %v4661
    %v4666 = vadd.f32 %v4650, %v4662
    %v4667 = vadd.f32 %v4651, %v4663
    %v4668 = vadd.f32 %v4652, %v4664
    %v4669 = vlaneseq
    %v4670 = vshrl.u32 %v4669, 7
    %v4671 = vsub.s32 6, %v4670
    %v4672 = vrot.slane %v4571, %v4671
    %v4673 = vlaneseq
    %v4674 = vshrl.u32 %v4673, 7
    %v4675 = vsub.s32 6, %v4674
    %v4676 = vrot.slane %v4572, %v4675
    %v4677 = vmul.f32 %v3629, %v4672
    %v4678 = vmul.f32 %v3630, %v4676
    %v4679 = vmul.f32 %v3631, %v4672
    %v4680 = vmul.f32 %v3632, %v4676
    %v4681 = vadd.f32 %v4665, %v4677
    %v4682 = vadd.f32 %v4666, %v4678
    %v4683 = vadd.f32 %v4667, %v4679
    %v4684 = vadd.f32 %v4668, %v4680
    %v4685 = vlaneseq
    %v4686 = vshrl.u32 %v4685, 7
    %v4687 = vsub.s32 7, %v4686
    %v4688 = vrot.slane %v4571, %v4687
    %v4689 = vlaneseq
    %v4690 = vshrl.u32 %v4689, 7
    %v4691 = vsub.s32 7, %v4690
    %v4692 = vrot.slane %v4572, %v4691
    %v4693 = vmul.f32 %v3649, %v4688
    %v4694 = vmul.f32 %v3650, %v4692
    %v4695 = vmul.f32 %v3651, %v4688
    %v4696 = vmul.f32 %v3652, %v4692
    %v4697 = vadd.f32 %v4681, %v4693
    %v4698 = vadd.f32 %v4682, %v4694
    %v4699 = vadd.f32 %v4683, %v4695
    %v4700 = vadd.f32 %v4684, %v4696
    %v4701 = vsub.f32 %v4365, %v4697
    %v4702 = vsub.f32 %v4366, %v4698
    %v4703 = vsub.f32 %v4367, %v4699
    %v4704 = vsub.f32 %v4368, %v4700
    %v4705 = vmax.f32 %v4701, 0.0
    %v4706 = vmax.f32 %v4702, 0.0
    %v4707 = vmax.f32 %v4703, 0.0
    %v4708 = vmax.f32 %v4704, 0.0
    %v4709 = vmin.f32 %v4705, 1.0
    %v4710 = vmin.f32 %v4706, 1.0
    %v4711 = vmin.f32 %v4707, 1.0
    %v4712 = vmin.f32 %v4708, 1.0
    %4713 = vst [vmem:[#allocation12] sm:$0xff] %v4709
    %4714 = vst [vmem:[#allocation12 + $0x8] sm:$0xff] %v4710
    %4715 = vst [vmem:[#allocation12 + $0x10] sm:$0xff] %v4711
    %4716 = vst [vmem:[#allocation12 + $0x18] sm:$0xff] %v4712
    // Predicated region
    $region41: #{tpu_custom_call.1} parent=1 // pred_check
      _
    $region42: #{tpu_custom_call.1} parent=1 // pred_check_branch
      %4718 = sbr.rel (0) target = $region44
    $region43: #{tpu_custom_call.1} parent=1 // pred_region
      %s4720 = ssub.s32 512, 512
      %4721 = vsyncadd [#allocation6], %s4720
      %s4722 = sshll.u32 [#allocation12], 4
      %s4723 = int_to_ptr.vmem [resolvable:$true] %s4722
      %4728 = dma.vmem_to_hbm [thread:$0]  %s4723, 512, %s4, [#allocation6], 256, 256, 16
    $region44: #{tpu_custom_call.1} parent=1 // pred_fallthru
      _
    // Predicated region
    $region45: #{tpu_custom_call.1} parent=1 // pred_check
      _
    $region46: #{tpu_custom_call.1} parent=1 // pred_check_branch
      %4730 = sbr.rel (0) target = $region48
    $region47: #{tpu_custom_call.1} parent=1 // pred_region
      %4731 = dma.done [#allocation6], 512
    $region48: #{tpu_custom_call.1} parent=1 // pred_fallthru
      _
    %4732 = vsyncpa [#allocation5], 1
    %4733 = vsyncpa [#allocation8], 1
    %4734 = vsyncpa [#allocation11], 1
    %4735 = vsyncpa [#allocation6], 1

</llo_original>
